<compile_context>
chip_gen: v6e
topology: v6e:2x2x1
jax: 0.10.0
libtpu: 0.0.40
codegen_flags: <defaults>
</compile_context>

<pallas_src>
import functools

import numpy as np

import jax
import jax.numpy as jnp
from jax.experimental import pallas as pl
from jax.experimental.pallas import tpu as pltpu

BN_EPS = 1e-5


# ----------------------------------------------------------------------------
# Kernel 1: bilinear x2 upsample (align_corners=False), both axes in one pass.
#   out_img = UhT @ (img @ Uw)
# A block of `tb` images is handled with a block-diagonal UhT so only plain 2-D
# matmuls are needed in-kernel (no batched dots, no interleave copies).
# ----------------------------------------------------------------------------
def _upsample2x_kernel(x_ref, uhtbd_ref, uw_ref, o_ref, *, tb, h, w):
    x = x_ref[...].reshape(tb * h, w).astype(jnp.float32)
    t = jnp.dot(x, uw_ref[...], preferred_element_type=jnp.float32)      # (tb*h, 2w)
    y = jnp.dot(uhtbd_ref[...], t, preferred_element_type=jnp.float32)   # (tb*2h, 2w)
    o_ref[...] = y.reshape(tb, 2 * h, 2 * w).astype(o_ref.dtype)


def _upsample_matrix(l):
    # out[2j]   = 0.75*x[j] + 0.25*x[max(j-1,0)]
    # out[2j+1] = 0.75*x[j] + 0.25*x[min(j+1,l-1)]   (== F.interpolate bilinear x2,
    #                                                 align_corners=False, edge clamp)
    u = np.zeros((l, 2 * l), np.float32)
    for j in range(l):
        u[j, 2 * j] += 0.75
        u[max(j - 1, 0), 2 * j] += 0.25
        u[j, 2 * j + 1] += 0.75
        u[min(j + 1, l - 1), 2 * j + 1] += 0.25
    return u


def _pick_image_tile(n):
    # keep >=2 grid blocks when possible so v7x's two TensorCores both get work
    cap = max(1, min(8, n // 2))
    for tb in range(cap, 0, -1):
        if n % tb == 0:
            return tb
    return 1


def bilinear_upsample2x_images(x, out_dtype=jnp.float32):
    """x: (N, h, w) -> (N, 2h, 2w); full 2-D upsample in a single Pallas pass."""
    n, h, w = x.shape
    tb = _pick_image_tile(n)
    uh = _upsample_matrix(h)                                   # (h, 2h)
    uw = jnp.asarray(_upsample_matrix(w))                      # (w, 2w)
    uhtbd = jnp.asarray(np.kron(np.eye(tb, dtype=np.float32), uh.T))  # (tb*2h, tb*h)
    return pl.pallas_call(
        functools.partial(_upsample2x_kernel, tb=tb, h=h, w=w),
        out_shape=jax.ShapeDtypeStruct((n, 2 * h, 2 * w), out_dtype),
        grid=(n // tb,),
        in_specs=[
            pl.BlockSpec((tb, h, w), lambda i: (i, 0, 0)),
            pl.BlockSpec((tb * 2 * h, tb * h), lambda i: (0, 0)),
            pl.BlockSpec((w, 2 * w), lambda i: (0, 0)),
        ],
        out_specs=pl.BlockSpec((tb, 2 * h, 2 * w), lambda i: (i, 0, 0)),
        compiler_params=pltpu.CompilerParams(dimension_semantics=("parallel",)),
    )(x, uhtbd, uw)


# ----------------------------------------------------------------------------
# Kernel 2: both ConvTranspose2d(k=2,s=2)+BN+ReLU layers fused into one kernel.
# Each transposed conv is a per-input-pixel 1x1 op (no overlap at stride 2), so
# layer 2 acts group-wise on layer 1's un-shuffled (rows, 4*c1) output, which is
# implemented as a block-diagonal (4*c1, 16*c2) matmul.  BN scale is pre-folded
# into the weights; only the shift is added here.  bf16 in, f32 accumulate.
# ----------------------------------------------------------------------------
def _double_convtranspose_kernel(x_ref, w1_ref, s1_ref, w2_ref, s2_ref, o_ref):
    h = jnp.dot(x_ref[...], w1_ref[...], preferred_element_type=jnp.float32)
    h = jnp.maximum(h + s1_ref[...], 0.0)
    y = jnp.dot(h.astype(w2_ref.dtype), w2_ref[...], preferred_element_type=jnp.float32)
    y = jnp.maximum(y + s2_ref[...], 0.0)
    o_ref[...] = y.astype(o_ref.dtype)


def _pick_row_tile(n, max_tile=2048):
    # big row tiles (amortize per-step overhead), but >=2 grid blocks for v7x
    t = min(max_tile, pl.cdiv(n, 2))
    return max(8, ((t + 7) // 8) * 8)


def double_convtranspose_bn_relu(x_rows, w1, s1, w2, s2, out_dtype=jnp.bfloat16):
    n, cin = x_rows.shape
    c_mid = w1.shape[1]
    c_out = w2.shape[1]
    tile = _pick_row_tile(n)
    grid_n = pl.cdiv(n, tile)
    n_pad = grid_n * tile - n
    if n_pad:
        x_rows = jnp.pad(x_rows, ((0, n_pad), (0, 0)))
    out = pl.pallas_call(
        _double_convtranspose_kernel,
        out_shape=jax.ShapeDtypeStruct((grid_n * tile, c_out), out_dtype),
        grid=(grid_n,),
        in_specs=[
            pl.BlockSpec((tile, cin), lambda i: (i, 0)),
            pl.BlockSpec((cin, c_mid), lambda i: (0, 0)),
            pl.BlockSpec((1, c_mid), lambda i: (0, 0)),
            pl.BlockSpec((c_mid, c_out), lambda i: (0, 0)),
            pl.BlockSpec((1, c_out), lambda i: (0, 0)),
        ],
        out_specs=pl.BlockSpec((tile, c_out), lambda i: (i, 0)),
        compiler_params=pltpu.CompilerParams(dimension_semantics=("parallel",)),
    )(x_rows, w1, s1, w2, s2)
    return out[:n] if n_pad else out


# ----------------------------------------------------------------------------
# Kernel 3: fused Matting_Head:  conv3x3(pad=1) + BN + ReLU + conv1x1 + sigmoid.
# The 3x3 conv is 9 accumulated dots over shifted in-VMEM views of the padded
# NHWC activation (no im2col in HBM); the 1x1 conv + bias + sigmoid run on the
# f32 intermediate in registers, so it never round-trips through HBM.
# ----------------------------------------------------------------------------
def _matting_head_kernel(xp_ref, w3_ref, s3_ref, w1_ref, b1_ref, o_ref,
                         *, th, wdim, c_in, c_mid):
    i = pl.program_id(1)
    r0 = i * th
    acc = jnp.zeros((th * wdim, c_mid), jnp.float32)
    for dh in range(3):
        rows = xp_ref[0, pl.ds(r0 + dh, th), :, :]              # (th, wdim+2, c_in)
        for dw in range(3):
            patch = rows[:, dw:dw + wdim, :].reshape(th * wdim, c_in)
            acc = acc + jnp.dot(patch, w3_ref[dh * 3 + dw],
                                preferred_element_type=jnp.float32)
    y = jnp.maximum(acc + s3_ref[...], 0.0)                     # conv3x3 + BN + ReLU
    z = jnp.sum(y * w1_ref[...], axis=1, keepdims=True) + b1_ref[...]   # conv1x1 + bias
    # TODO(synk): this per-pixel scalar store is lane-sparse (1/128); folding the final
    # 2x upsample into this kernel would make the store lane-dense, at extra complexity.
    o_ref[0] = (1.0 / (1.0 + jnp.exp(-z))).astype(o_ref.dtype)  # sigmoid


def matting_head_sigmoid(x_nhwc, w3, s3, w1, b1, th=8):
    b, hdim, wdim, c_in = x_nhwc.shape
    c_mid = w3.shape[-1]
    th = next(t for t in (th, 16, 8, 4, 2, 1) if hdim % t == 0)
    xp = jnp.pad(x_nhwc, ((0, 0), (1, 1), (1, 1), (0, 0)))
    out = pl.pallas_call(
        functools.partial(_matting_head_kernel, th=th, wdim=wdim,
                          c_in=c_in, c_mid=c_mid),
        out_shape=jax.ShapeDtypeStruct((b, hdim * wdim, 1), jnp.float32),
        grid=(b, hdim // th),
        in_specs=[
            pl.BlockSpec((1, hdim + 2, wdim + 2, c_in), lambda bi, i: (bi, 0, 0, 0)),
            pl.BlockSpec((9, c_in, c_mid), lambda bi, i: (0, 0, 0)),
            pl.BlockSpec((1, c_mid), lambda bi, i: (0, 0)),
            pl.BlockSpec((1, c_mid), lambda bi, i: (0, 0)),
            pl.BlockSpec((1, 1), lambda bi, i: (0, 0)),
        ],
        out_specs=pl.BlockSpec((1, th * wdim, 1), lambda bi, i: (bi, i, 0)),
        compiler_params=pltpu.CompilerParams(
            dimension_semantics=("parallel", "arbitrary")),
    )(xp, w3, s3, w1, b1)
    return out.reshape(b, hdim, wdim)


# ----------------------------------------------------------------------------
# Parameter preparation: fold eval-mode BatchNorm into the conv weights and
# pre-arrange everything into the layouts the kernels consume (host-side, once).
# ----------------------------------------------------------------------------
def _bn_fold(gamma, beta, mean, var, conv_bias):
    scale = gamma / jnp.sqrt(var + BN_EPS)
    shift = beta - mean * scale + conv_bias * scale
    return scale, shift


def prepare_params(params, compute_dtype=jnp.bfloat16):
    (wt1, bias1), bn1 = params["ct1"], params["bn1"]
    (wt2, bias2), bn2 = params["ct2"], params["bn2"]
    (wc3, bias3), bn3 = params["conv3"], params["bn3"]
    (wc1, bias_head) = params["conv1"]

    cin, c1 = wt1.shape[0], wt1.shape[1]
    c2 = wt2.shape[1]
    mid = wc3.shape[0]

    scale1, shift1 = _bn_fold(*bn1, bias1)
    scale2, shift2 = _bn_fold(*bn2, bias2)
    scale3, shift3 = _bn_fold(*bn3, bias3)

    # ConvTranspose #1: (cin, c1, 2, 2) -> (cin, 4*c1); columns ordered (di, dj, o).
    w1 = jnp.transpose(wt1, (0, 2, 3, 1)).reshape(cin, 4 * c1)
    w1 = w1 * jnp.tile(scale1, 4)[None, :]
    s1 = jnp.tile(shift1, 4).reshape(1, 4 * c1)

    # ConvTranspose #2 applied group-wise on the un-shuffled ct1 output:
    # block-diagonal (4*c1, 16*c2); output columns ordered (d1, d2, o).
    w2 = jnp.transpose(wt2, (0, 2, 3, 1)).reshape(c1, 4 * c2)
    w2 = w2 * jnp.tile(scale2, 4)[None, :]
    w2_bd = jnp.kron(jnp.eye(4, dtype=w2.dtype), w2)
    s2 = jnp.tile(shift2, 16).reshape(1, 16 * c2)

    # Matting head conv3x3: (mid, c2, 3, 3) -> per-tap (c2, mid), BN scale folded in.
    w3 = jnp.transpose(wc3, (2, 3, 1, 0)).reshape(9, c2, mid) * scale3[None, None, :]
    s3 = shift3.reshape(1, mid)

    # Matting head conv1x1 (mid -> 1) + bias (kept in f32 for the epilogue).
    w_head = wc1.reshape(1, mid).astype(jnp.float32)
    b_head = bias_head.reshape(1, 1).astype(jnp.float32)

    return {
        "w1": w1.astype(compute_dtype), "s1": s1.astype(jnp.float32),
        "w2": w2_bd.astype(compute_dtype), "s2": s2.astype(jnp.float32),
        "w3": w3.astype(compute_dtype), "s3": s3.astype(jnp.float32),
        "w_head": w_head, "b_head": b_head,
    }


# ----------------------------------------------------------------------------
# MaskDecoder forward
# ----------------------------------------------------------------------------
def mask_decoder_forward(kparams, x_nchw, images=None):
    # `images` is unused in the reference forward pass (kept for signature parity)
    b, cin, h, w = x_nchw.shape
    c2 = kparams["w3"].shape[1]

    # 1) F.interpolate(x, scale_factor=2, bilinear) on the NCHW input.
    x = bilinear_upsample2x_images(x_nchw.reshape(b * cin, h, w),
                                   out_dtype=jnp.bfloat16)
    hh, ww = 2 * h, 2 * w
    x = x.reshape(b, cin, hh, ww)

    # 2) both ConvTranspose2d+BN+ReLU layers, fused (per-pixel rows matmul).
    x = jnp.transpose(x, (0, 2, 3, 1)).reshape(b * hh * ww, cin)      # NCHW -> pixel rows
    y = double_convtranspose_bn_relu(x, kparams["w1"], kparams["s1"],
                                     kparams["w2"], kparams["s2"])
    # single un-shuffle of both 2x2 pixel-shuffles -> NHWC at 4x resolution (glue).
    y = y.reshape(b, hh, ww, 2, 2, 2, 2, c2).transpose(0, 1, 3, 5, 2, 4, 6, 7)
    y = y.reshape(b, 4 * hh, 4 * ww, c2)

    # 3) Matting head: conv3x3 + BN + ReLU + conv1x1 + bias + sigmoid, fused.
    z = matting_head_sigmoid(y, kparams["w3"], kparams["s3"],
                             kparams["w_head"], kparams["b_head"])    # (b, 8h, 8w)

    # 4) final F.interpolate(scale_factor=2, bilinear).
    out = bilinear_upsample2x_images(z, out_dtype=jnp.float32)        # (b, 16h, 16w)
    return out.reshape(b, 1, 16 * h, 16 * w)


def init_params(key, in_chans=32):
    c1, c2, mid = in_chans // 4, in_chans // 8, 16  # Matting_Head default mid_chans=16
    ks = jax.random.split(key, 11)

    def w(k, shape, s=0.1):
        return s * jax.random.normal(k, shape, jnp.float32)

    def bn(k, c):
        kk = jax.random.split(k, 4)
        gamma = 1.0 + 0.1 * jax.random.normal(kk[0], (c,), jnp.float32)
        beta = 0.1 * jax.random.normal(kk[1], (c,), jnp.float32)
        mean = 0.1 * jax.random.normal(kk[2], (c,), jnp.float32)
        var = jnp.abs(jax.random.normal(kk[3], (c,), jnp.float32)) + 0.5
        return (gamma, beta, mean, var)

    return {
        "ct1": (w(ks[0], (in_chans, c1, 2, 2)), w(ks[1], (c1,))),
        "bn1": bn(ks[2], c1),
        "ct2": (w(ks[3], (c1, c2, 2, 2)), w(ks[4], (c2,))),
        "bn2": bn(ks[5], c2),
        "conv3": (w(ks[6], (mid, c2, 3, 3)), w(ks[7], (mid,))),
        "bn3": bn(ks[8], mid),
        "conv1": (w(ks[9], (1, mid, 1, 1)), w(ks[10], (1,))),
    }


if __name__ == "__main__":
    key = jax.random.PRNGKey(0)
    kx, ki = jax.random.split(key)
    IN_CHANS, B, H, W = 32, 2, 8, 8
    x = jax.random.normal(kx, (B, IN_CHANS, H, W), jnp.float32)
    images = jax.random.normal(ki, (B, 3, 16 * H, 16 * W), jnp.float32)  # unused by forward
    params = init_params(jax.random.PRNGKey(1), IN_CHANS)
    kparams = prepare_params(params)

    fwd = jax.jit(mask_decoder_forward)
    out = jax.block_until_ready(fwd(kparams, x, images))
    # MaskDecoder: x2 (interp) * x2 (convT) * x2 (convT) * x2 (interp) = 16x spatial.
    assert out.shape == (B, 1, 16 * H, 16 * W), out.shape
    assert bool(jnp.all(jnp.isfinite(out)))
    print("KERNEL_OK")
</pallas_src>

<mosaic_0001>
module attributes {stable_mosaic.version = 11 : i64} {
  func.func @_upsample2x_kernel(%arg0: i32, %arg1: memref<8x8x8xf32, #tpu.memory_space<vmem>>, %arg2: memref<128x64xf32, #tpu.memory_space<vmem>>, %arg3: memref<8x16xf32, #tpu.memory_space<vmem>>, %arg4: memref<8x16x16xbf16, #tpu.memory_space<vmem>>) attributes {dimension_semantics = [#tpu.dimension_semantics<parallel>], iteration_bounds = array<i64: 8>, scalar_prefetch = 0 : i64, scratch_operands = 0 : i64, tpu.core_type = #tpu.core_type<tc>, window_params = [{transform_indices = @transform_0, window_bounds = array<i64: 8, 8, 8>}, {pipeline_mode = #tpu.pipeline_mode<synchronous>, transform_indices = @transform_1, window_bounds = array<i64: 128, 64>}, {pipeline_mode = #tpu.pipeline_mode<synchronous>, transform_indices = @transform_2, window_bounds = array<i64: 8, 16>}, {transform_indices = @transform_3, window_bounds = array<i64: 8, 16, 16>}]} {
    %c0 = arith.constant 0 : index
    %c0_0 = arith.constant 0 : index
    %c0_1 = arith.constant 0 : index
    %0 = vector.load %arg1[%c0, %c0_0, %c0_1] : memref<8x8x8xf32, #tpu.memory_space<vmem>>, vector<8x8x8xf32>
    %1 = vector.shape_cast %0 : vector<8x8x8xf32> to vector<64x8xf32>
    %c0_2 = arith.constant 0 : index
    %c0_3 = arith.constant 0 : index
    %2 = vector.load %arg3[%c0_2, %c0_3] : memref<8x16xf32, #tpu.memory_space<vmem>>, vector<8x16xf32>
    %cst = arith.constant dense<0.000000e+00> : vector<64x16xf32>
    %3 = tpu.matmul %1, %2, %cst {dimension_numbers = #tpu.dot_dimension_numbers<[1], [0], [0], [1], [0, 0, 1, 1], [], []>} : vector<64x8xf32>, vector<8x16xf32>, vector<64x16xf32> -> vector<64x16xf32>
    %c0_4 = arith.constant 0 : index
    %c0_5 = arith.constant 0 : index
    %4 = vector.load %arg2[%c0_4, %c0_5] : memref<128x64xf32, #tpu.memory_space<vmem>>, vector<128x64xf32>
    %cst_6 = arith.constant dense<0.000000e+00> : vector<128x16xf32>
    %5 = tpu.matmul %4, %3, %cst_6 {dimension_numbers = #tpu.dot_dimension_numbers<[1], [0], [0], [1], [0, 0, 1, 1], [], []>} : vector<128x64xf32>, vector<64x16xf32>, vector<128x16xf32> -> vector<128x16xf32>
    %6 = vector.shape_cast %5 : vector<128x16xf32> to vector<8x16x16xf32>
    %7 = arith.truncf %6 : vector<8x16x16xf32> to vector<8x16x16xbf16>
    %c0_7 = arith.constant 0 : index
    %c0_8 = arith.constant 0 : index
    %c0_9 = arith.constant 0 : index
    %8 = vector.load %arg4[%c0_7, %c0_8, %c0_9] : memref<8x16x16xbf16, #tpu.memory_space<vmem>>, vector<8x16x16xbf16>
    tpu.vector_store %arg4[%c0_7, %c0_8, %c0_9], %7 {strides = array<i32>} : memref<8x16x16xbf16, #tpu.memory_space<vmem>>, vector<8x16x16xbf16>,
    return
  }
  func.func @transform_0(%arg0: i32) -> (i32, i32, i32) {
    %c0_i32 = arith.constant 0 : i32
    %c0_i32_0 = arith.constant 0 : i32
    %c0_i32_1 = arith.constant 0 : i32
    return %arg0, %c0_i32, %c0_i32_0 : i32, i32, i32
  }
  func.func @transform_1(%arg0: i32) -> (i32, i32) {
    %c0_i32 = arith.constant 0 : i32
    %c0_i32_0 = arith.constant 0 : i32
    %c0_i32_1 = arith.constant 0 : i32
    return %c0_i32, %c0_i32_0 : i32, i32
  }
  func.func @transform_2(%arg0: i32) -> (i32, i32) {
    %c0_i32 = arith.constant 0 : i32
    %c0_i32_0 = arith.constant 0 : i32
    %c0_i32_1 = arith.constant 0 : i32
    return %c0_i32, %c0_i32_0 : i32, i32
  }
  func.func @transform_3(%arg0: i32) -> (i32, i32, i32) {
    %c0_i32 = arith.constant 0 : i32
    %c0_i32_0 = arith.constant 0 : i32
    %c0_i32_1 = arith.constant 0 : i32
    return %arg0, %c0_i32, %c0_i32_0 : i32, i32, i32
  }
}

module attributes {stable_mosaic.version = 11 : i64} {
  func.func @_double_convtranspose_kernel(%arg0: i32, %arg1: memref<256x32xbf16, #tpu.memory_space<vmem>>, %arg2: memref<32x32xbf16, #tpu.memory_space<vmem>>, %arg3: memref<1x32xf32, #tpu.memory_space<vmem>>, %arg4: memref<32x64xbf16, #tpu.memory_space<vmem>>, %arg5: memref<1x64xf32, #tpu.memory_space<vmem>>, %arg6: memref<256x64xbf16, #tpu.memory_space<vmem>>) attributes {dimension_semantics = [#tpu.dimension_semantics<parallel>], iteration_bounds = array<i64: 2>, scalar_prefetch = 0 : i64, scratch_operands = 0 : i64, tpu.core_type = #tpu.core_type<tc>, window_params = [{transform_indices = @transform_0, window_bounds = array<i64: 256, 32>}, {pipeline_mode = #tpu.pipeline_mode<synchronous>, transform_indices = @transform_1, window_bounds = array<i64: 32, 32>}, {pipeline_mode = #tpu.pipeline_mode<synchronous>, transform_indices = @transform_2, window_bounds = array<i64: 1, 32>}, {pipeline_mode = #tpu.pipeline_mode<synchronous>, transform_indices = @transform_3, window_bounds = array<i64: 32, 64>}, {pipeline_mode = #tpu.pipeline_mode<synchronous>, transform_indices = @transform_4, window_bounds = array<i64: 1, 64>}, {transform_indices = @transform_5, window_bounds = array<i64: 256, 64>}]} {
    %c0 = arith.constant 0 : index
    %c0_0 = arith.constant 0 : index
    %0 = vector.load %arg1[%c0, %c0_0] : memref<256x32xbf16, #tpu.memory_space<vmem>>, vector<256x32xbf16>
    %c0_1 = arith.constant 0 : index
    %c0_2 = arith.constant 0 : index
    %1 = vector.load %arg2[%c0_1, %c0_2] : memref<32x32xbf16, #tpu.memory_space<vmem>>, vector<32x32xbf16>
    %cst = arith.constant dense<0.000000e+00> : vector<256x32xf32>
    %2 = tpu.matmul %0, %1, %cst {dimension_numbers = #tpu.dot_dimension_numbers<[1], [0], [0], [1], [0, 0, 1, 1], [], []>} : vector<256x32xbf16>, vector<32x32xbf16>, vector<256x32xf32> -> vector<256x32xf32>
    %c0_3 = arith.constant 0 : index
    %c0_4 = arith.constant 0 : index
    %3 = vector.load %arg3[%c0_3, %c0_4] : memref<1x32xf32, #tpu.memory_space<vmem>>, vector<1x32xf32>
    %4 = vector.broadcast %3 : vector<1x32xf32> to vector<256x32xf32>
    %5 = arith.addf %2, %4 : vector<256x32xf32>
    %cst_5 = arith.constant 0.000000e+00 : f32
    %6 = vector.broadcast %cst_5 : f32 to vector<256x32xf32>
    %7 = arith.maximumf %5, %6 : vector<256x32xf32>
    %8 = arith.truncf %7 : vector<256x32xf32> to vector<256x32xbf16>
    %c0_6 = arith.constant 0 : index
    %c0_7 = arith.constant 0 : index
    %9 = vector.load %arg4[%c0_6, %c0_7] : memref<32x64xbf16, #tpu.memory_space<vmem>>, vector<32x64xbf16>
    %cst_8 = arith.constant dense<0.000000e+00> : vector<256x64xf32>
    %10 = tpu.matmul %8, %9, %cst_8 {dimension_numbers = #tpu.dot_dimension_numbers<[1], [0], [0], [1], [0, 0, 1, 1], [], []>} : vector<256x32xbf16>, vector<32x64xbf16>, vector<256x64xf32> -> vector<256x64xf32>
    %c0_9 = arith.constant 0 : index
    %c0_10 = arith.constant 0 : index
    %11 = vector.load %arg5[%c0_9, %c0_10] : memref<1x64xf32, #tpu.memory_space<vmem>>, vector<1x64xf32>
    %12 = vector.broadcast %11 : vector<1x64xf32> to vector<256x64xf32>
    %13 = arith.addf %10, %12 : vector<256x64xf32>
    %cst_11 = arith.constant 0.000000e+00 : f32
    %14 = vector.broadcast %cst_11 : f32 to vector<256x64xf32>
    %15 = arith.maximumf %13, %14 : vector<256x64xf32>
    %16 = arith.truncf %15 : vector<256x64xf32> to vector<256x64xbf16>
    %c0_12 = arith.constant 0 : index
    %c0_13 = arith.constant 0 : index
    %17 = vector.load %arg6[%c0_12, %c0_13] : memref<256x64xbf16, #tpu.memory_space<vmem>>, vector<256x64xbf16>
    tpu.vector_store %arg6[%c0_12, %c0_13], %16 {strides = array<i32>} : memref<256x64xbf16, #tpu.memory_space<vmem>>, vector<256x64xbf16>,
    return
  }
  func.func @transform_0(%arg0: i32) -> (i32, i32) {
    %c0_i32 = arith.constant 0 : i32
    %c0_i32_0 = arith.constant 0 : i32
    return %arg0, %c0_i32 : i32, i32
  }
  func.func @transform_1(%arg0: i32) -> (i32, i32) {
    %c0_i32 = arith.constant 0 : i32
    %c0_i32_0 = arith.constant 0 : i32
    %c0_i32_1 = arith.constant 0 : i32
    return %c0_i32, %c0_i32_0 : i32, i32
  }
  func.func @transform_2(%arg0: i32) -> (i32, i32) {
    %c0_i32 = arith.constant 0 : i32
    %c0_i32_0 = arith.constant 0 : i32
    %c0_i32_1 = arith.constant 0 : i32
    return %c0_i32, %c0_i32_0 : i32, i32
  }
  func.func @transform_3(%arg0: i32) -> (i32, i32) {
    %c0_i32 = arith.constant 0 : i32
    %c0_i32_0 = arith.constant 0 : i32
    %c0_i32_1 = arith.constant 0 : i32
    return %c0_i32, %c0_i32_0 : i32, i32
  }
  func.func @transform_4(%arg0: i32) -> (i32, i32) {
    %c0_i32 = arith.constant 0 : i32
    %c0_i32_0 = arith.constant 0 : i32
    %c0_i32_1 = arith.constant 0 : i32
    return %c0_i32, %c0_i32_0 : i32, i32
  }
  func.func @transform_5(%arg0: i32) -> (i32, i32) {
    %c0_i32 = arith.constant 0 : i32
    %c0_i32_0 = arith.constant 0 : i32
    return %arg0, %c0_i32 : i32, i32
  }
}

module attributes {stable_mosaic.version = 11 : i64} {
  func.func @_matting_head_kernel(%arg0: i32, %arg1: i32, %arg2: memref<1x66x66x4xbf16, #tpu.memory_space<vmem>>, %arg3: memref<9x4x16xbf16, #tpu.memory_space<vmem>>, %arg4: memref<1x16xf32, #tpu.memory_space<vmem>>, %arg5: memref<1x16xf32, #tpu.memory_space<vmem>>, %arg6: memref<1x1xf32, #tpu.memory_space<vmem>>, %arg7: memref<1x512x1xf32, #tpu.memory_space<vmem>>) attributes {dimension_semantics = [#tpu.dimension_semantics<parallel>, #tpu.dimension_semantics<arbitrary>], iteration_bounds = array<i64: 2, 8>, scalar_prefetch = 0 : i64, scratch_operands = 0 : i64, tpu.core_type = #tpu.core_type<tc>, window_params = [{transform_indices = @transform_0, window_bounds = array<i64: 1, 66, 66, 4>}, {pipeline_mode = #tpu.pipeline_mode<synchronous>, transform_indices = @transform_1, window_bounds = array<i64: 9, 4, 16>}, {pipeline_mode = #tpu.pipeline_mode<synchronous>, transform_indices = @transform_2, window_bounds = array<i64: 1, 16>}, {pipeline_mode = #tpu.pipeline_mode<synchronous>, transform_indices = @transform_3, window_bounds = array<i64: 1, 16>}, {pipeline_mode = #tpu.pipeline_mode<synchronous>, transform_indices = @transform_4, window_bounds = array<i64: 1, 1>}, {transform_indices = @transform_5, window_bounds = array<i64: 1, 512, 1>}]} {
    %c8_i32 = arith.constant 8 : i32
    %0 = arith.muli %arg1, %c8_i32 : i32
    %cst = arith.constant 0.000000e+00 : f32
    %1 = vector.broadcast %cst : f32 to vector<512x16xf32>
    %c0_i32 = arith.constant 0 : i32
    %2 = arith.addi %0, %c0_i32 : i32
    %c0 = arith.constant 0 : index
    %3 = arith.index_cast %2 : i32 to index
    %c0_0 = arith.constant 0 : index
    %c0_1 = arith.constant 0 : index
    %4 = vector.load %arg2[%c0, %3, %c0_0, %c0_1] : memref<1x66x66x4xbf16, #tpu.memory_space<vmem>>, vector<1x8x66x4xbf16>
    %5 = vector.shape_cast %4 : vector<1x8x66x4xbf16> to vector<8x66x4xbf16>
    %6 = vector.extract_strided_slice %5 {offsets = [0, 0, 0], sizes = [8, 64, 4], strides = [1, 1, 1]} : vector<8x66x4xbf16> to vector<8x64x4xbf16>
    %7 = vector.shape_cast %6 : vector<8x64x4xbf16> to vector<512x4xbf16>
    %c0_2 = arith.constant 0 : index
    %c0_3 = arith.constant 0 : index
    %c0_4 = arith.constant 0 : index
    %8 = vector.load %arg3[%c0_2, %c0_3, %c0_4] : memref<9x4x16xbf16, #tpu.memory_space<vmem>>, vector<1x4x16xbf16>
    %9 = vector.shape_cast %8 : vector<1x4x16xbf16> to vector<4x16xbf16>
    %cst_5 = arith.constant dense<0.000000e+00> : vector<512x16xf32>
    %10 = tpu.matmul %7, %9, %cst_5 {dimension_numbers = #tpu.dot_dimension_numbers<[1], [0], [0], [1], [0, 0, 1, 1], [], []>} : vector<512x4xbf16>, vector<4x16xbf16>, vector<512x16xf32> -> vector<512x16xf32>
    %11 = arith.addf %1, %10 : vector<512x16xf32>
    %12 = vector.extract_strided_slice %5 {offsets = [0, 1, 0], sizes = [8, 64, 4], strides = [1, 1, 1]} : vector<8x66x4xbf16> to vector<8x64x4xbf16>
    %13 = vector.shape_cast %12 : vector<8x64x4xbf16> to vector<512x4xbf16>
    %c1 = arith.constant 1 : index
    %c0_6 = arith.constant 0 : index
    %c0_7 = arith.constant 0 : index
    %14 = vector.load %arg3[%c1, %c0_6, %c0_7] : memref<9x4x16xbf16, #tpu.memory_space<vmem>>, vector<1x4x16xbf16>
    %15 = vector.shape_cast %14 : vector<1x4x16xbf16> to vector<4x16xbf16>
    %cst_8 = arith.constant dense<0.000000e+00> : vector<512x16xf32>
    %16 = tpu.matmul %13, %15, %cst_8 {dimension_numbers = #tpu.dot_dimension_numbers<[1], [0], [0], [1], [0, 0, 1, 1], [], []>} : vector<512x4xbf16>, vector<4x16xbf16>, vector<512x16xf32> -> vector<512x16xf32>
    %17 = arith.addf %11, %16 : vector<512x16xf32>
    %18 = vector.extract_strided_slice %5 {offsets = [0, 2, 0], sizes = [8, 64, 4], strides = [1, 1, 1]} : vector<8x66x4xbf16> to vector<8x64x4xbf16>
    %19 = vector.shape_cast %18 : vector<8x64x4xbf16> to vector<512x4xbf16>
    %c2 = arith.constant 2 : index
    %c0_9 = arith.constant 0 : index
    %c0_10 = arith.constant 0 : index
    %20 = vector.load %arg3[%c2, %c0_9, %c0_10] : memref<9x4x16xbf16, #tpu.memory_space<vmem>>, vector<1x4x16xbf16>
    %21 = vector.shape_cast %20 : vector<1x4x16xbf16> to vector<4x16xbf16>
    %cst_11 = arith.constant dense<0.000000e+00> : vector<512x16xf32>
    %22 = tpu.matmul %19, %21, %cst_11 {dimension_numbers = #tpu.dot_dimension_numbers<[1], [0], [0], [1], [0, 0, 1, 1], [], []>} : vector<512x4xbf16>, vector<4x16xbf16>, vector<512x16xf32> -> vector<512x16xf32>
    %23 = arith.addf %17, %22 : vector<512x16xf32>
    %c1_i32 = arith.constant 1 : i32
    %24 = arith.addi %0, %c1_i32 : i32
    %c0_12 = arith.constant 0 : index
    %25 = arith.index_cast %24 : i32 to index
    %c0_13 = arith.constant 0 : index
    %c0_14 = arith.constant 0 : index
    %26 = vector.load %arg2[%c0_12, %25, %c0_13, %c0_14] : memref<1x66x66x4xbf16, #tpu.memory_space<vmem>>, vector<1x8x66x4xbf16>
    %27 = vector.shape_cast %26 : vector<1x8x66x4xbf16> to vector<8x66x4xbf16>
    %28 = vector.extract_strided_slice %27 {offsets = [0, 0, 0], sizes = [8, 64, 4], strides = [1, 1, 1]} : vector<8x66x4xbf16> to vector<8x64x4xbf16>
    %29 = vector.shape_cast %28 : vector<8x64x4xbf16> to vector<512x4xbf16>
    %c3 = arith.constant 3 : index
    %c0_15 = arith.constant 0 : index
    %c0_16 = arith.constant 0 : index
    %30 = vector.load %arg3[%c3, %c0_15, %c0_16] : memref<9x4x16xbf16, #tpu.memory_space<vmem>>, vector<1x4x16xbf16>
    %31 = vector.shape_cast %30 : vector<1x4x16xbf16> to vector<4x16xbf16>
    %cst_17 = arith.constant dense<0.000000e+00> : vector<512x16xf32>
    %32 = tpu.matmul %29, %31, %cst_17 {dimension_numbers = #tpu.dot_dimension_numbers<[1], [0], [0], [1], [0, 0, 1, 1], [], []>} : vector<512x4xbf16>, vector<4x16xbf16>, vector<512x16xf32> -> vector<512x16xf32>
    %33 = arith.addf %23, %32 : vector<512x16xf32>
    %34 = vector.extract_strided_slice %27 {offsets = [0, 1, 0], sizes = [8, 64, 4], strides = [1, 1, 1]} : vector<8x66x4xbf16> to vector<8x64x4xbf16>
    %35 = vector.shape_cast %34 : vector<8x64x4xbf16> to vector<512x4xbf16>
    %c4 = arith.constant 4 : index
    %c0_18 = arith.constant 0 : index
    %c0_19 = arith.constant 0 : index
    %36 = vector.load %arg3[%c4, %c0_18, %c0_19] : memref<9x4x16xbf16, #tpu.memory_space<vmem>>, vector<1x4x16xbf16>
    %37 = vector.shape_cast %36 : vector<1x4x16xbf16> to vector<4x16xbf16>
    %cst_20 = arith.constant dense<0.000000e+00> : vector<512x16xf32>
    %38 = tpu.matmul %35, %37, %cst_20 {dimension_numbers = #tpu.dot_dimension_numbers<[1], [0], [0], [1], [0, 0, 1, 1], [], []>} : vector<512x4xbf16>, vector<4x16xbf16>, vector<512x16xf32> -> vector<512x16xf32>
    %39 = arith.addf %33, %38 : vector<512x16xf32>
    %40 = vector.extract_strided_slice %27 {offsets = [0, 2, 0], sizes = [8, 64, 4], strides = [1, 1, 1]} : vector<8x66x4xbf16> to vector<8x64x4xbf16>
    %41 = vector.shape_cast %40 : vector<8x64x4xbf16> to vector<512x4xbf16>
    %c5 = arith.constant 5 : index
    %c0_21 = arith.constant 0 : index
    %c0_22 = arith.constant 0 : index
    %42 = vector.load %arg3[%c5, %c0_21, %c0_22] : memref<9x4x16xbf16, #tpu.memory_space<vmem>>, vector<1x4x16xbf16>
    %43 = vector.shape_cast %42 : vector<1x4x16xbf16> to vector<4x16xbf16>
    %cst_23 = arith.constant dense<0.000000e+00> : vector<512x16xf32>
    %44 = tpu.matmul %41, %43, %cst_23 {dimension_numbers = #tpu.dot_dimension_numbers<[1], [0], [0], [1], [0, 0, 1, 1], [], []>} : vector<512x4xbf16>, vector<4x16xbf16>, vector<512x16xf32> -> vector<512x16xf32>
    %45 = arith.addf %39, %44 : vector<512x16xf32>
    %c2_i32 = arith.constant 2 : i32
    %46 = arith.addi %0, %c2_i32 : i32
    %c0_24 = arith.constant 0 : index
    %47 = arith.index_cast %46 : i32 to index
    %c0_25 = arith.constant 0 : index
    %c0_26 = arith.constant 0 : index
    %48 = vector.load %arg2[%c0_24, %47, %c0_25, %c0_26] : memref<1x66x66x4xbf16, #tpu.memory_space<vmem>>, vector<1x8x66x4xbf16>
    %49 = vector.shape_cast %48 : vector<1x8x66x4xbf16> to vector<8x66x4xbf16>
    %50 = vector.extract_strided_slice %49 {offsets = [0, 0, 0], sizes = [8, 64, 4], strides = [1, 1, 1]} : vector<8x66x4xbf16> to vector<8x64x4xbf16>
    %51 = vector.shape_cast %50 : vector<8x64x4xbf16> to vector<512x4xbf16>
    %c6 = arith.constant 6 : index
    %c0_27 = arith.constant 0 : index
    %c0_28 = arith.constant 0 : index
    %52 = vector.load %arg3[%c6, %c0_27, %c0_28] : memref<9x4x16xbf16, #tpu.memory_space<vmem>>, vector<1x4x16xbf16>
    %53 = vector.shape_cast %52 : vector<1x4x16xbf16> to vector<4x16xbf16>
    %cst_29 = arith.constant dense<0.000000e+00> : vector<512x16xf32>
    %54 = tpu.matmul %51, %53, %cst_29 {dimension_numbers = #tpu.dot_dimension_numbers<[1], [0], [0], [1], [0, 0, 1, 1], [], []>} : vector<512x4xbf16>, vector<4x16xbf16>, vector<512x16xf32> -> vector<512x16xf32>
    %55 = arith.addf %45, %54 : vector<512x16xf32>
    %56 = vector.extract_strided_slice %49 {offsets = [0, 1, 0], sizes = [8, 64, 4], strides = [1, 1, 1]} : vector<8x66x4xbf16> to vector<8x64x4xbf16>
    %57 = vector.shape_cast %56 : vector<8x64x4xbf16> to vector<512x4xbf16>
    %c7 = arith.constant 7 : index
    %c0_30 = arith.constant 0 : index
    %c0_31 = arith.constant 0 : index
    %58 = vector.load %arg3[%c7, %c0_30, %c0_31] : memref<9x4x16xbf16, #tpu.memory_space<vmem>>, vector<1x4x16xbf16>
    %59 = vector.shape_cast %58 : vector<1x4x16xbf16> to vector<4x16xbf16>
    %cst_32 = arith.constant dense<0.000000e+00> : vector<512x16xf32>
    %60 = tpu.matmul %57, %59, %cst_32 {dimension_numbers = #tpu.dot_dimension_numbers<[1], [0], [0], [1], [0, 0, 1, 1], [], []>} : vector<512x4xbf16>, vector<4x16xbf16>, vector<512x16xf32> -> vector<512x16xf32>
    %61 = arith.addf %55, %60 : vector<512x16xf32>
    %62 = vector.extract_strided_slice %49 {offsets = [0, 2, 0], sizes = [8, 64, 4], strides = [1, 1, 1]} : vector<8x66x4xbf16> to vector<8x64x4xbf16>
    %63 = vector.shape_cast %62 : vector<8x64x4xbf16> to vector<512x4xbf16>
    %c8 = arith.constant 8 : index
    %c0_33 = arith.constant 0 : index
    %c0_34 = arith.constant 0 : index
    %64 = vector.load %arg3[%c8, %c0_33, %c0_34] : memref<9x4x16xbf16, #tpu.memory_space<vmem>>, vector<1x4x16xbf16>
    %65 = vector.shape_cast %64 : vector<1x4x16xbf16> to vector<4x16xbf16>
    %cst_35 = arith.constant dense<0.000000e+00> : vector<512x16xf32>
    %66 = tpu.matmul %63, %65, %cst_35 {dimension_numbers = #tpu.dot_dimension_numbers<[1], [0], [0], [1], [0, 0, 1, 1], [], []>} : vector<512x4xbf16>, vector<4x16xbf16>, vector<512x16xf32> -> vector<512x16xf32>
    %67 = arith.addf %61, %66 : vector<512x16xf32>
    %c0_36 = arith.constant 0 : index
    %c0_37 = arith.constant 0 : index
    %68 = vector.load %arg4[%c0_36, %c0_37] : memref<1x16xf32, #tpu.memory_space<vmem>>, vector<1x16xf32>
    %69 = vector.broadcast %68 : vector<1x16xf32> to vector<512x16xf32>
    %70 = arith.addf %67, %69 : vector<512x16xf32>
    %cst_38 = arith.constant 0.000000e+00 : f32
    %71 = vector.broadcast %cst_38 : f32 to vector<512x16xf32>
    %72 = arith.maximumf %70, %71 : vector<512x16xf32>
    %c0_39 = arith.constant 0 : index
    %c0_40 = arith.constant 0 : index
    %73 = vector.load %arg5[%c0_39, %c0_40] : memref<1x16xf32, #tpu.memory_space<vmem>>, vector<1x16xf32>
    %74 = vector.broadcast %73 : vector<1x16xf32> to vector<512x16xf32>
    %75 = arith.mulf %72, %74 : vector<512x16xf32>
    %cst_41 = arith.constant dense<0.000000e+00> : vector<512xf32>
    %76 = vector.multi_reduction <add>, %75, %cst_41 [1] : vector<512x16xf32> to vector<512xf32>
    %77 = vector.shape_cast %76 : vector<512xf32> to vector<512x1xf32>
    %c0_42 = arith.constant 0 : index
    %c0_43 = arith.constant 0 : index
    %78 = vector.load %arg6[%c0_42, %c0_43] : memref<1x1xf32, #tpu.memory_space<vmem>>, vector<1x1xf32>
    %79 = vector.broadcast %78 : vector<1x1xf32> to vector<512x1xf32>
    %80 = arith.addf %77, %79 : vector<512x1xf32>
    %cst_44 = arith.constant 0.000000e+00 : f32
    %81 = vector.broadcast %cst_44 : f32 to vector<512x1xf32>
    %82 = arith.subf %81, %80 : vector<512x1xf32>
    %83 = math.exp %82 : vector<512x1xf32>
    %cst_45 = arith.constant 1.000000e+00 : f32
    %84 = vector.broadcast %cst_45 : f32 to vector<512x1xf32>
    %85 = arith.addf %84, %83 : vector<512x1xf32>
    %cst_46 = arith.constant 1.000000e+00 : f32
    %86 = vector.broadcast %cst_46 : f32 to vector<512x1xf32>
    %87 = arith.divf %86, %85 : vector<512x1xf32>
    %c0_47 = arith.constant 0 : index
    %c0_48 = arith.constant 0 : index
    %c0_49 = arith.constant 0 : index
    %88 = vector.load %arg7[%c0_47, %c0_48, %c0_49] : memref<1x512x1xf32, #tpu.memory_space<vmem>>, vector<1x512x1xf32>
    %89 = vector.shape_cast %88 : vector<1x512x1xf32> to vector<512x1xf32>
    %90 = vector.shape_cast %87 : vector<512x1xf32> to vector<1x512x1xf32>
    tpu.vector_store %arg7[%c0_47, %c0_48, %c0_49], %90 {strides = array<i32>} : memref<1x512x1xf32, #tpu.memory_space<vmem>>, vector<1x512x1xf32>,
    return
  }
  func.func @transform_0(%arg0: i32, %arg1: i32) -> (i32, i32, i32, i32) {
    %c0_i32 = arith.constant 0 : i32
    %c0_i32_0 = arith.constant 0 : i32
    %c0_i32_1 = arith.constant 0 : i32
    %c0_i32_2 = arith.constant 0 : i32
    return %arg0, %c0_i32, %c0_i32_0, %c0_i32_1 : i32, i32, i32, i32
  }
  func.func @transform_1(%arg0: i32, %arg1: i32) -> (i32, i32, i32) {
    %c0_i32 = arith.constant 0 : i32
    %c0_i32_0 = arith.constant 0 : i32
    %c0_i32_1 = arith.constant 0 : i32
    %c0_i32_2 = arith.constant 0 : i32
    return %c0_i32, %c0_i32_0, %c0_i32_1 : i32, i32, i32
  }
  func.func @transform_2(%arg0: i32, %arg1: i32) -> (i32, i32) {
    %c0_i32 = arith.constant 0 : i32
    %c0_i32_0 = arith.constant 0 : i32
    %c0_i32_1 = arith.constant 0 : i32
    return %c0_i32, %c0_i32_0 : i32, i32
  }
  func.func @transform_3(%arg0: i32, %arg1: i32) -> (i32, i32) {
    %c0_i32 = arith.constant 0 : i32
    %c0_i32_0 = arith.constant 0 : i32
    %c0_i32_1 = arith.constant 0 : i32
    return %c0_i32, %c0_i32_0 : i32, i32
  }
  func.func @transform_4(%arg0: i32, %arg1: i32) -> (i32, i32) {
    %c0_i32 = arith.constant 0 : i32
    %c0_i32_0 = arith.constant 0 : i32
    %c0_i32_1 = arith.constant 0 : i32
    return %c0_i32, %c0_i32_0 : i32, i32
  }
  func.func @transform_5(%arg0: i32, %arg1: i32) -> (i32, i32, i32) {
    %c0_i32 = arith.constant 0 : i32
    %c0_i32_0 = arith.constant 0 : i32
    return %arg0, %arg1, %c0_i32 : i32, i32, i32
  }
}

module attributes {stable_mosaic.version = 11 : i64} {
  func.func @_upsample2x_kernel(%arg0: i32, %arg1: memref<1x64x64xf32, #tpu.memory_space<vmem>>, %arg2: memref<128x64xf32, #tpu.memory_space<vmem>>, %arg3: memref<64x128xf32, #tpu.memory_space<vmem>>, %arg4: memref<1x128x128xf32, #tpu.memory_space<vmem>>) attributes {dimension_semantics = [#tpu.dimension_semantics<parallel>], iteration_bounds = array<i64: 2>, scalar_prefetch = 0 : i64, scratch_operands = 0 : i64, tpu.core_type = #tpu.core_type<tc>, window_params = [{transform_indices = @transform_0, window_bounds = array<i64: 1, 64, 64>}, {pipeline_mode = #tpu.pipeline_mode<synchronous>, transform_indices = @transform_1, window_bounds = array<i64: 128, 64>}, {pipeline_mode = #tpu.pipeline_mode<synchronous>, transform_indices = @transform_2, window_bounds = array<i64: 64, 128>}, {transform_indices = @transform_3, window_bounds = array<i64: 1, 128, 128>}]} {
    %c0 = arith.constant 0 : index
    %c0_0 = arith.constant 0 : index
    %c0_1 = arith.constant 0 : index
    %0 = vector.load %arg1[%c0, %c0_0, %c0_1] : memref<1x64x64xf32, #tpu.memory_space<vmem>>, vector<1x64x64xf32>
    %1 = vector.shape_cast %0 : vector<1x64x64xf32> to vector<64x64xf32>
    %c0_2 = arith.constant 0 : index
    %c0_3 = arith.constant 0 : index
    %2 = vector.load %arg3[%c0_2, %c0_3] : memref<64x128xf32, #tpu.memory_space<vmem>>, vector<64x128xf32>
    %cst = arith.constant dense<0.000000e+00> : vector<64x128xf32>
    %3 = tpu.matmul %1, %2, %cst {dimension_numbers = #tpu.dot_dimension_numbers<[1], [0], [0], [1], [0, 0, 1, 1], [], []>} : vector<64x64xf32>, vector<64x128xf32>, vector<64x128xf32> -> vector<64x128xf32>
    %c0_4 = arith.constant 0 : index
    %c0_5 = arith.constant 0 : index
    %4 = vector.load %arg2[%c0_4, %c0_5] : memref<128x64xf32, #tpu.memory_space<vmem>>, vector<128x64xf32>
    %cst_6 = arith.constant dense<0.000000e+00> : vector<128x128xf32>
    %5 = tpu.matmul %4, %3, %cst_6 {dimension_numbers = #tpu.dot_dimension_numbers<[1], [0], [0], [1], [0, 0, 1, 1], [], []>} : vector<128x64xf32>, vector<64x128xf32>, vector<128x128xf32> -> vector<128x128xf32>
    %6 = vector.shape_cast %5 : vector<128x128xf32> to vector<1x128x128xf32>
    %c0_7 = arith.constant 0 : index
    %c0_8 = arith.constant 0 : index
    %c0_9 = arith.constant 0 : index
    %7 = vector.load %arg4[%c0_7, %c0_8, %c0_9] : memref<1x128x128xf32, #tpu.memory_space<vmem>>, vector<1x128x128xf32>
    tpu.vector_store %arg4[%c0_7, %c0_8, %c0_9], %6 {strides = array<i32>} : memref<1x128x128xf32, #tpu.memory_space<vmem>>, vector<1x128x128xf32>,
    return
  }
  func.func @transform_0(%arg0: i32) -> (i32, i32, i32) {
    %c0_i32 = arith.constant 0 : i32
    %c0_i32_0 = arith.constant 0 : i32
    %c0_i32_1 = arith.constant 0 : i32
    return %arg0, %c0_i32, %c0_i32_0 : i32, i32, i32
  }
  func.func @transform_1(%arg0: i32) -> (i32, i32) {
    %c0_i32 = arith.constant 0 : i32
    %c0_i32_0 = arith.constant 0 : i32
    %c0_i32_1 = arith.constant 0 : i32
    return %c0_i32, %c0_i32_0 : i32, i32
  }
  func.func @transform_2(%arg0: i32) -> (i32, i32) {
    %c0_i32 = arith.constant 0 : i32
    %c0_i32_0 = arith.constant 0 : i32
    %c0_i32_1 = arith.constant 0 : i32
    return %c0_i32, %c0_i32_0 : i32, i32
  }
  func.func @transform_3(%arg0: i32) -> (i32, i32, i32) {
    %c0_i32 = arith.constant 0 : i32
    %c0_i32_0 = arith.constant 0 : i32
    %c0_i32_1 = arith.constant 0 : i32
    return %arg0, %c0_i32, %c0_i32_0 : i32, i32, i32
  }
}

</mosaic_0001>

<llo_original>
// kernel: mask_decoder_forward.4
$region0: #{mask_decoder_forward.4}
  #allocation0 [shape = 'u32[]', space=smem, size = 0x4, offset = 0x4, fixed_abs, tag = 'smem constant byte address 0x4 - core index']
  #allocation1 [shape = 'u32[144,128]{1,0:T(1,128)}', space=vmem, size = 0x12000, scoped, tag = 'internal scratch']
  %s0 = inlined_call_operand.vmem [shape: f32[64,8,8], index: 0, kind: input, shape index: {}]
  %s1 = inlined_call_operand.hbm [shape: f32[128,64], index: 1, kind: input, shape index: {}]
  %s2 = inlined_call_operand.hbm [shape: f32[8,16], index: 2, kind: input, shape index: {}]
  %s3 = inlined_call_operand.vmem [shape: bf16[64,16,16], index: 3, kind: output, shape index: {}]
  %s4 = sld [smem:[#allocation0]]
  $region53: #{mask_decoder_forward.4} parent=0
    _
  %s6 = ssub.s32 1, %s4
  %s7 = scalar_select 0, %s6, %s4
  $region1: #{mask_decoder_forward.4} parent=0
    #allocation2 [shape = 'u8[65536]{0}', space=vmem, size = 0x10000, scoped, tag = 'input window, operand 1, single buffered']
    #allocation3 [shape = 's32[2]{0}', space=sflag, size = 0x8, scoped, tag = 'scoped memory for mask_decoder_forward.4']
    #allocation4 [shape = 'u8[4096]{0}', space=vmem, size = 0x1000, scoped, tag = 'input window, operand 2, single buffered']
    #allocation5 [shape = 's32[1]{0}', space=sflag, size = 0x4, scoped, tag = 'scoped memory for mask_decoder_forward.4']
    %8 = vsyncpa [#allocation3], 0
    %9 = vsyncpa [#allocation5], 0
    loop: start=0, step=1, limit=10
    $region2: #{mask_decoder_forward.4} parent=1 // loop_pre_header
      _
    $region3: #{mask_decoder_forward.4} parent=1 // loop_header
      %s11 = sphi 0, %s15
      %p12 = scmp.ge.s32.totalorder %s11, 10
      %s21 = sphi 0, %s23
      %s24 = sphi 0, %s21
      %s25 = sphi 0, %s24
      %s41 = sphi 0, %s25
      %s45 = sphi 0, %s45
      %s47 = sphi 0, %s45
      %s48 = sphi 0, %s47
      %s62 = sphi 0, %s48
      %s66 = sphi 0, %s66
      %s68 = sphi 0, %s66
      %s69 = sphi 0, %s68
      %s83 = sphi 0, %s69
      %s89 = sphi 0, %s91
      %s92 = sphi 0, %s89
      %s93 = sphi 0, %s92
      %s109 = sphi 0, %s93
    $region4: #{mask_decoder_forward.4} parent=1 // loop_header_branch
      %14 = sbr.rel (%p12) target = $region8
    $region5: #{mask_decoder_forward.4} parent=1 // loop_body
      %s16 = ssub.s32 %s11, 1
      %s17 = ssub.s32 %s11, 2
      %s18 = sadd.s32 %s11, 1
      %s19 = ssub.s32 %s11, %s18
      %p20 = scmp.eq.s32.totalorder %s19, 0
      %s22 = sadd.s32 %s21, 1
      %s23 = scalar_select %p20, %s21, %s22
      %p26 = pneg %p20
      %p27 = scmp.eq.s32.totalorder %s11, 7
      %p28 = por %p26, %p27
      %p29 = scmp.ne.s32.totalorder %s21, %s24
      %p30 = scmp.eq.s32.totalorder %s11, 0
      %p31 = por %p29, %p30
      %p32 = scmp.ne.s32.totalorder %s21, %s24
      %p33 = scmp.eq.s32.totalorder %s16, 7
      %p34 = por %p32, %p33
      %p35 = scmp.ne.s32.totalorder %s24, %s25
      %p36 = scmp.eq.s32.totalorder %s16, 0
      %p37 = por %p35, %p36
      %p38 = scmp.ne.s32.totalorder %s24, %s25
      %p39 = scmp.eq.s32.totalorder %s17, 7
      %p40 = por %p38, %p39
      %p42 = scmp.ne.s32.totalorder %s25, %s41
      %p43 = scmp.eq.s32.totalorder %s17, 0
      %p44 = por %p42, %p43
      %s46 = sadd.s32 %s45, 1
      %p49 = scmp.eq.s32.totalorder %s11, 7
      %p50 = scmp.ne.s32.totalorder %s45, %s47
      %p51 = scmp.eq.s32.totalorder %s11, 0
      %p52 = por %p50, %p51
      %p53 = scmp.ne.s32.totalorder %s45, %s47
      %p54 = scmp.eq.s32.totalorder %s16, 7
      %p55 = por %p53, %p54
      %p56 = scmp.ne.s32.totalorder %s47, %s48
      %p57 = scmp.eq.s32.totalorder %s16, 0
      %p58 = por %p56, %p57
      %p59 = scmp.ne.s32.totalorder %s47, %s48
      %p60 = scmp.eq.s32.totalorder %s17, 7
      %p61 = por %p59, %p60
      %p63 = scmp.ne.s32.totalorder %s48, %s62
      %p64 = scmp.eq.s32.totalorder %s17, 0
      %p65 = por %p63, %p64
      %s67 = sadd.s32 %s66, 1
      %p70 = scmp.eq.s32.totalorder %s11, 7
      %p71 = scmp.ne.s32.totalorder %s66, %s68
      %p72 = scmp.eq.s32.totalorder %s11, 0
      %p73 = por %p71, %p72
      %p74 = scmp.ne.s32.totalorder %s66, %s68
      %p75 = scmp.eq.s32.totalorder %s16, 7
      %p76 = por %p74, %p75
      %p77 = scmp.ne.s32.totalorder %s68, %s69
      %p78 = scmp.eq.s32.totalorder %s16, 0
      %p79 = por %p77, %p78
      %p80 = scmp.ne.s32.totalorder %s68, %s69
      %p81 = scmp.eq.s32.totalorder %s17, 7
      %p82 = por %p80, %p81
      %p84 = scmp.ne.s32.totalorder %s69, %s83
      %p85 = scmp.eq.s32.totalorder %s17, 0
      %p86 = por %p84, %p85
      %s87 = ssub.s32 %s11, %s18
      %p88 = scmp.eq.s32.totalorder %s87, 0
      %s90 = sadd.s32 %s89, 1
      %s91 = scalar_select %p88, %s89, %s90
      %p94 = pneg %p88
      %p95 = scmp.eq.s32.totalorder %s11, 7
      %p96 = por %p94, %p95
      %p97 = scmp.ne.s32.totalorder %s89, %s92
      %p98 = scmp.eq.s32.totalorder %s11, 0
      %p99 = por %p97, %p98
      %p100 = scmp.ne.s32.totalorder %s89, %s92
      %p101 = scmp.eq.s32.totalorder %s16, 7
      %p102 = por %p100, %p101
      %p103 = scmp.ne.s32.totalorder %s92, %s93
      %p104 = scmp.eq.s32.totalorder %s16, 0
      %p105 = por %p103, %p104
      %p106 = scmp.ne.s32.totalorder %s92, %s93
      %p107 = scmp.eq.s32.totalorder %s17, 7
      %p108 = por %p106, %p107
      %p110 = scmp.ne.s32.totalorder %s93, %s109
      %p111 = scmp.eq.s32.totalorder %s17, 0
      %p112 = por %p110, %p111
      %p113 = scmp.le.s32.totalorder 1, %s11
      %p114 = scmp.lt.s32.totalorder %s11, 9
      %p115 = pnand %p113, %p114
      %p116 = pneg %p115
      // Predicated region
      $region9: #{mask_decoder_forward.4} parent=5 // pred_check
        _
      $region10: #{mask_decoder_forward.4} parent=5 // pred_check_branch
        %118 = sbr.rel (%p115) target = $region12
      $region11: #{mask_decoder_forward.4} parent=5 // pred_region
        %s119 = ssub.s32 %s11, 1
        // Predicated region
        $region13: #{mask_decoder_forward.4} parent=11 // pred_check
          %p120 = pneg %p58
        $region14: #{mask_decoder_forward.4} parent=11 // pred_check_branch
          %122 = sbr.rel (%p120) target = $region16
        $region15: #{mask_decoder_forward.4} parent=11 // pred_region
          %s124 = ssub.s32 2048, 2048
          %125 = vsyncadd [#allocation3], %s124
          %s126 = sshll.u32 [#allocation2], 4
          %s127 = int_to_ptr.vmem [resolvable:$true] %s126
          %132 = dma.hbm_to_vmem [thread:$0]  %s1, 2048, %s127, [#allocation3], 128, 128, 8
        $region16: #{mask_decoder_forward.4} parent=11 // pred_fallthru
          _
        // Predicated region
        $region17: #{mask_decoder_forward.4} parent=11 // pred_check
          %p133 = pneg %p79
        $region18: #{mask_decoder_forward.4} parent=11 // pred_check_branch
          %135 = sbr.rel (%p133) target = $region20
        $region19: #{mask_decoder_forward.4} parent=11 // pred_region
          %s137 = ssub.s32 128, 128
          %138 = vsyncadd [#allocation5], %s137
          %s140 = sshll.u32 [#allocation4], 4
          %s141 = int_to_ptr.vmem [resolvable:$true] %s140
          %143 = dma.hbm_to_vmem [thread:$0]  %s2, 128, %s141, [#allocation5]
        $region20: #{mask_decoder_forward.4} parent=11 // pred_fallthru
          _
      $region12: #{mask_decoder_forward.4} parent=5 // pred_fallthru
        _
      %p144 = scmp.lt.s32.totalorder %s11, 8
      // Predicated region
      $region21: #{mask_decoder_forward.4} parent=5 // pred_check
        %p145 = pneg %p144
      $region22: #{mask_decoder_forward.4} parent=5 // pred_check_branch
        %147 = sbr.rel (%p145) target = $region24
      $region23: #{mask_decoder_forward.4} parent=5 // pred_region
        // Predicated region
        $region25: #{mask_decoder_forward.4} parent=23 // pred_check
          %p148 = pneg %p31
        $region26: #{mask_decoder_forward.4} parent=23 // pred_check_branch
          %150 = sbr.rel (%p148) target = $region28
        $region27: #{mask_decoder_forward.4} parent=23 // pred_region
          %s151 = smul.u32 8, %s11
          %p152 = scmp.lt.s32.totalorder %s151, 63
          %s153 = scalar_select %p152, %s151, 63
          %s154 = smul.addr %s153, 8
          %s155 = scalar_lea.vmem %s0, %s154
          %s156 = smul.u32 8, %s11
        $region28: #{mask_decoder_forward.4} parent=23 // pred_fallthru
          _
      $region24: #{mask_decoder_forward.4} parent=5 // pred_fallthru
        _
      %p157 = scmp.le.s32.totalorder 1, %s11
      %p158 = scmp.lt.s32.totalorder %s11, 9
      %p159 = pnand %p157, %p158
      %p160 = pneg %p159
      // Predicated region
      $region29: #{mask_decoder_forward.4} parent=5 // pred_check
        _
      $region30: #{mask_decoder_forward.4} parent=5 // pred_check_branch
        %162 = sbr.rel (%p159) target = $region32
      $region31: #{mask_decoder_forward.4} parent=5 // pred_region
        %s163 = ssub.s32 %s11, 1
        // Predicated region
        $region33: #{mask_decoder_forward.4} parent=31 // pred_check
          %p164 = pneg %p58
        $region34: #{mask_decoder_forward.4} parent=31 // pred_check_branch
          %166 = sbr.rel (%p164) target = $region36
        $region35: #{mask_decoder_forward.4} parent=31 // pred_region
          %167 = dma.done [#allocation3], 2048
        $region36: #{mask_decoder_forward.4} parent=31 // pred_fallthru
          _
        // Predicated region
        $region37: #{mask_decoder_forward.4} parent=31 // pred_check
          %p168 = pneg %p79
        $region38: #{mask_decoder_forward.4} parent=31 // pred_check_branch
          %170 = sbr.rel (%p168) target = $region40
        $region39: #{mask_decoder_forward.4} parent=31 // pred_region
          %171 = dma.done [#allocation5], 128
        $region40: #{mask_decoder_forward.4} parent=31 // pred_fallthru
          _
        %s172 = smul.u32 8, %s16
        %p173 = scmp.lt.s32.totalorder %s172, 63
        %s174 = scalar_select %p173, %s172, 63
        %s175 = smul.addr %s174, 8
        %s176 = scalar_lea.vmem %s0, %s175
        %p177 = pneg %p37
        %p178 = pneg %p34
        %p179 = pneg %p58
        %p180 = pneg %p55
        %p181 = pneg %p79
        %p182 = pneg %p76
        %p183 = pneg %p105
        %p184 = pneg %p102
        %s185 = smul.u32 8, %s16
        %p186 = scmp.lt.s32.totalorder %s185, 63
        %s187 = scalar_select %p186, %s185, 63
        %s188 = smul.addr %s187, 2
        %s189 = smul.addr %s188, 4
        %s190 = scalar_lea.vmem %s3, %s189
        %s191 = smul.u32 8, %s16
        %p192 = scmp.lt.s32.totalorder %s191, 63
        %s193 = scalar_select %p192, %s191, 63
        %s194 = smul.addr %s193, 8
        %s195 = scalar_lea.vmem %s0, %s194
        %s196 = smul.u32 8, %s16
        %s197 = smul.u32 8, %s16
        %p198 = scmp.lt.s32.totalorder %s197, 63
        %s199 = scalar_select %p198, %s197, 63
        %s200 = smul.addr %s199, 2
        %s201 = smul.addr %s200, 4
        %s202 = scalar_lea.vmem %s3, %s201
        %s203 = smul.u32 8, %s16
        %v204 = vld [vmem:[%s195] sm:$0xff]
        %v205 = vld [vmem:[%s195 + $0x8] sm:$0xff]
        %v206 = vld [vmem:[%s195 + $0x10] sm:$0xff]
        %v207 = vld [vmem:[%s195 + $0x18] sm:$0xff]
        %v208 = vld [vmem:[%s195 + $0x20] sm:$0xff]
        %v209 = vld [vmem:[%s195 + $0x28] sm:$0xff]
        %v210 = vld [vmem:[%s195 + $0x30] sm:$0xff]
        %v211 = vld [vmem:[%s195 + $0x38] sm:$0xff]
        %v212 = vld [vmem:[#allocation4] sm:$0xff]
        %vm213 = vcmask 64512
        %v215 = vsel %vm213, %v204, 0
        %v218 = vsel %vm213, %v205, 0
        %v221 = vsel %vm213, %v206, 0
        %v224 = vsel %vm213, %v207, 0
        %v227 = vsel %vm213, %v208, 0
        %v230 = vsel %vm213, %v209, 0
        %v233 = vsel %vm213, %v210, 0
        %v236 = vsel %vm213, %v211, 0
        %238 = vmatprep.subr.mxu0 0.0
        %239 = vmatpush1.msra.mxu0 0.0
        %240 = vmatprep.subr.mxu0 0.0
        %241 = vmatpush1.msra.mxu0 0.0
        %242 = vmatprep.subr.mxu0 0.0
        %243 = vmatpush1.msra.mxu0 0.0
        %244 = vmatprep.subr.mxu0 0.0
        %245 = vmatpush1.msra.mxu0 0.0
        %246 = vmatprep.subr.mxu0 0.0
        %247 = vmatpush1.msra.mxu0 0.0
        %248 = vmatprep.subr.mxu0 0.0
        %249 = vmatpush1.msra.mxu0 0.0
        %250 = vmatprep.subr.mxu0 0.0
        %251 = vmatpush1.msra.mxu0 0.0
        %252 = vmatprep.subr.mxu0 0.0
        %253 = vmatpush1.msra.mxu0 0.0
        %254 = vmatprep.subr.mxu0 0.0
        %255 = vmatpush1.msra.mxu0 0.0
        %256 = vmatprep.subr.mxu0 0.0
        %257 = vmatpush1.msra.mxu0 0.0
        %258 = vmatprep.subr.mxu0 0.0
        %259 = vmatpush1.msra.mxu0 0.0
        %260 = vmatprep.subr.mxu0 0.0
        %261 = vmatpush1.msra.mxu0 0.0
        %262 = vmatprep.subr.mxu0 0.0
        %263 = vmatpush1.msra.mxu0 0.0
        %264 = vmatprep.subr.mxu0 0.0
        %265 = vmatpush1.msra.mxu0 0.0
        %266 = vmatprep.subr.mxu0 0.0
        %267 = vmatpush1.msra.mxu0 0.0
        %268 = vmatprep.subr.mxu0 0.0
        %269 = vmatpush1.msra.mxu0 %v212
        %270 = vmatprep.subr.mxu0 0.0
        %271 = vmatpush2.msra.mxu0 0.0
        %272 = vmatprep.subr.mxu0 0.0
        %273 = vmatpush2.msra.mxu0 0.0
        %274 = vmatprep.subr.mxu0 0.0
        %275 = vmatpush2.msra.mxu0 0.0
        %276 = vmatprep.subr.mxu0 0.0
        %277 = vmatpush2.msra.mxu0 0.0
        %278 = vmatprep.subr.mxu0 0.0
        %279 = vmatpush2.msra.mxu0 0.0
        %280 = vmatprep.subr.mxu0 0.0
        %281 = vmatpush2.msra.mxu0 0.0
        %282 = vmatprep.subr.mxu0 0.0
        %283 = vmatpush2.msra.mxu0 0.0
        %284 = vmatprep.subr.mxu0 0.0
        %285 = vmatpush2.msra.mxu0 0.0
        %286 = vmatprep.subr.mxu0 0.0
        %287 = vmatpush2.msra.mxu0 0.0
        %288 = vmatprep.subr.mxu0 0.0
        %289 = vmatpush2.msra.mxu0 0.0
        %290 = vmatprep.subr.mxu0 0.0
        %291 = vmatpush2.msra.mxu0 0.0
        %292 = vmatprep.subr.mxu0 0.0
        %293 = vmatpush2.msra.mxu0 0.0
        %294 = vmatprep.subr.mxu0 0.0
        %295 = vmatpush2.msra.mxu0 0.0
        %296 = vmatprep.subr.mxu0 0.0
        %297 = vmatpush2.msra.mxu0 0.0
        %298 = vmatprep.subr.mxu0 0.0
        %299 = vmatpush2.msra.mxu0 0.0
        %300 = vmatprep.subr.mxu0 0.0
        %301 = vmatpush2.msra.mxu0 0.0
        %302 = vmatprep.mubr.f32.mxu0 0.0
        %303 = vmatmul.mubr.f32.gmra.mxu0 %v215
        %v304 = vpop.f32.mrf.mxu0
        %v305 = vadd.f32 0.0, %v304
        %v306 = vpop.f32.mrf.mxu0
        %307 = vmatprep.mubr.f32.mxu0 0.0
        %308 = vmatmul.mubr.f32.gmra.mxu0 %v218
        %v309 = vpop.f32.mrf.mxu0
        %v310 = vadd.f32 0.0, %v309
        %v311 = vpop.f32.mrf.mxu0
        %312 = vmatprep.mubr.f32.mxu0 0.0
        %313 = vmatmul.mubr.f32.gmra.mxu0 %v221
        %v314 = vpop.f32.mrf.mxu0
        %v315 = vadd.f32 0.0, %v314
        %v316 = vpop.f32.mrf.mxu0
        %317 = vmatprep.mubr.f32.mxu0 0.0
        %318 = vmatmul.mubr.f32.gmra.mxu0 %v224
        %v319 = vpop.f32.mrf.mxu0
        %v320 = vadd.f32 0.0, %v319
        %v321 = vpop.f32.mrf.mxu0
        %322 = vmatprep.mubr.f32.mxu0 0.0
        %323 = vmatmul.mubr.f32.gmra.mxu0 %v227
        %v324 = vpop.f32.mrf.mxu0
        %v325 = vadd.f32 0.0, %v324
        %v326 = vpop.f32.mrf.mxu0
        %327 = vmatprep.mubr.f32.mxu0 0.0
        %328 = vmatmul.mubr.f32.gmra.mxu0 %v230
        %v329 = vpop.f32.mrf.mxu0
        %v330 = vadd.f32 0.0, %v329
        %v331 = vpop.f32.mrf.mxu0
        %332 = vmatprep.mubr.f32.mxu0 0.0
        %333 = vmatmul.mubr.f32.gmra.mxu0 %v233
        %v334 = vpop.f32.mrf.mxu0
        %v335 = vadd.f32 0.0, %v334
        %v336 = vpop.f32.mrf.mxu0
        %337 = vmatprep.mubr.f32.mxu0 0.0
        %338 = vmatmul.mubr.f32.gmra.mxu0 %v236
        %v339 = vpop.f32.mrf.mxu0
        %v340 = vadd.f32 0.0, %v339
        %v341 = vpop.f32.mrf.mxu0
        %342 = vdwg.mxu0
        %v343 = vld [vmem:[#allocation2] sm:$0xff]
        %v344 = vld [vmem:[#allocation2 + $0x8] sm:$0xff]
        %v345 = vld [vmem:[#allocation2 + $0x10] sm:$0xff]
        %v346 = vld [vmem:[#allocation2 + $0x18] sm:$0xff]
        %v347 = vld [vmem:[#allocation2 + $0x20] sm:$0xff]
        %v348 = vld [vmem:[#allocation2 + $0x28] sm:$0xff]
        %v349 = vld [vmem:[#allocation2 + $0x30] sm:$0xff]
        %v350 = vld [vmem:[#allocation2 + $0x38] sm:$0xff]
        %v351 = vld [vmem:[#allocation2 + $0x40] sm:$0xff]
        %v352 = vld [vmem:[#allocation2 + $0x48] sm:$0xff]
        %v353 = vld [vmem:[#allocation2 + $0x50] sm:$0xff]
        %v354 = vld [vmem:[#allocation2 + $0x58] sm:$0xff]
        %v355 = vld [vmem:[#allocation2 + $0x60] sm:$0xff]
        %v356 = vld [vmem:[#allocation2 + $0x68] sm:$0xff]
        %v357 = vld [vmem:[#allocation2 + $0x70] sm:$0xff]
        %v358 = vld [vmem:[#allocation2 + $0x78] sm:$0xff]
        %vm359 = vcmask 523264
        %v361 = vsel %vm359, %v343, 0
        %v364 = vsel %vm359, %v344, 0
        %v367 = vsel %vm359, %v345, 0
        %v370 = vsel %vm359, %v346, 0
        %v373 = vsel %vm359, %v347, 0
        %v376 = vsel %vm359, %v348, 0
        %v379 = vsel %vm359, %v349, 0
        %v382 = vsel %vm359, %v350, 0
        %v385 = vsel %vm359, %v351, 0
        %v388 = vsel %vm359, %v352, 0
        %v391 = vsel %vm359, %v353, 0
        %v394 = vsel %vm359, %v354, 0
        %v397 = vsel %vm359, %v355, 0
        %v400 = vsel %vm359, %v356, 0
        %v403 = vsel %vm359, %v357, 0
        %v406 = vsel %vm359, %v358, 0
        %408 = vmatprep.subr.mxu0 0.0
        %409 = vmatpush1.msra.mxu0 0.0
        %410 = vmatprep.subr.mxu0 0.0
        %411 = vmatpush1.msra.mxu0 0.0
        %412 = vmatprep.subr.mxu0 0.0
        %413 = vmatpush1.msra.mxu0 0.0
        %414 = vmatprep.subr.mxu0 0.0
        %415 = vmatpush1.msra.mxu0 0.0
        %416 = vmatprep.subr.mxu0 0.0
        %417 = vmatpush1.msra.mxu0 0.0
        %418 = vmatprep.subr.mxu0 0.0
        %419 = vmatpush1.msra.mxu0 0.0
        %420 = vmatprep.subr.mxu0 0.0
        %421 = vmatpush1.msra.mxu0 0.0
        %422 = vmatprep.subr.mxu0 0.0
        %423 = vmatpush1.msra.mxu0 0.0
        %424 = vmatprep.subr.mxu0 0.0
        %425 = vmatpush1.msra.mxu0 %v340
        %426 = vmatprep.subr.mxu0 0.0
        %427 = vmatpush1.msra.mxu0 %v335
        %428 = vmatprep.subr.mxu0 0.0
        %429 = vmatpush1.msra.mxu0 %v330
        %430 = vmatprep.subr.mxu0 0.0
        %431 = vmatpush1.msra.mxu0 %v325
        %432 = vmatprep.subr.mxu0 0.0
        %433 = vmatpush1.msra.mxu0 %v320
        %434 = vmatprep.subr.mxu0 0.0
        %435 = vmatpush1.msra.mxu0 %v315
        %436 = vmatprep.subr.mxu0 0.0
        %437 = vmatpush1.msra.mxu0 %v310
        %438 = vmatprep.subr.mxu0 0.0
        %439 = vmatpush1.msra.mxu0 %v305
        %440 = vmatprep.subr.mxu0 0.0
        %441 = vmatpush2.msra.mxu0 0.0
        %442 = vmatprep.subr.mxu0 0.0
        %443 = vmatpush2.msra.mxu0 0.0
        %444 = vmatprep.subr.mxu0 0.0
        %445 = vmatpush2.msra.mxu0 0.0
        %446 = vmatprep.subr.mxu0 0.0
        %447 = vmatpush2.msra.mxu0 0.0
        %448 = vmatprep.subr.mxu0 0.0
        %449 = vmatpush2.msra.mxu0 0.0
        %450 = vmatprep.subr.mxu0 0.0
        %451 = vmatpush2.msra.mxu0 0.0
        %452 = vmatprep.subr.mxu0 0.0
        %453 = vmatpush2.msra.mxu0 0.0
        %454 = vmatprep.subr.mxu0 0.0
        %455 = vmatpush2.msra.mxu0 0.0
        %456 = vmatprep.subr.mxu0 0.0
        %457 = vmatpush2.msra.mxu0 0.0
        %458 = vmatprep.subr.mxu0 0.0
        %459 = vmatpush2.msra.mxu0 0.0
        %460 = vmatprep.subr.mxu0 0.0
        %461 = vmatpush2.msra.mxu0 0.0
        %462 = vmatprep.subr.mxu0 0.0
        %463 = vmatpush2.msra.mxu0 0.0
        %464 = vmatprep.subr.mxu0 0.0
        %465 = vmatpush2.msra.mxu0 0.0
        %466 = vmatprep.subr.mxu0 0.0
        %467 = vmatpush2.msra.mxu0 0.0
        %468 = vmatprep.subr.mxu0 0.0
        %469 = vmatpush2.msra.mxu0 0.0
        %470 = vmatprep.subr.mxu0 0.0
        %471 = vmatpush2.msra.mxu0 0.0
        %472 = vmatprep.mubr.f32.mxu0 0.0
        %473 = vmatmul.mubr.f32.gmra.mxu0 %v361
        %v474 = vpop.f32.mrf.mxu0
        %v475 = vadd.f32 0.0, %v474
        %v476 = vpop.f32.mrf.mxu0
        %477 = vmatprep.mubr.f32.mxu0 0.0
        %478 = vmatmul.mubr.f32.gmra.mxu0 %v364
        %v479 = vpop.f32.mrf.mxu0
        %v480 = vadd.f32 0.0, %v479
        %v481 = vpop.f32.mrf.mxu0
        %482 = vmatprep.mubr.f32.mxu0 0.0
        %483 = vmatmul.mubr.f32.gmra.mxu0 %v367
        %v484 = vpop.f32.mrf.mxu0
        %v485 = vadd.f32 0.0, %v484
        %v486 = vpop.f32.mrf.mxu0
        %487 = vmatprep.mubr.f32.mxu0 0.0
        %488 = vmatmul.mubr.f32.gmra.mxu0 %v370
        %v489 = vpop.f32.mrf.mxu0
        %v490 = vadd.f32 0.0, %v489
        %v491 = vpop.f32.mrf.mxu0
        %492 = vmatprep.mubr.f32.mxu0 0.0
        %493 = vmatmul.mubr.f32.gmra.mxu0 %v373
        %v494 = vpop.f32.mrf.mxu0
        %v495 = vadd.f32 0.0, %v494
        %v496 = vpop.f32.mrf.mxu0
        %497 = vmatprep.mubr.f32.mxu0 0.0
        %498 = vmatmul.mubr.f32.gmra.mxu0 %v376
        %v499 = vpop.f32.mrf.mxu0
        %v500 = vadd.f32 0.0, %v499
        %v501 = vpop.f32.mrf.mxu0
        %502 = vmatprep.mubr.f32.mxu0 0.0
        %503 = vmatmul.mubr.f32.gmra.mxu0 %v379
        %v504 = vpop.f32.mrf.mxu0
        %v505 = vadd.f32 0.0, %v504
        %v506 = vpop.f32.mrf.mxu0
        %507 = vmatprep.mubr.f32.mxu0 0.0
        %508 = vmatmul.mubr.f32.gmra.mxu0 %v382
        %v509 = vpop.f32.mrf.mxu0
        %v510 = vadd.f32 0.0, %v509
        %v511 = vpop.f32.mrf.mxu0
        %512 = vmatprep.mubr.f32.mxu0 0.0
        %513 = vmatmul.mubr.f32.gmra.mxu0 %v385
        %v514 = vpop.f32.mrf.mxu0
        %v515 = vadd.f32 0.0, %v514
        %v516 = vpop.f32.mrf.mxu0
        %517 = vmatprep.mubr.f32.mxu0 0.0
        %518 = vmatmul.mubr.f32.gmra.mxu0 %v388
        %v519 = vpop.f32.mrf.mxu0
        %v520 = vadd.f32 0.0, %v519
        %v521 = vpop.f32.mrf.mxu0
        %522 = vmatprep.mubr.f32.mxu0 0.0
        %523 = vmatmul.mubr.f32.gmra.mxu0 %v391
        %v524 = vpop.f32.mrf.mxu0
        %v525 = vadd.f32 0.0, %v524
        %v526 = vpop.f32.mrf.mxu0
        %527 = vmatprep.mubr.f32.mxu0 0.0
        %528 = vmatmul.mubr.f32.gmra.mxu0 %v394
        %v529 = vpop.f32.mrf.mxu0
        %v530 = vadd.f32 0.0, %v529
        %v531 = vpop.f32.mrf.mxu0
        %532 = vmatprep.mubr.f32.mxu0 0.0
        %533 = vmatmul.mubr.f32.gmra.mxu0 %v397
        %v534 = vpop.f32.mrf.mxu0
        %v535 = vadd.f32 0.0, %v534
        %v536 = vpop.f32.mrf.mxu0
        %537 = vmatprep.mubr.f32.mxu0 0.0
        %538 = vmatmul.mubr.f32.gmra.mxu0 %v400
        %v539 = vpop.f32.mrf.mxu0
        %v540 = vadd.f32 0.0, %v539
        %v541 = vpop.f32.mrf.mxu0
        %542 = vmatprep.mubr.f32.mxu0 0.0
        %543 = vmatmul.mubr.f32.gmra.mxu0 %v403
        %v544 = vpop.f32.mrf.mxu0
        %v545 = vadd.f32 0.0, %v544
        %v546 = vpop.f32.mrf.mxu0
        %547 = vmatprep.mubr.f32.mxu0 0.0
        %548 = vmatmul.mubr.f32.gmra.mxu0 %v406
        %v549 = vpop.f32.mrf.mxu0
        %v550 = vadd.f32 0.0, %v549
        %v551 = vpop.f32.mrf.mxu0
        %552 = vdwg.mxu0
        %v553 = vpack.c.bf16 %v480, %v475
        %v554 = vpack.c.bf16 %v490, %v485
        %v555 = vpack.c.bf16 %v500, %v495
        %v556 = vpack.c.bf16 %v510, %v505
        %v557 = vpack.c.bf16 %v520, %v515
        %v558 = vpack.c.bf16 %v530, %v525
        %v559 = vpack.c.bf16 %v540, %v535
        %v560 = vpack.c.bf16 %v550, %v545
        %v569 = vunpack.c.l.b16 %v553
        %v570 = vunpack.c.h.b16 %v553
        %v571 = vunpack.c.l.b16 %v554
        %v572 = vunpack.c.h.b16 %v554
        %v573 = vunpack.c.l.b16 %v555
        %v574 = vunpack.c.h.b16 %v555
        %v575 = vunpack.c.l.b16 %v556
        %v576 = vunpack.c.h.b16 %v556
        %v577 = vunpack.c.l.b16 %v557
        %v578 = vunpack.c.h.b16 %v557
        %v579 = vunpack.c.l.b16 %v558
        %v580 = vunpack.c.h.b16 %v558
        %v581 = vunpack.c.l.b16 %v559
        %v582 = vunpack.c.h.b16 %v559
        %v583 = vunpack.c.l.b16 %v560
        %v584 = vunpack.c.h.b16 %v560
        %v585 = vpack.c.b16 %v569, %v569
        %v586 = vpack.c.b16 %v570, %v570
        %v587 = vpack.c.b16 %v571, %v571
        %v588 = vpack.c.b16 %v572, %v572
        %v589 = vpack.c.b16 %v573, %v573
        %v590 = vpack.c.b16 %v574, %v574
        %v591 = vpack.c.b16 %v575, %v575
        %v592 = vpack.c.b16 %v576, %v576
        %v593 = vpack.c.b16 %v577, %v577
        %v594 = vpack.c.b16 %v578, %v578
        %v595 = vpack.c.b16 %v579, %v579
        %v596 = vpack.c.b16 %v580, %v580
        %v597 = vpack.c.b16 %v581, %v581
        %v598 = vpack.c.b16 %v582, %v582
        %v599 = vpack.c.b16 %v583, %v583
        %v600 = vpack.c.b16 %v584, %v584
        %vm617 = vcmask 125952
        %618 = vst.msk [vmem:[%s202] sm:$0xf] %vm617, %v585
        %619 = vst.msk [vmem:[%s202 + $0x4] sm:$0xf] %vm617, %v586
        %620 = vst.msk [vmem:[%s202 + $0x8] sm:$0xf] %vm617, %v587
        %621 = vst.msk [vmem:[%s202 + $0xc] sm:$0xf] %vm617, %v588
        %622 = vst.msk [vmem:[%s202 + $0x10] sm:$0xf] %vm617, %v589
        %623 = vst.msk [vmem:[%s202 + $0x14] sm:$0xf] %vm617, %v590
        %624 = vst.msk [vmem:[%s202 + $0x18] sm:$0xf] %vm617, %v591
        %625 = vst.msk [vmem:[%s202 + $0x1c] sm:$0xf] %vm617, %v592
        %626 = vst.msk [vmem:[%s202 + $0x20] sm:$0xf] %vm617, %v593
        %627 = vst.msk [vmem:[%s202 + $0x24] sm:$0xf] %vm617, %v594
        %628 = vst.msk [vmem:[%s202 + $0x28] sm:$0xf] %vm617, %v595
        %629 = vst.msk [vmem:[%s202 + $0x2c] sm:$0xf] %vm617, %v596
        %630 = vst.msk [vmem:[%s202 + $0x30] sm:$0xf] %vm617, %v597
        %631 = vst.msk [vmem:[%s202 + $0x34] sm:$0xf] %vm617, %v598
        %632 = vst.msk [vmem:[%s202 + $0x38] sm:$0xf] %vm617, %v599
        %633 = vst.msk [vmem:[%s202 + $0x3c] sm:$0xf] %vm617, %v600
        %s634 = smul.u32 8, %s16
        %p635 = scmp.lt.s32.totalorder %s634, 63
        %s636 = scalar_select %p635, %s634, 63
        %s637 = smul.addr %s636, 2
        %s638 = smul.addr %s637, 4
        %s639 = scalar_lea.vmem %s3, %s638
        // Predicated region
        $region41: #{mask_decoder_forward.4} parent=31 // pred_check
          %p640 = pneg %p102
        $region42: #{mask_decoder_forward.4} parent=31 // pred_check_branch
          %642 = sbr.rel (%p640) target = $region44
        $region43: #{mask_decoder_forward.4} parent=31 // pred_region
          %s643 = smul.u32 8, %s16
        $region44: #{mask_decoder_forward.4} parent=31 // pred_fallthru
          _
      $region32: #{mask_decoder_forward.4} parent=5 // pred_fallthru
        _
      %p644 = scmp.le.s32.totalorder 2, %s11
      // Predicated region
      $region45: #{mask_decoder_forward.4} parent=5 // pred_check
        %p645 = pneg %p644
      $region46: #{mask_decoder_forward.4} parent=5 // pred_check_branch
        %647 = sbr.rel (%p645) target = $region48
      $region47: #{mask_decoder_forward.4} parent=5 // pred_region
        %s648 = ssub.s32 %s11, 2
        // Predicated region
        $region49: #{mask_decoder_forward.4} parent=47 // pred_check
          %p649 = pneg %p108
        $region50: #{mask_decoder_forward.4} parent=47 // pred_check_branch
          %651 = sbr.rel (%p649) target = $region52
        $region51: #{mask_decoder_forward.4} parent=47 // pred_region
          %s652 = smul.u32 8, %s17
          %p653 = scmp.lt.s32.totalorder %s652, 63
          %s654 = scalar_select %p653, %s652, 63
          %s655 = smul.addr %s654, 2
          %s656 = smul.addr %s655, 4
          %s657 = scalar_lea.vmem %s3, %s656
        $region52: #{mask_decoder_forward.4} parent=47 // pred_fallthru
          _
      $region48: #{mask_decoder_forward.4} parent=5 // pred_fallthru
        _
    $region6: #{mask_decoder_forward.4} parent=1 // loop_footer
      %s15 = sadd.s32 1, %s11
    $region7: #{mask_decoder_forward.4} parent=1 // loop_footer_branch
      %10 = sbr.rel target = $region3
    $region8: #{mask_decoder_forward.4} parent=1 // loop_exit
      _
    %658 = vsyncpa [#allocation3], 1
    %s659 = scalar_lea.sflag [#allocation3], 1
    %660 = vsyncpa %s659, 1
    %661 = vsyncpa [#allocation5], 1

// kernel: mask_decoder_forward.5
$region0: #{mask_decoder_forward.5}
  #allocation0 [shape = 'u32[]', space=smem, size = 0x4, offset = 0x4, fixed_abs, tag = 'smem constant byte address 0x4 - core index']
  #allocation1 [shape = 'u32[144,128]{1,0:T(1,128)}', space=vmem, size = 0x12000, scoped, tag = 'internal scratch']
  %s0 = inlined_call_operand.vmem [shape: bf16[512,32], index: 0, kind: input, shape index: {}]
  %s1 = inlined_call_operand.hbm [shape: bf16[32,32], index: 1, kind: input, shape index: {}]
  %s2 = inlined_call_operand.hbm [shape: f32[1,32], index: 2, kind: input, shape index: {}]
  %s3 = inlined_call_operand.hbm [shape: bf16[32,64], index: 3, kind: input, shape index: {}]
  %s4 = inlined_call_operand.hbm [shape: f32[1,64], index: 4, kind: input, shape index: {}]
  %s5 = inlined_call_operand.vmem [shape: bf16[512,64], index: 5, kind: output, shape index: {}]
  %s6 = sld [smem:[#allocation0]]
  $region69: #{mask_decoder_forward.5} parent=0
    _
  %s8 = ssub.s32 1, %s6
  %s9 = scalar_select 0, %s8, %s6
  $region1: #{mask_decoder_forward.5} parent=0
    #allocation2 [shape = 'u8[8192]{0}', space=vmem, size = 0x2000, scoped, tag = 'input window, operand 1, single buffered']
    #allocation3 [shape = 's32[2]{0}', space=sflag, size = 0x8, scoped, tag = 'scoped memory for mask_decoder_forward.5']
    #allocation4 [shape = 'u8[512]{0}', space=vmem, size = 0x400, scoped, tag = 'input window, operand 2, single buffered']
    #allocation5 [shape = 's32[1]{0}', space=sflag, size = 0x4, scoped, tag = 'scoped memory for mask_decoder_forward.5']
    #allocation6 [shape = 'u8[8192]{0}', space=vmem, size = 0x2000, scoped, tag = 'input window, operand 3, single buffered']
    #allocation7 [shape = 'u8[512]{0}', space=vmem, size = 0x400, scoped, tag = 'input window, operand 4, single buffered']
    #allocation8 [shape = 's32[1]{0}', space=sflag, size = 0x4, scoped, tag = 'scoped memory for mask_decoder_forward.5']
    %10 = vsyncpa [#allocation3], 0
    %11 = vsyncpa [#allocation5], 0
    %12 = vsyncpa [#allocation8], 0
    loop: start=0, step=1, limit=4
    $region2: #{mask_decoder_forward.5} parent=1 // loop_pre_header
      _
    $region3: #{mask_decoder_forward.5} parent=1 // loop_header
      %s14 = sphi 0, %s18
      %p15 = scmp.ge.s32.totalorder %s14, 4
      %s24 = sphi 0, %s26
      %s27 = sphi 0, %s24
      %s28 = sphi 0, %s27
      %s44 = sphi 0, %s28
      %s48 = sphi 0, %s48
      %s50 = sphi 0, %s48
      %s51 = sphi 0, %s50
      %s65 = sphi 0, %s51
      %s69 = sphi 0, %s69
      %s71 = sphi 0, %s69
      %s72 = sphi 0, %s71
      %s86 = sphi 0, %s72
      %s90 = sphi 0, %s90
      %s92 = sphi 0, %s90
      %s93 = sphi 0, %s92
      %s107 = sphi 0, %s93
      %s111 = sphi 0, %s111
      %s113 = sphi 0, %s111
      %s114 = sphi 0, %s113
      %s128 = sphi 0, %s114
      %s134 = sphi 0, %s136
      %s137 = sphi 0, %s134
      %s138 = sphi 0, %s137
      %s154 = sphi 0, %s138
    $region4: #{mask_decoder_forward.5} parent=1 // loop_header_branch
      %17 = sbr.rel (%p15) target = $region8
    $region5: #{mask_decoder_forward.5} parent=1 // loop_body
      %s19 = ssub.s32 %s14, 1
      %s20 = ssub.s32 %s14, 2
      %s21 = sadd.s32 %s14, 1
      %s22 = ssub.s32 %s14, %s21
      %p23 = scmp.eq.s32.totalorder %s22, 0
      %s25 = sadd.s32 %s24, 1
      %s26 = scalar_select %p23, %s24, %s25
      %p29 = pneg %p23
      %p30 = scmp.eq.s32.totalorder %s14, 1
      %p31 = por %p29, %p30
      %p32 = scmp.ne.s32.totalorder %s24, %s27
      %p33 = scmp.eq.s32.totalorder %s14, 0
      %p34 = por %p32, %p33
      %p35 = scmp.ne.s32.totalorder %s24, %s27
      %p36 = scmp.eq.s32.totalorder %s19, 1
      %p37 = por %p35, %p36
      %p38 = scmp.ne.s32.totalorder %s27, %s28
      %p39 = scmp.eq.s32.totalorder %s19, 0
      %p40 = por %p38, %p39
      %p41 = scmp.ne.s32.totalorder %s27, %s28
      %p42 = scmp.eq.s32.totalorder %s20, 1
      %p43 = por %p41, %p42
      %p45 = scmp.ne.s32.totalorder %s28, %s44
      %p46 = scmp.eq.s32.totalorder %s20, 0
      %p47 = por %p45, %p46
      %s49 = sadd.s32 %s48, 1
      %p52 = scmp.eq.s32.totalorder %s14, 1
      %p53 = scmp.ne.s32.totalorder %s48, %s50
      %p54 = scmp.eq.s32.totalorder %s14, 0
      %p55 = por %p53, %p54
      %p56 = scmp.ne.s32.totalorder %s48, %s50
      %p57 = scmp.eq.s32.totalorder %s19, 1
      %p58 = por %p56, %p57
      %p59 = scmp.ne.s32.totalorder %s50, %s51
      %p60 = scmp.eq.s32.totalorder %s19, 0
      %p61 = por %p59, %p60
      %p62 = scmp.ne.s32.totalorder %s50, %s51
      %p63 = scmp.eq.s32.totalorder %s20, 1
      %p64 = por %p62, %p63
      %p66 = scmp.ne.s32.totalorder %s51, %s65
      %p67 = scmp.eq.s32.totalorder %s20, 0
      %p68 = por %p66, %p67
      %s70 = sadd.s32 %s69, 1
      %p73 = scmp.eq.s32.totalorder %s14, 1
      %p74 = scmp.ne.s32.totalorder %s69, %s71
      %p75 = scmp.eq.s32.totalorder %s14, 0
      %p76 = por %p74, %p75
      %p77 = scmp.ne.s32.totalorder %s69, %s71
      %p78 = scmp.eq.s32.totalorder %s19, 1
      %p79 = por %p77, %p78
      %p80 = scmp.ne.s32.totalorder %s71, %s72
      %p81 = scmp.eq.s32.totalorder %s19, 0
      %p82 = por %p80, %p81
      %p83 = scmp.ne.s32.totalorder %s71, %s72
      %p84 = scmp.eq.s32.totalorder %s20, 1
      %p85 = por %p83, %p84
      %p87 = scmp.ne.s32.totalorder %s72, %s86
      %p88 = scmp.eq.s32.totalorder %s20, 0
      %p89 = por %p87, %p88
      %s91 = sadd.s32 %s90, 1
      %p94 = scmp.eq.s32.totalorder %s14, 1
      %p95 = scmp.ne.s32.totalorder %s90, %s92
      %p96 = scmp.eq.s32.totalorder %s14, 0
      %p97 = por %p95, %p96
      %p98 = scmp.ne.s32.totalorder %s90, %s92
      %p99 = scmp.eq.s32.totalorder %s19, 1
      %p100 = por %p98, %p99
      %p101 = scmp.ne.s32.totalorder %s92, %s93
      %p102 = scmp.eq.s32.totalorder %s19, 0
      %p103 = por %p101, %p102
      %p104 = scmp.ne.s32.totalorder %s92, %s93
      %p105 = scmp.eq.s32.totalorder %s20, 1
      %p106 = por %p104, %p105
      %p108 = scmp.ne.s32.totalorder %s93, %s107
      %p109 = scmp.eq.s32.totalorder %s20, 0
      %p110 = por %p108, %p109
      %s112 = sadd.s32 %s111, 1
      %p115 = scmp.eq.s32.totalorder %s14, 1
      %p116 = scmp.ne.s32.totalorder %s111, %s113
      %p117 = scmp.eq.s32.totalorder %s14, 0
      %p118 = por %p116, %p117
      %p119 = scmp.ne.s32.totalorder %s111, %s113
      %p120 = scmp.eq.s32.totalorder %s19, 1
      %p121 = por %p119, %p120
      %p122 = scmp.ne.s32.totalorder %s113, %s114
      %p123 = scmp.eq.s32.totalorder %s19, 0
      %p124 = por %p122, %p123
      %p125 = scmp.ne.s32.totalorder %s113, %s114
      %p126 = scmp.eq.s32.totalorder %s20, 1
      %p127 = por %p125, %p126
      %p129 = scmp.ne.s32.totalorder %s114, %s128
      %p130 = scmp.eq.s32.totalorder %s20, 0
      %p131 = por %p129, %p130
      %s132 = ssub.s32 %s14, %s21
      %p133 = scmp.eq.s32.totalorder %s132, 0
      %s135 = sadd.s32 %s134, 1
      %s136 = scalar_select %p133, %s134, %s135
      %p139 = pneg %p133
      %p140 = scmp.eq.s32.totalorder %s14, 1
      %p141 = por %p139, %p140
      %p142 = scmp.ne.s32.totalorder %s134, %s137
      %p143 = scmp.eq.s32.totalorder %s14, 0
      %p144 = por %p142, %p143
      %p145 = scmp.ne.s32.totalorder %s134, %s137
      %p146 = scmp.eq.s32.totalorder %s19, 1
      %p147 = por %p145, %p146
      %p148 = scmp.ne.s32.totalorder %s137, %s138
      %p149 = scmp.eq.s32.totalorder %s19, 0
      %p150 = por %p148, %p149
      %p151 = scmp.ne.s32.totalorder %s137, %s138
      %p152 = scmp.eq.s32.totalorder %s20, 1
      %p153 = por %p151, %p152
      %p155 = scmp.ne.s32.totalorder %s138, %s154
      %p156 = scmp.eq.s32.totalorder %s20, 0
      %p157 = por %p155, %p156
      %p158 = scmp.le.s32.totalorder 1, %s14
      %p159 = scmp.lt.s32.totalorder %s14, 3
      %p160 = pnand %p158, %p159
      %p161 = pneg %p160
      // Predicated region
      $region9: #{mask_decoder_forward.5} parent=5 // pred_check
        _
      $region10: #{mask_decoder_forward.5} parent=5 // pred_check_branch
        %163 = sbr.rel (%p160) target = $region12
      $region11: #{mask_decoder_forward.5} parent=5 // pred_region
        %s164 = ssub.s32 %s14, 1
        // Predicated region
        $region13: #{mask_decoder_forward.5} parent=11 // pred_check
          %p165 = pneg %p61
        $region14: #{mask_decoder_forward.5} parent=11 // pred_check_branch
          %167 = sbr.rel (%p165) target = $region16
        $region15: #{mask_decoder_forward.5} parent=11 // pred_region
          %s169 = ssub.s32 256, 256
          %170 = vsyncadd [#allocation3], %s169
          %s171 = sshll.u32 [#allocation2], 4
          %s172 = int_to_ptr.vmem [resolvable:$true] %s171
          %177 = dma.hbm_to_vmem [thread:$0]  %s1, 256, %s172, [#allocation3], 64, 64, 4
        $region16: #{mask_decoder_forward.5} parent=11 // pred_fallthru
          _
        // Predicated region
        $region17: #{mask_decoder_forward.5} parent=11 // pred_check
          %p178 = pneg %p82
        $region18: #{mask_decoder_forward.5} parent=11 // pred_check_branch
          %180 = sbr.rel (%p178) target = $region20
        $region19: #{mask_decoder_forward.5} parent=11 // pred_region
          %s182 = ssub.s32 16, 16
          %183 = vsyncadd [#allocation5], %s182
          %s185 = sshll.u32 [#allocation4], 4
          %s186 = int_to_ptr.vmem [resolvable:$true] %s185
          %188 = dma.hbm_to_vmem [thread:$0]  %s2, 16, %s186, [#allocation5]
        $region20: #{mask_decoder_forward.5} parent=11 // pred_fallthru
          _
        // Predicated region
        $region21: #{mask_decoder_forward.5} parent=11 // pred_check
          %p189 = pneg %p103
        $region22: #{mask_decoder_forward.5} parent=11 // pred_check_branch
          %191 = sbr.rel (%p189) target = $region24
        $region23: #{mask_decoder_forward.5} parent=11 // pred_region
          %s193 = ssub.s32 256, 256
          %194 = vsyncadd [#allocation5], %s193
          %s195 = sshll.u32 [#allocation6], 4
          %s196 = int_to_ptr.vmem [resolvable:$true] %s195
          %201 = dma.hbm_to_vmem [thread:$0]  %s3, 256, %s196, [#allocation5], 64, 64, 4
        $region24: #{mask_decoder_forward.5} parent=11 // pred_fallthru
          _
        // Predicated region
        $region25: #{mask_decoder_forward.5} parent=11 // pred_check
          %p202 = pneg %p124
        $region26: #{mask_decoder_forward.5} parent=11 // pred_check_branch
          %204 = sbr.rel (%p202) target = $region28
        $region27: #{mask_decoder_forward.5} parent=11 // pred_region
          %s206 = ssub.s32 16, 16
          %207 = vsyncadd [#allocation8], %s206
          %s209 = sshll.u32 [#allocation7], 4
          %s210 = int_to_ptr.vmem [resolvable:$true] %s209
          %212 = dma.hbm_to_vmem [thread:$0]  %s4, 16, %s210, [#allocation8]
        $region28: #{mask_decoder_forward.5} parent=11 // pred_fallthru
          _
      $region12: #{mask_decoder_forward.5} parent=5 // pred_fallthru
        _
      %p213 = scmp.lt.s32.totalorder %s14, 2
      // Predicated region
      $region29: #{mask_decoder_forward.5} parent=5 // pred_check
        %p214 = pneg %p213
      $region30: #{mask_decoder_forward.5} parent=5 // pred_check_branch
        %216 = sbr.rel (%p214) target = $region32
      $region31: #{mask_decoder_forward.5} parent=5 // pred_region
        // Predicated region
        $region33: #{mask_decoder_forward.5} parent=31 // pred_check
          %p217 = pneg %p34
        $region34: #{mask_decoder_forward.5} parent=31 // pred_check_branch
          %219 = sbr.rel (%p217) target = $region36
        $region35: #{mask_decoder_forward.5} parent=31 // pred_region
          %s220 = smul.u32 32, %s14
          %p221 = scmp.lt.s32.totalorder %s220, 63
          %s222 = scalar_select %p221, %s220, 63
          %s223 = smul.addr %s222, 4
          %s224 = scalar_lea.vmem %s0, %s223
          %s225 = smul.u32 32, %s14
        $region36: #{mask_decoder_forward.5} parent=31 // pred_fallthru
          _
      $region32: #{mask_decoder_forward.5} parent=5 // pred_fallthru
        _
      %p226 = scmp.le.s32.totalorder 1, %s14
      %p227 = scmp.lt.s32.totalorder %s14, 3
      %p228 = pnand %p226, %p227
      %p229 = pneg %p228
      // Predicated region
      $region37: #{mask_decoder_forward.5} parent=5 // pred_check
        _
      $region38: #{mask_decoder_forward.5} parent=5 // pred_check_branch
        %231 = sbr.rel (%p228) target = $region40
      $region39: #{mask_decoder_forward.5} parent=5 // pred_region
        %s232 = ssub.s32 %s14, 1
        // Predicated region
        $region41: #{mask_decoder_forward.5} parent=39 // pred_check
          %p233 = pneg %p61
        $region42: #{mask_decoder_forward.5} parent=39 // pred_check_branch
          %235 = sbr.rel (%p233) target = $region44
        $region43: #{mask_decoder_forward.5} parent=39 // pred_region
          %236 = dma.done [#allocation3], 256
        $region44: #{mask_decoder_forward.5} parent=39 // pred_fallthru
          _
        // Predicated region
        $region45: #{mask_decoder_forward.5} parent=39 // pred_check
          %p237 = pneg %p82
        $region46: #{mask_decoder_forward.5} parent=39 // pred_check_branch
          %239 = sbr.rel (%p237) target = $region48
        $region47: #{mask_decoder_forward.5} parent=39 // pred_region
          %240 = dma.done [#allocation5], 16
        $region48: #{mask_decoder_forward.5} parent=39 // pred_fallthru
          _
        // Predicated region
        $region49: #{mask_decoder_forward.5} parent=39 // pred_check
          %p241 = pneg %p103
        $region50: #{mask_decoder_forward.5} parent=39 // pred_check_branch
          %243 = sbr.rel (%p241) target = $region52
        $region51: #{mask_decoder_forward.5} parent=39 // pred_region
          %244 = dma.done [#allocation5], 256
        $region52: #{mask_decoder_forward.5} parent=39 // pred_fallthru
          _
        // Predicated region
        $region53: #{mask_decoder_forward.5} parent=39 // pred_check
          %p245 = pneg %p124
        $region54: #{mask_decoder_forward.5} parent=39 // pred_check_branch
          %247 = sbr.rel (%p245) target = $region56
        $region55: #{mask_decoder_forward.5} parent=39 // pred_region
          %248 = dma.done [#allocation8], 16
        $region56: #{mask_decoder_forward.5} parent=39 // pred_fallthru
          _
        %s249 = smul.u32 32, %s19
        %p250 = scmp.lt.s32.totalorder %s249, 63
        %s251 = scalar_select %p250, %s249, 63
        %s252 = smul.addr %s251, 4
        %s253 = scalar_lea.vmem %s0, %s252
        %p254 = pneg %p40
        %p255 = pneg %p37
        %p256 = pneg %p61
        %p257 = pneg %p58
        %p258 = pneg %p82
        %p259 = pneg %p79
        %p260 = pneg %p103
        %p261 = pneg %p100
        %p262 = pneg %p124
        %p263 = pneg %p121
        %p264 = pneg %p150
        %p265 = pneg %p147
        %s266 = smul.u32 32, %s19
        %p267 = scmp.lt.s32.totalorder %s266, 63
        %s268 = scalar_select %p267, %s266, 63
        %s269 = smul.addr %s268, 4
        %s270 = scalar_lea.vmem %s5, %s269
        %s271 = smul.u32 32, %s19
        %p272 = scmp.lt.s32.totalorder %s271, 63
        %s273 = scalar_select %p272, %s271, 63
        %s274 = smul.addr %s273, 4
        %s275 = scalar_lea.vmem %s0, %s274
        %s276 = smul.u32 32, %s19
        %s277 = smul.u32 32, %s19
        %p278 = scmp.lt.s32.totalorder %s277, 63
        %s279 = scalar_select %p278, %s277, 63
        %s280 = smul.addr %s279, 4
        %s281 = scalar_lea.vmem %s5, %s280
        %s282 = smul.u32 32, %s19
        %v284 = vld [vmem:[%s275] sm:$0xf]
        %v285 = vld [vmem:[%s275 + $0x4] sm:$0xf]
        %v286 = vld [vmem:[%s275 + $0x8] sm:$0xf]
        %v287 = vld [vmem:[%s275 + $0xc] sm:$0xf]
        %v288 = vld [vmem:[%s275 + $0x10] sm:$0xf]
        %v289 = vld [vmem:[%s275 + $0x14] sm:$0xf]
        %v290 = vld [vmem:[%s275 + $0x18] sm:$0xf]
        %v291 = vld [vmem:[%s275 + $0x1c] sm:$0xf]
        %v292 = vld [vmem:[%s275 + $0x20] sm:$0xf]
        %v293 = vld [vmem:[%s275 + $0x24] sm:$0xf]
        %v294 = vld [vmem:[%s275 + $0x28] sm:$0xf]
        %v295 = vld [vmem:[%s275 + $0x2c] sm:$0xf]
        %v296 = vld [vmem:[%s275 + $0x30] sm:$0xf]
        %v297 = vld [vmem:[%s275 + $0x34] sm:$0xf]
        %v298 = vld [vmem:[%s275 + $0x38] sm:$0xf]
        %v299 = vld [vmem:[%s275 + $0x3c] sm:$0xf]
        %v300 = vld [vmem:[%s275 + $0x40] sm:$0xf]
        %v301 = vld [vmem:[%s275 + $0x44] sm:$0xf]
        %v302 = vld [vmem:[%s275 + $0x48] sm:$0xf]
        %v303 = vld [vmem:[%s275 + $0x4c] sm:$0xf]
        %v304 = vld [vmem:[%s275 + $0x50] sm:$0xf]
        %v305 = vld [vmem:[%s275 + $0x54] sm:$0xf]
        %v306 = vld [vmem:[%s275 + $0x58] sm:$0xf]
        %v307 = vld [vmem:[%s275 + $0x5c] sm:$0xf]
        %v308 = vld [vmem:[%s275 + $0x60] sm:$0xf]
        %v309 = vld [vmem:[%s275 + $0x64] sm:$0xf]
        %v310 = vld [vmem:[%s275 + $0x68] sm:$0xf]
        %v311 = vld [vmem:[%s275 + $0x6c] sm:$0xf]
        %v312 = vld [vmem:[%s275 + $0x70] sm:$0xf]
        %v313 = vld [vmem:[%s275 + $0x74] sm:$0xf]
        %v314 = vld [vmem:[%s275 + $0x78] sm:$0xf]
        %v315 = vld [vmem:[%s275 + $0x7c] sm:$0xf]
        %v316 = vld [vmem:[#allocation2] sm:$0xf]
        %v317 = vld [vmem:[#allocation2 + $0x4] sm:$0xf]
        %v318 = vld [vmem:[#allocation2 + $0x8] sm:$0xf]
        %v319 = vld [vmem:[#allocation2 + $0xc] sm:$0xf]
        %v320 = vld [vmem:[#allocation4] sm:$0x1]
        %v322 = vlaneseq
        %v323 = vshrl.u32 %v322, 7
        %v324 = vsub.s32 0, %v323
        %v325 = vrot.slane %v320, %v324
        %v359 = vunpack.c.l.b16 %v284
        %v360 = vunpack.c.l.b16 %v285
        %v361 = vunpack.c.l.b16 %v286
        %v362 = vunpack.c.l.b16 %v287
        %v363 = vunpack.c.l.b16 %v288
        %v364 = vunpack.c.l.b16 %v289
        %v365 = vunpack.c.l.b16 %v290
        %v366 = vunpack.c.l.b16 %v291
        %v367 = vunpack.c.l.b16 %v292
        %v368 = vunpack.c.l.b16 %v293
        %v369 = vunpack.c.l.b16 %v294
        %v370 = vunpack.c.l.b16 %v295
        %v371 = vunpack.c.l.b16 %v296
        %v372 = vunpack.c.l.b16 %v297
        %v373 = vunpack.c.l.b16 %v298
        %v374 = vunpack.c.l.b16 %v299
        %v375 = vunpack.c.l.b16 %v300
        %v376 = vunpack.c.l.b16 %v301
        %v377 = vunpack.c.l.b16 %v302
        %v378 = vunpack.c.l.b16 %v303
        %v379 = vunpack.c.l.b16 %v304
        %v380 = vunpack.c.l.b16 %v305
        %v381 = vunpack.c.l.b16 %v306
        %v382 = vunpack.c.l.b16 %v307
        %v383 = vunpack.c.l.b16 %v308
        %v384 = vunpack.c.l.b16 %v309
        %v385 = vunpack.c.l.b16 %v310
        %v386 = vunpack.c.l.b16 %v311
        %v387 = vunpack.c.l.b16 %v312
        %v388 = vunpack.c.l.b16 %v313
        %v389 = vunpack.c.l.b16 %v314
        %v390 = vunpack.c.l.b16 %v315
        %v391 = vpack.c.b16 %v360, %v359
        %v392 = vpack.c.b16 %v362, %v361
        %v393 = vpack.c.b16 %v364, %v363
        %v394 = vpack.c.b16 %v366, %v365
        %v395 = vpack.c.b16 %v368, %v367
        %v396 = vpack.c.b16 %v370, %v369
        %v397 = vpack.c.b16 %v372, %v371
        %v398 = vpack.c.b16 %v374, %v373
        %v399 = vpack.c.b16 %v376, %v375
        %v400 = vpack.c.b16 %v378, %v377
        %v401 = vpack.c.b16 %v380, %v379
        %v402 = vpack.c.b16 %v382, %v381
        %v403 = vpack.c.b16 %v384, %v383
        %v404 = vpack.c.b16 %v386, %v385
        %v405 = vpack.c.b16 %v388, %v387
        %v406 = vpack.c.b16 %v390, %v389
        %v411 = vunpack.c.l.b16 %v316
        %v412 = vunpack.c.l.b16 %v317
        %v413 = vunpack.c.l.b16 %v318
        %v414 = vunpack.c.l.b16 %v319
        %v415 = vpack.c.b16 %v412, %v411
        %v416 = vpack.c.b16 %v414, %v413
        %vm419 = vcmask 261120
        %v421 = vsel %vm419, %v391, 0
        %v424 = vsel %vm419, %v392, 0
        %v427 = vsel %vm419, %v393, 0
        %v430 = vsel %vm419, %v394, 0
        %v433 = vsel %vm419, %v395, 0
        %v436 = vsel %vm419, %v396, 0
        %v439 = vsel %vm419, %v397, 0
        %v442 = vsel %vm419, %v398, 0
        %v445 = vsel %vm419, %v399, 0
        %v448 = vsel %vm419, %v400, 0
        %v451 = vsel %vm419, %v401, 0
        %v454 = vsel %vm419, %v402, 0
        %v457 = vsel %vm419, %v403, 0
        %v460 = vsel %vm419, %v404, 0
        %v463 = vsel %vm419, %v405, 0
        %v466 = vsel %vm419, %v406, 0
        %468 = vmatprep.subr.bf16.mxu0 0
        %469 = vmatpush1.bf16.msra.mxu0 0
        %470 = vmatprep.subr.bf16.mxu0 0
        %471 = vmatpush1.bf16.msra.mxu0 0
        %472 = vmatprep.subr.bf16.mxu0 0
        %473 = vmatpush1.bf16.msra.mxu0 0
        %474 = vmatprep.subr.bf16.mxu0 0
        %475 = vmatpush1.bf16.msra.mxu0 0
        %476 = vmatprep.subr.bf16.mxu0 0
        %477 = vmatpush1.bf16.msra.mxu0 0
        %478 = vmatprep.subr.bf16.mxu0 0
        %479 = vmatpush1.bf16.msra.mxu0 0
        %480 = vmatprep.subr.bf16.mxu0 0
        %481 = vmatpush1.bf16.msra.mxu0 %v416
        %482 = vmatprep.subr.bf16.mxu0 0
        %483 = vmatpush1.bf16.msra.mxu0 %v415
        %484 = vmatprep.subr.bf16.mxu0 0
        %485 = vmatpush2.bf16.msra.mxu0 0
        %486 = vmatprep.subr.bf16.mxu0 0
        %487 = vmatpush2.bf16.msra.mxu0 0
        %488 = vmatprep.subr.bf16.mxu0 0
        %489 = vmatpush2.bf16.msra.mxu0 0
        %490 = vmatprep.subr.bf16.mxu0 0
        %491 = vmatpush2.bf16.msra.mxu0 0
        %492 = vmatprep.subr.bf16.mxu0 0
        %493 = vmatpush2.bf16.msra.mxu0 0
        %494 = vmatprep.subr.bf16.mxu0 0
        %495 = vmatpush2.bf16.msra.mxu0 0
        %496 = vmatprep.subr.bf16.mxu0 0
        %497 = vmatpush2.bf16.msra.mxu0 0
        %498 = vmatprep.subr.bf16.mxu0 0
        %499 = vmatpush2.bf16.msra.mxu0 0
        %500 = vmatprep.mubr.bf16.mxu0 0
        %501 = vmatmul.mubr.bf16.gmra.mxu0 %v421
        %v502 = vpop.f32.mrf.mxu0
        %v503 = vadd.f32 %v325, %v502
        %v504 = vpop.f32.mrf.mxu0
        %v505 = vpop.f32.mrf.mxu0
        %v506 = vadd.f32 %v325, %v505
        %v507 = vpop.f32.mrf.mxu0
        %508 = vmatprep.mubr.bf16.mxu0 0
        %509 = vmatmul.mubr.bf16.gmra.mxu0 %v424
        %v510 = vpop.f32.mrf.mxu0
        %v511 = vadd.f32 %v325, %v510
        %v512 = vpop.f32.mrf.mxu0
        %v513 = vpop.f32.mrf.mxu0
        %v514 = vadd.f32 %v325, %v513
        %v515 = vpop.f32.mrf.mxu0
        %516 = vmatprep.mubr.bf16.mxu0 0
        %517 = vmatmul.mubr.bf16.gmra.mxu0 %v427
        %v518 = vpop.f32.mrf.mxu0
        %v519 = vadd.f32 %v325, %v518
        %v520 = vpop.f32.mrf.mxu0
        %v521 = vpop.f32.mrf.mxu0
        %v522 = vadd.f32 %v325, %v521
        %v523 = vpop.f32.mrf.mxu0
        %524 = vmatprep.mubr.bf16.mxu0 0
        %525 = vmatmul.mubr.bf16.gmra.mxu0 %v430
        %v526 = vpop.f32.mrf.mxu0
        %v527 = vadd.f32 %v325, %v526
        %v528 = vpop.f32.mrf.mxu0
        %v529 = vpop.f32.mrf.mxu0
        %v530 = vadd.f32 %v325, %v529
        %v531 = vpop.f32.mrf.mxu0
        %532 = vmatprep.mubr.bf16.mxu0 0
        %533 = vmatmul.mubr.bf16.gmra.mxu0 %v433
        %v534 = vpop.f32.mrf.mxu0
        %v535 = vadd.f32 %v325, %v534
        %v536 = vpop.f32.mrf.mxu0
        %v537 = vpop.f32.mrf.mxu0
        %v538 = vadd.f32 %v325, %v537
        %v539 = vpop.f32.mrf.mxu0
        %540 = vmatprep.mubr.bf16.mxu0 0
        %541 = vmatmul.mubr.bf16.gmra.mxu0 %v436
        %v542 = vpop.f32.mrf.mxu0
        %v543 = vadd.f32 %v325, %v542
        %v544 = vpop.f32.mrf.mxu0
        %v545 = vpop.f32.mrf.mxu0
        %v546 = vadd.f32 %v325, %v545
        %v547 = vpop.f32.mrf.mxu0
        %548 = vmatprep.mubr.bf16.mxu0 0
        %549 = vmatmul.mubr.bf16.gmra.mxu0 %v439
        %v550 = vpop.f32.mrf.mxu0
        %v551 = vadd.f32 %v325, %v550
        %v552 = vpop.f32.mrf.mxu0
        %v553 = vpop.f32.mrf.mxu0
        %v554 = vadd.f32 %v325, %v553
        %v555 = vpop.f32.mrf.mxu0
        %556 = vmatprep.mubr.bf16.mxu0 0
        %557 = vmatmul.mubr.bf16.gmra.mxu0 %v442
        %v558 = vpop.f32.mrf.mxu0
        %v559 = vadd.f32 %v325, %v558
        %v560 = vpop.f32.mrf.mxu0
        %v561 = vpop.f32.mrf.mxu0
        %v562 = vadd.f32 %v325, %v561
        %v563 = vpop.f32.mrf.mxu0
        %564 = vmatprep.mubr.bf16.mxu0 0
        %565 = vmatmul.mubr.bf16.gmra.mxu0 %v445
        %v566 = vpop.f32.mrf.mxu0
        %v567 = vadd.f32 %v325, %v566
        %v568 = vpop.f32.mrf.mxu0
        %v569 = vpop.f32.mrf.mxu0
        %v570 = vadd.f32 %v325, %v569
        %v571 = vpop.f32.mrf.mxu0
        %572 = vmatprep.mubr.bf16.mxu0 0
        %573 = vmatmul.mubr.bf16.gmra.mxu0 %v448
        %v574 = vpop.f32.mrf.mxu0
        %v575 = vadd.f32 %v325, %v574
        %v576 = vpop.f32.mrf.mxu0
        %v577 = vpop.f32.mrf.mxu0
        %v578 = vadd.f32 %v325, %v577
        %v579 = vpop.f32.mrf.mxu0
        %580 = vmatprep.mubr.bf16.mxu0 0
        %581 = vmatmul.mubr.bf16.gmra.mxu0 %v451
        %v582 = vpop.f32.mrf.mxu0
        %v583 = vadd.f32 %v325, %v582
        %v584 = vpop.f32.mrf.mxu0
        %v585 = vpop.f32.mrf.mxu0
        %v586 = vadd.f32 %v325, %v585
        %v587 = vpop.f32.mrf.mxu0
        %588 = vmatprep.mubr.bf16.mxu0 0
        %589 = vmatmul.mubr.bf16.gmra.mxu0 %v454
        %v590 = vpop.f32.mrf.mxu0
        %v591 = vadd.f32 %v325, %v590
        %v592 = vpop.f32.mrf.mxu0
        %v593 = vpop.f32.mrf.mxu0
        %v594 = vadd.f32 %v325, %v593
        %v595 = vpop.f32.mrf.mxu0
        %596 = vmatprep.mubr.bf16.mxu0 0
        %597 = vmatmul.mubr.bf16.gmra.mxu0 %v457
        %v598 = vpop.f32.mrf.mxu0
        %v599 = vadd.f32 %v325, %v598
        %v600 = vpop.f32.mrf.mxu0
        %v601 = vpop.f32.mrf.mxu0
        %v602 = vadd.f32 %v325, %v601
        %v603 = vpop.f32.mrf.mxu0
        %604 = vmatprep.mubr.bf16.mxu0 0
        %605 = vmatmul.mubr.bf16.gmra.mxu0 %v460
        %v606 = vpop.f32.mrf.mxu0
        %v607 = vadd.f32 %v325, %v606
        %v608 = vpop.f32.mrf.mxu0
        %v609 = vpop.f32.mrf.mxu0
        %v610 = vadd.f32 %v325, %v609
        %v611 = vpop.f32.mrf.mxu0
        %612 = vmatprep.mubr.bf16.mxu0 0
        %613 = vmatmul.mubr.bf16.gmra.mxu0 %v463
        %v614 = vpop.f32.mrf.mxu0
        %v615 = vadd.f32 %v325, %v614
        %v616 = vpop.f32.mrf.mxu0
        %v617 = vpop.f32.mrf.mxu0
        %v618 = vadd.f32 %v325, %v617
        %v619 = vpop.f32.mrf.mxu0
        %620 = vmatprep.mubr.bf16.mxu0 0
        %621 = vmatmul.mubr.bf16.gmra.mxu0 %v466
        %v622 = vpop.f32.mrf.mxu0
        %v623 = vadd.f32 %v325, %v622
        %v624 = vpop.f32.mrf.mxu0
        %v625 = vpop.f32.mrf.mxu0
        %v626 = vadd.f32 %v325, %v625
        %v627 = vpop.f32.mrf.mxu0
        %628 = vdwg.mxu0
        %v629 = vmax.f32 %v503, 0.0
        %v630 = vmax.f32 %v506, 0.0
        %v631 = vmax.f32 %v511, 0.0
        %v632 = vmax.f32 %v514, 0.0
        %v633 = vmax.f32 %v519, 0.0
        %v634 = vmax.f32 %v522, 0.0
        %v635 = vmax.f32 %v527, 0.0
        %v636 = vmax.f32 %v530, 0.0
        %v637 = vmax.f32 %v535, 0.0
        %v638 = vmax.f32 %v538, 0.0
        %v639 = vmax.f32 %v543, 0.0
        %v640 = vmax.f32 %v546, 0.0
        %v641 = vmax.f32 %v551, 0.0
        %v642 = vmax.f32 %v554, 0.0
        %v643 = vmax.f32 %v559, 0.0
        %v644 = vmax.f32 %v562, 0.0
        %v645 = vmax.f32 %v567, 0.0
        %v646 = vmax.f32 %v570, 0.0
        %v647 = vmax.f32 %v575, 0.0
        %v648 = vmax.f32 %v578, 0.0
        %v649 = vmax.f32 %v583, 0.0
        %v650 = vmax.f32 %v586, 0.0
        %v651 = vmax.f32 %v591, 0.0
        %v652 = vmax.f32 %v594, 0.0
        %v653 = vmax.f32 %v599, 0.0
        %v654 = vmax.f32 %v602, 0.0
        %v655 = vmax.f32 %v607, 0.0
        %v656 = vmax.f32 %v610, 0.0
        %v657 = vmax.f32 %v615, 0.0
        %v658 = vmax.f32 %v618, 0.0
        %v659 = vmax.f32 %v623, 0.0
        %v660 = vmax.f32 %v626, 0.0
        %v661 = vpack.c.bf16 %v630, %v629
        %v662 = vpack.c.bf16 %v632, %v631
        %v663 = vpack.c.bf16 %v634, %v633
        %v664 = vpack.c.bf16 %v636, %v635
        %v665 = vpack.c.bf16 %v638, %v637
        %v666 = vpack.c.bf16 %v640, %v639
        %v667 = vpack.c.bf16 %v642, %v641
        %v668 = vpack.c.bf16 %v644, %v643
        %v669 = vpack.c.bf16 %v646, %v645
        %v670 = vpack.c.bf16 %v648, %v647
        %v671 = vpack.c.bf16 %v650, %v649
        %v672 = vpack.c.bf16 %v652, %v651
        %v673 = vpack.c.bf16 %v654, %v653
        %v674 = vpack.c.bf16 %v656, %v655
        %v675 = vpack.c.bf16 %v658, %v657
        %v676 = vpack.c.bf16 %v660, %v659
        %v677 = vld [vmem:[#allocation6] sm:$0xf]
        %v678 = vld [vmem:[#allocation6 + $0x4] sm:$0xf]
        %v679 = vld [vmem:[#allocation6 + $0x8] sm:$0xf]
        %v680 = vld [vmem:[#allocation6 + $0xc] sm:$0xf]
        %v681 = vld [vmem:[#allocation7] sm:$0x1]
        %v683 = vlaneseq
        %v684 = vshrl.u32 %v683, 7
        %v685 = vsub.s32 0, %v684
        %v686 = vrot.slane %v681, %v685
        %v692 = vunpack.c.l.b16 %v677
        %v693 = vunpack.c.l.b16 %v678
        %v694 = vunpack.c.l.b16 %v679
        %v695 = vunpack.c.l.b16 %v680
        %v696 = vpack.c.b16 %v693, %v692
        %v697 = vpack.c.b16 %v695, %v694
        %v701 = vsel %vm419, %v661, 0
        %v704 = vsel %vm419, %v662, 0
        %v707 = vsel %vm419, %v663, 0
        %v710 = vsel %vm419, %v664, 0
        %v713 = vsel %vm419, %v665, 0
        %v716 = vsel %vm419, %v666, 0
        %v719 = vsel %vm419, %v667, 0
        %v722 = vsel %vm419, %v668, 0
        %v725 = vsel %vm419, %v669, 0
        %v728 = vsel %vm419, %v670, 0
        %v731 = vsel %vm419, %v671, 0
        %v734 = vsel %vm419, %v672, 0
        %v737 = vsel %vm419, %v673, 0
        %v740 = vsel %vm419, %v674, 0
        %v743 = vsel %vm419, %v675, 0
        %v746 = vsel %vm419, %v676, 0
        %748 = vmatprep.subr.bf16.mxu0 0
        %749 = vmatpush1.bf16.msra.mxu0 0
        %750 = vmatprep.subr.bf16.mxu0 0
        %751 = vmatpush1.bf16.msra.mxu0 0
        %752 = vmatprep.subr.bf16.mxu0 0
        %753 = vmatpush1.bf16.msra.mxu0 0
        %754 = vmatprep.subr.bf16.mxu0 0
        %755 = vmatpush1.bf16.msra.mxu0 0
        %756 = vmatprep.subr.bf16.mxu0 0
        %757 = vmatpush1.bf16.msra.mxu0 0
        %758 = vmatprep.subr.bf16.mxu0 0
        %759 = vmatpush1.bf16.msra.mxu0 0
        %760 = vmatprep.subr.bf16.mxu0 0
        %761 = vmatpush1.bf16.msra.mxu0 %v697
        %762 = vmatprep.subr.bf16.mxu0 0
        %763 = vmatpush1.bf16.msra.mxu0 %v696
        %764 = vmatprep.subr.bf16.mxu0 0
        %765 = vmatpush2.bf16.msra.mxu0 0
        %766 = vmatprep.subr.bf16.mxu0 0
        %767 = vmatpush2.bf16.msra.mxu0 0
        %768 = vmatprep.subr.bf16.mxu0 0
        %769 = vmatpush2.bf16.msra.mxu0 0
        %770 = vmatprep.subr.bf16.mxu0 0
        %771 = vmatpush2.bf16.msra.mxu0 0
        %772 = vmatprep.subr.bf16.mxu0 0
        %773 = vmatpush2.bf16.msra.mxu0 0
        %774 = vmatprep.subr.bf16.mxu0 0
        %775 = vmatpush2.bf16.msra.mxu0 0
        %776 = vmatprep.subr.bf16.mxu0 0
        %777 = vmatpush2.bf16.msra.mxu0 0
        %778 = vmatprep.subr.bf16.mxu0 0
        %779 = vmatpush2.bf16.msra.mxu0 0
        %780 = vmatprep.mubr.bf16.mxu0 0
        %781 = vmatmul.mubr.bf16.gmra.mxu0 %v701
        %v782 = vpop.f32.mrf.mxu0
        %v783 = vadd.f32 %v686, %v782
        %v784 = vpop.f32.mrf.mxu0
        %v785 = vpop.f32.mrf.mxu0
        %v786 = vadd.f32 %v686, %v785
        %v787 = vpop.f32.mrf.mxu0
        %788 = vmatprep.mubr.bf16.mxu0 0
        %789 = vmatmul.mubr.bf16.gmra.mxu0 %v704
        %v790 = vpop.f32.mrf.mxu0
        %v791 = vadd.f32 %v686, %v790
        %v792 = vpop.f32.mrf.mxu0
        %v793 = vpop.f32.mrf.mxu0
        %v794 = vadd.f32 %v686, %v793
        %v795 = vpop.f32.mrf.mxu0
        %796 = vmatprep.mubr.bf16.mxu0 0
        %797 = vmatmul.mubr.bf16.gmra.mxu0 %v707
        %v798 = vpop.f32.mrf.mxu0
        %v799 = vadd.f32 %v686, %v798
        %v800 = vpop.f32.mrf.mxu0
        %v801 = vpop.f32.mrf.mxu0
        %v802 = vadd.f32 %v686, %v801
        %v803 = vpop.f32.mrf.mxu0
        %804 = vmatprep.mubr.bf16.mxu0 0
        %805 = vmatmul.mubr.bf16.gmra.mxu0 %v710
        %v806 = vpop.f32.mrf.mxu0
        %v807 = vadd.f32 %v686, %v806
        %v808 = vpop.f32.mrf.mxu0
        %v809 = vpop.f32.mrf.mxu0
        %v810 = vadd.f32 %v686, %v809
        %v811 = vpop.f32.mrf.mxu0
        %812 = vmatprep.mubr.bf16.mxu0 0
        %813 = vmatmul.mubr.bf16.gmra.mxu0 %v713
        %v814 = vpop.f32.mrf.mxu0
        %v815 = vadd.f32 %v686, %v814
        %v816 = vpop.f32.mrf.mxu0
        %v817 = vpop.f32.mrf.mxu0
        %v818 = vadd.f32 %v686, %v817
        %v819 = vpop.f32.mrf.mxu0
        %820 = vmatprep.mubr.bf16.mxu0 0
        %821 = vmatmul.mubr.bf16.gmra.mxu0 %v716
        %v822 = vpop.f32.mrf.mxu0
        %v823 = vadd.f32 %v686, %v822
        %v824 = vpop.f32.mrf.mxu0
        %v825 = vpop.f32.mrf.mxu0
        %v826 = vadd.f32 %v686, %v825
        %v827 = vpop.f32.mrf.mxu0
        %828 = vmatprep.mubr.bf16.mxu0 0
        %829 = vmatmul.mubr.bf16.gmra.mxu0 %v719
        %v830 = vpop.f32.mrf.mxu0
        %v831 = vadd.f32 %v686, %v830
        %v832 = vpop.f32.mrf.mxu0
        %v833 = vpop.f32.mrf.mxu0
        %v834 = vadd.f32 %v686, %v833
        %v835 = vpop.f32.mrf.mxu0
        %836 = vmatprep.mubr.bf16.mxu0 0
        %837 = vmatmul.mubr.bf16.gmra.mxu0 %v722
        %v838 = vpop.f32.mrf.mxu0
        %v839 = vadd.f32 %v686, %v838
        %v840 = vpop.f32.mrf.mxu0
        %v841 = vpop.f32.mrf.mxu0
        %v842 = vadd.f32 %v686, %v841
        %v843 = vpop.f32.mrf.mxu0
        %844 = vmatprep.mubr.bf16.mxu0 0
        %845 = vmatmul.mubr.bf16.gmra.mxu0 %v725
        %v846 = vpop.f32.mrf.mxu0
        %v847 = vadd.f32 %v686, %v846
        %v848 = vpop.f32.mrf.mxu0
        %v849 = vpop.f32.mrf.mxu0
        %v850 = vadd.f32 %v686, %v849
        %v851 = vpop.f32.mrf.mxu0
        %852 = vmatprep.mubr.bf16.mxu0 0
        %853 = vmatmul.mubr.bf16.gmra.mxu0 %v728
        %v854 = vpop.f32.mrf.mxu0
        %v855 = vadd.f32 %v686, %v854
        %v856 = vpop.f32.mrf.mxu0
        %v857 = vpop.f32.mrf.mxu0
        %v858 = vadd.f32 %v686, %v857
        %v859 = vpop.f32.mrf.mxu0
        %860 = vmatprep.mubr.bf16.mxu0 0
        %861 = vmatmul.mubr.bf16.gmra.mxu0 %v731
        %v862 = vpop.f32.mrf.mxu0
        %v863 = vadd.f32 %v686, %v862
        %v864 = vpop.f32.mrf.mxu0
        %v865 = vpop.f32.mrf.mxu0
        %v866 = vadd.f32 %v686, %v865
        %v867 = vpop.f32.mrf.mxu0
        %868 = vmatprep.mubr.bf16.mxu0 0
        %869 = vmatmul.mubr.bf16.gmra.mxu0 %v734
        %v870 = vpop.f32.mrf.mxu0
        %v871 = vadd.f32 %v686, %v870
        %v872 = vpop.f32.mrf.mxu0
        %v873 = vpop.f32.mrf.mxu0
        %v874 = vadd.f32 %v686, %v873
        %v875 = vpop.f32.mrf.mxu0
        %876 = vmatprep.mubr.bf16.mxu0 0
        %877 = vmatmul.mubr.bf16.gmra.mxu0 %v737
        %v878 = vpop.f32.mrf.mxu0
        %v879 = vadd.f32 %v686, %v878
        %v880 = vpop.f32.mrf.mxu0
        %v881 = vpop.f32.mrf.mxu0
        %v882 = vadd.f32 %v686, %v881
        %v883 = vpop.f32.mrf.mxu0
        %884 = vmatprep.mubr.bf16.mxu0 0
        %885 = vmatmul.mubr.bf16.gmra.mxu0 %v740
        %v886 = vpop.f32.mrf.mxu0
        %v887 = vadd.f32 %v686, %v886
        %v888 = vpop.f32.mrf.mxu0
        %v889 = vpop.f32.mrf.mxu0
        %v890 = vadd.f32 %v686, %v889
        %v891 = vpop.f32.mrf.mxu0
        %892 = vmatprep.mubr.bf16.mxu0 0
        %893 = vmatmul.mubr.bf16.gmra.mxu0 %v743
        %v894 = vpop.f32.mrf.mxu0
        %v895 = vadd.f32 %v686, %v894
        %v896 = vpop.f32.mrf.mxu0
        %v897 = vpop.f32.mrf.mxu0
        %v898 = vadd.f32 %v686, %v897
        %v899 = vpop.f32.mrf.mxu0
        %900 = vmatprep.mubr.bf16.mxu0 0
        %901 = vmatmul.mubr.bf16.gmra.mxu0 %v746
        %v902 = vpop.f32.mrf.mxu0
        %v903 = vadd.f32 %v686, %v902
        %v904 = vpop.f32.mrf.mxu0
        %v905 = vpop.f32.mrf.mxu0
        %v906 = vadd.f32 %v686, %v905
        %v907 = vpop.f32.mrf.mxu0
        %908 = vdwg.mxu0
        %v909 = vmax.f32 %v783, 0.0
        %v910 = vmax.f32 %v786, 0.0
        %v911 = vmax.f32 %v791, 0.0
        %v912 = vmax.f32 %v794, 0.0
        %v913 = vmax.f32 %v799, 0.0
        %v914 = vmax.f32 %v802, 0.0
        %v915 = vmax.f32 %v807, 0.0
        %v916 = vmax.f32 %v810, 0.0
        %v917 = vmax.f32 %v815, 0.0
        %v918 = vmax.f32 %v818, 0.0
        %v919 = vmax.f32 %v823, 0.0
        %v920 = vmax.f32 %v826, 0.0
        %v921 = vmax.f32 %v831, 0.0
        %v922 = vmax.f32 %v834, 0.0
        %v923 = vmax.f32 %v839, 0.0
        %v924 = vmax.f32 %v842, 0.0
        %v925 = vmax.f32 %v847, 0.0
        %v926 = vmax.f32 %v850, 0.0
        %v927 = vmax.f32 %v855, 0.0
        %v928 = vmax.f32 %v858, 0.0
        %v929 = vmax.f32 %v863, 0.0
        %v930 = vmax.f32 %v866, 0.0
        %v931 = vmax.f32 %v871, 0.0
        %v932 = vmax.f32 %v874, 0.0
        %v933 = vmax.f32 %v879, 0.0
        %v934 = vmax.f32 %v882, 0.0
        %v935 = vmax.f32 %v887, 0.0
        %v936 = vmax.f32 %v890, 0.0
        %v937 = vmax.f32 %v895, 0.0
        %v938 = vmax.f32 %v898, 0.0
        %v939 = vmax.f32 %v903, 0.0
        %v940 = vmax.f32 %v906, 0.0
        %v941 = vpack.c.bf16 %v910, %v909
        %v942 = vpack.c.bf16 %v912, %v911
        %v943 = vpack.c.bf16 %v914, %v913
        %v944 = vpack.c.bf16 %v916, %v915
        %v945 = vpack.c.bf16 %v918, %v917
        %v946 = vpack.c.bf16 %v920, %v919
        %v947 = vpack.c.bf16 %v922, %v921
        %v948 = vpack.c.bf16 %v924, %v923
        %v949 = vpack.c.bf16 %v926, %v925
        %v950 = vpack.c.bf16 %v928, %v927
        %v951 = vpack.c.bf16 %v930, %v929
        %v952 = vpack.c.bf16 %v932, %v931
        %v953 = vpack.c.bf16 %v934, %v933
        %v954 = vpack.c.bf16 %v936, %v935
        %v955 = vpack.c.bf16 %v938, %v937
        %v956 = vpack.c.bf16 %v940, %v939
        %v973 = vunpack.c.l.b16 %v941
        %v974 = vunpack.c.h.b16 %v941
        %v975 = vunpack.c.l.b16 %v942
        %v976 = vunpack.c.h.b16 %v942
        %v977 = vunpack.c.l.b16 %v943
        %v978 = vunpack.c.h.b16 %v943
        %v979 = vunpack.c.l.b16 %v944
        %v980 = vunpack.c.h.b16 %v944
        %v981 = vunpack.c.l.b16 %v945
        %v982 = vunpack.c.h.b16 %v945
        %v983 = vunpack.c.l.b16 %v946
        %v984 = vunpack.c.h.b16 %v946
        %v985 = vunpack.c.l.b16 %v947
        %v986 = vunpack.c.h.b16 %v947
        %v987 = vunpack.c.l.b16 %v948
        %v988 = vunpack.c.h.b16 %v948
        %v989 = vunpack.c.l.b16 %v949
        %v990 = vunpack.c.h.b16 %v949
        %v991 = vunpack.c.l.b16 %v950
        %v992 = vunpack.c.h.b16 %v950
        %v993 = vunpack.c.l.b16 %v951
        %v994 = vunpack.c.h.b16 %v951
        %v995 = vunpack.c.l.b16 %v952
        %v996 = vunpack.c.h.b16 %v952
        %v997 = vunpack.c.l.b16 %v953
        %v998 = vunpack.c.h.b16 %v953
        %v999 = vunpack.c.l.b16 %v954
        %v1000 = vunpack.c.h.b16 %v954
        %v1001 = vunpack.c.l.b16 %v955
        %v1002 = vunpack.c.h.b16 %v955
        %v1003 = vunpack.c.l.b16 %v956
        %v1004 = vunpack.c.h.b16 %v956
        %v1005 = vpack.c.b16 %v973, %v973
        %v1006 = vpack.c.b16 %v974, %v974
        %v1007 = vpack.c.b16 %v975, %v975
        %v1008 = vpack.c.b16 %v976, %v976
        %v1009 = vpack.c.b16 %v977, %v977
        %v1010 = vpack.c.b16 %v978, %v978
        %v1011 = vpack.c.b16 %v979, %v979
        %v1012 = vpack.c.b16 %v980, %v980
        %v1013 = vpack.c.b16 %v981, %v981
        %v1014 = vpack.c.b16 %v982, %v982
        %v1015 = vpack.c.b16 %v983, %v983
        %v1016 = vpack.c.b16 %v984, %v984
        %v1017 = vpack.c.b16 %v985, %v985
        %v1018 = vpack.c.b16 %v986, %v986
        %v1019 = vpack.c.b16 %v987, %v987
        %v1020 = vpack.c.b16 %v988, %v988
        %v1021 = vpack.c.b16 %v989, %v989
        %v1022 = vpack.c.b16 %v990, %v990
        %v1023 = vpack.c.b16 %v991, %v991
        %v1024 = vpack.c.b16 %v992, %v992
        %v1025 = vpack.c.b16 %v993, %v993
        %v1026 = vpack.c.b16 %v994, %v994
        %v1027 = vpack.c.b16 %v995, %v995
        %v1028 = vpack.c.b16 %v996, %v996
        %v1029 = vpack.c.b16 %v997, %v997
        %v1030 = vpack.c.b16 %v998, %v998
        %v1031 = vpack.c.b16 %v999, %v999
        %v1032 = vpack.c.b16 %v1000, %v1000
        %v1033 = vpack.c.b16 %v1001, %v1001
        %v1034 = vpack.c.b16 %v1002, %v1002
        %v1035 = vpack.c.b16 %v1003, %v1003
        %v1036 = vpack.c.b16 %v1004, %v1004
        %vm1069 = vcmask 519168
        %1070 = vst.msk [vmem:[%s281] sm:$0xf] %vm1069, %v1005
        %1071 = vst.msk [vmem:[%s281 + $0x4] sm:$0xf] %vm1069, %v1006
        %1072 = vst.msk [vmem:[%s281 + $0x8] sm:$0xf] %vm1069, %v1007
        %1073 = vst.msk [vmem:[%s281 + $0xc] sm:$0xf] %vm1069, %v1008
        %1074 = vst.msk [vmem:[%s281 + $0x10] sm:$0xf] %vm1069, %v1009
        %1075 = vst.msk [vmem:[%s281 + $0x14] sm:$0xf] %vm1069, %v1010
        %1076 = vst.msk [vmem:[%s281 + $0x18] sm:$0xf] %vm1069, %v1011
        %1077 = vst.msk [vmem:[%s281 + $0x1c] sm:$0xf] %vm1069, %v1012
        %1078 = vst.msk [vmem:[%s281 + $0x20] sm:$0xf] %vm1069, %v1013
        %1079 = vst.msk [vmem:[%s281 + $0x24] sm:$0xf] %vm1069, %v1014
        %1080 = vst.msk [vmem:[%s281 + $0x28] sm:$0xf] %vm1069, %v1015
        %1081 = vst.msk [vmem:[%s281 + $0x2c] sm:$0xf] %vm1069, %v1016
        %1082 = vst.msk [vmem:[%s281 + $0x30] sm:$0xf] %vm1069, %v1017
        %1083 = vst.msk [vmem:[%s281 + $0x34] sm:$0xf] %vm1069, %v1018
        %1084 = vst.msk [vmem:[%s281 + $0x38] sm:$0xf] %vm1069, %v1019
        %1085 = vst.msk [vmem:[%s281 + $0x3c] sm:$0xf] %vm1069, %v1020
        %1086 = vst.msk [vmem:[%s281 + $0x40] sm:$0xf] %vm1069, %v1021
        %1087 = vst.msk [vmem:[%s281 + $0x44] sm:$0xf] %vm1069, %v1022
        %1088 = vst.msk [vmem:[%s281 + $0x48] sm:$0xf] %vm1069, %v1023
        %1089 = vst.msk [vmem:[%s281 + $0x4c] sm:$0xf] %vm1069, %v1024
        %1090 = vst.msk [vmem:[%s281 + $0x50] sm:$0xf] %vm1069, %v1025
        %1091 = vst.msk [vmem:[%s281 + $0x54] sm:$0xf] %vm1069, %v1026
        %1092 = vst.msk [vmem:[%s281 + $0x58] sm:$0xf] %vm1069, %v1027
        %1093 = vst.msk [vmem:[%s281 + $0x5c] sm:$0xf] %vm1069, %v1028
        %1094 = vst.msk [vmem:[%s281 + $0x60] sm:$0xf] %vm1069, %v1029
        %1095 = vst.msk [vmem:[%s281 + $0x64] sm:$0xf] %vm1069, %v1030
        %1096 = vst.msk [vmem:[%s281 + $0x68] sm:$0xf] %vm1069, %v1031
        %1097 = vst.msk [vmem:[%s281 + $0x6c] sm:$0xf] %vm1069, %v1032
        %1098 = vst.msk [vmem:[%s281 + $0x70] sm:$0xf] %vm1069, %v1033
        %1099 = vst.msk [vmem:[%s281 + $0x74] sm:$0xf] %vm1069, %v1034
        %1100 = vst.msk [vmem:[%s281 + $0x78] sm:$0xf] %vm1069, %v1035
        %1101 = vst.msk [vmem:[%s281 + $0x7c] sm:$0xf] %vm1069, %v1036
        %s1102 = smul.u32 32, %s19
        %p1103 = scmp.lt.s32.totalorder %s1102, 63
        %s1104 = scalar_select %p1103, %s1102, 63
        %s1105 = smul.addr %s1104, 4
        %s1106 = scalar_lea.vmem %s5, %s1105
        // Predicated region
        $region57: #{mask_decoder_forward.5} parent=39 // pred_check
          %p1107 = pneg %p147
        $region58: #{mask_decoder_forward.5} parent=39 // pred_check_branch
          %1109 = sbr.rel (%p1107) target = $region60
        $region59: #{mask_decoder_forward.5} parent=39 // pred_region
          %s1110 = smul.u32 32, %s19
        $region60: #{mask_decoder_forward.5} parent=39 // pred_fallthru
          _
      $region40: #{mask_decoder_forward.5} parent=5 // pred_fallthru
        _
      %p1111 = scmp.le.s32.totalorder 2, %s14
      // Predicated region
      $region61: #{mask_decoder_forward.5} parent=5 // pred_check
        %p1112 = pneg %p1111
      $region62: #{mask_decoder_forward.5} parent=5 // pred_check_branch
        %1114 = sbr.rel (%p1112) target = $region64
      $region63: #{mask_decoder_forward.5} parent=5 // pred_region
        %s1115 = ssub.s32 %s14, 2
        // Predicated region
        $region65: #{mask_decoder_forward.5} parent=63 // pred_check
          %p1116 = pneg %p153
        $region66: #{mask_decoder_forward.5} parent=63 // pred_check_branch
          %1118 = sbr.rel (%p1116) target = $region68
        $region67: #{mask_decoder_forward.5} parent=63 // pred_region
          %s1119 = smul.u32 32, %s20
          %p1120 = scmp.lt.s32.totalorder %s1119, 63
          %s1121 = scalar_select %p1120, %s1119, 63
          %s1122 = smul.addr %s1121, 4
          %s1123 = scalar_lea.vmem %s5, %s1122
        $region68: #{mask_decoder_forward.5} parent=63 // pred_fallthru
          _
      $region64: #{mask_decoder_forward.5} parent=5 // pred_fallthru
        _
    $region6: #{mask_decoder_forward.5} parent=1 // loop_footer
      %s18 = sadd.s32 1, %s14
    $region7: #{mask_decoder_forward.5} parent=1 // loop_footer_branch
      %13 = sbr.rel target = $region3
    $region8: #{mask_decoder_forward.5} parent=1 // loop_exit
      _
    %1124 = vsyncpa [#allocation3], 1
    %s1125 = scalar_lea.sflag [#allocation3], 1
    %1126 = vsyncpa %s1125, 1
    %1127 = vsyncpa [#allocation5], 1
    %1128 = vsyncpa [#allocation8], 1

// kernel: mask_decoder_forward.7
$region0: #{mask_decoder_forward.7}
  #allocation0 [shape = 'u32[]', space=smem, size = 0x4, offset = 0x4, fixed_abs, tag = 'smem constant byte address 0x4 - core index']
  #allocation1 [shape = 'u32[144,128]{1,0:T(1,128)}', space=vmem, size = 0x12000, scoped, tag = 'internal scratch']
  %s0 = inlined_call_operand.vmem [shape: f32[2,64,64], index: 0, kind: input, shape index: {}]
  %s1 = inlined_call_operand.vmem [shape: f32[128,64], index: 1, kind: input, shape index: {}]
  %s2 = inlined_call_operand.vmem [shape: f32[64,128], index: 2, kind: input, shape index: {}]
  %s3 = inlined_call_operand.hbm [shape: f32[2,128,128], index: 3, kind: output, shape index: {}]
  %s4 = sld [smem:[#allocation0]]
  $region45: #{mask_decoder_forward.7} parent=0
    _
  %s6 = ssub.s32 1, %s4
  %s7 = scalar_select 0, %s6, %s4
  $region1: #{mask_decoder_forward.7} parent=0
    #allocation2 [shape = 'u8[131072]{0}', space=vmem, size = 0x20000, scoped, tag = 'output window, operand 0']
    #allocation3 [shape = 's32[2]{0}', space=sflag, size = 0x8, scoped, tag = 'scoped memory for mask_decoder_forward.7']
    %8 = vsyncpa [#allocation3], 0
    %s9 = scalar_lea.sflag [#allocation3], 1
    %10 = vsyncpa %s9, 0
    loop: start=0, step=1, limit=4
    $region2: #{mask_decoder_forward.7} parent=1 // loop_pre_header
      _
    $region3: #{mask_decoder_forward.7} parent=1 // loop_header
      %s12 = sphi 0, %s16
      %p13 = scmp.ge.s32.totalorder %s12, 4
      %s22 = sphi 0, %s24
      %s25 = sphi 0, %s22
      %s26 = sphi 0, %s25
      %s42 = sphi 0, %s26
      %s46 = sphi 0, %s46
      %s48 = sphi 0, %s46
      %s49 = sphi 0, %s48
      %s63 = sphi 0, %s49
      %s67 = sphi 0, %s67
      %s69 = sphi 0, %s67
      %s70 = sphi 0, %s69
      %s84 = sphi 0, %s70
      %s90 = sphi 0, %s92
      %s93 = sphi 0, %s90
      %s94 = sphi 0, %s93
      %s110 = sphi 0, %s94
    $region4: #{mask_decoder_forward.7} parent=1 // loop_header_branch
      %15 = sbr.rel (%p13) target = $region8
    $region5: #{mask_decoder_forward.7} parent=1 // loop_body
      %s17 = ssub.s32 %s12, 1
      %s18 = ssub.s32 %s12, 2
      %s19 = sadd.s32 %s12, 1
      %s20 = ssub.s32 %s12, %s19
      %p21 = scmp.eq.s32.totalorder %s20, 0
      %s23 = sadd.s32 %s22, 1
      %s24 = scalar_select %p21, %s22, %s23
      %p27 = pneg %p21
      %p28 = scmp.eq.s32.totalorder %s12, 1
      %p29 = por %p27, %p28
      %p30 = scmp.ne.s32.totalorder %s22, %s25
      %p31 = scmp.eq.s32.totalorder %s12, 0
      %p32 = por %p30, %p31
      %p33 = scmp.ne.s32.totalorder %s22, %s25
      %p34 = scmp.eq.s32.totalorder %s17, 1
      %p35 = por %p33, %p34
      %p36 = scmp.ne.s32.totalorder %s25, %s26
      %p37 = scmp.eq.s32.totalorder %s17, 0
      %p38 = por %p36, %p37
      %p39 = scmp.ne.s32.totalorder %s25, %s26
      %p40 = scmp.eq.s32.totalorder %s18, 1
      %p41 = por %p39, %p40
      %p43 = scmp.ne.s32.totalorder %s26, %s42
      %p44 = scmp.eq.s32.totalorder %s18, 0
      %p45 = por %p43, %p44
      %s47 = sadd.s32 %s46, 1
      %p50 = scmp.eq.s32.totalorder %s12, 1
      %p51 = scmp.ne.s32.totalorder %s46, %s48
      %p52 = scmp.eq.s32.totalorder %s12, 0
      %p53 = por %p51, %p52
      %p54 = scmp.ne.s32.totalorder %s46, %s48
      %p55 = scmp.eq.s32.totalorder %s17, 1
      %p56 = por %p54, %p55
      %p57 = scmp.ne.s32.totalorder %s48, %s49
      %p58 = scmp.eq.s32.totalorder %s17, 0
      %p59 = por %p57, %p58
      %p60 = scmp.ne.s32.totalorder %s48, %s49
      %p61 = scmp.eq.s32.totalorder %s18, 1
      %p62 = por %p60, %p61
      %p64 = scmp.ne.s32.totalorder %s49, %s63
      %p65 = scmp.eq.s32.totalorder %s18, 0
      %p66 = por %p64, %p65
      %s68 = sadd.s32 %s67, 1
      %p71 = scmp.eq.s32.totalorder %s12, 1
      %p72 = scmp.ne.s32.totalorder %s67, %s69
      %p73 = scmp.eq.s32.totalorder %s12, 0
      %p74 = por %p72, %p73
      %p75 = scmp.ne.s32.totalorder %s67, %s69
      %p76 = scmp.eq.s32.totalorder %s17, 1
      %p77 = por %p75, %p76
      %p78 = scmp.ne.s32.totalorder %s69, %s70
      %p79 = scmp.eq.s32.totalorder %s17, 0
      %p80 = por %p78, %p79
      %p81 = scmp.ne.s32.totalorder %s69, %s70
      %p82 = scmp.eq.s32.totalorder %s18, 1
      %p83 = por %p81, %p82
      %p85 = scmp.ne.s32.totalorder %s70, %s84
      %p86 = scmp.eq.s32.totalorder %s18, 0
      %p87 = por %p85, %p86
      %s88 = ssub.s32 %s12, %s19
      %p89 = scmp.eq.s32.totalorder %s88, 0
      %s91 = sadd.s32 %s90, 1
      %s92 = scalar_select %p89, %s90, %s91
      %p95 = pneg %p89
      %p96 = scmp.eq.s32.totalorder %s12, 1
      %p97 = por %p95, %p96
      %p98 = scmp.ne.s32.totalorder %s90, %s93
      %p99 = scmp.eq.s32.totalorder %s12, 0
      %p100 = por %p98, %p99
      %p101 = scmp.ne.s32.totalorder %s90, %s93
      %p102 = scmp.eq.s32.totalorder %s17, 1
      %p103 = por %p101, %p102
      %p104 = scmp.ne.s32.totalorder %s93, %s94
      %p105 = scmp.eq.s32.totalorder %s17, 0
      %p106 = por %p104, %p105
      %p107 = scmp.ne.s32.totalorder %s93, %s94
      %p108 = scmp.eq.s32.totalorder %s18, 1
      %p109 = por %p107, %p108
      %p111 = scmp.ne.s32.totalorder %s94, %s110
      %p112 = scmp.eq.s32.totalorder %s18, 0
      %p113 = por %p111, %p112
      %p114 = scmp.le.s32.totalorder 1, %s12
      %p115 = scmp.lt.s32.totalorder %s12, 3
      %p116 = pnand %p114, %p115
      %p117 = pneg %p116
      // Predicated region
      $region9: #{mask_decoder_forward.7} parent=5 // pred_check
        _
      $region10: #{mask_decoder_forward.7} parent=5 // pred_check_branch
        %119 = sbr.rel (%p116) target = $region12
      $region11: #{mask_decoder_forward.7} parent=5 // pred_region
        %s120 = ssub.s32 %s12, 1
        // Predicated region
        $region13: #{mask_decoder_forward.7} parent=11 // pred_check
          %p121 = pneg %p59
        $region14: #{mask_decoder_forward.7} parent=11 // pred_check_branch
          %123 = sbr.rel (%p121) target = $region16
        $region15: #{mask_decoder_forward.7} parent=11 // pred_region
          _
        $region16: #{mask_decoder_forward.7} parent=11 // pred_fallthru
          _
        // Predicated region
        $region17: #{mask_decoder_forward.7} parent=11 // pred_check
          %p124 = pneg %p80
        $region18: #{mask_decoder_forward.7} parent=11 // pred_check_branch
          %126 = sbr.rel (%p124) target = $region20
        $region19: #{mask_decoder_forward.7} parent=11 // pred_region
          _
        $region20: #{mask_decoder_forward.7} parent=11 // pred_fallthru
          _
      $region12: #{mask_decoder_forward.7} parent=5 // pred_fallthru
        _
      %p127 = scmp.lt.s32.totalorder %s12, 2
      // Predicated region
      $region21: #{mask_decoder_forward.7} parent=5 // pred_check
        %p128 = pneg %p127
      $region22: #{mask_decoder_forward.7} parent=5 // pred_check_branch
        %130 = sbr.rel (%p128) target = $region24
      $region23: #{mask_decoder_forward.7} parent=5 // pred_region
        // Predicated region
        $region25: #{mask_decoder_forward.7} parent=23 // pred_check
          %p131 = pneg %p32
        $region26: #{mask_decoder_forward.7} parent=23 // pred_check_branch
          %133 = sbr.rel (%p131) target = $region28
        $region27: #{mask_decoder_forward.7} parent=23 // pred_region
          %p134 = scmp.lt.s32.totalorder %s12, 1
          %s135 = scalar_select %p134, %s12, 1
          %s136 = smul.addr %s135, 8
          %s137 = smul.addr %s136, 8
          %s138 = scalar_lea.vmem %s0, %s137
        $region28: #{mask_decoder_forward.7} parent=23 // pred_fallthru
          _
      $region24: #{mask_decoder_forward.7} parent=5 // pred_fallthru
        _
      %p139 = scmp.le.s32.totalorder 1, %s12
      %p140 = scmp.lt.s32.totalorder %s12, 3
      %p141 = pnand %p139, %p140
      %p142 = pneg %p141
      // Predicated region
      $region29: #{mask_decoder_forward.7} parent=5 // pred_check
        _
      $region30: #{mask_decoder_forward.7} parent=5 // pred_check_branch
        %144 = sbr.rel (%p141) target = $region32
      $region31: #{mask_decoder_forward.7} parent=5 // pred_region
        %s145 = ssub.s32 %s12, 1
        %p146 = scmp.lt.s32.totalorder %s17, 1
        %s147 = scalar_select %p146, %s17, 1
        %s148 = smul.addr %s147, 8
        %s149 = smul.addr %s148, 8
        %s150 = scalar_lea.vmem %s0, %s149
        %p151 = pneg %p38
        %p152 = pneg %p35
        %p153 = pneg %p59
        %p154 = pneg %p56
        %p155 = pneg %p80
        %p156 = pneg %p77
        %p157 = pneg %p106
        %p158 = pneg %p103
        %s159 = sand.u32 %s93, 1
        %s160 = scalar_lea.sflag [#allocation3], %s159
        %s161 = sand.u32 %s93, 1
        %s162 = smul.addr %s161, 128
        %s163 = scalar_lea.vmem [#allocation2], %s162
        %p164 = scmp.lt.s32.totalorder %s17, 1
        %s165 = scalar_select %p164, %s17, 1
        %s166 = smul.addr %s165, 8
        %s167 = smul.addr %s166, 8
        %s168 = scalar_lea.vmem %s0, %s167
        %v169 = vld [vmem:[%s168] sm:$0xff]
        %v170 = vld [vmem:[%s168 + $0x8] sm:$0xff]
        %v171 = vld [vmem:[%s168 + $0x10] sm:$0xff]
        %v172 = vld [vmem:[%s168 + $0x18] sm:$0xff]
        %v173 = vld [vmem:[%s168 + $0x20] sm:$0xff]
        %v174 = vld [vmem:[%s168 + $0x28] sm:$0xff]
        %v175 = vld [vmem:[%s168 + $0x30] sm:$0xff]
        %v176 = vld [vmem:[%s168 + $0x38] sm:$0xff]
        %v177 = vld [vmem:[%s2] sm:$0xff]
        %v178 = vld [vmem:[%s2 + $0x8] sm:$0xff]
        %v179 = vld [vmem:[%s2 + $0x10] sm:$0xff]
        %v180 = vld [vmem:[%s2 + $0x18] sm:$0xff]
        %v181 = vld [vmem:[%s2 + $0x20] sm:$0xff]
        %v182 = vld [vmem:[%s2 + $0x28] sm:$0xff]
        %v183 = vld [vmem:[%s2 + $0x30] sm:$0xff]
        %v184 = vld [vmem:[%s2 + $0x38] sm:$0xff]
        %vm185 = vcmask 523264
        %v187 = vsel %vm185, %v169, 0
        %v190 = vsel %vm185, %v170, 0
        %v193 = vsel %vm185, %v171, 0
        %v196 = vsel %vm185, %v172, 0
        %v199 = vsel %vm185, %v173, 0
        %v202 = vsel %vm185, %v174, 0
        %v205 = vsel %vm185, %v175, 0
        %v208 = vsel %vm185, %v176, 0
        %210 = vmatprep.subr.mxu0 0.0
        %211 = vmatpush1.msra.mxu0 0.0
        %212 = vmatprep.subr.mxu0 0.0
        %213 = vmatpush1.msra.mxu0 0.0
        %214 = vmatprep.subr.mxu0 0.0
        %215 = vmatpush1.msra.mxu0 0.0
        %216 = vmatprep.subr.mxu0 0.0
        %217 = vmatpush1.msra.mxu0 0.0
        %218 = vmatprep.subr.mxu0 0.0
        %219 = vmatpush1.msra.mxu0 0.0
        %220 = vmatprep.subr.mxu0 0.0
        %221 = vmatpush1.msra.mxu0 0.0
        %222 = vmatprep.subr.mxu0 0.0
        %223 = vmatpush1.msra.mxu0 0.0
        %224 = vmatprep.subr.mxu0 0.0
        %225 = vmatpush1.msra.mxu0 0.0
        %226 = vmatprep.subr.mxu0 0.0
        %227 = vmatpush1.msra.mxu0 %v184
        %228 = vmatprep.subr.mxu0 0.0
        %229 = vmatpush1.msra.mxu0 %v183
        %230 = vmatprep.subr.mxu0 0.0
        %231 = vmatpush1.msra.mxu0 %v182
        %232 = vmatprep.subr.mxu0 0.0
        %233 = vmatpush1.msra.mxu0 %v181
        %234 = vmatprep.subr.mxu0 0.0
        %235 = vmatpush1.msra.mxu0 %v180
        %236 = vmatprep.subr.mxu0 0.0
        %237 = vmatpush1.msra.mxu0 %v179
        %238 = vmatprep.subr.mxu0 0.0
        %239 = vmatpush1.msra.mxu0 %v178
        %240 = vmatprep.subr.mxu0 0.0
        %241 = vmatpush1.msra.mxu0 %v177
        %242 = vmatprep.subr.mxu0 0.0
        %243 = vmatpush2.msra.mxu0 0.0
        %244 = vmatprep.subr.mxu0 0.0
        %245 = vmatpush2.msra.mxu0 0.0
        %246 = vmatprep.subr.mxu0 0.0
        %247 = vmatpush2.msra.mxu0 0.0
        %248 = vmatprep.subr.mxu0 0.0
        %249 = vmatpush2.msra.mxu0 0.0
        %250 = vmatprep.subr.mxu0 0.0
        %251 = vmatpush2.msra.mxu0 0.0
        %252 = vmatprep.subr.mxu0 0.0
        %253 = vmatpush2.msra.mxu0 0.0
        %254 = vmatprep.subr.mxu0 0.0
        %255 = vmatpush2.msra.mxu0 0.0
        %256 = vmatprep.subr.mxu0 0.0
        %257 = vmatpush2.msra.mxu0 0.0
        %258 = vmatprep.subr.mxu0 0.0
        %259 = vmatpush2.msra.mxu0 0.0
        %260 = vmatprep.subr.mxu0 0.0
        %261 = vmatpush2.msra.mxu0 0.0
        %262 = vmatprep.subr.mxu0 0.0
        %263 = vmatpush2.msra.mxu0 0.0
        %264 = vmatprep.subr.mxu0 0.0
        %265 = vmatpush2.msra.mxu0 0.0
        %266 = vmatprep.subr.mxu0 0.0
        %267 = vmatpush2.msra.mxu0 0.0
        %268 = vmatprep.subr.mxu0 0.0
        %269 = vmatpush2.msra.mxu0 0.0
        %270 = vmatprep.subr.mxu0 0.0
        %271 = vmatpush2.msra.mxu0 0.0
        %272 = vmatprep.subr.mxu0 0.0
        %273 = vmatpush2.msra.mxu0 0.0
        %274 = vmatprep.mubr.f32.mxu0 0.0
        %275 = vmatmul.mubr.f32.gmra.mxu0 %v187
        %v276 = vpop.f32.mrf.mxu0
        %v277 = vadd.f32 0.0, %v276
        %v278 = vpop.f32.mrf.mxu0
        %279 = vmatprep.mubr.f32.mxu0 0.0
        %280 = vmatmul.mubr.f32.gmra.mxu0 %v190
        %v281 = vpop.f32.mrf.mxu0
        %v282 = vadd.f32 0.0, %v281
        %v283 = vpop.f32.mrf.mxu0
        %284 = vmatprep.mubr.f32.mxu0 0.0
        %285 = vmatmul.mubr.f32.gmra.mxu0 %v193
        %v286 = vpop.f32.mrf.mxu0
        %v287 = vadd.f32 0.0, %v286
        %v288 = vpop.f32.mrf.mxu0
        %289 = vmatprep.mubr.f32.mxu0 0.0
        %290 = vmatmul.mubr.f32.gmra.mxu0 %v196
        %v291 = vpop.f32.mrf.mxu0
        %v292 = vadd.f32 0.0, %v291
        %v293 = vpop.f32.mrf.mxu0
        %294 = vmatprep.mubr.f32.mxu0 0.0
        %295 = vmatmul.mubr.f32.gmra.mxu0 %v199
        %v296 = vpop.f32.mrf.mxu0
        %v297 = vadd.f32 0.0, %v296
        %v298 = vpop.f32.mrf.mxu0
        %299 = vmatprep.mubr.f32.mxu0 0.0
        %300 = vmatmul.mubr.f32.gmra.mxu0 %v202
        %v301 = vpop.f32.mrf.mxu0
        %v302 = vadd.f32 0.0, %v301
        %v303 = vpop.f32.mrf.mxu0
        %304 = vmatprep.mubr.f32.mxu0 0.0
        %305 = vmatmul.mubr.f32.gmra.mxu0 %v205
        %v306 = vpop.f32.mrf.mxu0
        %v307 = vadd.f32 0.0, %v306
        %v308 = vpop.f32.mrf.mxu0
        %309 = vmatprep.mubr.f32.mxu0 0.0
        %310 = vmatmul.mubr.f32.gmra.mxu0 %v208
        %v311 = vpop.f32.mrf.mxu0
        %v312 = vadd.f32 0.0, %v311
        %v313 = vpop.f32.mrf.mxu0
        %314 = vdwg.mxu0
        %v315 = vld [vmem:[%s1] sm:$0xff]
        %v316 = vld [vmem:[%s1 + $0x8] sm:$0xff]
        %v317 = vld [vmem:[%s1 + $0x10] sm:$0xff]
        %v318 = vld [vmem:[%s1 + $0x18] sm:$0xff]
        %v319 = vld [vmem:[%s1 + $0x20] sm:$0xff]
        %v320 = vld [vmem:[%s1 + $0x28] sm:$0xff]
        %v321 = vld [vmem:[%s1 + $0x30] sm:$0xff]
        %v322 = vld [vmem:[%s1 + $0x38] sm:$0xff]
        %v323 = vld [vmem:[%s1 + $0x40] sm:$0xff]
        %v324 = vld [vmem:[%s1 + $0x48] sm:$0xff]
        %v325 = vld [vmem:[%s1 + $0x50] sm:$0xff]
        %v326 = vld [vmem:[%s1 + $0x58] sm:$0xff]
        %v327 = vld [vmem:[%s1 + $0x60] sm:$0xff]
        %v328 = vld [vmem:[%s1 + $0x68] sm:$0xff]
        %v329 = vld [vmem:[%s1 + $0x70] sm:$0xff]
        %v330 = vld [vmem:[%s1 + $0x78] sm:$0xff]
        %v332 = vsel %vm185, %v315, 0
        %v335 = vsel %vm185, %v316, 0
        %v338 = vsel %vm185, %v317, 0
        %v341 = vsel %vm185, %v318, 0
        %v344 = vsel %vm185, %v319, 0
        %v347 = vsel %vm185, %v320, 0
        %v350 = vsel %vm185, %v321, 0
        %v353 = vsel %vm185, %v322, 0
        %v356 = vsel %vm185, %v323, 0
        %v359 = vsel %vm185, %v324, 0
        %v362 = vsel %vm185, %v325, 0
        %v365 = vsel %vm185, %v326, 0
        %v368 = vsel %vm185, %v327, 0
        %v371 = vsel %vm185, %v328, 0
        %v374 = vsel %vm185, %v329, 0
        %v377 = vsel %vm185, %v330, 0
        %379 = vmatprep.subr.mxu0 0.0
        %380 = vmatpush1.msra.mxu0 0.0
        %381 = vmatprep.subr.mxu0 0.0
        %382 = vmatpush1.msra.mxu0 0.0
        %383 = vmatprep.subr.mxu0 0.0
        %384 = vmatpush1.msra.mxu0 0.0
        %385 = vmatprep.subr.mxu0 0.0
        %386 = vmatpush1.msra.mxu0 0.0
        %387 = vmatprep.subr.mxu0 0.0
        %388 = vmatpush1.msra.mxu0 0.0
        %389 = vmatprep.subr.mxu0 0.0
        %390 = vmatpush1.msra.mxu0 0.0
        %391 = vmatprep.subr.mxu0 0.0
        %392 = vmatpush1.msra.mxu0 0.0
        %393 = vmatprep.subr.mxu0 0.0
        %394 = vmatpush1.msra.mxu0 0.0
        %395 = vmatprep.subr.mxu0 0.0
        %396 = vmatpush1.msra.mxu0 %v312
        %397 = vmatprep.subr.mxu0 0.0
        %398 = vmatpush1.msra.mxu0 %v307
        %399 = vmatprep.subr.mxu0 0.0
        %400 = vmatpush1.msra.mxu0 %v302
        %401 = vmatprep.subr.mxu0 0.0
        %402 = vmatpush1.msra.mxu0 %v297
        %403 = vmatprep.subr.mxu0 0.0
        %404 = vmatpush1.msra.mxu0 %v292
        %405 = vmatprep.subr.mxu0 0.0
        %406 = vmatpush1.msra.mxu0 %v287
        %407 = vmatprep.subr.mxu0 0.0
        %408 = vmatpush1.msra.mxu0 %v282
        %409 = vmatprep.subr.mxu0 0.0
        %410 = vmatpush1.msra.mxu0 %v277
        %411 = vmatprep.subr.mxu0 0.0
        %412 = vmatpush2.msra.mxu0 0.0
        %413 = vmatprep.subr.mxu0 0.0
        %414 = vmatpush2.msra.mxu0 0.0
        %415 = vmatprep.subr.mxu0 0.0
        %416 = vmatpush2.msra.mxu0 0.0
        %417 = vmatprep.subr.mxu0 0.0
        %418 = vmatpush2.msra.mxu0 0.0
        %419 = vmatprep.subr.mxu0 0.0
        %420 = vmatpush2.msra.mxu0 0.0
        %421 = vmatprep.subr.mxu0 0.0
        %422 = vmatpush2.msra.mxu0 0.0
        %423 = vmatprep.subr.mxu0 0.0
        %424 = vmatpush2.msra.mxu0 0.0
        %425 = vmatprep.subr.mxu0 0.0
        %426 = vmatpush2.msra.mxu0 0.0
        %427 = vmatprep.subr.mxu0 0.0
        %428 = vmatpush2.msra.mxu0 0.0
        %429 = vmatprep.subr.mxu0 0.0
        %430 = vmatpush2.msra.mxu0 0.0
        %431 = vmatprep.subr.mxu0 0.0
        %432 = vmatpush2.msra.mxu0 0.0
        %433 = vmatprep.subr.mxu0 0.0
        %434 = vmatpush2.msra.mxu0 0.0
        %435 = vmatprep.subr.mxu0 0.0
        %436 = vmatpush2.msra.mxu0 0.0
        %437 = vmatprep.subr.mxu0 0.0
        %438 = vmatpush2.msra.mxu0 0.0
        %439 = vmatprep.subr.mxu0 0.0
        %440 = vmatpush2.msra.mxu0 0.0
        %441 = vmatprep.subr.mxu0 0.0
        %442 = vmatpush2.msra.mxu0 0.0
        %443 = vmatprep.mubr.f32.mxu0 0.0
        %444 = vmatmul.mubr.f32.gmra.mxu0 %v332
        %v445 = vpop.f32.mrf.mxu0
        %v446 = vadd.f32 0.0, %v445
        %v447 = vpop.f32.mrf.mxu0
        %448 = vmatprep.mubr.f32.mxu0 0.0
        %449 = vmatmul.mubr.f32.gmra.mxu0 %v335
        %v450 = vpop.f32.mrf.mxu0
        %v451 = vadd.f32 0.0, %v450
        %v452 = vpop.f32.mrf.mxu0
        %453 = vmatprep.mubr.f32.mxu0 0.0
        %454 = vmatmul.mubr.f32.gmra.mxu0 %v338
        %v455 = vpop.f32.mrf.mxu0
        %v456 = vadd.f32 0.0, %v455
        %v457 = vpop.f32.mrf.mxu0
        %458 = vmatprep.mubr.f32.mxu0 0.0
        %459 = vmatmul.mubr.f32.gmra.mxu0 %v341
        %v460 = vpop.f32.mrf.mxu0
        %v461 = vadd.f32 0.0, %v460
        %v462 = vpop.f32.mrf.mxu0
        %463 = vmatprep.mubr.f32.mxu0 0.0
        %464 = vmatmul.mubr.f32.gmra.mxu0 %v344
        %v465 = vpop.f32.mrf.mxu0
        %v466 = vadd.f32 0.0, %v465
        %v467 = vpop.f32.mrf.mxu0
        %468 = vmatprep.mubr.f32.mxu0 0.0
        %469 = vmatmul.mubr.f32.gmra.mxu0 %v347
        %v470 = vpop.f32.mrf.mxu0
        %v471 = vadd.f32 0.0, %v470
        %v472 = vpop.f32.mrf.mxu0
        %473 = vmatprep.mubr.f32.mxu0 0.0
        %474 = vmatmul.mubr.f32.gmra.mxu0 %v350
        %v475 = vpop.f32.mrf.mxu0
        %v476 = vadd.f32 0.0, %v475
        %v477 = vpop.f32.mrf.mxu0
        %478 = vmatprep.mubr.f32.mxu0 0.0
        %479 = vmatmul.mubr.f32.gmra.mxu0 %v353
        %v480 = vpop.f32.mrf.mxu0
        %v481 = vadd.f32 0.0, %v480
        %v482 = vpop.f32.mrf.mxu0
        %483 = vmatprep.mubr.f32.mxu0 0.0
        %484 = vmatmul.mubr.f32.gmra.mxu0 %v356
        %v485 = vpop.f32.mrf.mxu0
        %v486 = vadd.f32 0.0, %v485
        %v487 = vpop.f32.mrf.mxu0
        %488 = vmatprep.mubr.f32.mxu0 0.0
        %489 = vmatmul.mubr.f32.gmra.mxu0 %v359
        %v490 = vpop.f32.mrf.mxu0
        %v491 = vadd.f32 0.0, %v490
        %v492 = vpop.f32.mrf.mxu0
        %493 = vmatprep.mubr.f32.mxu0 0.0
        %494 = vmatmul.mubr.f32.gmra.mxu0 %v362
        %v495 = vpop.f32.mrf.mxu0
        %v496 = vadd.f32 0.0, %v495
        %v497 = vpop.f32.mrf.mxu0
        %498 = vmatprep.mubr.f32.mxu0 0.0
        %499 = vmatmul.mubr.f32.gmra.mxu0 %v365
        %v500 = vpop.f32.mrf.mxu0
        %v501 = vadd.f32 0.0, %v500
        %v502 = vpop.f32.mrf.mxu0
        %503 = vmatprep.mubr.f32.mxu0 0.0
        %504 = vmatmul.mubr.f32.gmra.mxu0 %v368
        %v505 = vpop.f32.mrf.mxu0
        %v506 = vadd.f32 0.0, %v505
        %v507 = vpop.f32.mrf.mxu0
        %508 = vmatprep.mubr.f32.mxu0 0.0
        %509 = vmatmul.mubr.f32.gmra.mxu0 %v371
        %v510 = vpop.f32.mrf.mxu0
        %v511 = vadd.f32 0.0, %v510
        %v512 = vpop.f32.mrf.mxu0
        %513 = vmatprep.mubr.f32.mxu0 0.0
        %514 = vmatmul.mubr.f32.gmra.mxu0 %v374
        %v515 = vpop.f32.mrf.mxu0
        %v516 = vadd.f32 0.0, %v515
        %v517 = vpop.f32.mrf.mxu0
        %518 = vmatprep.mubr.f32.mxu0 0.0
        %519 = vmatmul.mubr.f32.gmra.mxu0 %v377
        %v520 = vpop.f32.mrf.mxu0
        %v521 = vadd.f32 0.0, %v520
        %v522 = vpop.f32.mrf.mxu0
        %523 = vdwg.mxu0
        %524 = vst [vmem:[%s163] sm:$0xff] %v446
        %525 = vst [vmem:[%s163 + $0x8] sm:$0xff] %v451
        %526 = vst [vmem:[%s163 + $0x10] sm:$0xff] %v456
        %527 = vst [vmem:[%s163 + $0x18] sm:$0xff] %v461
        %528 = vst [vmem:[%s163 + $0x20] sm:$0xff] %v466
        %529 = vst [vmem:[%s163 + $0x28] sm:$0xff] %v471
        %530 = vst [vmem:[%s163 + $0x30] sm:$0xff] %v476
        %531 = vst [vmem:[%s163 + $0x38] sm:$0xff] %v481
        %532 = vst [vmem:[%s163 + $0x40] sm:$0xff] %v486
        %533 = vst [vmem:[%s163 + $0x48] sm:$0xff] %v491
        %534 = vst [vmem:[%s163 + $0x50] sm:$0xff] %v496
        %535 = vst [vmem:[%s163 + $0x58] sm:$0xff] %v501
        %536 = vst [vmem:[%s163 + $0x60] sm:$0xff] %v506
        %537 = vst [vmem:[%s163 + $0x68] sm:$0xff] %v511
        %538 = vst [vmem:[%s163 + $0x70] sm:$0xff] %v516
        %539 = vst [vmem:[%s163 + $0x78] sm:$0xff] %v521
        %s540 = sand.u32 %s93, 1
        %s541 = scalar_lea.sflag [#allocation3], %s540
        %s542 = sand.u32 %s93, 1
        %s543 = smul.addr %s542, 128
        %s544 = scalar_lea.vmem [#allocation2], %s543
        // Predicated region
        $region33: #{mask_decoder_forward.7} parent=31 // pred_check
          %p545 = pneg %p103
        $region34: #{mask_decoder_forward.7} parent=31 // pred_check_branch
          %547 = sbr.rel (%p545) target = $region36
        $region35: #{mask_decoder_forward.7} parent=31 // pred_region
          %s549 = ssub.s32 2048, 2048
          %550 = vsyncadd %s541, %s549
          %s551 = smul.addr %s17, 16
          %s552 = smul.addr %s551, 128
          %s553 = scalar_lea.hbm %s3, %s552
          %s554 = sshll.u32 %s544, 4
          %s555 = int_to_ptr.vmem [resolvable:$true] %s554
          %560 = dma.vmem_to_hbm [thread:$0]  %s555, 2048, %s553, %s541, 128, 128, 8
        $region36: #{mask_decoder_forward.7} parent=31 // pred_fallthru
          _
      $region32: #{mask_decoder_forward.7} parent=5 // pred_fallthru
        _
      %p561 = scmp.le.s32.totalorder 2, %s12
      // Predicated region
      $region37: #{mask_decoder_forward.7} parent=5 // pred_check
        %p562 = pneg %p561
      $region38: #{mask_decoder_forward.7} parent=5 // pred_check_branch
        %564 = sbr.rel (%p562) target = $region40
      $region39: #{mask_decoder_forward.7} parent=5 // pred_region
        %s565 = ssub.s32 %s12, 2
        // Predicated region
        $region41: #{mask_decoder_forward.7} parent=39 // pred_check
          %p566 = pneg %p109
        $region42: #{mask_decoder_forward.7} parent=39 // pred_check_branch
          %568 = sbr.rel (%p566) target = $region44
        $region43: #{mask_decoder_forward.7} parent=39 // pred_region
          %s569 = sand.u32 %s94, 1
          %s570 = scalar_lea.sflag [#allocation3], %s569
          %s571 = sand.u32 %s94, 1
          %s572 = smul.addr %s571, 128
          %s573 = scalar_lea.vmem [#allocation2], %s572
          %574 = dma.done %s570, 2048
        $region44: #{mask_decoder_forward.7} parent=39 // pred_fallthru
          _
      $region40: #{mask_decoder_forward.7} parent=5 // pred_fallthru
        _
    $region6: #{mask_decoder_forward.7} parent=1 // loop_footer
      %s16 = sadd.s32 1, %s12
    $region7: #{mask_decoder_forward.7} parent=1 // loop_footer_branch
      %11 = sbr.rel target = $region3
    $region8: #{mask_decoder_forward.7} parent=1 // loop_exit
      _
    %575 = vsyncpa [#allocation3], 1
    %s576 = scalar_lea.sflag [#allocation3], 1
    %577 = vsyncpa %s576, 1

// kernel: mask_decoder_forward.6
$region0: #{mask_decoder_forward.6}
  #allocation0 [shape = 'u32[]', space=smem, size = 0x4, offset = 0x4, fixed_abs, tag = 'smem constant byte address 0x4 - core index']
  #allocation1 [shape = 'u32[144,128]{1,0:T(1,128)}', space=vmem, size = 0x12000, scoped, tag = 'internal scratch']
  #allocation2 [shape = 'f32[1,1]{1,0:T(1,128)S(1)}', space=vmem, size = 0x200, scoped, tag = 'scoped memory for mask_decoder_forward.6']
  %s0 = inlined_call_operand.vmem [shape: bf16[2,66,66,4], index: 0, kind: input, shape index: {}]
  %s1 = inlined_call_operand.vmem [shape: bf16[9,4,16], index: 1, kind: input, shape index: {}]
  %s2 = inlined_call_operand.vmem [shape: f32[1,16], index: 2, kind: input, shape index: {}]
  %s3 = inlined_call_operand.vmem [shape: f32[1,16], index: 3, kind: input, shape index: {}]
  %s4 = inlined_call_operand.<no memory space> [shape: f32[1,1], index: 4, kind: input, shape index: {}]
  %s5 = inlined_call_operand.vmem [shape: f32[2,4096,1], index: 5, kind: output, shape index: {}]
  %s6 = sld [smem:[#allocation0]]
  $region53: #{mask_decoder_forward.6} parent=0
    _
  %s8 = ssub.s32 1, %s6
  %s9 = scalar_select 0, %s8, %s6
  %v10 = vstv %s4
  %11 = vst [vmem:[#allocation2] sm:$0x1] %v10
  loop: start=0, step=1, limit=18
  $region2: #{mask_decoder_forward.6} parent=0 // loop_pre_header
    _
  $region3: #{mask_decoder_forward.6} parent=0 // loop_header
    %s13 = sphi 0, %s17
    %p14 = scmp.ge.s32.totalorder %s13, 18
    %s20 = sphi 0, %s32
    %s21 = sphi 0, %s28
    %s22 = sphi 0, %s20
    %s23 = sphi 0, %s21
    %s24 = sphi 0, %s22
    %s25 = sphi 0, %s23
    %s35 = sphi 0, %s37
    %s38 = sphi 0, %s35
    %s39 = sphi 0, %s38
    %s55 = sphi 0, %s39
    %s59 = sphi 0, %s59
    %s61 = sphi 0, %s59
    %s62 = sphi 0, %s61
    %s76 = sphi 0, %s62
    %s80 = sphi 0, %s80
    %s82 = sphi 0, %s80
    %s83 = sphi 0, %s82
    %s97 = sphi 0, %s83
    %s101 = sphi 0, %s101
    %s103 = sphi 0, %s101
    %s104 = sphi 0, %s103
    %s118 = sphi 0, %s104
    %s122 = sphi 0, %s122
    %s124 = sphi 0, %s122
    %s125 = sphi 0, %s124
    %s139 = sphi 0, %s125
    %s147 = sphi 0, %s149
    %s150 = sphi 0, %s147
    %s151 = sphi 0, %s150
    %s167 = sphi 0, %s151
  $region4: #{mask_decoder_forward.6} parent=0 // loop_header_branch
    %16 = sbr.rel (%p14) target = $region8
  $region5: #{mask_decoder_forward.6} parent=0 // loop_body
    %s18 = ssub.s32 %s13, 1
    %s19 = ssub.s32 %s13, 2
    %s26 = sadd.s32 1, %s21
    %p27 = scmp.ge.s32.totalorder %s26, 8
    %s28 = scalar_select %p27, 0, %s26
    %s29 = sadd.s32 1, %s20
    %s30 = scalar_select %p27, %s29, %s20
    %p31 = scmp.ge.s32.totalorder %s30, 2
    %s32 = scalar_select %p31, 0, %s30
    %s33 = ssub.s32 %s20, %s32
    %p34 = scmp.eq.s32.totalorder %s33, 0
    %s36 = sadd.s32 %s35, 1
    %s37 = scalar_select %p34, %s35, %s36
    %p40 = pneg %p34
    %p41 = scmp.eq.s32.totalorder %s13, 15
    %p42 = por %p40, %p41
    %p43 = scmp.ne.s32.totalorder %s35, %s38
    %p44 = scmp.eq.s32.totalorder %s13, 0
    %p45 = por %p43, %p44
    %p46 = scmp.ne.s32.totalorder %s35, %s38
    %p47 = scmp.eq.s32.totalorder %s18, 15
    %p48 = por %p46, %p47
    %p49 = scmp.ne.s32.totalorder %s38, %s39
    %p50 = scmp.eq.s32.totalorder %s18, 0
    %p51 = por %p49, %p50
    %p52 = scmp.ne.s32.totalorder %s38, %s39
    %p53 = scmp.eq.s32.totalorder %s19, 15
    %p54 = por %p52, %p53
    %p56 = scmp.ne.s32.totalorder %s39, %s55
    %p57 = scmp.eq.s32.totalorder %s19, 0
    %p58 = por %p56, %p57
    %s60 = sadd.s32 %s59, 1
    %p63 = scmp.eq.s32.totalorder %s13, 15
    %p64 = scmp.ne.s32.totalorder %s59, %s61
    %p65 = scmp.eq.s32.totalorder %s13, 0
    %p66 = por %p64, %p65
    %p67 = scmp.ne.s32.totalorder %s59, %s61
    %p68 = scmp.eq.s32.totalorder %s18, 15
    %p69 = por %p67, %p68
    %p70 = scmp.ne.s32.totalorder %s61, %s62
    %p71 = scmp.eq.s32.totalorder %s18, 0
    %p72 = por %p70, %p71
    %p73 = scmp.ne.s32.totalorder %s61, %s62
    %p74 = scmp.eq.s32.totalorder %s19, 15
    %p75 = por %p73, %p74
    %p77 = scmp.ne.s32.totalorder %s62, %s76
    %p78 = scmp.eq.s32.totalorder %s19, 0
    %p79 = por %p77, %p78
    %s81 = sadd.s32 %s80, 1
    %p84 = scmp.eq.s32.totalorder %s13, 15
    %p85 = scmp.ne.s32.totalorder %s80, %s82
    %p86 = scmp.eq.s32.totalorder %s13, 0
    %p87 = por %p85, %p86
    %p88 = scmp.ne.s32.totalorder %s80, %s82
    %p89 = scmp.eq.s32.totalorder %s18, 15
    %p90 = por %p88, %p89
    %p91 = scmp.ne.s32.totalorder %s82, %s83
    %p92 = scmp.eq.s32.totalorder %s18, 0
    %p93 = por %p91, %p92
    %p94 = scmp.ne.s32.totalorder %s82, %s83
    %p95 = scmp.eq.s32.totalorder %s19, 15
    %p96 = por %p94, %p95
    %p98 = scmp.ne.s32.totalorder %s83, %s97
    %p99 = scmp.eq.s32.totalorder %s19, 0
    %p100 = por %p98, %p99
    %s102 = sadd.s32 %s101, 1
    %p105 = scmp.eq.s32.totalorder %s13, 15
    %p106 = scmp.ne.s32.totalorder %s101, %s103
    %p107 = scmp.eq.s32.totalorder %s13, 0
    %p108 = por %p106, %p107
    %p109 = scmp.ne.s32.totalorder %s101, %s103
    %p110 = scmp.eq.s32.totalorder %s18, 15
    %p111 = por %p109, %p110
    %p112 = scmp.ne.s32.totalorder %s103, %s104
    %p113 = scmp.eq.s32.totalorder %s18, 0
    %p114 = por %p112, %p113
    %p115 = scmp.ne.s32.totalorder %s103, %s104
    %p116 = scmp.eq.s32.totalorder %s19, 15
    %p117 = por %p115, %p116
    %p119 = scmp.ne.s32.totalorder %s104, %s118
    %p120 = scmp.eq.s32.totalorder %s19, 0
    %p121 = por %p119, %p120
    %s123 = sadd.s32 %s122, 1
    %p126 = scmp.eq.s32.totalorder %s13, 15
    %p127 = scmp.ne.s32.totalorder %s122, %s124
    %p128 = scmp.eq.s32.totalorder %s13, 0
    %p129 = por %p127, %p128
    %p130 = scmp.ne.s32.totalorder %s122, %s124
    %p131 = scmp.eq.s32.totalorder %s18, 15
    %p132 = por %p130, %p131
    %p133 = scmp.ne.s32.totalorder %s124, %s125
    %p134 = scmp.eq.s32.totalorder %s18, 0
    %p135 = por %p133, %p134
    %p136 = scmp.ne.s32.totalorder %s124, %s125
    %p137 = scmp.eq.s32.totalorder %s19, 15
    %p138 = por %p136, %p137
    %p140 = scmp.ne.s32.totalorder %s125, %s139
    %p141 = scmp.eq.s32.totalorder %s19, 0
    %p142 = por %p140, %p141
    %s143 = ssub.s32 %s20, %s32
    %s144 = ssub.s32 %s21, %s28
    %s145 = sor.u32 %s143, %s144
    %p146 = scmp.eq.s32.totalorder %s145, 0
    %s148 = sadd.s32 %s147, 1
    %s149 = scalar_select %p146, %s147, %s148
    %p152 = pneg %p146
    %p153 = scmp.eq.s32.totalorder %s13, 15
    %p154 = por %p152, %p153
    %p155 = scmp.ne.s32.totalorder %s147, %s150
    %p156 = scmp.eq.s32.totalorder %s13, 0
    %p157 = por %p155, %p156
    %p158 = scmp.ne.s32.totalorder %s147, %s150
    %p159 = scmp.eq.s32.totalorder %s18, 15
    %p160 = por %p158, %p159
    %p161 = scmp.ne.s32.totalorder %s150, %s151
    %p162 = scmp.eq.s32.totalorder %s18, 0
    %p163 = por %p161, %p162
    %p164 = scmp.ne.s32.totalorder %s150, %s151
    %p165 = scmp.eq.s32.totalorder %s19, 15
    %p166 = por %p164, %p165
    %p168 = scmp.ne.s32.totalorder %s151, %s167
    %p169 = scmp.eq.s32.totalorder %s19, 0
    %p170 = por %p168, %p169
    %p171 = scmp.le.s32.totalorder 1, %s13
    %p172 = scmp.lt.s32.totalorder %s13, 17
    %p173 = pnand %p171, %p172
    %p174 = pneg %p173
    // Predicated region
    $region9: #{mask_decoder_forward.6} parent=5 // pred_check
      _
    $region10: #{mask_decoder_forward.6} parent=5 // pred_check_branch
      %176 = sbr.rel (%p173) target = $region12
    $region11: #{mask_decoder_forward.6} parent=5 // pred_region
      %s177 = ssub.s32 %s13, 1
      // Predicated region
      $region13: #{mask_decoder_forward.6} parent=11 // pred_check
        %p178 = pneg %p72
      $region14: #{mask_decoder_forward.6} parent=11 // pred_check_branch
        %180 = sbr.rel (%p178) target = $region16
      $region15: #{mask_decoder_forward.6} parent=11 // pred_region
        _
      $region16: #{mask_decoder_forward.6} parent=11 // pred_fallthru
        _
      // Predicated region
      $region17: #{mask_decoder_forward.6} parent=11 // pred_check
        %p181 = pneg %p93
      $region18: #{mask_decoder_forward.6} parent=11 // pred_check_branch
        %183 = sbr.rel (%p181) target = $region20
      $region19: #{mask_decoder_forward.6} parent=11 // pred_region
        _
      $region20: #{mask_decoder_forward.6} parent=11 // pred_fallthru
        _
      // Predicated region
      $region21: #{mask_decoder_forward.6} parent=11 // pred_check
        %p184 = pneg %p114
      $region22: #{mask_decoder_forward.6} parent=11 // pred_check_branch
        %186 = sbr.rel (%p184) target = $region24
      $region23: #{mask_decoder_forward.6} parent=11 // pred_region
        _
      $region24: #{mask_decoder_forward.6} parent=11 // pred_fallthru
        _
      // Predicated region
      $region25: #{mask_decoder_forward.6} parent=11 // pred_check
        %p187 = pneg %p135
      $region26: #{mask_decoder_forward.6} parent=11 // pred_check_branch
        %189 = sbr.rel (%p187) target = $region28
      $region27: #{mask_decoder_forward.6} parent=11 // pred_region
        _
      $region28: #{mask_decoder_forward.6} parent=11 // pred_fallthru
        _
    $region12: #{mask_decoder_forward.6} parent=5 // pred_fallthru
      _
    %p190 = scmp.lt.s32.totalorder %s13, 16
    // Predicated region
    $region29: #{mask_decoder_forward.6} parent=5 // pred_check
      %p191 = pneg %p190
    $region30: #{mask_decoder_forward.6} parent=5 // pred_check_branch
      %193 = sbr.rel (%p191) target = $region32
    $region31: #{mask_decoder_forward.6} parent=5 // pred_region
      // Predicated region
      $region33: #{mask_decoder_forward.6} parent=31 // pred_check
        %p194 = pneg %p45
      $region34: #{mask_decoder_forward.6} parent=31 // pred_check_branch
        %196 = sbr.rel (%p194) target = $region36
      $region35: #{mask_decoder_forward.6} parent=31 // pred_region
        %p197 = scmp.lt.s32.totalorder %s20, 1
        %s198 = scalar_select %p197, %s20, 1
        %s199 = smul.addr %s198, 594
        %s200 = smul.addr %s199, 4
        %s201 = scalar_lea.vmem %s0, %s200
      $region36: #{mask_decoder_forward.6} parent=31 // pred_fallthru
        _
    $region32: #{mask_decoder_forward.6} parent=5 // pred_fallthru
      _
    %p202 = scmp.le.s32.totalorder 1, %s13
    %p203 = scmp.lt.s32.totalorder %s13, 17
    %p204 = pnand %p202, %p203
    %p205 = pneg %p204
    // Predicated region
    $region37: #{mask_decoder_forward.6} parent=5 // pred_check
      _
    $region38: #{mask_decoder_forward.6} parent=5 // pred_check_branch
      %207 = sbr.rel (%p204) target = $region40
    $region39: #{mask_decoder_forward.6} parent=5 // pred_region
      %s208 = ssub.s32 %s13, 1
      %p209 = scmp.lt.s32.totalorder %s22, 1
      %s210 = scalar_select %p209, %s22, 1
      %s211 = smul.addr %s210, 594
      %s212 = smul.addr %s211, 4
      %s213 = scalar_lea.vmem %s0, %s212
      %p214 = pneg %p51
      %p215 = pneg %p48
      %p216 = pneg %p72
      %p217 = pneg %p69
      %p218 = pneg %p93
      %p219 = pneg %p90
      %p220 = pneg %p114
      %p221 = pneg %p111
      %p222 = pneg %p135
      %p223 = pneg %p132
      %p224 = pneg %p163
      %p225 = pneg %p160
      %s226 = smul.u32 64, %s23
      %p227 = scmp.lt.s32.totalorder %s22, 1
      %s228 = scalar_select %p227, %s22, 1
      %p229 = scmp.lt.s32.totalorder %s226, 511
      %s230 = scalar_select %p229, %s226, 511
      %s231 = smul.addr %s228, 512
      %s232 = sadd.s32 %s230, %s231
      %s233 = smul.addr %s232, 8
      %s234 = scalar_lea.vmem %s5, %s233
      %p235 = scmp.lt.s32.totalorder %s22, 1
      %s236 = scalar_select %p235, %s22, 1
      %s237 = smul.addr %s236, 594
      %s238 = smul.addr %s237, 4
      %s239 = scalar_lea.vmem %s0, %s238
      %s240 = smul.u32 64, %s23
      %p241 = scmp.lt.s32.totalorder %s22, 1
      %s242 = scalar_select %p241, %s22, 1
      %p243 = scmp.lt.s32.totalorder %s240, 511
      %s244 = scalar_select %p243, %s240, 511
      %s245 = smul.addr %s242, 512
      %s246 = sadd.s32 %s244, %s245
      %s247 = smul.addr %s246, 8
      %s248 = scalar_lea.vmem %s5, %s247
      %s249 = smul.u32 64, %s23
      %s251 = smul.u32 %s23, 8
      %s252 = smul.u32 %s251, 9
      %s253 = smul.addr %s252, 4
      %s254 = scalar_lea.vmem %s239, %s253
      %v255 = vld [vmem:[%s254] sm:$0xf]
      %v256 = vld [vmem:[%s254 + $0x4] sm:$0xf]
      %v257 = vld [vmem:[%s254 + $0x8] sm:$0xf]
      %v258 = vld [vmem:[%s254 + $0xc] sm:$0xf]
      %v259 = vld [vmem:[%s254 + $0x10] sm:$0xf]
      %v260 = vld [vmem:[%s254 + $0x14] sm:$0xf]
      %v261 = vld [vmem:[%s254 + $0x18] sm:$0xf]
      %v262 = vld [vmem:[%s254 + $0x1c] sm:$0xf]
      %v263 = vld [vmem:[%s254 + $0x20] sm:$0x1]
      %v264 = vld [vmem:[%s254 + $0x24] sm:$0xf]
      %v265 = vld [vmem:[%s254 + $0x28] sm:$0xf]
      %v266 = vld [vmem:[%s254 + $0x2c] sm:$0xf]
      %v267 = vld [vmem:[%s254 + $0x30] sm:$0xf]
      %v268 = vld [vmem:[%s254 + $0x34] sm:$0xf]
      %v269 = vld [vmem:[%s254 + $0x38] sm:$0xf]
      %v270 = vld [vmem:[%s254 + $0x3c] sm:$0xf]
      %v271 = vld [vmem:[%s254 + $0x40] sm:$0xf]
      %v272 = vld [vmem:[%s254 + $0x44] sm:$0x1]
      %v273 = vld [vmem:[%s254 + $0x48] sm:$0xf]
      %v274 = vld [vmem:[%s254 + $0x4c] sm:$0xf]
      %v275 = vld [vmem:[%s254 + $0x50] sm:$0xf]
      %v276 = vld [vmem:[%s254 + $0x54] sm:$0xf]
      %v277 = vld [vmem:[%s254 + $0x58] sm:$0xf]
      %v278 = vld [vmem:[%s254 + $0x5c] sm:$0xf]
      %v279 = vld [vmem:[%s254 + $0x60] sm:$0xf]
      %v280 = vld [vmem:[%s254 + $0x64] sm:$0xf]
      %v281 = vld [vmem:[%s254 + $0x68] sm:$0x1]
      %v282 = vld [vmem:[%s254 + $0x6c] sm:$0xf]
      %v283 = vld [vmem:[%s254 + $0x70] sm:$0xf]
      %v284 = vld [vmem:[%s254 + $0x74] sm:$0xf]
      %v285 = vld [vmem:[%s254 + $0x78] sm:$0xf]
      %v286 = vld [vmem:[%s254 + $0x7c] sm:$0xf]
      %v287 = vld [vmem:[%s254 + $0x80] sm:$0xf]
      %v288 = vld [vmem:[%s254 + $0x84] sm:$0xf]
      %v289 = vld [vmem:[%s254 + $0x88] sm:$0xf]
      %v290 = vld [vmem:[%s254 + $0x8c] sm:$0x1]
      %v291 = vld [vmem:[%s254 + $0x90] sm:$0xf]
      %v292 = vld [vmem:[%s254 + $0x94] sm:$0xf]
      %v293 = vld [vmem:[%s254 + $0x98] sm:$0xf]
      %v294 = vld [vmem:[%s254 + $0x9c] sm:$0xf]
      %v295 = vld [vmem:[%s254 + $0xa0] sm:$0xf]
      %v296 = vld [vmem:[%s254 + $0xa4] sm:$0xf]
      %v297 = vld [vmem:[%s254 + $0xa8] sm:$0xf]
      %v298 = vld [vmem:[%s254 + $0xac] sm:$0xf]
      %v299 = vld [vmem:[%s254 + $0xb0] sm:$0x1]
      %v300 = vld [vmem:[%s254 + $0xb4] sm:$0xf]
      %v301 = vld [vmem:[%s254 + $0xb8] sm:$0xf]
      %v302 = vld [vmem:[%s254 + $0xbc] sm:$0xf]
      %v303 = vld [vmem:[%s254 + $0xc0] sm:$0xf]
      %v304 = vld [vmem:[%s254 + $0xc4] sm:$0xf]
      %v305 = vld [vmem:[%s254 + $0xc8] sm:$0xf]
      %v306 = vld [vmem:[%s254 + $0xcc] sm:$0xf]
      %v307 = vld [vmem:[%s254 + $0xd0] sm:$0xf]
      %v308 = vld [vmem:[%s254 + $0xd4] sm:$0x1]
      %v309 = vld [vmem:[%s254 + $0xd8] sm:$0xf]
      %v310 = vld [vmem:[%s254 + $0xdc] sm:$0xf]
      %v311 = vld [vmem:[%s254 + $0xe0] sm:$0xf]
      %v312 = vld [vmem:[%s254 + $0xe4] sm:$0xf]
      %v313 = vld [vmem:[%s254 + $0xe8] sm:$0xf]
      %v314 = vld [vmem:[%s254 + $0xec] sm:$0xf]
      %v315 = vld [vmem:[%s254 + $0xf0] sm:$0xf]
      %v316 = vld [vmem:[%s254 + $0xf4] sm:$0xf]
      %v317 = vld [vmem:[%s254 + $0xf8] sm:$0x1]
      %v318 = vld [vmem:[%s254 + $0xfc] sm:$0xf]
      %v319 = vld [vmem:[%s254 + $0x100] sm:$0xf]
      %v320 = vld [vmem:[%s254 + $0x104] sm:$0xf]
      %v321 = vld [vmem:[%s254 + $0x108] sm:$0xf]
      %v322 = vld [vmem:[%s254 + $0x10c] sm:$0xf]
      %v323 = vld [vmem:[%s254 + $0x110] sm:$0xf]
      %v324 = vld [vmem:[%s254 + $0x114] sm:$0xf]
      %v325 = vld [vmem:[%s254 + $0x118] sm:$0xf]
      %v326 = vld [vmem:[%s254 + $0x11c] sm:$0x1]
      %v327 = vld [vmem:[%s1] sm:$0x3]
      %vm328 = vsmask.f32 3328
      %vm329 = vsmask.f32 7440
      %vm330 = vmor %vm328, %vm329
      %v332 = vshrl.u32 %v255, 16
      %v334 = vrot.slane %v332, 4
      %v335 = vshll.u32 %v255, 16
      %v337 = vrot.slane %v335, 5
      %v338 = vor.u32 %v334, %v337
      %v339 = vrot.slane %v338, 4
      %v341 = vshll.u32 %v256, 16
      %v343 = vrot.slane %v341, 5
      %v344 = vsel %vm330, %v339, %v343
      %v345 = vshrl.u32 %v256, 16
      %v347 = vrot.slane %v345, 4
      %v348 = vor.u32 %v347, %v343
      %v349 = vrot.slane %v348, 4
      %v351 = vshll.u32 %v257, 16
      %v353 = vrot.slane %v351, 5
      %v354 = vsel %vm330, %v349, %v353
      %v355 = vshrl.u32 %v257, 16
      %v357 = vrot.slane %v355, 4
      %v358 = vor.u32 %v357, %v353
      %v359 = vrot.slane %v358, 4
      %v361 = vshll.u32 %v258, 16
      %v363 = vrot.slane %v361, 5
      %v364 = vsel %vm330, %v359, %v363
      %v365 = vshrl.u32 %v258, 16
      %v367 = vrot.slane %v365, 4
      %v368 = vor.u32 %v367, %v363
      %v369 = vrot.slane %v368, 4
      %v371 = vshll.u32 %v259, 16
      %v373 = vrot.slane %v371, 5
      %v374 = vsel %vm330, %v369, %v373
      %v375 = vshrl.u32 %v259, 16
      %v377 = vrot.slane %v375, 4
      %v378 = vor.u32 %v377, %v373
      %v379 = vrot.slane %v378, 4
      %v381 = vshll.u32 %v260, 16
      %v383 = vrot.slane %v381, 5
      %v384 = vsel %vm330, %v379, %v383
      %v385 = vshrl.u32 %v260, 16
      %v387 = vrot.slane %v385, 4
      %v388 = vor.u32 %v387, %v383
      %v389 = vrot.slane %v388, 4
      %v391 = vshll.u32 %v261, 16
      %v393 = vrot.slane %v391, 5
      %v394 = vsel %vm330, %v389, %v393
      %v395 = vshrl.u32 %v261, 16
      %v397 = vrot.slane %v395, 4
      %v398 = vor.u32 %v397, %v393
      %v399 = vrot.slane %v398, 4
      %v401 = vshll.u32 %v262, 16
      %v403 = vrot.slane %v401, 5
      %v404 = vsel %vm330, %v399, %v403
      %v405 = vshrl.u32 %v262, 16
      %v407 = vrot.slane %v405, 4
      %v408 = vor.u32 %v407, %v403
      %v409 = vrot.slane %v408, 4
      %v411 = vshll.u32 %v263, 16
      %v413 = vrot.slane %v411, 5
      %v414 = vsel %vm330, %v409, %v413
      %v416 = vshrl.u32 %v264, 16
      %v418 = vrot.slane %v416, 4
      %v419 = vshll.u32 %v264, 16
      %v421 = vrot.slane %v419, 5
      %v422 = vor.u32 %v418, %v421
      %v423 = vrot.slane %v422, 4
      %v425 = vshll.u32 %v265, 16
      %v427 = vrot.slane %v425, 5
      %v428 = vsel %vm330, %v423, %v427
      %v429 = vshrl.u32 %v265, 16
      %v431 = vrot.slane %v429, 4
      %v432 = vor.u32 %v431, %v427
      %v433 = vrot.slane %v432, 4
      %v435 = vshll.u32 %v266, 16
      %v437 = vrot.slane %v435, 5
      %v438 = vsel %vm330, %v433, %v437
      %v439 = vshrl.u32 %v266, 16
      %v441 = vrot.slane %v439, 4
      %v442 = vor.u32 %v441, %v437
      %v443 = vrot.slane %v442, 4
      %v445 = vshll.u32 %v267, 16
      %v447 = vrot.slane %v445, 5
      %v448 = vsel %vm330, %v443, %v447
      %v449 = vshrl.u32 %v267, 16
      %v451 = vrot.slane %v449, 4
      %v452 = vor.u32 %v451, %v447
      %v453 = vrot.slane %v452, 4
      %v455 = vshll.u32 %v268, 16
      %v457 = vrot.slane %v455, 5
      %v458 = vsel %vm330, %v453, %v457
      %v459 = vshrl.u32 %v268, 16
      %v461 = vrot.slane %v459, 4
      %v462 = vor.u32 %v461, %v457
      %v463 = vrot.slane %v462, 4
      %v465 = vshll.u32 %v269, 16
      %v467 = vrot.slane %v465, 5
      %v468 = vsel %vm330, %v463, %v467
      %v469 = vshrl.u32 %v269, 16
      %v471 = vrot.slane %v469, 4
      %v472 = vor.u32 %v471, %v467
      %v473 = vrot.slane %v472, 4
      %v475 = vshll.u32 %v270, 16
      %v477 = vrot.slane %v475, 5
      %v478 = vsel %vm330, %v473, %v477
      %v479 = vshrl.u32 %v270, 16
      %v481 = vrot.slane %v479, 4
      %v482 = vor.u32 %v481, %v477
      %v483 = vrot.slane %v482, 4
      %v485 = vshll.u32 %v271, 16
      %v487 = vrot.slane %v485, 5
      %v488 = vsel %vm330, %v483, %v487
      %v489 = vshrl.u32 %v271, 16
      %v491 = vrot.slane %v489, 4
      %v492 = vor.u32 %v491, %v487
      %v493 = vrot.slane %v492, 4
      %v495 = vshll.u32 %v272, 16
      %v497 = vrot.slane %v495, 5
      %v498 = vsel %vm330, %v493, %v497
      %v500 = vshrl.u32 %v273, 16
      %v502 = vrot.slane %v500, 4
      %v503 = vshll.u32 %v273, 16
      %v505 = vrot.slane %v503, 5
      %v506 = vor.u32 %v502, %v505
      %v507 = vrot.slane %v506, 4
      %v509 = vshll.u32 %v274, 16
      %v511 = vrot.slane %v509, 5
      %v512 = vsel %vm330, %v507, %v511
      %v513 = vshrl.u32 %v274, 16
      %v515 = vrot.slane %v513, 4
      %v516 = vor.u32 %v515, %v511
      %v517 = vrot.slane %v516, 4
      %v519 = vshll.u32 %v275, 16
      %v521 = vrot.slane %v519, 5
      %v522 = vsel %vm330, %v517, %v521
      %v523 = vshrl.u32 %v275, 16
      %v525 = vrot.slane %v523, 4
      %v526 = vor.u32 %v525, %v521
      %v527 = vrot.slane %v526, 4
      %v529 = vshll.u32 %v276, 16
      %v531 = vrot.slane %v529, 5
      %v532 = vsel %vm330, %v527, %v531
      %v533 = vshrl.u32 %v276, 16
      %v535 = vrot.slane %v533, 4
      %v536 = vor.u32 %v535, %v531
      %v537 = vrot.slane %v536, 4
      %v539 = vshll.u32 %v277, 16
      %v541 = vrot.slane %v539, 5
      %v542 = vsel %vm330, %v537, %v541
      %v543 = vshrl.u32 %v277, 16
      %v545 = vrot.slane %v543, 4
      %v546 = vor.u32 %v545, %v541
      %v547 = vrot.slane %v546, 4
      %v549 = vshll.u32 %v278, 16
      %v551 = vrot.slane %v549, 5
      %v552 = vsel %vm330, %v547, %v551
      %v553 = vshrl.u32 %v278, 16
      %v555 = vrot.slane %v553, 4
      %v556 = vor.u32 %v555, %v551
      %v557 = vrot.slane %v556, 4
      %v559 = vshll.u32 %v279, 16
      %v561 = vrot.slane %v559, 5
      %v562 = vsel %vm330, %v557, %v561
      %v563 = vshrl.u32 %v279, 16
      %v565 = vrot.slane %v563, 4
      %v566 = vor.u32 %v565, %v561
      %v567 = vrot.slane %v566, 4
      %v569 = vshll.u32 %v280, 16
      %v571 = vrot.slane %v569, 5
      %v572 = vsel %vm330, %v567, %v571
      %v573 = vshrl.u32 %v280, 16
      %v575 = vrot.slane %v573, 4
      %v576 = vor.u32 %v575, %v571
      %v577 = vrot.slane %v576, 4
      %v579 = vshll.u32 %v281, 16
      %v581 = vrot.slane %v579, 5
      %v582 = vsel %vm330, %v577, %v581
      %v584 = vshrl.u32 %v282, 16
      %v586 = vrot.slane %v584, 4
      %v587 = vshll.u32 %v282, 16
      %v589 = vrot.slane %v587, 5
      %v590 = vor.u32 %v586, %v589
      %v591 = vrot.slane %v590, 4
      %v593 = vshll.u32 %v283, 16
      %v595 = vrot.slane %v593, 5
      %v596 = vsel %vm330, %v591, %v595
      %v597 = vshrl.u32 %v283, 16
      %v599 = vrot.slane %v597, 4
      %v600 = vor.u32 %v599, %v595
      %v601 = vrot.slane %v600, 4
      %v603 = vshll.u32 %v284, 16
      %v605 = vrot.slane %v603, 5
      %v606 = vsel %vm330, %v601, %v605
      %v607 = vshrl.u32 %v284, 16
      %v609 = vrot.slane %v607, 4
      %v610 = vor.u32 %v609, %v605
      %v611 = vrot.slane %v610, 4
      %v613 = vshll.u32 %v285, 16
      %v615 = vrot.slane %v613, 5
      %v616 = vsel %vm330, %v611, %v615
      %v617 = vshrl.u32 %v285, 16
      %v619 = vrot.slane %v617, 4
      %v620 = vor.u32 %v619, %v615
      %v621 = vrot.slane %v620, 4
      %v623 = vshll.u32 %v286, 16
      %v625 = vrot.slane %v623, 5
      %v626 = vsel %vm330, %v621, %v625
      %v627 = vshrl.u32 %v286, 16
      %v629 = vrot.slane %v627, 4
      %v630 = vor.u32 %v629, %v625
      %v631 = vrot.slane %v630, 4
      %v633 = vshll.u32 %v287, 16
      %v635 = vrot.slane %v633, 5
      %v636 = vsel %vm330, %v631, %v635
      %v637 = vshrl.u32 %v287, 16
      %v639 = vrot.slane %v637, 4
      %v640 = vor.u32 %v639, %v635
      %v641 = vrot.slane %v640, 4
      %v643 = vshll.u32 %v288, 16
      %v645 = vrot.slane %v643, 5
      %v646 = vsel %vm330, %v641, %v645
      %v647 = vshrl.u32 %v288, 16
      %v649 = vrot.slane %v647, 4
      %v650 = vor.u32 %v649, %v645
      %v651 = vrot.slane %v650, 4
      %v653 = vshll.u32 %v289, 16
      %v655 = vrot.slane %v653, 5
      %v656 = vsel %vm330, %v651, %v655
      %v657 = vshrl.u32 %v289, 16
      %v659 = vrot.slane %v657, 4
      %v660 = vor.u32 %v659, %v655
      %v661 = vrot.slane %v660, 4
      %v663 = vshll.u32 %v290, 16
      %v665 = vrot.slane %v663, 5
      %v666 = vsel %vm330, %v661, %v665
      %v668 = vshrl.u32 %v291, 16
      %v670 = vrot.slane %v668, 4
      %v671 = vshll.u32 %v291, 16
      %v673 = vrot.slane %v671, 5
      %v674 = vor.u32 %v670, %v673
      %v675 = vrot.slane %v674, 4
      %v677 = vshll.u32 %v292, 16
      %v679 = vrot.slane %v677, 5
      %v680 = vsel %vm330, %v675, %v679
      %v681 = vshrl.u32 %v292, 16
      %v683 = vrot.slane %v681, 4
      %v684 = vor.u32 %v683, %v679
      %v685 = vrot.slane %v684, 4
      %v687 = vshll.u32 %v293, 16
      %v689 = vrot.slane %v687, 5
      %v690 = vsel %vm330, %v685, %v689
      %v691 = vshrl.u32 %v293, 16
      %v693 = vrot.slane %v691, 4
      %v694 = vor.u32 %v693, %v689
      %v695 = vrot.slane %v694, 4
      %v697 = vshll.u32 %v294, 16
      %v699 = vrot.slane %v697, 5
      %v700 = vsel %vm330, %v695, %v699
      %v701 = vshrl.u32 %v294, 16
      %v703 = vrot.slane %v701, 4
      %v704 = vor.u32 %v703, %v699
      %v705 = vrot.slane %v704, 4
      %v707 = vshll.u32 %v295, 16
      %v709 = vrot.slane %v707, 5
      %v710 = vsel %vm330, %v705, %v709
      %v711 = vshrl.u32 %v295, 16
      %v713 = vrot.slane %v711, 4
      %v714 = vor.u32 %v713, %v709
      %v715 = vrot.slane %v714, 4
      %v717 = vshll.u32 %v296, 16
      %v719 = vrot.slane %v717, 5
      %v720 = vsel %vm330, %v715, %v719
      %v721 = vshrl.u32 %v296, 16
      %v723 = vrot.slane %v721, 4
      %v724 = vor.u32 %v723, %v719
      %v725 = vrot.slane %v724, 4
      %v727 = vshll.u32 %v297, 16
      %v729 = vrot.slane %v727, 5
      %v730 = vsel %vm330, %v725, %v729
      %v731 = vshrl.u32 %v297, 16
      %v733 = vrot.slane %v731, 4
      %v734 = vor.u32 %v733, %v729
      %v735 = vrot.slane %v734, 4
      %v737 = vshll.u32 %v298, 16
      %v739 = vrot.slane %v737, 5
      %v740 = vsel %vm330, %v735, %v739
      %v741 = vshrl.u32 %v298, 16
      %v743 = vrot.slane %v741, 4
      %v744 = vor.u32 %v743, %v739
      %v745 = vrot.slane %v744, 4
      %v747 = vshll.u32 %v299, 16
      %v749 = vrot.slane %v747, 5
      %v750 = vsel %vm330, %v745, %v749
      %v752 = vshrl.u32 %v300, 16
      %v754 = vrot.slane %v752, 4
      %v755 = vshll.u32 %v300, 16
      %v757 = vrot.slane %v755, 5
      %v758 = vor.u32 %v754, %v757
      %v759 = vrot.slane %v758, 4
      %v761 = vshll.u32 %v301, 16
      %v763 = vrot.slane %v761, 5
      %v764 = vsel %vm330, %v759, %v763
      %v765 = vshrl.u32 %v301, 16
      %v767 = vrot.slane %v765, 4
      %v768 = vor.u32 %v767, %v763
      %v769 = vrot.slane %v768, 4
      %v771 = vshll.u32 %v302, 16
      %v773 = vrot.slane %v771, 5
      %v774 = vsel %vm330, %v769, %v773
      %v775 = vshrl.u32 %v302, 16
      %v777 = vrot.slane %v775, 4
      %v778 = vor.u32 %v777, %v773
      %v779 = vrot.slane %v778, 4
      %v781 = vshll.u32 %v303, 16
      %v783 = vrot.slane %v781, 5
      %v784 = vsel %vm330, %v779, %v783
      %v785 = vshrl.u32 %v303, 16
      %v787 = vrot.slane %v785, 4
      %v788 = vor.u32 %v787, %v783
      %v789 = vrot.slane %v788, 4
      %v791 = vshll.u32 %v304, 16
      %v793 = vrot.slane %v791, 5
      %v794 = vsel %vm330, %v789, %v793
      %v795 = vshrl.u32 %v304, 16
      %v797 = vrot.slane %v795, 4
      %v798 = vor.u32 %v797, %v793
      %v799 = vrot.slane %v798, 4
      %v801 = vshll.u32 %v305, 16
      %v803 = vrot.slane %v801, 5
      %v804 = vsel %vm330, %v799, %v803
      %v805 = vshrl.u32 %v305, 16
      %v807 = vrot.slane %v805, 4
      %v808 = vor.u32 %v807, %v803
      %v809 = vrot.slane %v808, 4
      %v811 = vshll.u32 %v306, 16
      %v813 = vrot.slane %v811, 5
      %v814 = vsel %vm330, %v809, %v813
      %v815 = vshrl.u32 %v306, 16
      %v817 = vrot.slane %v815, 4
      %v818 = vor.u32 %v817, %v813
      %v819 = vrot.slane %v818, 4
      %v821 = vshll.u32 %v307, 16
      %v823 = vrot.slane %v821, 5
      %v824 = vsel %vm330, %v819, %v823
      %v825 = vshrl.u32 %v307, 16
      %v827 = vrot.slane %v825, 4
      %v828 = vor.u32 %v827, %v823
      %v829 = vrot.slane %v828, 4
      %v831 = vshll.u32 %v308, 16
      %v833 = vrot.slane %v831, 5
      %v834 = vsel %vm330, %v829, %v833
      %v836 = vshrl.u32 %v309, 16
      %v838 = vrot.slane %v836, 4
      %v839 = vshll.u32 %v309, 16
      %v841 = vrot.slane %v839, 5
      %v842 = vor.u32 %v838, %v841
      %v843 = vrot.slane %v842, 4
      %v845 = vshll.u32 %v310, 16
      %v847 = vrot.slane %v845, 5
      %v848 = vsel %vm330, %v843, %v847
      %v849 = vshrl.u32 %v310, 16
      %v851 = vrot.slane %v849, 4
      %v852 = vor.u32 %v851, %v847
      %v853 = vrot.slane %v852, 4
      %v855 = vshll.u32 %v311, 16
      %v857 = vrot.slane %v855, 5
      %v858 = vsel %vm330, %v853, %v857
      %v859 = vshrl.u32 %v311, 16
      %v861 = vrot.slane %v859, 4
      %v862 = vor.u32 %v861, %v857
      %v863 = vrot.slane %v862, 4
      %v865 = vshll.u32 %v312, 16
      %v867 = vrot.slane %v865, 5
      %v868 = vsel %vm330, %v863, %v867
      %v869 = vshrl.u32 %v312, 16
      %v871 = vrot.slane %v869, 4
      %v872 = vor.u32 %v871, %v867
      %v873 = vrot.slane %v872, 4
      %v875 = vshll.u32 %v313, 16
      %v877 = vrot.slane %v875, 5
      %v878 = vsel %vm330, %v873, %v877
      %v879 = vshrl.u32 %v313, 16
      %v881 = vrot.slane %v879, 4
      %v882 = vor.u32 %v881, %v877
      %v883 = vrot.slane %v882, 4
      %v885 = vshll.u32 %v314, 16
      %v887 = vrot.slane %v885, 5
      %v888 = vsel %vm330, %v883, %v887
      %v889 = vshrl.u32 %v314, 16
      %v891 = vrot.slane %v889, 4
      %v892 = vor.u32 %v891, %v887
      %v893 = vrot.slane %v892, 4
      %v895 = vshll.u32 %v315, 16
      %v897 = vrot.slane %v895, 5
      %v898 = vsel %vm330, %v893, %v897
      %v899 = vshrl.u32 %v315, 16
      %v901 = vrot.slane %v899, 4
      %v902 = vor.u32 %v901, %v897
      %v903 = vrot.slane %v902, 4
      %v905 = vshll.u32 %v316, 16
      %v907 = vrot.slane %v905, 5
      %v908 = vsel %vm330, %v903, %v907
      %v909 = vshrl.u32 %v316, 16
      %v911 = vrot.slane %v909, 4
      %v912 = vor.u32 %v911, %v907
      %v913 = vrot.slane %v912, 4
      %v915 = vshll.u32 %v317, 16
      %v917 = vrot.slane %v915, 5
      %v918 = vsel %vm330, %v913, %v917
      %v920 = vshrl.u32 %v318, 16
      %v922 = vrot.slane %v920, 4
      %v923 = vshll.u32 %v318, 16
      %v925 = vrot.slane %v923, 5
      %v926 = vor.u32 %v922, %v925
      %v927 = vrot.slane %v926, 4
      %v929 = vshll.u32 %v319, 16
      %v931 = vrot.slane %v929, 5
      %v932 = vsel %vm330, %v927, %v931
      %v933 = vshrl.u32 %v319, 16
      %v935 = vrot.slane %v933, 4
      %v936 = vor.u32 %v935, %v931
      %v937 = vrot.slane %v936, 4
      %v939 = vshll.u32 %v320, 16
      %v941 = vrot.slane %v939, 5
      %v942 = vsel %vm330, %v937, %v941
      %v943 = vshrl.u32 %v320, 16
      %v945 = vrot.slane %v943, 4
      %v946 = vor.u32 %v945, %v941
      %v947 = vrot.slane %v946, 4
      %v949 = vshll.u32 %v321, 16
      %v951 = vrot.slane %v949, 5
      %v952 = vsel %vm330, %v947, %v951
      %v953 = vshrl.u32 %v321, 16
      %v955 = vrot.slane %v953, 4
      %v956 = vor.u32 %v955, %v951
      %v957 = vrot.slane %v956, 4
      %v959 = vshll.u32 %v322, 16
      %v961 = vrot.slane %v959, 5
      %v962 = vsel %vm330, %v957, %v961
      %v963 = vshrl.u32 %v322, 16
      %v965 = vrot.slane %v963, 4
      %v966 = vor.u32 %v965, %v961
      %v967 = vrot.slane %v966, 4
      %v969 = vshll.u32 %v323, 16
      %v971 = vrot.slane %v969, 5
      %v972 = vsel %vm330, %v967, %v971
      %v973 = vshrl.u32 %v323, 16
      %v975 = vrot.slane %v973, 4
      %v976 = vor.u32 %v975, %v971
      %v977 = vrot.slane %v976, 4
      %v979 = vshll.u32 %v324, 16
      %v981 = vrot.slane %v979, 5
      %v982 = vsel %vm330, %v977, %v981
      %v983 = vshrl.u32 %v324, 16
      %v985 = vrot.slane %v983, 4
      %v986 = vor.u32 %v985, %v981
      %v987 = vrot.slane %v986, 4
      %v989 = vshll.u32 %v325, 16
      %v991 = vrot.slane %v989, 5
      %v992 = vsel %vm330, %v987, %v991
      %v993 = vshrl.u32 %v325, 16
      %v995 = vrot.slane %v993, 4
      %v996 = vor.u32 %v995, %v991
      %v997 = vrot.slane %v996, 4
      %v999 = vshll.u32 %v326, 16
      %v1001 = vrot.slane %v999, 5
      %v1002 = vsel %vm330, %v997, %v1001
      %s1003 = scalar_lea.vmem %s1, 2
      %v1004 = vld [vmem:[%s1003] sm:$0x3]
      %v1005 = vunpack.c.l.b16 %v344
      %v1006 = vunpack.c.l.b16 %v354
      %v1007 = vunpack.c.l.b16 %v364
      %v1008 = vunpack.c.l.b16 %v374
      %v1009 = vunpack.c.l.b16 %v384
      %v1010 = vunpack.c.l.b16 %v394
      %v1011 = vunpack.c.l.b16 %v404
      %v1012 = vunpack.c.l.b16 %v414
      %v1013 = vunpack.c.l.b16 %v428
      %v1014 = vunpack.c.l.b16 %v438
      %v1015 = vunpack.c.l.b16 %v448
      %v1016 = vunpack.c.l.b16 %v458
      %v1017 = vunpack.c.l.b16 %v468
      %v1018 = vunpack.c.l.b16 %v478
      %v1019 = vunpack.c.l.b16 %v488
      %v1020 = vunpack.c.l.b16 %v498
      %v1021 = vunpack.c.l.b16 %v512
      %v1022 = vunpack.c.l.b16 %v522
      %v1023 = vunpack.c.l.b16 %v532
      %v1024 = vunpack.c.l.b16 %v542
      %v1025 = vunpack.c.l.b16 %v552
      %v1026 = vunpack.c.l.b16 %v562
      %v1027 = vunpack.c.l.b16 %v572
      %v1028 = vunpack.c.l.b16 %v582
      %v1029 = vunpack.c.l.b16 %v596
      %v1030 = vunpack.c.l.b16 %v606
      %v1031 = vunpack.c.l.b16 %v616
      %v1032 = vunpack.c.l.b16 %v626
      %v1033 = vunpack.c.l.b16 %v636
      %v1034 = vunpack.c.l.b16 %v646
      %v1035 = vunpack.c.l.b16 %v656
      %v1036 = vunpack.c.l.b16 %v666
      %v1037 = vunpack.c.l.b16 %v680
      %v1038 = vunpack.c.l.b16 %v690
      %v1039 = vunpack.c.l.b16 %v700
      %v1040 = vunpack.c.l.b16 %v710
      %v1041 = vunpack.c.l.b16 %v720
      %v1042 = vunpack.c.l.b16 %v730
      %v1043 = vunpack.c.l.b16 %v740
      %v1044 = vunpack.c.l.b16 %v750
      %v1045 = vunpack.c.l.b16 %v764
      %v1046 = vunpack.c.l.b16 %v774
      %v1047 = vunpack.c.l.b16 %v784
      %v1048 = vunpack.c.l.b16 %v794
      %v1049 = vunpack.c.l.b16 %v804
      %v1050 = vunpack.c.l.b16 %v814
      %v1051 = vunpack.c.l.b16 %v824
      %v1052 = vunpack.c.l.b16 %v834
      %v1053 = vunpack.c.l.b16 %v848
      %v1054 = vunpack.c.l.b16 %v858
      %v1055 = vunpack.c.l.b16 %v868
      %v1056 = vunpack.c.l.b16 %v878
      %v1057 = vunpack.c.l.b16 %v888
      %v1058 = vunpack.c.l.b16 %v898
      %v1059 = vunpack.c.l.b16 %v908
      %v1060 = vunpack.c.l.b16 %v918
      %v1061 = vunpack.c.l.b16 %v932
      %v1062 = vunpack.c.l.b16 %v942
      %v1063 = vunpack.c.l.b16 %v952
      %v1064 = vunpack.c.l.b16 %v962
      %v1065 = vunpack.c.l.b16 %v972
      %v1066 = vunpack.c.l.b16 %v982
      %v1067 = vunpack.c.l.b16 %v992
      %v1068 = vunpack.c.l.b16 %v1002
      %v1069 = vpack.c.b16 %v1006, %v1005
      %v1070 = vpack.c.b16 %v1008, %v1007
      %v1071 = vpack.c.b16 %v1010, %v1009
      %v1072 = vpack.c.b16 %v1012, %v1011
      %v1073 = vpack.c.b16 %v1014, %v1013
      %v1074 = vpack.c.b16 %v1016, %v1015
      %v1075 = vpack.c.b16 %v1018, %v1017
      %v1076 = vpack.c.b16 %v1020, %v1019
      %v1077 = vpack.c.b16 %v1022, %v1021
      %v1078 = vpack.c.b16 %v1024, %v1023
      %v1079 = vpack.c.b16 %v1026, %v1025
      %v1080 = vpack.c.b16 %v1028, %v1027
      %v1081 = vpack.c.b16 %v1030, %v1029
      %v1082 = vpack.c.b16 %v1032, %v1031
      %v1083 = vpack.c.b16 %v1034, %v1033
      %v1084 = vpack.c.b16 %v1036, %v1035
      %v1085 = vpack.c.b16 %v1038, %v1037
      %v1086 = vpack.c.b16 %v1040, %v1039
      %v1087 = vpack.c.b16 %v1042, %v1041
      %v1088 = vpack.c.b16 %v1044, %v1043
      %v1089 = vpack.c.b16 %v1046, %v1045
      %v1090 = vpack.c.b16 %v1048, %v1047
      %v1091 = vpack.c.b16 %v1050, %v1049
      %v1092 = vpack.c.b16 %v1052, %v1051
      %v1093 = vpack.c.b16 %v1054, %v1053
      %v1094 = vpack.c.b16 %v1056, %v1055
      %v1095 = vpack.c.b16 %v1058, %v1057
      %v1096 = vpack.c.b16 %v1060, %v1059
      %v1097 = vpack.c.b16 %v1062, %v1061
      %v1098 = vpack.c.b16 %v1064, %v1063
      %v1099 = vpack.c.b16 %v1066, %v1065
      %v1100 = vpack.c.b16 %v1068, %v1067
      %vm1101 = vcmask 31744
      %v1103 = vsel %vm1101, %v1069, 0
      %v1106 = vsel %vm1101, %v1070, 0
      %v1109 = vsel %vm1101, %v1071, 0
      %v1112 = vsel %vm1101, %v1072, 0
      %v1115 = vsel %vm1101, %v1073, 0
      %v1118 = vsel %vm1101, %v1074, 0
      %v1121 = vsel %vm1101, %v1075, 0
      %v1124 = vsel %vm1101, %v1076, 0
      %v1127 = vsel %vm1101, %v1077, 0
      %v1130 = vsel %vm1101, %v1078, 0
      %v1133 = vsel %vm1101, %v1079, 0
      %v1136 = vsel %vm1101, %v1080, 0
      %v1139 = vsel %vm1101, %v1081, 0
      %v1142 = vsel %vm1101, %v1082, 0
      %v1145 = vsel %vm1101, %v1083, 0
      %v1148 = vsel %vm1101, %v1084, 0
      %v1151 = vsel %vm1101, %v1085, 0
      %v1154 = vsel %vm1101, %v1086, 0
      %v1157 = vsel %vm1101, %v1087, 0
      %v1160 = vsel %vm1101, %v1088, 0
      %v1163 = vsel %vm1101, %v1089, 0
      %v1166 = vsel %vm1101, %v1090, 0
      %v1169 = vsel %vm1101, %v1091, 0
      %v1172 = vsel %vm1101, %v1092, 0
      %v1175 = vsel %vm1101, %v1093, 0
      %v1178 = vsel %vm1101, %v1094, 0
      %v1181 = vsel %vm1101, %v1095, 0
      %v1184 = vsel %vm1101, %v1096, 0
      %v1187 = vsel %vm1101, %v1097, 0
      %v1190 = vsel %vm1101, %v1098, 0
      %v1193 = vsel %vm1101, %v1099, 0
      %v1196 = vsel %vm1101, %v1100, 0
      %vm1198 = vcmask 1041408
      %v1200 = vsel %vm1198, %v1004, 0
      %1202 = vmatprep.subr.bf16.mxu0 0
      %1203 = vmatpush1.bf16.msra.mxu0 0
      %1204 = vmatprep.subr.bf16.mxu0 0
      %1205 = vmatpush1.bf16.msra.mxu0 0
      %1206 = vmatprep.subr.bf16.mxu0 0
      %1207 = vmatpush1.bf16.msra.mxu0 0
      %1208 = vmatprep.subr.bf16.mxu0 0
      %1209 = vmatpush1.bf16.msra.mxu0 0
      %1210 = vmatprep.subr.bf16.mxu0 0
      %1211 = vmatpush1.bf16.msra.mxu0 0
      %1212 = vmatprep.subr.bf16.mxu0 0
      %1213 = vmatpush1.bf16.msra.mxu0 0
      %1214 = vmatprep.subr.bf16.mxu0 0
      %1215 = vmatpush1.bf16.msra.mxu0 0
      %1216 = vmatprep.subr.bf16.mxu0 0
      %1217 = vmatpush1.bf16.msra.mxu0 %v1200
      %1218 = vmatprep.subr.bf16.mxu0 0
      %1219 = vmatpush2.bf16.msra.mxu0 0
      %1220 = vmatprep.subr.bf16.mxu0 0
      %1221 = vmatpush2.bf16.msra.mxu0 0
      %1222 = vmatprep.subr.bf16.mxu0 0
      %1223 = vmatpush2.bf16.msra.mxu0 0
      %1224 = vmatprep.subr.bf16.mxu0 0
      %1225 = vmatpush2.bf16.msra.mxu0 0
      %1226 = vmatprep.subr.bf16.mxu0 0
      %1227 = vmatpush2.bf16.msra.mxu0 0
      %1228 = vmatprep.subr.bf16.mxu0 0
      %1229 = vmatpush2.bf16.msra.mxu0 0
      %1230 = vmatprep.subr.bf16.mxu0 0
      %1231 = vmatpush2.bf16.msra.mxu0 0
      %1232 = vmatprep.subr.bf16.mxu0 0
      %1233 = vmatpush2.bf16.msra.mxu0 0
      %1234 = vmatprep.mubr.bf16.mxu0 0
      %1235 = vmatmul.mubr.bf16.gmra.mxu0 %v1103
      %v1236 = vpop.f32.mrf.mxu0
      %v1237 = vadd.f32 0.0, %v1236
      %v1238 = vpop.f32.mrf.mxu0
      %v1239 = vpop.f32.mrf.mxu0
      %v1240 = vadd.f32 0.0, %v1239
      %v1241 = vpop.f32.mrf.mxu0
      %1242 = vmatprep.mubr.bf16.mxu0 0
      %1243 = vmatmul.mubr.bf16.gmra.mxu0 %v1106
      %v1244 = vpop.f32.mrf.mxu0
      %v1245 = vadd.f32 0.0, %v1244
      %v1246 = vpop.f32.mrf.mxu0
      %v1247 = vpop.f32.mrf.mxu0
      %v1248 = vadd.f32 0.0, %v1247
      %v1249 = vpop.f32.mrf.mxu0
      %1250 = vmatprep.mubr.bf16.mxu0 0
      %1251 = vmatmul.mubr.bf16.gmra.mxu0 %v1109
      %v1252 = vpop.f32.mrf.mxu0
      %v1253 = vadd.f32 0.0, %v1252
      %v1254 = vpop.f32.mrf.mxu0
      %v1255 = vpop.f32.mrf.mxu0
      %v1256 = vadd.f32 0.0, %v1255
      %v1257 = vpop.f32.mrf.mxu0
      %1258 = vmatprep.mubr.bf16.mxu0 0
      %1259 = vmatmul.mubr.bf16.gmra.mxu0 %v1112
      %v1260 = vpop.f32.mrf.mxu0
      %v1261 = vadd.f32 0.0, %v1260
      %v1262 = vpop.f32.mrf.mxu0
      %v1263 = vpop.f32.mrf.mxu0
      %v1264 = vadd.f32 0.0, %v1263
      %v1265 = vpop.f32.mrf.mxu0
      %1266 = vmatprep.mubr.bf16.mxu0 0
      %1267 = vmatmul.mubr.bf16.gmra.mxu0 %v1115
      %v1268 = vpop.f32.mrf.mxu0
      %v1269 = vadd.f32 0.0, %v1268
      %v1270 = vpop.f32.mrf.mxu0
      %v1271 = vpop.f32.mrf.mxu0
      %v1272 = vadd.f32 0.0, %v1271
      %v1273 = vpop.f32.mrf.mxu0
      %1274 = vmatprep.mubr.bf16.mxu0 0
      %1275 = vmatmul.mubr.bf16.gmra.mxu0 %v1118
      %v1276 = vpop.f32.mrf.mxu0
      %v1277 = vadd.f32 0.0, %v1276
      %v1278 = vpop.f32.mrf.mxu0
      %v1279 = vpop.f32.mrf.mxu0
      %v1280 = vadd.f32 0.0, %v1279
      %v1281 = vpop.f32.mrf.mxu0
      %1282 = vmatprep.mubr.bf16.mxu0 0
      %1283 = vmatmul.mubr.bf16.gmra.mxu0 %v1121
      %v1284 = vpop.f32.mrf.mxu0
      %v1285 = vadd.f32 0.0, %v1284
      %v1286 = vpop.f32.mrf.mxu0
      %v1287 = vpop.f32.mrf.mxu0
      %v1288 = vadd.f32 0.0, %v1287
      %v1289 = vpop.f32.mrf.mxu0
      %1290 = vmatprep.mubr.bf16.mxu0 0
      %1291 = vmatmul.mubr.bf16.gmra.mxu0 %v1124
      %v1292 = vpop.f32.mrf.mxu0
      %v1293 = vadd.f32 0.0, %v1292
      %v1294 = vpop.f32.mrf.mxu0
      %v1295 = vpop.f32.mrf.mxu0
      %v1296 = vadd.f32 0.0, %v1295
      %v1297 = vpop.f32.mrf.mxu0
      %1298 = vmatprep.mubr.bf16.mxu0 0
      %1299 = vmatmul.mubr.bf16.gmra.mxu0 %v1127
      %v1300 = vpop.f32.mrf.mxu0
      %v1301 = vadd.f32 0.0, %v1300
      %v1302 = vpop.f32.mrf.mxu0
      %v1303 = vpop.f32.mrf.mxu0
      %v1304 = vadd.f32 0.0, %v1303
      %v1305 = vpop.f32.mrf.mxu0
      %1306 = vmatprep.mubr.bf16.mxu0 0
      %1307 = vmatmul.mubr.bf16.gmra.mxu0 %v1130
      %v1308 = vpop.f32.mrf.mxu0
      %v1309 = vadd.f32 0.0, %v1308
      %v1310 = vpop.f32.mrf.mxu0
      %v1311 = vpop.f32.mrf.mxu0
      %v1312 = vadd.f32 0.0, %v1311
      %v1313 = vpop.f32.mrf.mxu0
      %1314 = vmatprep.mubr.bf16.mxu0 0
      %1315 = vmatmul.mubr.bf16.gmra.mxu0 %v1133
      %v1316 = vpop.f32.mrf.mxu0
      %v1317 = vadd.f32 0.0, %v1316
      %v1318 = vpop.f32.mrf.mxu0
      %v1319 = vpop.f32.mrf.mxu0
      %v1320 = vadd.f32 0.0, %v1319
      %v1321 = vpop.f32.mrf.mxu0
      %1322 = vmatprep.mubr.bf16.mxu0 0
      %1323 = vmatmul.mubr.bf16.gmra.mxu0 %v1136
      %v1324 = vpop.f32.mrf.mxu0
      %v1325 = vadd.f32 0.0, %v1324
      %v1326 = vpop.f32.mrf.mxu0
      %v1327 = vpop.f32.mrf.mxu0
      %v1328 = vadd.f32 0.0, %v1327
      %v1329 = vpop.f32.mrf.mxu0
      %1330 = vmatprep.mubr.bf16.mxu0 0
      %1331 = vmatmul.mubr.bf16.gmra.mxu0 %v1139
      %v1332 = vpop.f32.mrf.mxu0
      %v1333 = vadd.f32 0.0, %v1332
      %v1334 = vpop.f32.mrf.mxu0
      %v1335 = vpop.f32.mrf.mxu0
      %v1336 = vadd.f32 0.0, %v1335
      %v1337 = vpop.f32.mrf.mxu0
      %1338 = vmatprep.mubr.bf16.mxu0 0
      %1339 = vmatmul.mubr.bf16.gmra.mxu0 %v1142
      %v1340 = vpop.f32.mrf.mxu0
      %v1341 = vadd.f32 0.0, %v1340
      %v1342 = vpop.f32.mrf.mxu0
      %v1343 = vpop.f32.mrf.mxu0
      %v1344 = vadd.f32 0.0, %v1343
      %v1345 = vpop.f32.mrf.mxu0
      %1346 = vmatprep.mubr.bf16.mxu0 0
      %1347 = vmatmul.mubr.bf16.gmra.mxu0 %v1145
      %v1348 = vpop.f32.mrf.mxu0
      %v1349 = vadd.f32 0.0, %v1348
      %v1350 = vpop.f32.mrf.mxu0
      %v1351 = vpop.f32.mrf.mxu0
      %v1352 = vadd.f32 0.0, %v1351
      %v1353 = vpop.f32.mrf.mxu0
      %1354 = vmatprep.mubr.bf16.mxu0 0
      %1355 = vmatmul.mubr.bf16.gmra.mxu0 %v1148
      %v1356 = vpop.f32.mrf.mxu0
      %v1357 = vadd.f32 0.0, %v1356
      %v1358 = vpop.f32.mrf.mxu0
      %v1359 = vpop.f32.mrf.mxu0
      %v1360 = vadd.f32 0.0, %v1359
      %v1361 = vpop.f32.mrf.mxu0
      %1362 = vmatprep.mubr.bf16.mxu0 0
      %1363 = vmatmul.mubr.bf16.gmra.mxu0 %v1151
      %v1364 = vpop.f32.mrf.mxu0
      %v1365 = vadd.f32 0.0, %v1364
      %v1366 = vpop.f32.mrf.mxu0
      %v1367 = vpop.f32.mrf.mxu0
      %v1368 = vadd.f32 0.0, %v1367
      %v1369 = vpop.f32.mrf.mxu0
      %1370 = vmatprep.mubr.bf16.mxu0 0
      %1371 = vmatmul.mubr.bf16.gmra.mxu0 %v1154
      %v1372 = vpop.f32.mrf.mxu0
      %v1373 = vadd.f32 0.0, %v1372
      %v1374 = vpop.f32.mrf.mxu0
      %v1375 = vpop.f32.mrf.mxu0
      %v1376 = vadd.f32 0.0, %v1375
      %v1377 = vpop.f32.mrf.mxu0
      %1378 = vmatprep.mubr.bf16.mxu0 0
      %1379 = vmatmul.mubr.bf16.gmra.mxu0 %v1157
      %v1380 = vpop.f32.mrf.mxu0
      %v1381 = vadd.f32 0.0, %v1380
      %v1382 = vpop.f32.mrf.mxu0
      %v1383 = vpop.f32.mrf.mxu0
      %v1384 = vadd.f32 0.0, %v1383
      %v1385 = vpop.f32.mrf.mxu0
      %1386 = vmatprep.mubr.bf16.mxu0 0
      %1387 = vmatmul.mubr.bf16.gmra.mxu0 %v1160
      %v1388 = vpop.f32.mrf.mxu0
      %v1389 = vadd.f32 0.0, %v1388
      %v1390 = vpop.f32.mrf.mxu0
      %v1391 = vpop.f32.mrf.mxu0
      %v1392 = vadd.f32 0.0, %v1391
      %v1393 = vpop.f32.mrf.mxu0
      %1394 = vmatprep.mubr.bf16.mxu0 0
      %1395 = vmatmul.mubr.bf16.gmra.mxu0 %v1163
      %v1396 = vpop.f32.mrf.mxu0
      %v1397 = vadd.f32 0.0, %v1396
      %v1398 = vpop.f32.mrf.mxu0
      %v1399 = vpop.f32.mrf.mxu0
      %v1400 = vadd.f32 0.0, %v1399
      %v1401 = vpop.f32.mrf.mxu0
      %1402 = vmatprep.mubr.bf16.mxu0 0
      %1403 = vmatmul.mubr.bf16.gmra.mxu0 %v1166
      %v1404 = vpop.f32.mrf.mxu0
      %v1405 = vadd.f32 0.0, %v1404
      %v1406 = vpop.f32.mrf.mxu0
      %v1407 = vpop.f32.mrf.mxu0
      %v1408 = vadd.f32 0.0, %v1407
      %v1409 = vpop.f32.mrf.mxu0
      %1410 = vmatprep.mubr.bf16.mxu0 0
      %1411 = vmatmul.mubr.bf16.gmra.mxu0 %v1169
      %v1412 = vpop.f32.mrf.mxu0
      %v1413 = vadd.f32 0.0, %v1412
      %v1414 = vpop.f32.mrf.mxu0
      %v1415 = vpop.f32.mrf.mxu0
      %v1416 = vadd.f32 0.0, %v1415
      %v1417 = vpop.f32.mrf.mxu0
      %1418 = vmatprep.mubr.bf16.mxu0 0
      %1419 = vmatmul.mubr.bf16.gmra.mxu0 %v1172
      %v1420 = vpop.f32.mrf.mxu0
      %v1421 = vadd.f32 0.0, %v1420
      %v1422 = vpop.f32.mrf.mxu0
      %v1423 = vpop.f32.mrf.mxu0
      %v1424 = vadd.f32 0.0, %v1423
      %v1425 = vpop.f32.mrf.mxu0
      %1426 = vmatprep.mubr.bf16.mxu0 0
      %1427 = vmatmul.mubr.bf16.gmra.mxu0 %v1175
      %v1428 = vpop.f32.mrf.mxu0
      %v1429 = vadd.f32 0.0, %v1428
      %v1430 = vpop.f32.mrf.mxu0
      %v1431 = vpop.f32.mrf.mxu0
      %v1432 = vadd.f32 0.0, %v1431
      %v1433 = vpop.f32.mrf.mxu0
      %1434 = vmatprep.mubr.bf16.mxu0 0
      %1435 = vmatmul.mubr.bf16.gmra.mxu0 %v1178
      %v1436 = vpop.f32.mrf.mxu0
      %v1437 = vadd.f32 0.0, %v1436
      %v1438 = vpop.f32.mrf.mxu0
      %v1439 = vpop.f32.mrf.mxu0
      %v1440 = vadd.f32 0.0, %v1439
      %v1441 = vpop.f32.mrf.mxu0
      %1442 = vmatprep.mubr.bf16.mxu0 0
      %1443 = vmatmul.mubr.bf16.gmra.mxu0 %v1181
      %v1444 = vpop.f32.mrf.mxu0
      %v1445 = vadd.f32 0.0, %v1444
      %v1446 = vpop.f32.mrf.mxu0
      %v1447 = vpop.f32.mrf.mxu0
      %v1448 = vadd.f32 0.0, %v1447
      %v1449 = vpop.f32.mrf.mxu0
      %1450 = vmatprep.mubr.bf16.mxu0 0
      %1451 = vmatmul.mubr.bf16.gmra.mxu0 %v1184
      %v1452 = vpop.f32.mrf.mxu0
      %v1453 = vadd.f32 0.0, %v1452
      %v1454 = vpop.f32.mrf.mxu0
      %v1455 = vpop.f32.mrf.mxu0
      %v1456 = vadd.f32 0.0, %v1455
      %v1457 = vpop.f32.mrf.mxu0
      %1458 = vmatprep.mubr.bf16.mxu0 0
      %1459 = vmatmul.mubr.bf16.gmra.mxu0 %v1187
      %v1460 = vpop.f32.mrf.mxu0
      %v1461 = vadd.f32 0.0, %v1460
      %v1462 = vpop.f32.mrf.mxu0
      %v1463 = vpop.f32.mrf.mxu0
      %v1464 = vadd.f32 0.0, %v1463
      %v1465 = vpop.f32.mrf.mxu0
      %1466 = vmatprep.mubr.bf16.mxu0 0
      %1467 = vmatmul.mubr.bf16.gmra.mxu0 %v1190
      %v1468 = vpop.f32.mrf.mxu0
      %v1469 = vadd.f32 0.0, %v1468
      %v1470 = vpop.f32.mrf.mxu0
      %v1471 = vpop.f32.mrf.mxu0
      %v1472 = vadd.f32 0.0, %v1471
      %v1473 = vpop.f32.mrf.mxu0
      %1474 = vmatprep.mubr.bf16.mxu0 0
      %1475 = vmatmul.mubr.bf16.gmra.mxu0 %v1193
      %v1476 = vpop.f32.mrf.mxu0
      %v1477 = vadd.f32 0.0, %v1476
      %v1478 = vpop.f32.mrf.mxu0
      %v1479 = vpop.f32.mrf.mxu0
      %v1480 = vadd.f32 0.0, %v1479
      %v1481 = vpop.f32.mrf.mxu0
      %1482 = vmatprep.mubr.bf16.mxu0 0
      %1483 = vmatmul.mubr.bf16.gmra.mxu0 %v1196
      %v1484 = vpop.f32.mrf.mxu0
      %v1485 = vadd.f32 0.0, %v1484
      %v1486 = vpop.f32.mrf.mxu0
      %v1487 = vpop.f32.mrf.mxu0
      %v1488 = vadd.f32 0.0, %v1487
      %v1489 = vpop.f32.mrf.mxu0
      %1490 = vdwg.mxu0
      %v1555 = vunpack.c.l.b16 %v255
      %v1556 = vunpack.c.l.b16 %v256
      %v1557 = vunpack.c.l.b16 %v257
      %v1558 = vunpack.c.l.b16 %v258
      %v1559 = vunpack.c.l.b16 %v259
      %v1560 = vunpack.c.l.b16 %v260
      %v1561 = vunpack.c.l.b16 %v261
      %v1562 = vunpack.c.l.b16 %v262
      %v1563 = vunpack.c.l.b16 %v264
      %v1564 = vunpack.c.l.b16 %v265
      %v1565 = vunpack.c.l.b16 %v266
      %v1566 = vunpack.c.l.b16 %v267
      %v1567 = vunpack.c.l.b16 %v268
      %v1568 = vunpack.c.l.b16 %v269
      %v1569 = vunpack.c.l.b16 %v270
      %v1570 = vunpack.c.l.b16 %v271
      %v1571 = vunpack.c.l.b16 %v273
      %v1572 = vunpack.c.l.b16 %v274
      %v1573 = vunpack.c.l.b16 %v275
      %v1574 = vunpack.c.l.b16 %v276
      %v1575 = vunpack.c.l.b16 %v277
      %v1576 = vunpack.c.l.b16 %v278
      %v1577 = vunpack.c.l.b16 %v279
      %v1578 = vunpack.c.l.b16 %v280
      %v1579 = vunpack.c.l.b16 %v282
      %v1580 = vunpack.c.l.b16 %v283
      %v1581 = vunpack.c.l.b16 %v284
      %v1582 = vunpack.c.l.b16 %v285
      %v1583 = vunpack.c.l.b16 %v286
      %v1584 = vunpack.c.l.b16 %v287
      %v1585 = vunpack.c.l.b16 %v288
      %v1586 = vunpack.c.l.b16 %v289
      %v1587 = vunpack.c.l.b16 %v291
      %v1588 = vunpack.c.l.b16 %v292
      %v1589 = vunpack.c.l.b16 %v293
      %v1590 = vunpack.c.l.b16 %v294
      %v1591 = vunpack.c.l.b16 %v295
      %v1592 = vunpack.c.l.b16 %v296
      %v1593 = vunpack.c.l.b16 %v297
      %v1594 = vunpack.c.l.b16 %v298
      %v1595 = vunpack.c.l.b16 %v300
      %v1596 = vunpack.c.l.b16 %v301
      %v1597 = vunpack.c.l.b16 %v302
      %v1598 = vunpack.c.l.b16 %v303
      %v1599 = vunpack.c.l.b16 %v304
      %v1600 = vunpack.c.l.b16 %v305
      %v1601 = vunpack.c.l.b16 %v306
      %v1602 = vunpack.c.l.b16 %v307
      %v1603 = vunpack.c.l.b16 %v309
      %v1604 = vunpack.c.l.b16 %v310
      %v1605 = vunpack.c.l.b16 %v311
      %v1606 = vunpack.c.l.b16 %v312
      %v1607 = vunpack.c.l.b16 %v313
      %v1608 = vunpack.c.l.b16 %v314
      %v1609 = vunpack.c.l.b16 %v315
      %v1610 = vunpack.c.l.b16 %v316
      %v1611 = vunpack.c.l.b16 %v318
      %v1612 = vunpack.c.l.b16 %v319
      %v1613 = vunpack.c.l.b16 %v320
      %v1614 = vunpack.c.l.b16 %v321
      %v1615 = vunpack.c.l.b16 %v322
      %v1616 = vunpack.c.l.b16 %v323
      %v1617 = vunpack.c.l.b16 %v324
      %v1618 = vunpack.c.l.b16 %v325
      %v1619 = vpack.c.b16 %v1556, %v1555
      %v1620 = vpack.c.b16 %v1558, %v1557
      %v1621 = vpack.c.b16 %v1560, %v1559
      %v1622 = vpack.c.b16 %v1562, %v1561
      %v1623 = vpack.c.b16 %v1564, %v1563
      %v1624 = vpack.c.b16 %v1566, %v1565
      %v1625 = vpack.c.b16 %v1568, %v1567
      %v1626 = vpack.c.b16 %v1570, %v1569
      %v1627 = vpack.c.b16 %v1572, %v1571
      %v1628 = vpack.c.b16 %v1574, %v1573
      %v1629 = vpack.c.b16 %v1576, %v1575
      %v1630 = vpack.c.b16 %v1578, %v1577
      %v1631 = vpack.c.b16 %v1580, %v1579
      %v1632 = vpack.c.b16 %v1582, %v1581
      %v1633 = vpack.c.b16 %v1584, %v1583
      %v1634 = vpack.c.b16 %v1586, %v1585
      %v1635 = vpack.c.b16 %v1588, %v1587
      %v1636 = vpack.c.b16 %v1590, %v1589
      %v1637 = vpack.c.b16 %v1592, %v1591
      %v1638 = vpack.c.b16 %v1594, %v1593
      %v1639 = vpack.c.b16 %v1596, %v1595
      %v1640 = vpack.c.b16 %v1598, %v1597
      %v1641 = vpack.c.b16 %v1600, %v1599
      %v1642 = vpack.c.b16 %v1602, %v1601
      %v1643 = vpack.c.b16 %v1604, %v1603
      %v1644 = vpack.c.b16 %v1606, %v1605
      %v1645 = vpack.c.b16 %v1608, %v1607
      %v1646 = vpack.c.b16 %v1610, %v1609
      %v1647 = vpack.c.b16 %v1612, %v1611
      %v1648 = vpack.c.b16 %v1614, %v1613
      %v1649 = vpack.c.b16 %v1616, %v1615
      %v1650 = vpack.c.b16 %v1618, %v1617
      %v1652 = vsel %vm1101, %v1619, 0
      %v1655 = vsel %vm1101, %v1620, 0
      %v1658 = vsel %vm1101, %v1621, 0
      %v1661 = vsel %vm1101, %v1622, 0
      %v1664 = vsel %vm1101, %v1623, 0
      %v1667 = vsel %vm1101, %v1624, 0
      %v1670 = vsel %vm1101, %v1625, 0
      %v1673 = vsel %vm1101, %v1626, 0
      %v1676 = vsel %vm1101, %v1627, 0
      %v1679 = vsel %vm1101, %v1628, 0
      %v1682 = vsel %vm1101, %v1629, 0
      %v1685 = vsel %vm1101, %v1630, 0
      %v1688 = vsel %vm1101, %v1631, 0
      %v1691 = vsel %vm1101, %v1632, 0
      %v1694 = vsel %vm1101, %v1633, 0
      %v1697 = vsel %vm1101, %v1634, 0
      %v1700 = vsel %vm1101, %v1635, 0
      %v1703 = vsel %vm1101, %v1636, 0
      %v1706 = vsel %vm1101, %v1637, 0
      %v1709 = vsel %vm1101, %v1638, 0
      %v1712 = vsel %vm1101, %v1639, 0
      %v1715 = vsel %vm1101, %v1640, 0
      %v1718 = vsel %vm1101, %v1641, 0
      %v1721 = vsel %vm1101, %v1642, 0
      %v1724 = vsel %vm1101, %v1643, 0
      %v1727 = vsel %vm1101, %v1644, 0
      %v1730 = vsel %vm1101, %v1645, 0
      %v1733 = vsel %vm1101, %v1646, 0
      %v1736 = vsel %vm1101, %v1647, 0
      %v1739 = vsel %vm1101, %v1648, 0
      %v1742 = vsel %vm1101, %v1649, 0
      %v1745 = vsel %vm1101, %v1650, 0
      %v1748 = vsel %vm1198, %v327, 0
      %1750 = vmatprep.subr.bf16.mxu0 0
      %1751 = vmatpush1.bf16.msra.mxu0 0
      %1752 = vmatprep.subr.bf16.mxu0 0
      %1753 = vmatpush1.bf16.msra.mxu0 0
      %1754 = vmatprep.subr.bf16.mxu0 0
      %1755 = vmatpush1.bf16.msra.mxu0 0
      %1756 = vmatprep.subr.bf16.mxu0 0
      %1757 = vmatpush1.bf16.msra.mxu0 0
      %1758 = vmatprep.subr.bf16.mxu0 0
      %1759 = vmatpush1.bf16.msra.mxu0 0
      %1760 = vmatprep.subr.bf16.mxu0 0
      %1761 = vmatpush1.bf16.msra.mxu0 0
      %1762 = vmatprep.subr.bf16.mxu0 0
      %1763 = vmatpush1.bf16.msra.mxu0 0
      %1764 = vmatprep.subr.bf16.mxu0 0
      %1765 = vmatpush1.bf16.msra.mxu0 %v1748
      %1766 = vmatprep.subr.bf16.mxu0 0
      %1767 = vmatpush2.bf16.msra.mxu0 0
      %1768 = vmatprep.subr.bf16.mxu0 0
      %1769 = vmatpush2.bf16.msra.mxu0 0
      %1770 = vmatprep.subr.bf16.mxu0 0
      %1771 = vmatpush2.bf16.msra.mxu0 0
      %1772 = vmatprep.subr.bf16.mxu0 0
      %1773 = vmatpush2.bf16.msra.mxu0 0
      %1774 = vmatprep.subr.bf16.mxu0 0
      %1775 = vmatpush2.bf16.msra.mxu0 0
      %1776 = vmatprep.subr.bf16.mxu0 0
      %1777 = vmatpush2.bf16.msra.mxu0 0
      %1778 = vmatprep.subr.bf16.mxu0 0
      %1779 = vmatpush2.bf16.msra.mxu0 0
      %1780 = vmatprep.subr.bf16.mxu0 0
      %1781 = vmatpush2.bf16.msra.mxu0 0
      %1782 = vmatprep.mubr.bf16.mxu0 0
      %1783 = vmatmul.mubr.bf16.gmra.mxu0 %v1652
      %v1784 = vpop.f32.mrf.mxu0
      %v1785 = vadd.f32 %v1237, %v1784
      %v1786 = vpop.f32.mrf.mxu0
      %v1787 = vpop.f32.mrf.mxu0
      %v1788 = vadd.f32 %v1240, %v1787
      %v1789 = vpop.f32.mrf.mxu0
      %1790 = vmatprep.mubr.bf16.mxu0 0
      %1791 = vmatmul.mubr.bf16.gmra.mxu0 %v1655
      %v1792 = vpop.f32.mrf.mxu0
      %v1793 = vadd.f32 %v1245, %v1792
      %v1794 = vpop.f32.mrf.mxu0
      %v1795 = vpop.f32.mrf.mxu0
      %v1796 = vadd.f32 %v1248, %v1795
      %v1797 = vpop.f32.mrf.mxu0
      %1798 = vmatprep.mubr.bf16.mxu0 0
      %1799 = vmatmul.mubr.bf16.gmra.mxu0 %v1658
      %v1800 = vpop.f32.mrf.mxu0
      %v1801 = vadd.f32 %v1253, %v1800
      %v1802 = vpop.f32.mrf.mxu0
      %v1803 = vpop.f32.mrf.mxu0
      %v1804 = vadd.f32 %v1256, %v1803
      %v1805 = vpop.f32.mrf.mxu0
      %1806 = vmatprep.mubr.bf16.mxu0 0
      %1807 = vmatmul.mubr.bf16.gmra.mxu0 %v1661
      %v1808 = vpop.f32.mrf.mxu0
      %v1809 = vadd.f32 %v1261, %v1808
      %v1810 = vpop.f32.mrf.mxu0
      %v1811 = vpop.f32.mrf.mxu0
      %v1812 = vadd.f32 %v1264, %v1811
      %v1813 = vpop.f32.mrf.mxu0
      %1814 = vmatprep.mubr.bf16.mxu0 0
      %1815 = vmatmul.mubr.bf16.gmra.mxu0 %v1664
      %v1816 = vpop.f32.mrf.mxu0
      %v1817 = vadd.f32 %v1269, %v1816
      %v1818 = vpop.f32.mrf.mxu0
      %v1819 = vpop.f32.mrf.mxu0
      %v1820 = vadd.f32 %v1272, %v1819
      %v1821 = vpop.f32.mrf.mxu0
      %1822 = vmatprep.mubr.bf16.mxu0 0
      %1823 = vmatmul.mubr.bf16.gmra.mxu0 %v1667
      %v1824 = vpop.f32.mrf.mxu0
      %v1825 = vadd.f32 %v1277, %v1824
      %v1826 = vpop.f32.mrf.mxu0
      %v1827 = vpop.f32.mrf.mxu0
      %v1828 = vadd.f32 %v1280, %v1827
      %v1829 = vpop.f32.mrf.mxu0
      %1830 = vmatprep.mubr.bf16.mxu0 0
      %1831 = vmatmul.mubr.bf16.gmra.mxu0 %v1670
      %v1832 = vpop.f32.mrf.mxu0
      %v1833 = vadd.f32 %v1285, %v1832
      %v1834 = vpop.f32.mrf.mxu0
      %v1835 = vpop.f32.mrf.mxu0
      %v1836 = vadd.f32 %v1288, %v1835
      %v1837 = vpop.f32.mrf.mxu0
      %1838 = vmatprep.mubr.bf16.mxu0 0
      %1839 = vmatmul.mubr.bf16.gmra.mxu0 %v1673
      %v1840 = vpop.f32.mrf.mxu0
      %v1841 = vadd.f32 %v1293, %v1840
      %v1842 = vpop.f32.mrf.mxu0
      %v1843 = vpop.f32.mrf.mxu0
      %v1844 = vadd.f32 %v1296, %v1843
      %v1845 = vpop.f32.mrf.mxu0
      %1846 = vmatprep.mubr.bf16.mxu0 0
      %1847 = vmatmul.mubr.bf16.gmra.mxu0 %v1676
      %v1848 = vpop.f32.mrf.mxu0
      %v1849 = vadd.f32 %v1301, %v1848
      %v1850 = vpop.f32.mrf.mxu0
      %v1851 = vpop.f32.mrf.mxu0
      %v1852 = vadd.f32 %v1304, %v1851
      %v1853 = vpop.f32.mrf.mxu0
      %1854 = vmatprep.mubr.bf16.mxu0 0
      %1855 = vmatmul.mubr.bf16.gmra.mxu0 %v1679
      %v1856 = vpop.f32.mrf.mxu0
      %v1857 = vadd.f32 %v1309, %v1856
      %v1858 = vpop.f32.mrf.mxu0
      %v1859 = vpop.f32.mrf.mxu0
      %v1860 = vadd.f32 %v1312, %v1859
      %v1861 = vpop.f32.mrf.mxu0
      %1862 = vmatprep.mubr.bf16.mxu0 0
      %1863 = vmatmul.mubr.bf16.gmra.mxu0 %v1682
      %v1864 = vpop.f32.mrf.mxu0
      %v1865 = vadd.f32 %v1317, %v1864
      %v1866 = vpop.f32.mrf.mxu0
      %v1867 = vpop.f32.mrf.mxu0
      %v1868 = vadd.f32 %v1320, %v1867
      %v1869 = vpop.f32.mrf.mxu0
      %1870 = vmatprep.mubr.bf16.mxu0 0
      %1871 = vmatmul.mubr.bf16.gmra.mxu0 %v1685
      %v1872 = vpop.f32.mrf.mxu0
      %v1873 = vadd.f32 %v1325, %v1872
      %v1874 = vpop.f32.mrf.mxu0
      %v1875 = vpop.f32.mrf.mxu0
      %v1876 = vadd.f32 %v1328, %v1875
      %v1877 = vpop.f32.mrf.mxu0
      %1878 = vmatprep.mubr.bf16.mxu0 0
      %1879 = vmatmul.mubr.bf16.gmra.mxu0 %v1688
      %v1880 = vpop.f32.mrf.mxu0
      %v1881 = vadd.f32 %v1333, %v1880
      %v1882 = vpop.f32.mrf.mxu0
      %v1883 = vpop.f32.mrf.mxu0
      %v1884 = vadd.f32 %v1336, %v1883
      %v1885 = vpop.f32.mrf.mxu0
      %1886 = vmatprep.mubr.bf16.mxu0 0
      %1887 = vmatmul.mubr.bf16.gmra.mxu0 %v1691
      %v1888 = vpop.f32.mrf.mxu0
      %v1889 = vadd.f32 %v1341, %v1888
      %v1890 = vpop.f32.mrf.mxu0
      %v1891 = vpop.f32.mrf.mxu0
      %v1892 = vadd.f32 %v1344, %v1891
      %v1893 = vpop.f32.mrf.mxu0
      %1894 = vmatprep.mubr.bf16.mxu0 0
      %1895 = vmatmul.mubr.bf16.gmra.mxu0 %v1694
      %v1896 = vpop.f32.mrf.mxu0
      %v1897 = vadd.f32 %v1349, %v1896
      %v1898 = vpop.f32.mrf.mxu0
      %v1899 = vpop.f32.mrf.mxu0
      %v1900 = vadd.f32 %v1352, %v1899
      %v1901 = vpop.f32.mrf.mxu0
      %1902 = vmatprep.mubr.bf16.mxu0 0
      %1903 = vmatmul.mubr.bf16.gmra.mxu0 %v1697
      %v1904 = vpop.f32.mrf.mxu0
      %v1905 = vadd.f32 %v1357, %v1904
      %v1906 = vpop.f32.mrf.mxu0
      %v1907 = vpop.f32.mrf.mxu0
      %v1908 = vadd.f32 %v1360, %v1907
      %v1909 = vpop.f32.mrf.mxu0
      %1910 = vmatprep.mubr.bf16.mxu0 0
      %1911 = vmatmul.mubr.bf16.gmra.mxu0 %v1700
      %v1912 = vpop.f32.mrf.mxu0
      %v1913 = vadd.f32 %v1365, %v1912
      %v1914 = vpop.f32.mrf.mxu0
      %v1915 = vpop.f32.mrf.mxu0
      %v1916 = vadd.f32 %v1368, %v1915
      %v1917 = vpop.f32.mrf.mxu0
      %1918 = vmatprep.mubr.bf16.mxu0 0
      %1919 = vmatmul.mubr.bf16.gmra.mxu0 %v1703
      %v1920 = vpop.f32.mrf.mxu0
      %v1921 = vadd.f32 %v1373, %v1920
      %v1922 = vpop.f32.mrf.mxu0
      %v1923 = vpop.f32.mrf.mxu0
      %v1924 = vadd.f32 %v1376, %v1923
      %v1925 = vpop.f32.mrf.mxu0
      %1926 = vmatprep.mubr.bf16.mxu0 0
      %1927 = vmatmul.mubr.bf16.gmra.mxu0 %v1706
      %v1928 = vpop.f32.mrf.mxu0
      %v1929 = vadd.f32 %v1381, %v1928
      %v1930 = vpop.f32.mrf.mxu0
      %v1931 = vpop.f32.mrf.mxu0
      %v1932 = vadd.f32 %v1384, %v1931
      %v1933 = vpop.f32.mrf.mxu0
      %1934 = vmatprep.mubr.bf16.mxu0 0
      %1935 = vmatmul.mubr.bf16.gmra.mxu0 %v1709
      %v1936 = vpop.f32.mrf.mxu0
      %v1937 = vadd.f32 %v1389, %v1936
      %v1938 = vpop.f32.mrf.mxu0
      %v1939 = vpop.f32.mrf.mxu0
      %v1940 = vadd.f32 %v1392, %v1939
      %v1941 = vpop.f32.mrf.mxu0
      %1942 = vmatprep.mubr.bf16.mxu0 0
      %1943 = vmatmul.mubr.bf16.gmra.mxu0 %v1712
      %v1944 = vpop.f32.mrf.mxu0
      %v1945 = vadd.f32 %v1397, %v1944
      %v1946 = vpop.f32.mrf.mxu0
      %v1947 = vpop.f32.mrf.mxu0
      %v1948 = vadd.f32 %v1400, %v1947
      %v1949 = vpop.f32.mrf.mxu0
      %1950 = vmatprep.mubr.bf16.mxu0 0
      %1951 = vmatmul.mubr.bf16.gmra.mxu0 %v1715
      %v1952 = vpop.f32.mrf.mxu0
      %v1953 = vadd.f32 %v1405, %v1952
      %v1954 = vpop.f32.mrf.mxu0
      %v1955 = vpop.f32.mrf.mxu0
      %v1956 = vadd.f32 %v1408, %v1955
      %v1957 = vpop.f32.mrf.mxu0
      %1958 = vmatprep.mubr.bf16.mxu0 0
      %1959 = vmatmul.mubr.bf16.gmra.mxu0 %v1718
      %v1960 = vpop.f32.mrf.mxu0
      %v1961 = vadd.f32 %v1413, %v1960
      %v1962 = vpop.f32.mrf.mxu0
      %v1963 = vpop.f32.mrf.mxu0
      %v1964 = vadd.f32 %v1416, %v1963
      %v1965 = vpop.f32.mrf.mxu0
      %1966 = vmatprep.mubr.bf16.mxu0 0
      %1967 = vmatmul.mubr.bf16.gmra.mxu0 %v1721
      %v1968 = vpop.f32.mrf.mxu0
      %v1969 = vadd.f32 %v1421, %v1968
      %v1970 = vpop.f32.mrf.mxu0
      %v1971 = vpop.f32.mrf.mxu0
      %v1972 = vadd.f32 %v1424, %v1971
      %v1973 = vpop.f32.mrf.mxu0
      %1974 = vmatprep.mubr.bf16.mxu0 0
      %1975 = vmatmul.mubr.bf16.gmra.mxu0 %v1724
      %v1976 = vpop.f32.mrf.mxu0
      %v1977 = vadd.f32 %v1429, %v1976
      %v1978 = vpop.f32.mrf.mxu0
      %v1979 = vpop.f32.mrf.mxu0
      %v1980 = vadd.f32 %v1432, %v1979
      %v1981 = vpop.f32.mrf.mxu0
      %1982 = vmatprep.mubr.bf16.mxu0 0
      %1983 = vmatmul.mubr.bf16.gmra.mxu0 %v1727
      %v1984 = vpop.f32.mrf.mxu0
      %v1985 = vadd.f32 %v1437, %v1984
      %v1986 = vpop.f32.mrf.mxu0
      %v1987 = vpop.f32.mrf.mxu0
      %v1988 = vadd.f32 %v1440, %v1987
      %v1989 = vpop.f32.mrf.mxu0
      %1990 = vmatprep.mubr.bf16.mxu0 0
      %1991 = vmatmul.mubr.bf16.gmra.mxu0 %v1730
      %v1992 = vpop.f32.mrf.mxu0
      %v1993 = vadd.f32 %v1445, %v1992
      %v1994 = vpop.f32.mrf.mxu0
      %v1995 = vpop.f32.mrf.mxu0
      %v1996 = vadd.f32 %v1448, %v1995
      %v1997 = vpop.f32.mrf.mxu0
      %1998 = vmatprep.mubr.bf16.mxu0 0
      %1999 = vmatmul.mubr.bf16.gmra.mxu0 %v1733
      %v2000 = vpop.f32.mrf.mxu0
      %v2001 = vadd.f32 %v1453, %v2000
      %v2002 = vpop.f32.mrf.mxu0
      %v2003 = vpop.f32.mrf.mxu0
      %v2004 = vadd.f32 %v1456, %v2003
      %v2005 = vpop.f32.mrf.mxu0
      %2006 = vmatprep.mubr.bf16.mxu0 0
      %2007 = vmatmul.mubr.bf16.gmra.mxu0 %v1736
      %v2008 = vpop.f32.mrf.mxu0
      %v2009 = vadd.f32 %v1461, %v2008
      %v2010 = vpop.f32.mrf.mxu0
      %v2011 = vpop.f32.mrf.mxu0
      %v2012 = vadd.f32 %v1464, %v2011
      %v2013 = vpop.f32.mrf.mxu0
      %2014 = vmatprep.mubr.bf16.mxu0 0
      %2015 = vmatmul.mubr.bf16.gmra.mxu0 %v1739
      %v2016 = vpop.f32.mrf.mxu0
      %v2017 = vadd.f32 %v1469, %v2016
      %v2018 = vpop.f32.mrf.mxu0
      %v2019 = vpop.f32.mrf.mxu0
      %v2020 = vadd.f32 %v1472, %v2019
      %v2021 = vpop.f32.mrf.mxu0
      %2022 = vmatprep.mubr.bf16.mxu0 0
      %2023 = vmatmul.mubr.bf16.gmra.mxu0 %v1742
      %v2024 = vpop.f32.mrf.mxu0
      %v2025 = vadd.f32 %v1477, %v2024
      %v2026 = vpop.f32.mrf.mxu0
      %v2027 = vpop.f32.mrf.mxu0
      %v2028 = vadd.f32 %v1480, %v2027
      %v2029 = vpop.f32.mrf.mxu0
      %2030 = vmatprep.mubr.bf16.mxu0 0
      %2031 = vmatmul.mubr.bf16.gmra.mxu0 %v1745
      %v2032 = vpop.f32.mrf.mxu0
      %v2033 = vadd.f32 %v1485, %v2032
      %v2034 = vpop.f32.mrf.mxu0
      %v2035 = vpop.f32.mrf.mxu0
      %v2036 = vadd.f32 %v1488, %v2035
      %v2037 = vpop.f32.mrf.mxu0
      %2038 = vdwg.mxu0
      %vm2047 = vcmask 1042432
      %vm2048 = vcmask 1046532
      %vm2049 = vmor %vm2047, %vm2048
      %v2050 = vrot.slane %v255, 5
      %v2051 = vrot.slane %v2050, 4
      %v2052 = vrot.slane %v256, 5
      %v2053 = vsel %vm2049, %v2051, %v2052
      %v2054 = vrot.slane %v2052, 4
      %v2055 = vrot.slane %v257, 5
      %v2056 = vsel %vm2049, %v2054, %v2055
      %v2057 = vrot.slane %v2055, 4
      %v2058 = vrot.slane %v258, 5
      %v2059 = vsel %vm2049, %v2057, %v2058
      %v2060 = vrot.slane %v2058, 4
      %v2061 = vrot.slane %v259, 5
      %v2062 = vsel %vm2049, %v2060, %v2061
      %v2063 = vrot.slane %v2061, 4
      %v2064 = vrot.slane %v260, 5
      %v2065 = vsel %vm2049, %v2063, %v2064
      %v2066 = vrot.slane %v2064, 4
      %v2067 = vrot.slane %v261, 5
      %v2068 = vsel %vm2049, %v2066, %v2067
      %v2069 = vrot.slane %v2067, 4
      %v2070 = vrot.slane %v262, 5
      %v2071 = vsel %vm2049, %v2069, %v2070
      %v2072 = vrot.slane %v2070, 4
      %v2073 = vrot.slane %v263, 5
      %v2074 = vsel %vm2049, %v2072, %v2073
      %v2075 = vrot.slane %v264, 5
      %v2076 = vrot.slane %v2075, 4
      %v2077 = vrot.slane %v265, 5
      %v2078 = vsel %vm2049, %v2076, %v2077
      %v2079 = vrot.slane %v2077, 4
      %v2080 = vrot.slane %v266, 5
      %v2081 = vsel %vm2049, %v2079, %v2080
      %v2082 = vrot.slane %v2080, 4
      %v2083 = vrot.slane %v267, 5
      %v2084 = vsel %vm2049, %v2082, %v2083
      %v2085 = vrot.slane %v2083, 4
      %v2086 = vrot.slane %v268, 5
      %v2087 = vsel %vm2049, %v2085, %v2086
      %v2088 = vrot.slane %v2086, 4
      %v2089 = vrot.slane %v269, 5
      %v2090 = vsel %vm2049, %v2088, %v2089
      %v2091 = vrot.slane %v2089, 4
      %v2092 = vrot.slane %v270, 5
      %v2093 = vsel %vm2049, %v2091, %v2092
      %v2094 = vrot.slane %v2092, 4
      %v2095 = vrot.slane %v271, 5
      %v2096 = vsel %vm2049, %v2094, %v2095
      %v2097 = vrot.slane %v2095, 4
      %v2098 = vrot.slane %v272, 5
      %v2099 = vsel %vm2049, %v2097, %v2098
      %v2100 = vrot.slane %v273, 5
      %v2101 = vrot.slane %v2100, 4
      %v2102 = vrot.slane %v274, 5
      %v2103 = vsel %vm2049, %v2101, %v2102
      %v2104 = vrot.slane %v2102, 4
      %v2105 = vrot.slane %v275, 5
      %v2106 = vsel %vm2049, %v2104, %v2105
      %v2107 = vrot.slane %v2105, 4
      %v2108 = vrot.slane %v276, 5
      %v2109 = vsel %vm2049, %v2107, %v2108
      %v2110 = vrot.slane %v2108, 4
      %v2111 = vrot.slane %v277, 5
      %v2112 = vsel %vm2049, %v2110, %v2111
      %v2113 = vrot.slane %v2111, 4
      %v2114 = vrot.slane %v278, 5
      %v2115 = vsel %vm2049, %v2113, %v2114
      %v2116 = vrot.slane %v2114, 4
      %v2117 = vrot.slane %v279, 5
      %v2118 = vsel %vm2049, %v2116, %v2117
      %v2119 = vrot.slane %v2117, 4
      %v2120 = vrot.slane %v280, 5
      %v2121 = vsel %vm2049, %v2119, %v2120
      %v2122 = vrot.slane %v2120, 4
      %v2123 = vrot.slane %v281, 5
      %v2124 = vsel %vm2049, %v2122, %v2123
      %v2125 = vrot.slane %v282, 5
      %v2126 = vrot.slane %v2125, 4
      %v2127 = vrot.slane %v283, 5
      %v2128 = vsel %vm2049, %v2126, %v2127
      %v2129 = vrot.slane %v2127, 4
      %v2130 = vrot.slane %v284, 5
      %v2131 = vsel %vm2049, %v2129, %v2130
      %v2132 = vrot.slane %v2130, 4
      %v2133 = vrot.slane %v285, 5
      %v2134 = vsel %vm2049, %v2132, %v2133
      %v2135 = vrot.slane %v2133, 4
      %v2136 = vrot.slane %v286, 5
      %v2137 = vsel %vm2049, %v2135, %v2136
      %v2138 = vrot.slane %v2136, 4
      %v2139 = vrot.slane %v287, 5
      %v2140 = vsel %vm2049, %v2138, %v2139
      %v2141 = vrot.slane %v2139, 4
      %v2142 = vrot.slane %v288, 5
      %v2143 = vsel %vm2049, %v2141, %v2142
      %v2144 = vrot.slane %v2142, 4
      %v2145 = vrot.slane %v289, 5
      %v2146 = vsel %vm2049, %v2144, %v2145
      %v2147 = vrot.slane %v2145, 4
      %v2148 = vrot.slane %v290, 5
      %v2149 = vsel %vm2049, %v2147, %v2148
      %v2150 = vrot.slane %v291, 5
      %v2151 = vrot.slane %v2150, 4
      %v2152 = vrot.slane %v292, 5
      %v2153 = vsel %vm2049, %v2151, %v2152
      %v2154 = vrot.slane %v2152, 4
      %v2155 = vrot.slane %v293, 5
      %v2156 = vsel %vm2049, %v2154, %v2155
      %v2157 = vrot.slane %v2155, 4
      %v2158 = vrot.slane %v294, 5
      %v2159 = vsel %vm2049, %v2157, %v2158
      %v2160 = vrot.slane %v2158, 4
      %v2161 = vrot.slane %v295, 5
      %v2162 = vsel %vm2049, %v2160, %v2161
      %v2163 = vrot.slane %v2161, 4
      %v2164 = vrot.slane %v296, 5
      %v2165 = vsel %vm2049, %v2163, %v2164
      %v2166 = vrot.slane %v2164, 4
      %v2167 = vrot.slane %v297, 5
      %v2168 = vsel %vm2049, %v2166, %v2167
      %v2169 = vrot.slane %v2167, 4
      %v2170 = vrot.slane %v298, 5
      %v2171 = vsel %vm2049, %v2169, %v2170
      %v2172 = vrot.slane %v2170, 4
      %v2173 = vrot.slane %v299, 5
      %v2174 = vsel %vm2049, %v2172, %v2173
      %v2175 = vrot.slane %v300, 5
      %v2176 = vrot.slane %v2175, 4
      %v2177 = vrot.slane %v301, 5
      %v2178 = vsel %vm2049, %v2176, %v2177
      %v2179 = vrot.slane %v2177, 4
      %v2180 = vrot.slane %v302, 5
      %v2181 = vsel %vm2049, %v2179, %v2180
      %v2182 = vrot.slane %v2180, 4
      %v2183 = vrot.slane %v303, 5
      %v2184 = vsel %vm2049, %v2182, %v2183
      %v2185 = vrot.slane %v2183, 4
      %v2186 = vrot.slane %v304, 5
      %v2187 = vsel %vm2049, %v2185, %v2186
      %v2188 = vrot.slane %v2186, 4
      %v2189 = vrot.slane %v305, 5
      %v2190 = vsel %vm2049, %v2188, %v2189
      %v2191 = vrot.slane %v2189, 4
      %v2192 = vrot.slane %v306, 5
      %v2193 = vsel %vm2049, %v2191, %v2192
      %v2194 = vrot.slane %v2192, 4
      %v2195 = vrot.slane %v307, 5
      %v2196 = vsel %vm2049, %v2194, %v2195
      %v2197 = vrot.slane %v2195, 4
      %v2198 = vrot.slane %v308, 5
      %v2199 = vsel %vm2049, %v2197, %v2198
      %v2200 = vrot.slane %v309, 5
      %v2201 = vrot.slane %v2200, 4
      %v2202 = vrot.slane %v310, 5
      %v2203 = vsel %vm2049, %v2201, %v2202
      %v2204 = vrot.slane %v2202, 4
      %v2205 = vrot.slane %v311, 5
      %v2206 = vsel %vm2049, %v2204, %v2205
      %v2207 = vrot.slane %v2205, 4
      %v2208 = vrot.slane %v312, 5
      %v2209 = vsel %vm2049, %v2207, %v2208
      %v2210 = vrot.slane %v2208, 4
      %v2211 = vrot.slane %v313, 5
      %v2212 = vsel %vm2049, %v2210, %v2211
      %v2213 = vrot.slane %v2211, 4
      %v2214 = vrot.slane %v314, 5
      %v2215 = vsel %vm2049, %v2213, %v2214
      %v2216 = vrot.slane %v2214, 4
      %v2217 = vrot.slane %v315, 5
      %v2218 = vsel %vm2049, %v2216, %v2217
      %v2219 = vrot.slane %v2217, 4
      %v2220 = vrot.slane %v316, 5
      %v2221 = vsel %vm2049, %v2219, %v2220
      %v2222 = vrot.slane %v2220, 4
      %v2223 = vrot.slane %v317, 5
      %v2224 = vsel %vm2049, %v2222, %v2223
      %v2225 = vrot.slane %v318, 5
      %v2226 = vrot.slane %v2225, 4
      %v2227 = vrot.slane %v319, 5
      %v2228 = vsel %vm2049, %v2226, %v2227
      %v2229 = vrot.slane %v2227, 4
      %v2230 = vrot.slane %v320, 5
      %v2231 = vsel %vm2049, %v2229, %v2230
      %v2232 = vrot.slane %v2230, 4
      %v2233 = vrot.slane %v321, 5
      %v2234 = vsel %vm2049, %v2232, %v2233
      %v2235 = vrot.slane %v2233, 4
      %v2236 = vrot.slane %v322, 5
      %v2237 = vsel %vm2049, %v2235, %v2236
      %v2238 = vrot.slane %v2236, 4
      %v2239 = vrot.slane %v323, 5
      %v2240 = vsel %vm2049, %v2238, %v2239
      %v2241 = vrot.slane %v2239, 4
      %v2242 = vrot.slane %v324, 5
      %v2243 = vsel %vm2049, %v2241, %v2242
      %v2244 = vrot.slane %v2242, 4
      %v2245 = vrot.slane %v325, 5
      %v2246 = vsel %vm2049, %v2244, %v2245
      %v2247 = vrot.slane %v2245, 4
      %v2248 = vrot.slane %v326, 5
      %v2249 = vsel %vm2049, %v2247, %v2248
      %s2250 = scalar_lea.vmem %s1, 4
      %v2251 = vld [vmem:[%s2250] sm:$0x3]
      %v2252 = vunpack.c.l.b16 %v2053
      %v2253 = vunpack.c.l.b16 %v2056
      %v2254 = vunpack.c.l.b16 %v2059
      %v2255 = vunpack.c.l.b16 %v2062
      %v2256 = vunpack.c.l.b16 %v2065
      %v2257 = vunpack.c.l.b16 %v2068
      %v2258 = vunpack.c.l.b16 %v2071
      %v2259 = vunpack.c.l.b16 %v2074
      %v2260 = vunpack.c.l.b16 %v2078
      %v2261 = vunpack.c.l.b16 %v2081
      %v2262 = vunpack.c.l.b16 %v2084
      %v2263 = vunpack.c.l.b16 %v2087
      %v2264 = vunpack.c.l.b16 %v2090
      %v2265 = vunpack.c.l.b16 %v2093
      %v2266 = vunpack.c.l.b16 %v2096
      %v2267 = vunpack.c.l.b16 %v2099
      %v2268 = vunpack.c.l.b16 %v2103
      %v2269 = vunpack.c.l.b16 %v2106
      %v2270 = vunpack.c.l.b16 %v2109
      %v2271 = vunpack.c.l.b16 %v2112
      %v2272 = vunpack.c.l.b16 %v2115
      %v2273 = vunpack.c.l.b16 %v2118
      %v2274 = vunpack.c.l.b16 %v2121
      %v2275 = vunpack.c.l.b16 %v2124
      %v2276 = vunpack.c.l.b16 %v2128
      %v2277 = vunpack.c.l.b16 %v2131
      %v2278 = vunpack.c.l.b16 %v2134
      %v2279 = vunpack.c.l.b16 %v2137
      %v2280 = vunpack.c.l.b16 %v2140
      %v2281 = vunpack.c.l.b16 %v2143
      %v2282 = vunpack.c.l.b16 %v2146
      %v2283 = vunpack.c.l.b16 %v2149
      %v2284 = vunpack.c.l.b16 %v2153
      %v2285 = vunpack.c.l.b16 %v2156
      %v2286 = vunpack.c.l.b16 %v2159
      %v2287 = vunpack.c.l.b16 %v2162
      %v2288 = vunpack.c.l.b16 %v2165
      %v2289 = vunpack.c.l.b16 %v2168
      %v2290 = vunpack.c.l.b16 %v2171
      %v2291 = vunpack.c.l.b16 %v2174
      %v2292 = vunpack.c.l.b16 %v2178
      %v2293 = vunpack.c.l.b16 %v2181
      %v2294 = vunpack.c.l.b16 %v2184
      %v2295 = vunpack.c.l.b16 %v2187
      %v2296 = vunpack.c.l.b16 %v2190
      %v2297 = vunpack.c.l.b16 %v2193
      %v2298 = vunpack.c.l.b16 %v2196
      %v2299 = vunpack.c.l.b16 %v2199
      %v2300 = vunpack.c.l.b16 %v2203
      %v2301 = vunpack.c.l.b16 %v2206
      %v2302 = vunpack.c.l.b16 %v2209
      %v2303 = vunpack.c.l.b16 %v2212
      %v2304 = vunpack.c.l.b16 %v2215
      %v2305 = vunpack.c.l.b16 %v2218
      %v2306 = vunpack.c.l.b16 %v2221
      %v2307 = vunpack.c.l.b16 %v2224
      %v2308 = vunpack.c.l.b16 %v2228
      %v2309 = vunpack.c.l.b16 %v2231
      %v2310 = vunpack.c.l.b16 %v2234
      %v2311 = vunpack.c.l.b16 %v2237
      %v2312 = vunpack.c.l.b16 %v2240
      %v2313 = vunpack.c.l.b16 %v2243
      %v2314 = vunpack.c.l.b16 %v2246
      %v2315 = vunpack.c.l.b16 %v2249
      %v2316 = vpack.c.b16 %v2253, %v2252
      %v2317 = vpack.c.b16 %v2255, %v2254
      %v2318 = vpack.c.b16 %v2257, %v2256
      %v2319 = vpack.c.b16 %v2259, %v2258
      %v2320 = vpack.c.b16 %v2261, %v2260
      %v2321 = vpack.c.b16 %v2263, %v2262
      %v2322 = vpack.c.b16 %v2265, %v2264
      %v2323 = vpack.c.b16 %v2267, %v2266
      %v2324 = vpack.c.b16 %v2269, %v2268
      %v2325 = vpack.c.b16 %v2271, %v2270
      %v2326 = vpack.c.b16 %v2273, %v2272
      %v2327 = vpack.c.b16 %v2275, %v2274
      %v2328 = vpack.c.b16 %v2277, %v2276
      %v2329 = vpack.c.b16 %v2279, %v2278
      %v2330 = vpack.c.b16 %v2281, %v2280
      %v2331 = vpack.c.b16 %v2283, %v2282
      %v2332 = vpack.c.b16 %v2285, %v2284
      %v2333 = vpack.c.b16 %v2287, %v2286
      %v2334 = vpack.c.b16 %v2289, %v2288
      %v2335 = vpack.c.b16 %v2291, %v2290
      %v2336 = vpack.c.b16 %v2293, %v2292
      %v2337 = vpack.c.b16 %v2295, %v2294
      %v2338 = vpack.c.b16 %v2297, %v2296
      %v2339 = vpack.c.b16 %v2299, %v2298
      %v2340 = vpack.c.b16 %v2301, %v2300
      %v2341 = vpack.c.b16 %v2303, %v2302
      %v2342 = vpack.c.b16 %v2305, %v2304
      %v2343 = vpack.c.b16 %v2307, %v2306
      %v2344 = vpack.c.b16 %v2309, %v2308
      %v2345 = vpack.c.b16 %v2311, %v2310
      %v2346 = vpack.c.b16 %v2313, %v2312
      %v2347 = vpack.c.b16 %v2315, %v2314
      %v2349 = vsel %vm1101, %v2316, 0
      %v2352 = vsel %vm1101, %v2317, 0
      %v2355 = vsel %vm1101, %v2318, 0
      %v2358 = vsel %vm1101, %v2319, 0
      %v2361 = vsel %vm1101, %v2320, 0
      %v2364 = vsel %vm1101, %v2321, 0
      %v2367 = vsel %vm1101, %v2322, 0
      %v2370 = vsel %vm1101, %v2323, 0
      %v2373 = vsel %vm1101, %v2324, 0
      %v2376 = vsel %vm1101, %v2325, 0
      %v2379 = vsel %vm1101, %v2326, 0
      %v2382 = vsel %vm1101, %v2327, 0
      %v2385 = vsel %vm1101, %v2328, 0
      %v2388 = vsel %vm1101, %v2329, 0
      %v2391 = vsel %vm1101, %v2330, 0
      %v2394 = vsel %vm1101, %v2331, 0
      %v2397 = vsel %vm1101, %v2332, 0
      %v2400 = vsel %vm1101, %v2333, 0
      %v2403 = vsel %vm1101, %v2334, 0
      %v2406 = vsel %vm1101, %v2335, 0
      %v2409 = vsel %vm1101, %v2336, 0
      %v2412 = vsel %vm1101, %v2337, 0
      %v2415 = vsel %vm1101, %v2338, 0
      %v2418 = vsel %vm1101, %v2339, 0
      %v2421 = vsel %vm1101, %v2340, 0
      %v2424 = vsel %vm1101, %v2341, 0
      %v2427 = vsel %vm1101, %v2342, 0
      %v2430 = vsel %vm1101, %v2343, 0
      %v2433 = vsel %vm1101, %v2344, 0
      %v2436 = vsel %vm1101, %v2345, 0
      %v2439 = vsel %vm1101, %v2346, 0
      %v2442 = vsel %vm1101, %v2347, 0
      %v2445 = vsel %vm1198, %v2251, 0
      %2447 = vmatprep.subr.bf16.mxu0 0
      %2448 = vmatpush1.bf16.msra.mxu0 0
      %2449 = vmatprep.subr.bf16.mxu0 0
      %2450 = vmatpush1.bf16.msra.mxu0 0
      %2451 = vmatprep.subr.bf16.mxu0 0
      %2452 = vmatpush1.bf16.msra.mxu0 0
      %2453 = vmatprep.subr.bf16.mxu0 0
      %2454 = vmatpush1.bf16.msra.mxu0 0
      %2455 = vmatprep.subr.bf16.mxu0 0
      %2456 = vmatpush1.bf16.msra.mxu0 0
      %2457 = vmatprep.subr.bf16.mxu0 0
      %2458 = vmatpush1.bf16.msra.mxu0 0
      %2459 = vmatprep.subr.bf16.mxu0 0
      %2460 = vmatpush1.bf16.msra.mxu0 0
      %2461 = vmatprep.subr.bf16.mxu0 0
      %2462 = vmatpush1.bf16.msra.mxu0 %v2445
      %2463 = vmatprep.subr.bf16.mxu0 0
      %2464 = vmatpush2.bf16.msra.mxu0 0
      %2465 = vmatprep.subr.bf16.mxu0 0
      %2466 = vmatpush2.bf16.msra.mxu0 0
      %2467 = vmatprep.subr.bf16.mxu0 0
      %2468 = vmatpush2.bf16.msra.mxu0 0
      %2469 = vmatprep.subr.bf16.mxu0 0
      %2470 = vmatpush2.bf16.msra.mxu0 0
      %2471 = vmatprep.subr.bf16.mxu0 0
      %2472 = vmatpush2.bf16.msra.mxu0 0
      %2473 = vmatprep.subr.bf16.mxu0 0
      %2474 = vmatpush2.bf16.msra.mxu0 0
      %2475 = vmatprep.subr.bf16.mxu0 0
      %2476 = vmatpush2.bf16.msra.mxu0 0
      %2477 = vmatprep.subr.bf16.mxu0 0
      %2478 = vmatpush2.bf16.msra.mxu0 0
      %2479 = vmatprep.mubr.bf16.mxu0 0
      %2480 = vmatmul.mubr.bf16.gmra.mxu0 %v2349
      %v2481 = vpop.f32.mrf.mxu0
      %v2482 = vadd.f32 0.0, %v2481
      %v2483 = vpop.f32.mrf.mxu0
      %v2484 = vpop.f32.mrf.mxu0
      %v2485 = vadd.f32 0.0, %v2484
      %v2486 = vpop.f32.mrf.mxu0
      %2487 = vmatprep.mubr.bf16.mxu0 0
      %2488 = vmatmul.mubr.bf16.gmra.mxu0 %v2352
      %v2489 = vpop.f32.mrf.mxu0
      %v2490 = vadd.f32 0.0, %v2489
      %v2491 = vpop.f32.mrf.mxu0
      %v2492 = vpop.f32.mrf.mxu0
      %v2493 = vadd.f32 0.0, %v2492
      %v2494 = vpop.f32.mrf.mxu0
      %2495 = vmatprep.mubr.bf16.mxu0 0
      %2496 = vmatmul.mubr.bf16.gmra.mxu0 %v2355
      %v2497 = vpop.f32.mrf.mxu0
      %v2498 = vadd.f32 0.0, %v2497
      %v2499 = vpop.f32.mrf.mxu0
      %v2500 = vpop.f32.mrf.mxu0
      %v2501 = vadd.f32 0.0, %v2500
      %v2502 = vpop.f32.mrf.mxu0
      %2503 = vmatprep.mubr.bf16.mxu0 0
      %2504 = vmatmul.mubr.bf16.gmra.mxu0 %v2358
      %v2505 = vpop.f32.mrf.mxu0
      %v2506 = vadd.f32 0.0, %v2505
      %v2507 = vpop.f32.mrf.mxu0
      %v2508 = vpop.f32.mrf.mxu0
      %v2509 = vadd.f32 0.0, %v2508
      %v2510 = vpop.f32.mrf.mxu0
      %2511 = vmatprep.mubr.bf16.mxu0 0
      %2512 = vmatmul.mubr.bf16.gmra.mxu0 %v2361
      %v2513 = vpop.f32.mrf.mxu0
      %v2514 = vadd.f32 0.0, %v2513
      %v2515 = vpop.f32.mrf.mxu0
      %v2516 = vpop.f32.mrf.mxu0
      %v2517 = vadd.f32 0.0, %v2516
      %v2518 = vpop.f32.mrf.mxu0
      %2519 = vmatprep.mubr.bf16.mxu0 0
      %2520 = vmatmul.mubr.bf16.gmra.mxu0 %v2364
      %v2521 = vpop.f32.mrf.mxu0
      %v2522 = vadd.f32 0.0, %v2521
      %v2523 = vpop.f32.mrf.mxu0
      %v2524 = vpop.f32.mrf.mxu0
      %v2525 = vadd.f32 0.0, %v2524
      %v2526 = vpop.f32.mrf.mxu0
      %2527 = vmatprep.mubr.bf16.mxu0 0
      %2528 = vmatmul.mubr.bf16.gmra.mxu0 %v2367
      %v2529 = vpop.f32.mrf.mxu0
      %v2530 = vadd.f32 0.0, %v2529
      %v2531 = vpop.f32.mrf.mxu0
      %v2532 = vpop.f32.mrf.mxu0
      %v2533 = vadd.f32 0.0, %v2532
      %v2534 = vpop.f32.mrf.mxu0
      %2535 = vmatprep.mubr.bf16.mxu0 0
      %2536 = vmatmul.mubr.bf16.gmra.mxu0 %v2370
      %v2537 = vpop.f32.mrf.mxu0
      %v2538 = vadd.f32 0.0, %v2537
      %v2539 = vpop.f32.mrf.mxu0
      %v2540 = vpop.f32.mrf.mxu0
      %v2541 = vadd.f32 0.0, %v2540
      %v2542 = vpop.f32.mrf.mxu0
      %2543 = vmatprep.mubr.bf16.mxu0 0
      %2544 = vmatmul.mubr.bf16.gmra.mxu0 %v2373
      %v2545 = vpop.f32.mrf.mxu0
      %v2546 = vadd.f32 0.0, %v2545
      %v2547 = vpop.f32.mrf.mxu0
      %v2548 = vpop.f32.mrf.mxu0
      %v2549 = vadd.f32 0.0, %v2548
      %v2550 = vpop.f32.mrf.mxu0
      %2551 = vmatprep.mubr.bf16.mxu0 0
      %2552 = vmatmul.mubr.bf16.gmra.mxu0 %v2376
      %v2553 = vpop.f32.mrf.mxu0
      %v2554 = vadd.f32 0.0, %v2553
      %v2555 = vpop.f32.mrf.mxu0
      %v2556 = vpop.f32.mrf.mxu0
      %v2557 = vadd.f32 0.0, %v2556
      %v2558 = vpop.f32.mrf.mxu0
      %2559 = vmatprep.mubr.bf16.mxu0 0
      %2560 = vmatmul.mubr.bf16.gmra.mxu0 %v2379
      %v2561 = vpop.f32.mrf.mxu0
      %v2562 = vadd.f32 0.0, %v2561
      %v2563 = vpop.f32.mrf.mxu0
      %v2564 = vpop.f32.mrf.mxu0
      %v2565 = vadd.f32 0.0, %v2564
      %v2566 = vpop.f32.mrf.mxu0
      %2567 = vmatprep.mubr.bf16.mxu0 0
      %2568 = vmatmul.mubr.bf16.gmra.mxu0 %v2382
      %v2569 = vpop.f32.mrf.mxu0
      %v2570 = vadd.f32 0.0, %v2569
      %v2571 = vpop.f32.mrf.mxu0
      %v2572 = vpop.f32.mrf.mxu0
      %v2573 = vadd.f32 0.0, %v2572
      %v2574 = vpop.f32.mrf.mxu0
      %2575 = vmatprep.mubr.bf16.mxu0 0
      %2576 = vmatmul.mubr.bf16.gmra.mxu0 %v2385
      %v2577 = vpop.f32.mrf.mxu0
      %v2578 = vadd.f32 0.0, %v2577
      %v2579 = vpop.f32.mrf.mxu0
      %v2580 = vpop.f32.mrf.mxu0
      %v2581 = vadd.f32 0.0, %v2580
      %v2582 = vpop.f32.mrf.mxu0
      %2583 = vmatprep.mubr.bf16.mxu0 0
      %2584 = vmatmul.mubr.bf16.gmra.mxu0 %v2388
      %v2585 = vpop.f32.mrf.mxu0
      %v2586 = vadd.f32 0.0, %v2585
      %v2587 = vpop.f32.mrf.mxu0
      %v2588 = vpop.f32.mrf.mxu0
      %v2589 = vadd.f32 0.0, %v2588
      %v2590 = vpop.f32.mrf.mxu0
      %2591 = vmatprep.mubr.bf16.mxu0 0
      %2592 = vmatmul.mubr.bf16.gmra.mxu0 %v2391
      %v2593 = vpop.f32.mrf.mxu0
      %v2594 = vadd.f32 0.0, %v2593
      %v2595 = vpop.f32.mrf.mxu0
      %v2596 = vpop.f32.mrf.mxu0
      %v2597 = vadd.f32 0.0, %v2596
      %v2598 = vpop.f32.mrf.mxu0
      %2599 = vmatprep.mubr.bf16.mxu0 0
      %2600 = vmatmul.mubr.bf16.gmra.mxu0 %v2394
      %v2601 = vpop.f32.mrf.mxu0
      %v2602 = vadd.f32 0.0, %v2601
      %v2603 = vpop.f32.mrf.mxu0
      %v2604 = vpop.f32.mrf.mxu0
      %v2605 = vadd.f32 0.0, %v2604
      %v2606 = vpop.f32.mrf.mxu0
      %2607 = vmatprep.mubr.bf16.mxu0 0
      %2608 = vmatmul.mubr.bf16.gmra.mxu0 %v2397
      %v2609 = vpop.f32.mrf.mxu0
      %v2610 = vadd.f32 0.0, %v2609
      %v2611 = vpop.f32.mrf.mxu0
      %v2612 = vpop.f32.mrf.mxu0
      %v2613 = vadd.f32 0.0, %v2612
      %v2614 = vpop.f32.mrf.mxu0
      %2615 = vmatprep.mubr.bf16.mxu0 0
      %2616 = vmatmul.mubr.bf16.gmra.mxu0 %v2400
      %v2617 = vpop.f32.mrf.mxu0
      %v2618 = vadd.f32 0.0, %v2617
      %v2619 = vpop.f32.mrf.mxu0
      %v2620 = vpop.f32.mrf.mxu0
      %v2621 = vadd.f32 0.0, %v2620
      %v2622 = vpop.f32.mrf.mxu0
      %2623 = vmatprep.mubr.bf16.mxu0 0
      %2624 = vmatmul.mubr.bf16.gmra.mxu0 %v2403
      %v2625 = vpop.f32.mrf.mxu0
      %v2626 = vadd.f32 0.0, %v2625
      %v2627 = vpop.f32.mrf.mxu0
      %v2628 = vpop.f32.mrf.mxu0
      %v2629 = vadd.f32 0.0, %v2628
      %v2630 = vpop.f32.mrf.mxu0
      %2631 = vmatprep.mubr.bf16.mxu0 0
      %2632 = vmatmul.mubr.bf16.gmra.mxu0 %v2406
      %v2633 = vpop.f32.mrf.mxu0
      %v2634 = vadd.f32 0.0, %v2633
      %v2635 = vpop.f32.mrf.mxu0
      %v2636 = vpop.f32.mrf.mxu0
      %v2637 = vadd.f32 0.0, %v2636
      %v2638 = vpop.f32.mrf.mxu0
      %2639 = vmatprep.mubr.bf16.mxu0 0
      %2640 = vmatmul.mubr.bf16.gmra.mxu0 %v2409
      %v2641 = vpop.f32.mrf.mxu0
      %v2642 = vadd.f32 0.0, %v2641
      %v2643 = vpop.f32.mrf.mxu0
      %v2644 = vpop.f32.mrf.mxu0
      %v2645 = vadd.f32 0.0, %v2644
      %v2646 = vpop.f32.mrf.mxu0
      %2647 = vmatprep.mubr.bf16.mxu0 0
      %2648 = vmatmul.mubr.bf16.gmra.mxu0 %v2412
      %v2649 = vpop.f32.mrf.mxu0
      %v2650 = vadd.f32 0.0, %v2649
      %v2651 = vpop.f32.mrf.mxu0
      %v2652 = vpop.f32.mrf.mxu0
      %v2653 = vadd.f32 0.0, %v2652
      %v2654 = vpop.f32.mrf.mxu0
      %2655 = vmatprep.mubr.bf16.mxu0 0
      %2656 = vmatmul.mubr.bf16.gmra.mxu0 %v2415
      %v2657 = vpop.f32.mrf.mxu0
      %v2658 = vadd.f32 0.0, %v2657
      %v2659 = vpop.f32.mrf.mxu0
      %v2660 = vpop.f32.mrf.mxu0
      %v2661 = vadd.f32 0.0, %v2660
      %v2662 = vpop.f32.mrf.mxu0
      %2663 = vmatprep.mubr.bf16.mxu0 0
      %2664 = vmatmul.mubr.bf16.gmra.mxu0 %v2418
      %v2665 = vpop.f32.mrf.mxu0
      %v2666 = vadd.f32 0.0, %v2665
      %v2667 = vpop.f32.mrf.mxu0
      %v2668 = vpop.f32.mrf.mxu0
      %v2669 = vadd.f32 0.0, %v2668
      %v2670 = vpop.f32.mrf.mxu0
      %2671 = vmatprep.mubr.bf16.mxu0 0
      %2672 = vmatmul.mubr.bf16.gmra.mxu0 %v2421
      %v2673 = vpop.f32.mrf.mxu0
      %v2674 = vadd.f32 0.0, %v2673
      %v2675 = vpop.f32.mrf.mxu0
      %v2676 = vpop.f32.mrf.mxu0
      %v2677 = vadd.f32 0.0, %v2676
      %v2678 = vpop.f32.mrf.mxu0
      %2679 = vmatprep.mubr.bf16.mxu0 0
      %2680 = vmatmul.mubr.bf16.gmra.mxu0 %v2424
      %v2681 = vpop.f32.mrf.mxu0
      %v2682 = vadd.f32 0.0, %v2681
      %v2683 = vpop.f32.mrf.mxu0
      %v2684 = vpop.f32.mrf.mxu0
      %v2685 = vadd.f32 0.0, %v2684
      %v2686 = vpop.f32.mrf.mxu0
      %2687 = vmatprep.mubr.bf16.mxu0 0
      %2688 = vmatmul.mubr.bf16.gmra.mxu0 %v2427
      %v2689 = vpop.f32.mrf.mxu0
      %v2690 = vadd.f32 0.0, %v2689
      %v2691 = vpop.f32.mrf.mxu0
      %v2692 = vpop.f32.mrf.mxu0
      %v2693 = vadd.f32 0.0, %v2692
      %v2694 = vpop.f32.mrf.mxu0
      %2695 = vmatprep.mubr.bf16.mxu0 0
      %2696 = vmatmul.mubr.bf16.gmra.mxu0 %v2430
      %v2697 = vpop.f32.mrf.mxu0
      %v2698 = vadd.f32 0.0, %v2697
      %v2699 = vpop.f32.mrf.mxu0
      %v2700 = vpop.f32.mrf.mxu0
      %v2701 = vadd.f32 0.0, %v2700
      %v2702 = vpop.f32.mrf.mxu0
      %2703 = vmatprep.mubr.bf16.mxu0 0
      %2704 = vmatmul.mubr.bf16.gmra.mxu0 %v2433
      %v2705 = vpop.f32.mrf.mxu0
      %v2706 = vadd.f32 0.0, %v2705
      %v2707 = vpop.f32.mrf.mxu0
      %v2708 = vpop.f32.mrf.mxu0
      %v2709 = vadd.f32 0.0, %v2708
      %v2710 = vpop.f32.mrf.mxu0
      %2711 = vmatprep.mubr.bf16.mxu0 0
      %2712 = vmatmul.mubr.bf16.gmra.mxu0 %v2436
      %v2713 = vpop.f32.mrf.mxu0
      %v2714 = vadd.f32 0.0, %v2713
      %v2715 = vpop.f32.mrf.mxu0
      %v2716 = vpop.f32.mrf.mxu0
      %v2717 = vadd.f32 0.0, %v2716
      %v2718 = vpop.f32.mrf.mxu0
      %2719 = vmatprep.mubr.bf16.mxu0 0
      %2720 = vmatmul.mubr.bf16.gmra.mxu0 %v2439
      %v2721 = vpop.f32.mrf.mxu0
      %v2722 = vadd.f32 0.0, %v2721
      %v2723 = vpop.f32.mrf.mxu0
      %v2724 = vpop.f32.mrf.mxu0
      %v2725 = vadd.f32 0.0, %v2724
      %v2726 = vpop.f32.mrf.mxu0
      %2727 = vmatprep.mubr.bf16.mxu0 0
      %2728 = vmatmul.mubr.bf16.gmra.mxu0 %v2442
      %v2729 = vpop.f32.mrf.mxu0
      %v2730 = vadd.f32 0.0, %v2729
      %v2731 = vpop.f32.mrf.mxu0
      %v2732 = vpop.f32.mrf.mxu0
      %v2733 = vadd.f32 0.0, %v2732
      %v2734 = vpop.f32.mrf.mxu0
      %2735 = vdwg.mxu0
      %v2736 = vadd.f32 %v1785, %v2482
      %v2737 = vadd.f32 %v1788, %v2485
      %v2738 = vadd.f32 %v1793, %v2490
      %v2739 = vadd.f32 %v1796, %v2493
      %v2740 = vadd.f32 %v1801, %v2498
      %v2741 = vadd.f32 %v1804, %v2501
      %v2742 = vadd.f32 %v1809, %v2506
      %v2743 = vadd.f32 %v1812, %v2509
      %v2744 = vadd.f32 %v1817, %v2514
      %v2745 = vadd.f32 %v1820, %v2517
      %v2746 = vadd.f32 %v1825, %v2522
      %v2747 = vadd.f32 %v1828, %v2525
      %v2748 = vadd.f32 %v1833, %v2530
      %v2749 = vadd.f32 %v1836, %v2533
      %v2750 = vadd.f32 %v1841, %v2538
      %v2751 = vadd.f32 %v1844, %v2541
      %v2752 = vadd.f32 %v1849, %v2546
      %v2753 = vadd.f32 %v1852, %v2549
      %v2754 = vadd.f32 %v1857, %v2554
      %v2755 = vadd.f32 %v1860, %v2557
      %v2756 = vadd.f32 %v1865, %v2562
      %v2757 = vadd.f32 %v1868, %v2565
      %v2758 = vadd.f32 %v1873, %v2570
      %v2759 = vadd.f32 %v1876, %v2573
      %v2760 = vadd.f32 %v1881, %v2578
      %v2761 = vadd.f32 %v1884, %v2581
      %v2762 = vadd.f32 %v1889, %v2586
      %v2763 = vadd.f32 %v1892, %v2589
      %v2764 = vadd.f32 %v1897, %v2594
      %v2765 = vadd.f32 %v1900, %v2597
      %v2766 = vadd.f32 %v1905, %v2602
      %v2767 = vadd.f32 %v1908, %v2605
      %v2768 = vadd.f32 %v1913, %v2610
      %v2769 = vadd.f32 %v1916, %v2613
      %v2770 = vadd.f32 %v1921, %v2618
      %v2771 = vadd.f32 %v1924, %v2621
      %v2772 = vadd.f32 %v1929, %v2626
      %v2773 = vadd.f32 %v1932, %v2629
      %v2774 = vadd.f32 %v1937, %v2634
      %v2775 = vadd.f32 %v1940, %v2637
      %v2776 = vadd.f32 %v1945, %v2642
      %v2777 = vadd.f32 %v1948, %v2645
      %v2778 = vadd.f32 %v1953, %v2650
      %v2779 = vadd.f32 %v1956, %v2653
      %v2780 = vadd.f32 %v1961, %v2658
      %v2781 = vadd.f32 %v1964, %v2661
      %v2782 = vadd.f32 %v1969, %v2666
      %v2783 = vadd.f32 %v1972, %v2669
      %v2784 = vadd.f32 %v1977, %v2674
      %v2785 = vadd.f32 %v1980, %v2677
      %v2786 = vadd.f32 %v1985, %v2682
      %v2787 = vadd.f32 %v1988, %v2685
      %v2788 = vadd.f32 %v1993, %v2690
      %v2789 = vadd.f32 %v1996, %v2693
      %v2790 = vadd.f32 %v2001, %v2698
      %v2791 = vadd.f32 %v2004, %v2701
      %v2792 = vadd.f32 %v2009, %v2706
      %v2793 = vadd.f32 %v2012, %v2709
      %v2794 = vadd.f32 %v2017, %v2714
      %v2795 = vadd.f32 %v2020, %v2717
      %v2796 = vadd.f32 %v2025, %v2722
      %v2797 = vadd.f32 %v2028, %v2725
      %v2798 = vadd.f32 %v2033, %v2730
      %v2799 = vadd.f32 %v2036, %v2733
      %s2800 = sadd.s32 %s251, 1
      %s2801 = smul.u32 %s2800, 9
      %s2802 = smul.addr %s2801, 4
      %s2803 = scalar_lea.vmem %s239, %s2802
      %v2804 = vld [vmem:[%s2803] sm:$0xf]
      %v2805 = vld [vmem:[%s2803 + $0x4] sm:$0xf]
      %v2806 = vld [vmem:[%s2803 + $0x8] sm:$0xf]
      %v2807 = vld [vmem:[%s2803 + $0xc] sm:$0xf]
      %v2808 = vld [vmem:[%s2803 + $0x10] sm:$0xf]
      %v2809 = vld [vmem:[%s2803 + $0x14] sm:$0xf]
      %v2810 = vld [vmem:[%s2803 + $0x18] sm:$0xf]
      %v2811 = vld [vmem:[%s2803 + $0x1c] sm:$0xf]
      %v2812 = vld [vmem:[%s2803 + $0x20] sm:$0x1]
      %v2813 = vld [vmem:[%s2803 + $0x24] sm:$0xf]
      %v2814 = vld [vmem:[%s2803 + $0x28] sm:$0xf]
      %v2815 = vld [vmem:[%s2803 + $0x2c] sm:$0xf]
      %v2816 = vld [vmem:[%s2803 + $0x30] sm:$0xf]
      %v2817 = vld [vmem:[%s2803 + $0x34] sm:$0xf]
      %v2818 = vld [vmem:[%s2803 + $0x38] sm:$0xf]
      %v2819 = vld [vmem:[%s2803 + $0x3c] sm:$0xf]
      %v2820 = vld [vmem:[%s2803 + $0x40] sm:$0xf]
      %v2821 = vld [vmem:[%s2803 + $0x44] sm:$0x1]
      %v2822 = vld [vmem:[%s2803 + $0x48] sm:$0xf]
      %v2823 = vld [vmem:[%s2803 + $0x4c] sm:$0xf]
      %v2824 = vld [vmem:[%s2803 + $0x50] sm:$0xf]
      %v2825 = vld [vmem:[%s2803 + $0x54] sm:$0xf]
      %v2826 = vld [vmem:[%s2803 + $0x58] sm:$0xf]
      %v2827 = vld [vmem:[%s2803 + $0x5c] sm:$0xf]
      %v2828 = vld [vmem:[%s2803 + $0x60] sm:$0xf]
      %v2829 = vld [vmem:[%s2803 + $0x64] sm:$0xf]
      %v2830 = vld [vmem:[%s2803 + $0x68] sm:$0x1]
      %v2831 = vld [vmem:[%s2803 + $0x6c] sm:$0xf]
      %v2832 = vld [vmem:[%s2803 + $0x70] sm:$0xf]
      %v2833 = vld [vmem:[%s2803 + $0x74] sm:$0xf]
      %v2834 = vld [vmem:[%s2803 + $0x78] sm:$0xf]
      %v2835 = vld [vmem:[%s2803 + $0x7c] sm:$0xf]
      %v2836 = vld [vmem:[%s2803 + $0x80] sm:$0xf]
      %v2837 = vld [vmem:[%s2803 + $0x84] sm:$0xf]
      %v2838 = vld [vmem:[%s2803 + $0x88] sm:$0xf]
      %v2839 = vld [vmem:[%s2803 + $0x8c] sm:$0x1]
      %v2840 = vld [vmem:[%s2803 + $0x90] sm:$0xf]
      %v2841 = vld [vmem:[%s2803 + $0x94] sm:$0xf]
      %v2842 = vld [vmem:[%s2803 + $0x98] sm:$0xf]
      %v2843 = vld [vmem:[%s2803 + $0x9c] sm:$0xf]
      %v2844 = vld [vmem:[%s2803 + $0xa0] sm:$0xf]
      %v2845 = vld [vmem:[%s2803 + $0xa4] sm:$0xf]
      %v2846 = vld [vmem:[%s2803 + $0xa8] sm:$0xf]
      %v2847 = vld [vmem:[%s2803 + $0xac] sm:$0xf]
      %v2848 = vld [vmem:[%s2803 + $0xb0] sm:$0x1]
      %v2849 = vld [vmem:[%s2803 + $0xb4] sm:$0xf]
      %v2850 = vld [vmem:[%s2803 + $0xb8] sm:$0xf]
      %v2851 = vld [vmem:[%s2803 + $0xbc] sm:$0xf]
      %v2852 = vld [vmem:[%s2803 + $0xc0] sm:$0xf]
      %v2853 = vld [vmem:[%s2803 + $0xc4] sm:$0xf]
      %v2854 = vld [vmem:[%s2803 + $0xc8] sm:$0xf]
      %v2855 = vld [vmem:[%s2803 + $0xcc] sm:$0xf]
      %v2856 = vld [vmem:[%s2803 + $0xd0] sm:$0xf]
      %v2857 = vld [vmem:[%s2803 + $0xd4] sm:$0x1]
      %v2858 = vld [vmem:[%s2803 + $0xd8] sm:$0xf]
      %v2859 = vld [vmem:[%s2803 + $0xdc] sm:$0xf]
      %v2860 = vld [vmem:[%s2803 + $0xe0] sm:$0xf]
      %v2861 = vld [vmem:[%s2803 + $0xe4] sm:$0xf]
      %v2862 = vld [vmem:[%s2803 + $0xe8] sm:$0xf]
      %v2863 = vld [vmem:[%s2803 + $0xec] sm:$0xf]
      %v2864 = vld [vmem:[%s2803 + $0xf0] sm:$0xf]
      %v2865 = vld [vmem:[%s2803 + $0xf4] sm:$0xf]
      %v2866 = vld [vmem:[%s2803 + $0xf8] sm:$0x1]
      %v2867 = vld [vmem:[%s2803 + $0xfc] sm:$0xf]
      %v2868 = vld [vmem:[%s2803 + $0x100] sm:$0xf]
      %v2869 = vld [vmem:[%s2803 + $0x104] sm:$0xf]
      %v2870 = vld [vmem:[%s2803 + $0x108] sm:$0xf]
      %v2871 = vld [vmem:[%s2803 + $0x10c] sm:$0xf]
      %v2872 = vld [vmem:[%s2803 + $0x110] sm:$0xf]
      %v2873 = vld [vmem:[%s2803 + $0x114] sm:$0xf]
      %v2874 = vld [vmem:[%s2803 + $0x118] sm:$0xf]
      %v2875 = vld [vmem:[%s2803 + $0x11c] sm:$0x1]
      %s2876 = scalar_lea.vmem %s1, 6
      %v2877 = vld [vmem:[%s2876] sm:$0x3]
      %v2942 = vunpack.c.l.b16 %v2804
      %v2943 = vunpack.c.l.b16 %v2805
      %v2944 = vunpack.c.l.b16 %v2806
      %v2945 = vunpack.c.l.b16 %v2807
      %v2946 = vunpack.c.l.b16 %v2808
      %v2947 = vunpack.c.l.b16 %v2809
      %v2948 = vunpack.c.l.b16 %v2810
      %v2949 = vunpack.c.l.b16 %v2811
      %v2950 = vunpack.c.l.b16 %v2813
      %v2951 = vunpack.c.l.b16 %v2814
      %v2952 = vunpack.c.l.b16 %v2815
      %v2953 = vunpack.c.l.b16 %v2816
      %v2954 = vunpack.c.l.b16 %v2817
      %v2955 = vunpack.c.l.b16 %v2818
      %v2956 = vunpack.c.l.b16 %v2819
      %v2957 = vunpack.c.l.b16 %v2820
      %v2958 = vunpack.c.l.b16 %v2822
      %v2959 = vunpack.c.l.b16 %v2823
      %v2960 = vunpack.c.l.b16 %v2824
      %v2961 = vunpack.c.l.b16 %v2825
      %v2962 = vunpack.c.l.b16 %v2826
      %v2963 = vunpack.c.l.b16 %v2827
      %v2964 = vunpack.c.l.b16 %v2828
      %v2965 = vunpack.c.l.b16 %v2829
      %v2966 = vunpack.c.l.b16 %v2831
      %v2967 = vunpack.c.l.b16 %v2832
      %v2968 = vunpack.c.l.b16 %v2833
      %v2969 = vunpack.c.l.b16 %v2834
      %v2970 = vunpack.c.l.b16 %v2835
      %v2971 = vunpack.c.l.b16 %v2836
      %v2972 = vunpack.c.l.b16 %v2837
      %v2973 = vunpack.c.l.b16 %v2838
      %v2974 = vunpack.c.l.b16 %v2840
      %v2975 = vunpack.c.l.b16 %v2841
      %v2976 = vunpack.c.l.b16 %v2842
      %v2977 = vunpack.c.l.b16 %v2843
      %v2978 = vunpack.c.l.b16 %v2844
      %v2979 = vunpack.c.l.b16 %v2845
      %v2980 = vunpack.c.l.b16 %v2846
      %v2981 = vunpack.c.l.b16 %v2847
      %v2982 = vunpack.c.l.b16 %v2849
      %v2983 = vunpack.c.l.b16 %v2850
      %v2984 = vunpack.c.l.b16 %v2851
      %v2985 = vunpack.c.l.b16 %v2852
      %v2986 = vunpack.c.l.b16 %v2853
      %v2987 = vunpack.c.l.b16 %v2854
      %v2988 = vunpack.c.l.b16 %v2855
      %v2989 = vunpack.c.l.b16 %v2856
      %v2990 = vunpack.c.l.b16 %v2858
      %v2991 = vunpack.c.l.b16 %v2859
      %v2992 = vunpack.c.l.b16 %v2860
      %v2993 = vunpack.c.l.b16 %v2861
      %v2994 = vunpack.c.l.b16 %v2862
      %v2995 = vunpack.c.l.b16 %v2863
      %v2996 = vunpack.c.l.b16 %v2864
      %v2997 = vunpack.c.l.b16 %v2865
      %v2998 = vunpack.c.l.b16 %v2867
      %v2999 = vunpack.c.l.b16 %v2868
      %v3000 = vunpack.c.l.b16 %v2869
      %v3001 = vunpack.c.l.b16 %v2870
      %v3002 = vunpack.c.l.b16 %v2871
      %v3003 = vunpack.c.l.b16 %v2872
      %v3004 = vunpack.c.l.b16 %v2873
      %v3005 = vunpack.c.l.b16 %v2874
      %v3006 = vpack.c.b16 %v2943, %v2942
      %v3007 = vpack.c.b16 %v2945, %v2944
      %v3008 = vpack.c.b16 %v2947, %v2946
      %v3009 = vpack.c.b16 %v2949, %v2948
      %v3010 = vpack.c.b16 %v2951, %v2950
      %v3011 = vpack.c.b16 %v2953, %v2952
      %v3012 = vpack.c.b16 %v2955, %v2954
      %v3013 = vpack.c.b16 %v2957, %v2956
      %v3014 = vpack.c.b16 %v2959, %v2958
      %v3015 = vpack.c.b16 %v2961, %v2960
      %v3016 = vpack.c.b16 %v2963, %v2962
      %v3017 = vpack.c.b16 %v2965, %v2964
      %v3018 = vpack.c.b16 %v2967, %v2966
      %v3019 = vpack.c.b16 %v2969, %v2968
      %v3020 = vpack.c.b16 %v2971, %v2970
      %v3021 = vpack.c.b16 %v2973, %v2972
      %v3022 = vpack.c.b16 %v2975, %v2974
      %v3023 = vpack.c.b16 %v2977, %v2976
      %v3024 = vpack.c.b16 %v2979, %v2978
      %v3025 = vpack.c.b16 %v2981, %v2980
      %v3026 = vpack.c.b16 %v2983, %v2982
      %v3027 = vpack.c.b16 %v2985, %v2984
      %v3028 = vpack.c.b16 %v2987, %v2986
      %v3029 = vpack.c.b16 %v2989, %v2988
      %v3030 = vpack.c.b16 %v2991, %v2990
      %v3031 = vpack.c.b16 %v2993, %v2992
      %v3032 = vpack.c.b16 %v2995, %v2994
      %v3033 = vpack.c.b16 %v2997, %v2996
      %v3034 = vpack.c.b16 %v2999, %v2998
      %v3035 = vpack.c.b16 %v3001, %v3000
      %v3036 = vpack.c.b16 %v3003, %v3002
      %v3037 = vpack.c.b16 %v3005, %v3004
      %v3039 = vsel %vm1101, %v3006, 0
      %v3042 = vsel %vm1101, %v3007, 0
      %v3045 = vsel %vm1101, %v3008, 0
      %v3048 = vsel %vm1101, %v3009, 0
      %v3051 = vsel %vm1101, %v3010, 0
      %v3054 = vsel %vm1101, %v3011, 0
      %v3057 = vsel %vm1101, %v3012, 0
      %v3060 = vsel %vm1101, %v3013, 0
      %v3063 = vsel %vm1101, %v3014, 0
      %v3066 = vsel %vm1101, %v3015, 0
      %v3069 = vsel %vm1101, %v3016, 0
      %v3072 = vsel %vm1101, %v3017, 0
      %v3075 = vsel %vm1101, %v3018, 0
      %v3078 = vsel %vm1101, %v3019, 0
      %v3081 = vsel %vm1101, %v3020, 0
      %v3084 = vsel %vm1101, %v3021, 0
      %v3087 = vsel %vm1101, %v3022, 0
      %v3090 = vsel %vm1101, %v3023, 0
      %v3093 = vsel %vm1101, %v3024, 0
      %v3096 = vsel %vm1101, %v3025, 0
      %v3099 = vsel %vm1101, %v3026, 0
      %v3102 = vsel %vm1101, %v3027, 0
      %v3105 = vsel %vm1101, %v3028, 0
      %v3108 = vsel %vm1101, %v3029, 0
      %v3111 = vsel %vm1101, %v3030, 0
      %v3114 = vsel %vm1101, %v3031, 0
      %v3117 = vsel %vm1101, %v3032, 0
      %v3120 = vsel %vm1101, %v3033, 0
      %v3123 = vsel %vm1101, %v3034, 0
      %v3126 = vsel %vm1101, %v3035, 0
      %v3129 = vsel %vm1101, %v3036, 0
      %v3132 = vsel %vm1101, %v3037, 0
      %v3135 = vsel %vm1198, %v2877, 0
      %3137 = vmatprep.subr.bf16.mxu0 0
      %3138 = vmatpush1.bf16.msra.mxu0 0
      %3139 = vmatprep.subr.bf16.mxu0 0
      %3140 = vmatpush1.bf16.msra.mxu0 0
      %3141 = vmatprep.subr.bf16.mxu0 0
      %3142 = vmatpush1.bf16.msra.mxu0 0
      %3143 = vmatprep.subr.bf16.mxu0 0
      %3144 = vmatpush1.bf16.msra.mxu0 0
      %3145 = vmatprep.subr.bf16.mxu0 0
      %3146 = vmatpush1.bf16.msra.mxu0 0
      %3147 = vmatprep.subr.bf16.mxu0 0
      %3148 = vmatpush1.bf16.msra.mxu0 0
      %3149 = vmatprep.subr.bf16.mxu0 0
      %3150 = vmatpush1.bf16.msra.mxu0 0
      %3151 = vmatprep.subr.bf16.mxu0 0
      %3152 = vmatpush1.bf16.msra.mxu0 %v3135
      %3153 = vmatprep.subr.bf16.mxu0 0
      %3154 = vmatpush2.bf16.msra.mxu0 0
      %3155 = vmatprep.subr.bf16.mxu0 0
      %3156 = vmatpush2.bf16.msra.mxu0 0
      %3157 = vmatprep.subr.bf16.mxu0 0
      %3158 = vmatpush2.bf16.msra.mxu0 0
      %3159 = vmatprep.subr.bf16.mxu0 0
      %3160 = vmatpush2.bf16.msra.mxu0 0
      %3161 = vmatprep.subr.bf16.mxu0 0
      %3162 = vmatpush2.bf16.msra.mxu0 0
      %3163 = vmatprep.subr.bf16.mxu0 0
      %3164 = vmatpush2.bf16.msra.mxu0 0
      %3165 = vmatprep.subr.bf16.mxu0 0
      %3166 = vmatpush2.bf16.msra.mxu0 0
      %3167 = vmatprep.subr.bf16.mxu0 0
      %3168 = vmatpush2.bf16.msra.mxu0 0
      %3169 = vmatprep.mubr.bf16.mxu0 0
      %3170 = vmatmul.mubr.bf16.gmra.mxu0 %v3039
      %v3171 = vpop.f32.mrf.mxu0
      %v3172 = vadd.f32 0.0, %v3171
      %v3173 = vpop.f32.mrf.mxu0
      %v3174 = vpop.f32.mrf.mxu0
      %v3175 = vadd.f32 0.0, %v3174
      %v3176 = vpop.f32.mrf.mxu0
      %3177 = vmatprep.mubr.bf16.mxu0 0
      %3178 = vmatmul.mubr.bf16.gmra.mxu0 %v3042
      %v3179 = vpop.f32.mrf.mxu0
      %v3180 = vadd.f32 0.0, %v3179
      %v3181 = vpop.f32.mrf.mxu0
      %v3182 = vpop.f32.mrf.mxu0
      %v3183 = vadd.f32 0.0, %v3182
      %v3184 = vpop.f32.mrf.mxu0
      %3185 = vmatprep.mubr.bf16.mxu0 0
      %3186 = vmatmul.mubr.bf16.gmra.mxu0 %v3045
      %v3187 = vpop.f32.mrf.mxu0
      %v3188 = vadd.f32 0.0, %v3187
      %v3189 = vpop.f32.mrf.mxu0
      %v3190 = vpop.f32.mrf.mxu0
      %v3191 = vadd.f32 0.0, %v3190
      %v3192 = vpop.f32.mrf.mxu0
      %3193 = vmatprep.mubr.bf16.mxu0 0
      %3194 = vmatmul.mubr.bf16.gmra.mxu0 %v3048
      %v3195 = vpop.f32.mrf.mxu0
      %v3196 = vadd.f32 0.0, %v3195
      %v3197 = vpop.f32.mrf.mxu0
      %v3198 = vpop.f32.mrf.mxu0
      %v3199 = vadd.f32 0.0, %v3198
      %v3200 = vpop.f32.mrf.mxu0
      %3201 = vmatprep.mubr.bf16.mxu0 0
      %3202 = vmatmul.mubr.bf16.gmra.mxu0 %v3051
      %v3203 = vpop.f32.mrf.mxu0
      %v3204 = vadd.f32 0.0, %v3203
      %v3205 = vpop.f32.mrf.mxu0
      %v3206 = vpop.f32.mrf.mxu0
      %v3207 = vadd.f32 0.0, %v3206
      %v3208 = vpop.f32.mrf.mxu0
      %3209 = vmatprep.mubr.bf16.mxu0 0
      %3210 = vmatmul.mubr.bf16.gmra.mxu0 %v3054
      %v3211 = vpop.f32.mrf.mxu0
      %v3212 = vadd.f32 0.0, %v3211
      %v3213 = vpop.f32.mrf.mxu0
      %v3214 = vpop.f32.mrf.mxu0
      %v3215 = vadd.f32 0.0, %v3214
      %v3216 = vpop.f32.mrf.mxu0
      %3217 = vmatprep.mubr.bf16.mxu0 0
      %3218 = vmatmul.mubr.bf16.gmra.mxu0 %v3057
      %v3219 = vpop.f32.mrf.mxu0
      %v3220 = vadd.f32 0.0, %v3219
      %v3221 = vpop.f32.mrf.mxu0
      %v3222 = vpop.f32.mrf.mxu0
      %v3223 = vadd.f32 0.0, %v3222
      %v3224 = vpop.f32.mrf.mxu0
      %3225 = vmatprep.mubr.bf16.mxu0 0
      %3226 = vmatmul.mubr.bf16.gmra.mxu0 %v3060
      %v3227 = vpop.f32.mrf.mxu0
      %v3228 = vadd.f32 0.0, %v3227
      %v3229 = vpop.f32.mrf.mxu0
      %v3230 = vpop.f32.mrf.mxu0
      %v3231 = vadd.f32 0.0, %v3230
      %v3232 = vpop.f32.mrf.mxu0
      %3233 = vmatprep.mubr.bf16.mxu0 0
      %3234 = vmatmul.mubr.bf16.gmra.mxu0 %v3063
      %v3235 = vpop.f32.mrf.mxu0
      %v3236 = vadd.f32 0.0, %v3235
      %v3237 = vpop.f32.mrf.mxu0
      %v3238 = vpop.f32.mrf.mxu0
      %v3239 = vadd.f32 0.0, %v3238
      %v3240 = vpop.f32.mrf.mxu0
      %3241 = vmatprep.mubr.bf16.mxu0 0
      %3242 = vmatmul.mubr.bf16.gmra.mxu0 %v3066
      %v3243 = vpop.f32.mrf.mxu0
      %v3244 = vadd.f32 0.0, %v3243
      %v3245 = vpop.f32.mrf.mxu0
      %v3246 = vpop.f32.mrf.mxu0
      %v3247 = vadd.f32 0.0, %v3246
      %v3248 = vpop.f32.mrf.mxu0
      %3249 = vmatprep.mubr.bf16.mxu0 0
      %3250 = vmatmul.mubr.bf16.gmra.mxu0 %v3069
      %v3251 = vpop.f32.mrf.mxu0
      %v3252 = vadd.f32 0.0, %v3251
      %v3253 = vpop.f32.mrf.mxu0
      %v3254 = vpop.f32.mrf.mxu0
      %v3255 = vadd.f32 0.0, %v3254
      %v3256 = vpop.f32.mrf.mxu0
      %3257 = vmatprep.mubr.bf16.mxu0 0
      %3258 = vmatmul.mubr.bf16.gmra.mxu0 %v3072
      %v3259 = vpop.f32.mrf.mxu0
      %v3260 = vadd.f32 0.0, %v3259
      %v3261 = vpop.f32.mrf.mxu0
      %v3262 = vpop.f32.mrf.mxu0
      %v3263 = vadd.f32 0.0, %v3262
      %v3264 = vpop.f32.mrf.mxu0
      %3265 = vmatprep.mubr.bf16.mxu0 0
      %3266 = vmatmul.mubr.bf16.gmra.mxu0 %v3075
      %v3267 = vpop.f32.mrf.mxu0
      %v3268 = vadd.f32 0.0, %v3267
      %v3269 = vpop.f32.mrf.mxu0
      %v3270 = vpop.f32.mrf.mxu0
      %v3271 = vadd.f32 0.0, %v3270
      %v3272 = vpop.f32.mrf.mxu0
      %3273 = vmatprep.mubr.bf16.mxu0 0
      %3274 = vmatmul.mubr.bf16.gmra.mxu0 %v3078
      %v3275 = vpop.f32.mrf.mxu0
      %v3276 = vadd.f32 0.0, %v3275
      %v3277 = vpop.f32.mrf.mxu0
      %v3278 = vpop.f32.mrf.mxu0
      %v3279 = vadd.f32 0.0, %v3278
      %v3280 = vpop.f32.mrf.mxu0
      %3281 = vmatprep.mubr.bf16.mxu0 0
      %3282 = vmatmul.mubr.bf16.gmra.mxu0 %v3081
      %v3283 = vpop.f32.mrf.mxu0
      %v3284 = vadd.f32 0.0, %v3283
      %v3285 = vpop.f32.mrf.mxu0
      %v3286 = vpop.f32.mrf.mxu0
      %v3287 = vadd.f32 0.0, %v3286
      %v3288 = vpop.f32.mrf.mxu0
      %3289 = vmatprep.mubr.bf16.mxu0 0
      %3290 = vmatmul.mubr.bf16.gmra.mxu0 %v3084
      %v3291 = vpop.f32.mrf.mxu0
      %v3292 = vadd.f32 0.0, %v3291
      %v3293 = vpop.f32.mrf.mxu0
      %v3294 = vpop.f32.mrf.mxu0
      %v3295 = vadd.f32 0.0, %v3294
      %v3296 = vpop.f32.mrf.mxu0
      %3297 = vmatprep.mubr.bf16.mxu0 0
      %3298 = vmatmul.mubr.bf16.gmra.mxu0 %v3087
      %v3299 = vpop.f32.mrf.mxu0
      %v3300 = vadd.f32 0.0, %v3299
      %v3301 = vpop.f32.mrf.mxu0
      %v3302 = vpop.f32.mrf.mxu0
      %v3303 = vadd.f32 0.0, %v3302
      %v3304 = vpop.f32.mrf.mxu0
      %3305 = vmatprep.mubr.bf16.mxu0 0
      %3306 = vmatmul.mubr.bf16.gmra.mxu0 %v3090
      %v3307 = vpop.f32.mrf.mxu0
      %v3308 = vadd.f32 0.0, %v3307
      %v3309 = vpop.f32.mrf.mxu0
      %v3310 = vpop.f32.mrf.mxu0
      %v3311 = vadd.f32 0.0, %v3310
      %v3312 = vpop.f32.mrf.mxu0
      %3313 = vmatprep.mubr.bf16.mxu0 0
      %3314 = vmatmul.mubr.bf16.gmra.mxu0 %v3093
      %v3315 = vpop.f32.mrf.mxu0
      %v3316 = vadd.f32 0.0, %v3315
      %v3317 = vpop.f32.mrf.mxu0
      %v3318 = vpop.f32.mrf.mxu0
      %v3319 = vadd.f32 0.0, %v3318
      %v3320 = vpop.f32.mrf.mxu0
      %3321 = vmatprep.mubr.bf16.mxu0 0
      %3322 = vmatmul.mubr.bf16.gmra.mxu0 %v3096
      %v3323 = vpop.f32.mrf.mxu0
      %v3324 = vadd.f32 0.0, %v3323
      %v3325 = vpop.f32.mrf.mxu0
      %v3326 = vpop.f32.mrf.mxu0
      %v3327 = vadd.f32 0.0, %v3326
      %v3328 = vpop.f32.mrf.mxu0
      %3329 = vmatprep.mubr.bf16.mxu0 0
      %3330 = vmatmul.mubr.bf16.gmra.mxu0 %v3099
      %v3331 = vpop.f32.mrf.mxu0
      %v3332 = vadd.f32 0.0, %v3331
      %v3333 = vpop.f32.mrf.mxu0
      %v3334 = vpop.f32.mrf.mxu0
      %v3335 = vadd.f32 0.0, %v3334
      %v3336 = vpop.f32.mrf.mxu0
      %3337 = vmatprep.mubr.bf16.mxu0 0
      %3338 = vmatmul.mubr.bf16.gmra.mxu0 %v3102
      %v3339 = vpop.f32.mrf.mxu0
      %v3340 = vadd.f32 0.0, %v3339
      %v3341 = vpop.f32.mrf.mxu0
      %v3342 = vpop.f32.mrf.mxu0
      %v3343 = vadd.f32 0.0, %v3342
      %v3344 = vpop.f32.mrf.mxu0
      %3345 = vmatprep.mubr.bf16.mxu0 0
      %3346 = vmatmul.mubr.bf16.gmra.mxu0 %v3105
      %v3347 = vpop.f32.mrf.mxu0
      %v3348 = vadd.f32 0.0, %v3347
      %v3349 = vpop.f32.mrf.mxu0
      %v3350 = vpop.f32.mrf.mxu0
      %v3351 = vadd.f32 0.0, %v3350
      %v3352 = vpop.f32.mrf.mxu0
      %3353 = vmatprep.mubr.bf16.mxu0 0
      %3354 = vmatmul.mubr.bf16.gmra.mxu0 %v3108
      %v3355 = vpop.f32.mrf.mxu0
      %v3356 = vadd.f32 0.0, %v3355
      %v3357 = vpop.f32.mrf.mxu0
      %v3358 = vpop.f32.mrf.mxu0
      %v3359 = vadd.f32 0.0, %v3358
      %v3360 = vpop.f32.mrf.mxu0
      %3361 = vmatprep.mubr.bf16.mxu0 0
      %3362 = vmatmul.mubr.bf16.gmra.mxu0 %v3111
      %v3363 = vpop.f32.mrf.mxu0
      %v3364 = vadd.f32 0.0, %v3363
      %v3365 = vpop.f32.mrf.mxu0
      %v3366 = vpop.f32.mrf.mxu0
      %v3367 = vadd.f32 0.0, %v3366
      %v3368 = vpop.f32.mrf.mxu0
      %3369 = vmatprep.mubr.bf16.mxu0 0
      %3370 = vmatmul.mubr.bf16.gmra.mxu0 %v3114
      %v3371 = vpop.f32.mrf.mxu0
      %v3372 = vadd.f32 0.0, %v3371
      %v3373 = vpop.f32.mrf.mxu0
      %v3374 = vpop.f32.mrf.mxu0
      %v3375 = vadd.f32 0.0, %v3374
      %v3376 = vpop.f32.mrf.mxu0
      %3377 = vmatprep.mubr.bf16.mxu0 0
      %3378 = vmatmul.mubr.bf16.gmra.mxu0 %v3117
      %v3379 = vpop.f32.mrf.mxu0
      %v3380 = vadd.f32 0.0, %v3379
      %v3381 = vpop.f32.mrf.mxu0
      %v3382 = vpop.f32.mrf.mxu0
      %v3383 = vadd.f32 0.0, %v3382
      %v3384 = vpop.f32.mrf.mxu0
      %3385 = vmatprep.mubr.bf16.mxu0 0
      %3386 = vmatmul.mubr.bf16.gmra.mxu0 %v3120
      %v3387 = vpop.f32.mrf.mxu0
      %v3388 = vadd.f32 0.0, %v3387
      %v3389 = vpop.f32.mrf.mxu0
      %v3390 = vpop.f32.mrf.mxu0
      %v3391 = vadd.f32 0.0, %v3390
      %v3392 = vpop.f32.mrf.mxu0
      %3393 = vmatprep.mubr.bf16.mxu0 0
      %3394 = vmatmul.mubr.bf16.gmra.mxu0 %v3123
      %v3395 = vpop.f32.mrf.mxu0
      %v3396 = vadd.f32 0.0, %v3395
      %v3397 = vpop.f32.mrf.mxu0
      %v3398 = vpop.f32.mrf.mxu0
      %v3399 = vadd.f32 0.0, %v3398
      %v3400 = vpop.f32.mrf.mxu0
      %3401 = vmatprep.mubr.bf16.mxu0 0
      %3402 = vmatmul.mubr.bf16.gmra.mxu0 %v3126
      %v3403 = vpop.f32.mrf.mxu0
      %v3404 = vadd.f32 0.0, %v3403
      %v3405 = vpop.f32.mrf.mxu0
      %v3406 = vpop.f32.mrf.mxu0
      %v3407 = vadd.f32 0.0, %v3406
      %v3408 = vpop.f32.mrf.mxu0
      %3409 = vmatprep.mubr.bf16.mxu0 0
      %3410 = vmatmul.mubr.bf16.gmra.mxu0 %v3129
      %v3411 = vpop.f32.mrf.mxu0
      %v3412 = vadd.f32 0.0, %v3411
      %v3413 = vpop.f32.mrf.mxu0
      %v3414 = vpop.f32.mrf.mxu0
      %v3415 = vadd.f32 0.0, %v3414
      %v3416 = vpop.f32.mrf.mxu0
      %3417 = vmatprep.mubr.bf16.mxu0 0
      %3418 = vmatmul.mubr.bf16.gmra.mxu0 %v3132
      %v3419 = vpop.f32.mrf.mxu0
      %v3420 = vadd.f32 0.0, %v3419
      %v3421 = vpop.f32.mrf.mxu0
      %v3422 = vpop.f32.mrf.mxu0
      %v3423 = vadd.f32 0.0, %v3422
      %v3424 = vpop.f32.mrf.mxu0
      %3425 = vdwg.mxu0
      %v3426 = vadd.f32 %v2736, %v3172
      %v3427 = vadd.f32 %v2737, %v3175
      %v3428 = vadd.f32 %v2738, %v3180
      %v3429 = vadd.f32 %v2739, %v3183
      %v3430 = vadd.f32 %v2740, %v3188
      %v3431 = vadd.f32 %v2741, %v3191
      %v3432 = vadd.f32 %v2742, %v3196
      %v3433 = vadd.f32 %v2743, %v3199
      %v3434 = vadd.f32 %v2744, %v3204
      %v3435 = vadd.f32 %v2745, %v3207
      %v3436 = vadd.f32 %v2746, %v3212
      %v3437 = vadd.f32 %v2747, %v3215
      %v3438 = vadd.f32 %v2748, %v3220
      %v3439 = vadd.f32 %v2749, %v3223
      %v3440 = vadd.f32 %v2750, %v3228
      %v3441 = vadd.f32 %v2751, %v3231
      %v3442 = vadd.f32 %v2752, %v3236
      %v3443 = vadd.f32 %v2753, %v3239
      %v3444 = vadd.f32 %v2754, %v3244
      %v3445 = vadd.f32 %v2755, %v3247
      %v3446 = vadd.f32 %v2756, %v3252
      %v3447 = vadd.f32 %v2757, %v3255
      %v3448 = vadd.f32 %v2758, %v3260
      %v3449 = vadd.f32 %v2759, %v3263
      %v3450 = vadd.f32 %v2760, %v3268
      %v3451 = vadd.f32 %v2761, %v3271
      %v3452 = vadd.f32 %v2762, %v3276
      %v3453 = vadd.f32 %v2763, %v3279
      %v3454 = vadd.f32 %v2764, %v3284
      %v3455 = vadd.f32 %v2765, %v3287
      %v3456 = vadd.f32 %v2766, %v3292
      %v3457 = vadd.f32 %v2767, %v3295
      %v3458 = vadd.f32 %v2768, %v3300
      %v3459 = vadd.f32 %v2769, %v3303
      %v3460 = vadd.f32 %v2770, %v3308
      %v3461 = vadd.f32 %v2771, %v3311
      %v3462 = vadd.f32 %v2772, %v3316
      %v3463 = vadd.f32 %v2773, %v3319
      %v3464 = vadd.f32 %v2774, %v3324
      %v3465 = vadd.f32 %v2775, %v3327
      %v3466 = vadd.f32 %v2776, %v3332
      %v3467 = vadd.f32 %v2777, %v3335
      %v3468 = vadd.f32 %v2778, %v3340
      %v3469 = vadd.f32 %v2779, %v3343
      %v3470 = vadd.f32 %v2780, %v3348
      %v3471 = vadd.f32 %v2781, %v3351
      %v3472 = vadd.f32 %v2782, %v3356
      %v3473 = vadd.f32 %v2783, %v3359
      %v3474 = vadd.f32 %v2784, %v3364
      %v3475 = vadd.f32 %v2785, %v3367
      %v3476 = vadd.f32 %v2786, %v3372
      %v3477 = vadd.f32 %v2787, %v3375
      %v3478 = vadd.f32 %v2788, %v3380
      %v3479 = vadd.f32 %v2789, %v3383
      %v3480 = vadd.f32 %v2790, %v3388
      %v3481 = vadd.f32 %v2791, %v3391
      %v3482 = vadd.f32 %v2792, %v3396
      %v3483 = vadd.f32 %v2793, %v3399
      %v3484 = vadd.f32 %v2794, %v3404
      %v3485 = vadd.f32 %v2795, %v3407
      %v3486 = vadd.f32 %v2796, %v3412
      %v3487 = vadd.f32 %v2797, %v3415
      %v3488 = vadd.f32 %v2798, %v3420
      %v3489 = vadd.f32 %v2799, %v3423
      %v3491 = vshrl.u32 %v2804, 16
      %v3493 = vrot.slane %v3491, 4
      %v3494 = vshll.u32 %v2804, 16
      %v3496 = vrot.slane %v3494, 5
      %v3497 = vor.u32 %v3493, %v3496
      %v3498 = vrot.slane %v3497, 4
      %v3500 = vshll.u32 %v2805, 16
      %v3502 = vrot.slane %v3500, 5
      %v3503 = vsel %vm330, %v3498, %v3502
      %v3504 = vshrl.u32 %v2805, 16
      %v3506 = vrot.slane %v3504, 4
      %v3507 = vor.u32 %v3506, %v3502
      %v3508 = vrot.slane %v3507, 4
      %v3510 = vshll.u32 %v2806, 16
      %v3512 = vrot.slane %v3510, 5
      %v3513 = vsel %vm330, %v3508, %v3512
      %v3514 = vshrl.u32 %v2806, 16
      %v3516 = vrot.slane %v3514, 4
      %v3517 = vor.u32 %v3516, %v3512
      %v3518 = vrot.slane %v3517, 4
      %v3520 = vshll.u32 %v2807, 16
      %v3522 = vrot.slane %v3520, 5
      %v3523 = vsel %vm330, %v3518, %v3522
      %v3524 = vshrl.u32 %v2807, 16
      %v3526 = vrot.slane %v3524, 4
      %v3527 = vor.u32 %v3526, %v3522
      %v3528 = vrot.slane %v3527, 4
      %v3530 = vshll.u32 %v2808, 16
      %v3532 = vrot.slane %v3530, 5
      %v3533 = vsel %vm330, %v3528, %v3532
      %v3534 = vshrl.u32 %v2808, 16
      %v3536 = vrot.slane %v3534, 4
      %v3537 = vor.u32 %v3536, %v3532
      %v3538 = vrot.slane %v3537, 4
      %v3540 = vshll.u32 %v2809, 16
      %v3542 = vrot.slane %v3540, 5
      %v3543 = vsel %vm330, %v3538, %v3542
      %v3544 = vshrl.u32 %v2809, 16
      %v3546 = vrot.slane %v3544, 4
      %v3547 = vor.u32 %v3546, %v3542
      %v3548 = vrot.slane %v3547, 4
      %v3550 = vshll.u32 %v2810, 16
      %v3552 = vrot.slane %v3550, 5
      %v3553 = vsel %vm330, %v3548, %v3552
      %v3554 = vshrl.u32 %v2810, 16
      %v3556 = vrot.slane %v3554, 4
      %v3557 = vor.u32 %v3556, %v3552
      %v3558 = vrot.slane %v3557, 4
      %v3560 = vshll.u32 %v2811, 16
      %v3562 = vrot.slane %v3560, 5
      %v3563 = vsel %vm330, %v3558, %v3562
      %v3564 = vshrl.u32 %v2811, 16
      %v3566 = vrot.slane %v3564, 4
      %v3567 = vor.u32 %v3566, %v3562
      %v3568 = vrot.slane %v3567, 4
      %v3570 = vshll.u32 %v2812, 16
      %v3572 = vrot.slane %v3570, 5
      %v3573 = vsel %vm330, %v3568, %v3572
      %v3575 = vshrl.u32 %v2813, 16
      %v3577 = vrot.slane %v3575, 4
      %v3578 = vshll.u32 %v2813, 16
      %v3580 = vrot.slane %v3578, 5
      %v3581 = vor.u32 %v3577, %v3580
      %v3582 = vrot.slane %v3581, 4
      %v3584 = vshll.u32 %v2814, 16
      %v3586 = vrot.slane %v3584, 5
      %v3587 = vsel %vm330, %v3582, %v3586
      %v3588 = vshrl.u32 %v2814, 16
      %v3590 = vrot.slane %v3588, 4
      %v3591 = vor.u32 %v3590, %v3586
      %v3592 = vrot.slane %v3591, 4
      %v3594 = vshll.u32 %v2815, 16
      %v3596 = vrot.slane %v3594, 5
      %v3597 = vsel %vm330, %v3592, %v3596
      %v3598 = vshrl.u32 %v2815, 16
      %v3600 = vrot.slane %v3598, 4
      %v3601 = vor.u32 %v3600, %v3596
      %v3602 = vrot.slane %v3601, 4
      %v3604 = vshll.u32 %v2816, 16
      %v3606 = vrot.slane %v3604, 5
      %v3607 = vsel %vm330, %v3602, %v3606
      %v3608 = vshrl.u32 %v2816, 16
      %v3610 = vrot.slane %v3608, 4
      %v3611 = vor.u32 %v3610, %v3606
      %v3612 = vrot.slane %v3611, 4
      %v3614 = vshll.u32 %v2817, 16
      %v3616 = vrot.slane %v3614, 5
      %v3617 = vsel %vm330, %v3612, %v3616
      %v3618 = vshrl.u32 %v2817, 16
      %v3620 = vrot.slane %v3618, 4
      %v3621 = vor.u32 %v3620, %v3616
      %v3622 = vrot.slane %v3621, 4
      %v3624 = vshll.u32 %v2818, 16
      %v3626 = vrot.slane %v3624, 5
      %v3627 = vsel %vm330, %v3622, %v3626
      %v3628 = vshrl.u32 %v2818, 16
      %v3630 = vrot.slane %v3628, 4
      %v3631 = vor.u32 %v3630, %v3626
      %v3632 = vrot.slane %v3631, 4
      %v3634 = vshll.u32 %v2819, 16
      %v3636 = vrot.slane %v3634, 5
      %v3637 = vsel %vm330, %v3632, %v3636
      %v3638 = vshrl.u32 %v2819, 16
      %v3640 = vrot.slane %v3638, 4
      %v3641 = vor.u32 %v3640, %v3636
      %v3642 = vrot.slane %v3641, 4
      %v3644 = vshll.u32 %v2820, 16
      %v3646 = vrot.slane %v3644, 5
      %v3647 = vsel %vm330, %v3642, %v3646
      %v3648 = vshrl.u32 %v2820, 16
      %v3650 = vrot.slane %v3648, 4
      %v3651 = vor.u32 %v3650, %v3646
      %v3652 = vrot.slane %v3651, 4
      %v3654 = vshll.u32 %v2821, 16
      %v3656 = vrot.slane %v3654, 5
      %v3657 = vsel %vm330, %v3652, %v3656
      %v3659 = vshrl.u32 %v2822, 16
      %v3661 = vrot.slane %v3659, 4
      %v3662 = vshll.u32 %v2822, 16
      %v3664 = vrot.slane %v3662, 5
      %v3665 = vor.u32 %v3661, %v3664
      %v3666 = vrot.slane %v3665, 4
      %v3668 = vshll.u32 %v2823, 16
      %v3670 = vrot.slane %v3668, 5
      %v3671 = vsel %vm330, %v3666, %v3670
      %v3672 = vshrl.u32 %v2823, 16
      %v3674 = vrot.slane %v3672, 4
      %v3675 = vor.u32 %v3674, %v3670
      %v3676 = vrot.slane %v3675, 4
      %v3678 = vshll.u32 %v2824, 16
      %v3680 = vrot.slane %v3678, 5
      %v3681 = vsel %vm330, %v3676, %v3680
      %v3682 = vshrl.u32 %v2824, 16
      %v3684 = vrot.slane %v3682, 4
      %v3685 = vor.u32 %v3684, %v3680
      %v3686 = vrot.slane %v3685, 4
      %v3688 = vshll.u32 %v2825, 16
      %v3690 = vrot.slane %v3688, 5
      %v3691 = vsel %vm330, %v3686, %v3690
      %v3692 = vshrl.u32 %v2825, 16
      %v3694 = vrot.slane %v3692, 4
      %v3695 = vor.u32 %v3694, %v3690
      %v3696 = vrot.slane %v3695, 4
      %v3698 = vshll.u32 %v2826, 16
      %v3700 = vrot.slane %v3698, 5
      %v3701 = vsel %vm330, %v3696, %v3700
      %v3702 = vshrl.u32 %v2826, 16
      %v3704 = vrot.slane %v3702, 4
      %v3705 = vor.u32 %v3704, %v3700
      %v3706 = vrot.slane %v3705, 4
      %v3708 = vshll.u32 %v2827, 16
      %v3710 = vrot.slane %v3708, 5
      %v3711 = vsel %vm330, %v3706, %v3710
      %v3712 = vshrl.u32 %v2827, 16
      %v3714 = vrot.slane %v3712, 4
      %v3715 = vor.u32 %v3714, %v3710
      %v3716 = vrot.slane %v3715, 4
      %v3718 = vshll.u32 %v2828, 16
      %v3720 = vrot.slane %v3718, 5
      %v3721 = vsel %vm330, %v3716, %v3720
      %v3722 = vshrl.u32 %v2828, 16
      %v3724 = vrot.slane %v3722, 4
      %v3725 = vor.u32 %v3724, %v3720
      %v3726 = vrot.slane %v3725, 4
      %v3728 = vshll.u32 %v2829, 16
      %v3730 = vrot.slane %v3728, 5
      %v3731 = vsel %vm330, %v3726, %v3730
      %v3732 = vshrl.u32 %v2829, 16
      %v3734 = vrot.slane %v3732, 4
      %v3735 = vor.u32 %v3734, %v3730
      %v3736 = vrot.slane %v3735, 4
      %v3738 = vshll.u32 %v2830, 16
      %v3740 = vrot.slane %v3738, 5
      %v3741 = vsel %vm330, %v3736, %v3740
      %v3743 = vshrl.u32 %v2831, 16
      %v3745 = vrot.slane %v3743, 4
      %v3746 = vshll.u32 %v2831, 16
      %v3748 = vrot.slane %v3746, 5
      %v3749 = vor.u32 %v3745, %v3748
      %v3750 = vrot.slane %v3749, 4
      %v3752 = vshll.u32 %v2832, 16
      %v3754 = vrot.slane %v3752, 5
      %v3755 = vsel %vm330, %v3750, %v3754
      %v3756 = vshrl.u32 %v2832, 16
      %v3758 = vrot.slane %v3756, 4
      %v3759 = vor.u32 %v3758, %v3754
      %v3760 = vrot.slane %v3759, 4
      %v3762 = vshll.u32 %v2833, 16
      %v3764 = vrot.slane %v3762, 5
      %v3765 = vsel %vm330, %v3760, %v3764
      %v3766 = vshrl.u32 %v2833, 16
      %v3768 = vrot.slane %v3766, 4
      %v3769 = vor.u32 %v3768, %v3764
      %v3770 = vrot.slane %v3769, 4
      %v3772 = vshll.u32 %v2834, 16
      %v3774 = vrot.slane %v3772, 5
      %v3775 = vsel %vm330, %v3770, %v3774
      %v3776 = vshrl.u32 %v2834, 16
      %v3778 = vrot.slane %v3776, 4
      %v3779 = vor.u32 %v3778, %v3774
      %v3780 = vrot.slane %v3779, 4
      %v3782 = vshll.u32 %v2835, 16
      %v3784 = vrot.slane %v3782, 5
      %v3785 = vsel %vm330, %v3780, %v3784
      %v3786 = vshrl.u32 %v2835, 16
      %v3788 = vrot.slane %v3786, 4
      %v3789 = vor.u32 %v3788, %v3784
      %v3790 = vrot.slane %v3789, 4
      %v3792 = vshll.u32 %v2836, 16
      %v3794 = vrot.slane %v3792, 5
      %v3795 = vsel %vm330, %v3790, %v3794
      %v3796 = vshrl.u32 %v2836, 16
      %v3798 = vrot.slane %v3796, 4
      %v3799 = vor.u32 %v3798, %v3794
      %v3800 = vrot.slane %v3799, 4
      %v3802 = vshll.u32 %v2837, 16
      %v3804 = vrot.slane %v3802, 5
      %v3805 = vsel %vm330, %v3800, %v3804
      %v3806 = vshrl.u32 %v2837, 16
      %v3808 = vrot.slane %v3806, 4
      %v3809 = vor.u32 %v3808, %v3804
      %v3810 = vrot.slane %v3809, 4
      %v3812 = vshll.u32 %v2838, 16
      %v3814 = vrot.slane %v3812, 5
      %v3815 = vsel %vm330, %v3810, %v3814
      %v3816 = vshrl.u32 %v2838, 16
      %v3818 = vrot.slane %v3816, 4
      %v3819 = vor.u32 %v3818, %v3814
      %v3820 = vrot.slane %v3819, 4
      %v3822 = vshll.u32 %v2839, 16
      %v3824 = vrot.slane %v3822, 5
      %v3825 = vsel %vm330, %v3820, %v3824
      %v3827 = vshrl.u32 %v2840, 16
      %v3829 = vrot.slane %v3827, 4
      %v3830 = vshll.u32 %v2840, 16
      %v3832 = vrot.slane %v3830, 5
      %v3833 = vor.u32 %v3829, %v3832
      %v3834 = vrot.slane %v3833, 4
      %v3836 = vshll.u32 %v2841, 16
      %v3838 = vrot.slane %v3836, 5
      %v3839 = vsel %vm330, %v3834, %v3838
      %v3840 = vshrl.u32 %v2841, 16
      %v3842 = vrot.slane %v3840, 4
      %v3843 = vor.u32 %v3842, %v3838
      %v3844 = vrot.slane %v3843, 4
      %v3846 = vshll.u32 %v2842, 16
      %v3848 = vrot.slane %v3846, 5
      %v3849 = vsel %vm330, %v3844, %v3848
      %v3850 = vshrl.u32 %v2842, 16
      %v3852 = vrot.slane %v3850, 4
      %v3853 = vor.u32 %v3852, %v3848
      %v3854 = vrot.slane %v3853, 4
      %v3856 = vshll.u32 %v2843, 16
      %v3858 = vrot.slane %v3856, 5
      %v3859 = vsel %vm330, %v3854, %v3858
      %v3860 = vshrl.u32 %v2843, 16
      %v3862 = vrot.slane %v3860, 4
      %v3863 = vor.u32 %v3862, %v3858
      %v3864 = vrot.slane %v3863, 4
      %v3866 = vshll.u32 %v2844, 16
      %v3868 = vrot.slane %v3866, 5
      %v3869 = vsel %vm330, %v3864, %v3868
      %v3870 = vshrl.u32 %v2844, 16
      %v3872 = vrot.slane %v3870, 4
      %v3873 = vor.u32 %v3872, %v3868
      %v3874 = vrot.slane %v3873, 4
      %v3876 = vshll.u32 %v2845, 16
      %v3878 = vrot.slane %v3876, 5
      %v3879 = vsel %vm330, %v3874, %v3878
      %v3880 = vshrl.u32 %v2845, 16
      %v3882 = vrot.slane %v3880, 4
      %v3883 = vor.u32 %v3882, %v3878
      %v3884 = vrot.slane %v3883, 4
      %v3886 = vshll.u32 %v2846, 16
      %v3888 = vrot.slane %v3886, 5
      %v3889 = vsel %vm330, %v3884, %v3888
      %v3890 = vshrl.u32 %v2846, 16
      %v3892 = vrot.slane %v3890, 4
      %v3893 = vor.u32 %v3892, %v3888
      %v3894 = vrot.slane %v3893, 4
      %v3896 = vshll.u32 %v2847, 16
      %v3898 = vrot.slane %v3896, 5
      %v3899 = vsel %vm330, %v3894, %v3898
      %v3900 = vshrl.u32 %v2847, 16
      %v3902 = vrot.slane %v3900, 4
      %v3903 = vor.u32 %v3902, %v3898
      %v3904 = vrot.slane %v3903, 4
      %v3906 = vshll.u32 %v2848, 16
      %v3908 = vrot.slane %v3906, 5
      %v3909 = vsel %vm330, %v3904, %v3908
      %v3911 = vshrl.u32 %v2849, 16
      %v3913 = vrot.slane %v3911, 4
      %v3914 = vshll.u32 %v2849, 16
      %v3916 = vrot.slane %v3914, 5
      %v3917 = vor.u32 %v3913, %v3916
      %v3918 = vrot.slane %v3917, 4
      %v3920 = vshll.u32 %v2850, 16
      %v3922 = vrot.slane %v3920, 5
      %v3923 = vsel %vm330, %v3918, %v3922
      %v3924 = vshrl.u32 %v2850, 16
      %v3926 = vrot.slane %v3924, 4
      %v3927 = vor.u32 %v3926, %v3922
      %v3928 = vrot.slane %v3927, 4
      %v3930 = vshll.u32 %v2851, 16
      %v3932 = vrot.slane %v3930, 5
      %v3933 = vsel %vm330, %v3928, %v3932
      %v3934 = vshrl.u32 %v2851, 16
      %v3936 = vrot.slane %v3934, 4
      %v3937 = vor.u32 %v3936, %v3932
      %v3938 = vrot.slane %v3937, 4
      %v3940 = vshll.u32 %v2852, 16
      %v3942 = vrot.slane %v3940, 5
      %v3943 = vsel %vm330, %v3938, %v3942
      %v3944 = vshrl.u32 %v2852, 16
      %v3946 = vrot.slane %v3944, 4
      %v3947 = vor.u32 %v3946, %v3942
      %v3948 = vrot.slane %v3947, 4
      %v3950 = vshll.u32 %v2853, 16
      %v3952 = vrot.slane %v3950, 5
      %v3953 = vsel %vm330, %v3948, %v3952
      %v3954 = vshrl.u32 %v2853, 16
      %v3956 = vrot.slane %v3954, 4
      %v3957 = vor.u32 %v3956, %v3952
      %v3958 = vrot.slane %v3957, 4
      %v3960 = vshll.u32 %v2854, 16
      %v3962 = vrot.slane %v3960, 5
      %v3963 = vsel %vm330, %v3958, %v3962
      %v3964 = vshrl.u32 %v2854, 16
      %v3966 = vrot.slane %v3964, 4
      %v3967 = vor.u32 %v3966, %v3962
      %v3968 = vrot.slane %v3967, 4
      %v3970 = vshll.u32 %v2855, 16
      %v3972 = vrot.slane %v3970, 5
      %v3973 = vsel %vm330, %v3968, %v3972
      %v3974 = vshrl.u32 %v2855, 16
      %v3976 = vrot.slane %v3974, 4
      %v3977 = vor.u32 %v3976, %v3972
      %v3978 = vrot.slane %v3977, 4
      %v3980 = vshll.u32 %v2856, 16
      %v3982 = vrot.slane %v3980, 5
      %v3983 = vsel %vm330, %v3978, %v3982
      %v3984 = vshrl.u32 %v2856, 16
      %v3986 = vrot.slane %v3984, 4
      %v3987 = vor.u32 %v3986, %v3982
      %v3988 = vrot.slane %v3987, 4
      %v3990 = vshll.u32 %v2857, 16
      %v3992 = vrot.slane %v3990, 5
      %v3993 = vsel %vm330, %v3988, %v3992
      %v3995 = vshrl.u32 %v2858, 16
      %v3997 = vrot.slane %v3995, 4
      %v3998 = vshll.u32 %v2858, 16
      %v4000 = vrot.slane %v3998, 5
      %v4001 = vor.u32 %v3997, %v4000
      %v4002 = vrot.slane %v4001, 4
      %v4004 = vshll.u32 %v2859, 16
      %v4006 = vrot.slane %v4004, 5
      %v4007 = vsel %vm330, %v4002, %v4006
      %v4008 = vshrl.u32 %v2859, 16
      %v4010 = vrot.slane %v4008, 4
      %v4011 = vor.u32 %v4010, %v4006
      %v4012 = vrot.slane %v4011, 4
      %v4014 = vshll.u32 %v2860, 16
      %v4016 = vrot.slane %v4014, 5
      %v4017 = vsel %vm330, %v4012, %v4016
      %v4018 = vshrl.u32 %v2860, 16
      %v4020 = vrot.slane %v4018, 4
      %v4021 = vor.u32 %v4020, %v4016
      %v4022 = vrot.slane %v4021, 4
      %v4024 = vshll.u32 %v2861, 16
      %v4026 = vrot.slane %v4024, 5
      %v4027 = vsel %vm330, %v4022, %v4026
      %v4028 = vshrl.u32 %v2861, 16
      %v4030 = vrot.slane %v4028, 4
      %v4031 = vor.u32 %v4030, %v4026
      %v4032 = vrot.slane %v4031, 4
      %v4034 = vshll.u32 %v2862, 16
      %v4036 = vrot.slane %v4034, 5
      %v4037 = vsel %vm330, %v4032, %v4036
      %v4038 = vshrl.u32 %v2862, 16
      %v4040 = vrot.slane %v4038, 4
      %v4041 = vor.u32 %v4040, %v4036
      %v4042 = vrot.slane %v4041, 4
      %v4044 = vshll.u32 %v2863, 16
      %v4046 = vrot.slane %v4044, 5
      %v4047 = vsel %vm330, %v4042, %v4046
      %v4048 = vshrl.u32 %v2863, 16
      %v4050 = vrot.slane %v4048, 4
      %v4051 = vor.u32 %v4050, %v4046
      %v4052 = vrot.slane %v4051, 4
      %v4054 = vshll.u32 %v2864, 16
      %v4056 = vrot.slane %v4054, 5
      %v4057 = vsel %vm330, %v4052, %v4056
      %v4058 = vshrl.u32 %v2864, 16
      %v4060 = vrot.slane %v4058, 4
      %v4061 = vor.u32 %v4060, %v4056
      %v4062 = vrot.slane %v4061, 4
      %v4064 = vshll.u32 %v2865, 16
      %v4066 = vrot.slane %v4064, 5
      %v4067 = vsel %vm330, %v4062, %v4066
      %v4068 = vshrl.u32 %v2865, 16
      %v4070 = vrot.slane %v4068, 4
      %v4071 = vor.u32 %v4070, %v4066
      %v4072 = vrot.slane %v4071, 4
      %v4074 = vshll.u32 %v2866, 16
      %v4076 = vrot.slane %v4074, 5
      %v4077 = vsel %vm330, %v4072, %v4076
      %v4079 = vshrl.u32 %v2867, 16
      %v4081 = vrot.slane %v4079, 4
      %v4082 = vshll.u32 %v2867, 16
      %v4084 = vrot.slane %v4082, 5
      %v4085 = vor.u32 %v4081, %v4084
      %v4086 = vrot.slane %v4085, 4
      %v4088 = vshll.u32 %v2868, 16
      %v4090 = vrot.slane %v4088, 5
      %v4091 = vsel %vm330, %v4086, %v4090
      %v4092 = vshrl.u32 %v2868, 16
      %v4094 = vrot.slane %v4092, 4
      %v4095 = vor.u32 %v4094, %v4090
      %v4096 = vrot.slane %v4095, 4
      %v4098 = vshll.u32 %v2869, 16
      %v4100 = vrot.slane %v4098, 5
      %v4101 = vsel %vm330, %v4096, %v4100
      %v4102 = vshrl.u32 %v2869, 16
      %v4104 = vrot.slane %v4102, 4
      %v4105 = vor.u32 %v4104, %v4100
      %v4106 = vrot.slane %v4105, 4
      %v4108 = vshll.u32 %v2870, 16
      %v4110 = vrot.slane %v4108, 5
      %v4111 = vsel %vm330, %v4106, %v4110
      %v4112 = vshrl.u32 %v2870, 16
      %v4114 = vrot.slane %v4112, 4
      %v4115 = vor.u32 %v4114, %v4110
      %v4116 = vrot.slane %v4115, 4
      %v4118 = vshll.u32 %v2871, 16
      %v4120 = vrot.slane %v4118, 5
      %v4121 = vsel %vm330, %v4116, %v4120
      %v4122 = vshrl.u32 %v2871, 16
      %v4124 = vrot.slane %v4122, 4
      %v4125 = vor.u32 %v4124, %v4120
      %v4126 = vrot.slane %v4125, 4
      %v4128 = vshll.u32 %v2872, 16
      %v4130 = vrot.slane %v4128, 5
      %v4131 = vsel %vm330, %v4126, %v4130
      %v4132 = vshrl.u32 %v2872, 16
      %v4134 = vrot.slane %v4132, 4
      %v4135 = vor.u32 %v4134, %v4130
      %v4136 = vrot.slane %v4135, 4
      %v4138 = vshll.u32 %v2873, 16
      %v4140 = vrot.slane %v4138, 5
      %v4141 = vsel %vm330, %v4136, %v4140
      %v4142 = vshrl.u32 %v2873, 16
      %v4144 = vrot.slane %v4142, 4
      %v4145 = vor.u32 %v4144, %v4140
      %v4146 = vrot.slane %v4145, 4
      %v4148 = vshll.u32 %v2874, 16
      %v4150 = vrot.slane %v4148, 5
      %v4151 = vsel %vm330, %v4146, %v4150
      %v4152 = vshrl.u32 %v2874, 16
      %v4154 = vrot.slane %v4152, 4
      %v4155 = vor.u32 %v4154, %v4150
      %v4156 = vrot.slane %v4155, 4
      %v4158 = vshll.u32 %v2875, 16
      %v4160 = vrot.slane %v4158, 5
      %v4161 = vsel %vm330, %v4156, %v4160
      %s4162 = scalar_lea.vmem %s1, 8
      %v4163 = vld [vmem:[%s4162] sm:$0x3]
      %v4164 = vunpack.c.l.b16 %v3503
      %v4165 = vunpack.c.l.b16 %v3513
      %v4166 = vunpack.c.l.b16 %v3523
      %v4167 = vunpack.c.l.b16 %v3533
      %v4168 = vunpack.c.l.b16 %v3543
      %v4169 = vunpack.c.l.b16 %v3553
      %v4170 = vunpack.c.l.b16 %v3563
      %v4171 = vunpack.c.l.b16 %v3573
      %v4172 = vunpack.c.l.b16 %v3587
      %v4173 = vunpack.c.l.b16 %v3597
      %v4174 = vunpack.c.l.b16 %v3607
      %v4175 = vunpack.c.l.b16 %v3617
      %v4176 = vunpack.c.l.b16 %v3627
      %v4177 = vunpack.c.l.b16 %v3637
      %v4178 = vunpack.c.l.b16 %v3647
      %v4179 = vunpack.c.l.b16 %v3657
      %v4180 = vunpack.c.l.b16 %v3671
      %v4181 = vunpack.c.l.b16 %v3681
      %v4182 = vunpack.c.l.b16 %v3691
      %v4183 = vunpack.c.l.b16 %v3701
      %v4184 = vunpack.c.l.b16 %v3711
      %v4185 = vunpack.c.l.b16 %v3721
      %v4186 = vunpack.c.l.b16 %v3731
      %v4187 = vunpack.c.l.b16 %v3741
      %v4188 = vunpack.c.l.b16 %v3755
      %v4189 = vunpack.c.l.b16 %v3765
      %v4190 = vunpack.c.l.b16 %v3775
      %v4191 = vunpack.c.l.b16 %v3785
      %v4192 = vunpack.c.l.b16 %v3795
      %v4193 = vunpack.c.l.b16 %v3805
      %v4194 = vunpack.c.l.b16 %v3815
      %v4195 = vunpack.c.l.b16 %v3825
      %v4196 = vunpack.c.l.b16 %v3839
      %v4197 = vunpack.c.l.b16 %v3849
      %v4198 = vunpack.c.l.b16 %v3859
      %v4199 = vunpack.c.l.b16 %v3869
      %v4200 = vunpack.c.l.b16 %v3879
      %v4201 = vunpack.c.l.b16 %v3889
      %v4202 = vunpack.c.l.b16 %v3899
      %v4203 = vunpack.c.l.b16 %v3909
      %v4204 = vunpack.c.l.b16 %v3923
      %v4205 = vunpack.c.l.b16 %v3933
      %v4206 = vunpack.c.l.b16 %v3943
      %v4207 = vunpack.c.l.b16 %v3953
      %v4208 = vunpack.c.l.b16 %v3963
      %v4209 = vunpack.c.l.b16 %v3973
      %v4210 = vunpack.c.l.b16 %v3983
      %v4211 = vunpack.c.l.b16 %v3993
      %v4212 = vunpack.c.l.b16 %v4007
      %v4213 = vunpack.c.l.b16 %v4017
      %v4214 = vunpack.c.l.b16 %v4027
      %v4215 = vunpack.c.l.b16 %v4037
      %v4216 = vunpack.c.l.b16 %v4047
      %v4217 = vunpack.c.l.b16 %v4057
      %v4218 = vunpack.c.l.b16 %v4067
      %v4219 = vunpack.c.l.b16 %v4077
      %v4220 = vunpack.c.l.b16 %v4091
      %v4221 = vunpack.c.l.b16 %v4101
      %v4222 = vunpack.c.l.b16 %v4111
      %v4223 = vunpack.c.l.b16 %v4121
      %v4224 = vunpack.c.l.b16 %v4131
      %v4225 = vunpack.c.l.b16 %v4141
      %v4226 = vunpack.c.l.b16 %v4151
      %v4227 = vunpack.c.l.b16 %v4161
      %v4228 = vpack.c.b16 %v4165, %v4164
      %v4229 = vpack.c.b16 %v4167, %v4166
      %v4230 = vpack.c.b16 %v4169, %v4168
      %v4231 = vpack.c.b16 %v4171, %v4170
      %v4232 = vpack.c.b16 %v4173, %v4172
      %v4233 = vpack.c.b16 %v4175, %v4174
      %v4234 = vpack.c.b16 %v4177, %v4176
      %v4235 = vpack.c.b16 %v4179, %v4178
      %v4236 = vpack.c.b16 %v4181, %v4180
      %v4237 = vpack.c.b16 %v4183, %v4182
      %v4238 = vpack.c.b16 %v4185, %v4184
      %v4239 = vpack.c.b16 %v4187, %v4186
      %v4240 = vpack.c.b16 %v4189, %v4188
      %v4241 = vpack.c.b16 %v4191, %v4190
      %v4242 = vpack.c.b16 %v4193, %v4192
      %v4243 = vpack.c.b16 %v4195, %v4194
      %v4244 = vpack.c.b16 %v4197, %v4196
      %v4245 = vpack.c.b16 %v4199, %v4198
      %v4246 = vpack.c.b16 %v4201, %v4200
      %v4247 = vpack.c.b16 %v4203, %v4202
      %v4248 = vpack.c.b16 %v4205, %v4204
      %v4249 = vpack.c.b16 %v4207, %v4206
      %v4250 = vpack.c.b16 %v4209, %v4208
      %v4251 = vpack.c.b16 %v4211, %v4210
      %v4252 = vpack.c.b16 %v4213, %v4212
      %v4253 = vpack.c.b16 %v4215, %v4214
      %v4254 = vpack.c.b16 %v4217, %v4216
      %v4255 = vpack.c.b16 %v4219, %v4218
      %v4256 = vpack.c.b16 %v4221, %v4220
      %v4257 = vpack.c.b16 %v4223, %v4222
      %v4258 = vpack.c.b16 %v4225, %v4224
      %v4259 = vpack.c.b16 %v4227, %v4226
      %v4261 = vsel %vm1101, %v4228, 0
      %v4264 = vsel %vm1101, %v4229, 0
      %v4267 = vsel %vm1101, %v4230, 0
      %v4270 = vsel %vm1101, %v4231, 0
      %v4273 = vsel %vm1101, %v4232, 0
      %v4276 = vsel %vm1101, %v4233, 0
      %v4279 = vsel %vm1101, %v4234, 0
      %v4282 = vsel %vm1101, %v4235, 0
      %v4285 = vsel %vm1101, %v4236, 0
      %v4288 = vsel %vm1101, %v4237, 0
      %v4291 = vsel %vm1101, %v4238, 0
      %v4294 = vsel %vm1101, %v4239, 0
      %v4297 = vsel %vm1101, %v4240, 0
      %v4300 = vsel %vm1101, %v4241, 0
      %v4303 = vsel %vm1101, %v4242, 0
      %v4306 = vsel %vm1101, %v4243, 0
      %v4309 = vsel %vm1101, %v4244, 0
      %v4312 = vsel %vm1101, %v4245, 0
      %v4315 = vsel %vm1101, %v4246, 0
      %v4318 = vsel %vm1101, %v4247, 0
      %v4321 = vsel %vm1101, %v4248, 0
      %v4324 = vsel %vm1101, %v4249, 0
      %v4327 = vsel %vm1101, %v4250, 0
      %v4330 = vsel %vm1101, %v4251, 0
      %v4333 = vsel %vm1101, %v4252, 0
      %v4336 = vsel %vm1101, %v4253, 0
      %v4339 = vsel %vm1101, %v4254, 0
      %v4342 = vsel %vm1101, %v4255, 0
      %v4345 = vsel %vm1101, %v4256, 0
      %v4348 = vsel %vm1101, %v4257, 0
      %v4351 = vsel %vm1101, %v4258, 0
      %v4354 = vsel %vm1101, %v4259, 0
      %v4357 = vsel %vm1198, %v4163, 0
      %4359 = vmatprep.subr.bf16.mxu0 0
      %4360 = vmatpush1.bf16.msra.mxu0 0
      %4361 = vmatprep.subr.bf16.mxu0 0
      %4362 = vmatpush1.bf16.msra.mxu0 0
      %4363 = vmatprep.subr.bf16.mxu0 0
      %4364 = vmatpush1.bf16.msra.mxu0 0
      %4365 = vmatprep.subr.bf16.mxu0 0
      %4366 = vmatpush1.bf16.msra.mxu0 0
      %4367 = vmatprep.subr.bf16.mxu0 0
      %4368 = vmatpush1.bf16.msra.mxu0 0
      %4369 = vmatprep.subr.bf16.mxu0 0
      %4370 = vmatpush1.bf16.msra.mxu0 0
      %4371 = vmatprep.subr.bf16.mxu0 0
      %4372 = vmatpush1.bf16.msra.mxu0 0
      %4373 = vmatprep.subr.bf16.mxu0 0
      %4374 = vmatpush1.bf16.msra.mxu0 %v4357
      %4375 = vmatprep.subr.bf16.mxu0 0
      %4376 = vmatpush2.bf16.msra.mxu0 0
      %4377 = vmatprep.subr.bf16.mxu0 0
      %4378 = vmatpush2.bf16.msra.mxu0 0
      %4379 = vmatprep.subr.bf16.mxu0 0
      %4380 = vmatpush2.bf16.msra.mxu0 0
      %4381 = vmatprep.subr.bf16.mxu0 0
      %4382 = vmatpush2.bf16.msra.mxu0 0
      %4383 = vmatprep.subr.bf16.mxu0 0
      %4384 = vmatpush2.bf16.msra.mxu0 0
      %4385 = vmatprep.subr.bf16.mxu0 0
      %4386 = vmatpush2.bf16.msra.mxu0 0
      %4387 = vmatprep.subr.bf16.mxu0 0
      %4388 = vmatpush2.bf16.msra.mxu0 0
      %4389 = vmatprep.subr.bf16.mxu0 0
      %4390 = vmatpush2.bf16.msra.mxu0 0
      %4391 = vmatprep.mubr.bf16.mxu0 0
      %4392 = vmatmul.mubr.bf16.gmra.mxu0 %v4261
      %v4393 = vpop.f32.mrf.mxu0
      %v4394 = vadd.f32 0.0, %v4393
      %v4395 = vpop.f32.mrf.mxu0
      %v4396 = vpop.f32.mrf.mxu0
      %v4397 = vadd.f32 0.0, %v4396
      %v4398 = vpop.f32.mrf.mxu0
      %4399 = vmatprep.mubr.bf16.mxu0 0
      %4400 = vmatmul.mubr.bf16.gmra.mxu0 %v4264
      %v4401 = vpop.f32.mrf.mxu0
      %v4402 = vadd.f32 0.0, %v4401
      %v4403 = vpop.f32.mrf.mxu0
      %v4404 = vpop.f32.mrf.mxu0
      %v4405 = vadd.f32 0.0, %v4404
      %v4406 = vpop.f32.mrf.mxu0
      %4407 = vmatprep.mubr.bf16.mxu0 0
      %4408 = vmatmul.mubr.bf16.gmra.mxu0 %v4267
      %v4409 = vpop.f32.mrf.mxu0
      %v4410 = vadd.f32 0.0, %v4409
      %v4411 = vpop.f32.mrf.mxu0
      %v4412 = vpop.f32.mrf.mxu0
      %v4413 = vadd.f32 0.0, %v4412
      %v4414 = vpop.f32.mrf.mxu0
      %4415 = vmatprep.mubr.bf16.mxu0 0
      %4416 = vmatmul.mubr.bf16.gmra.mxu0 %v4270
      %v4417 = vpop.f32.mrf.mxu0
      %v4418 = vadd.f32 0.0, %v4417
      %v4419 = vpop.f32.mrf.mxu0
      %v4420 = vpop.f32.mrf.mxu0
      %v4421 = vadd.f32 0.0, %v4420
      %v4422 = vpop.f32.mrf.mxu0
      %4423 = vmatprep.mubr.bf16.mxu0 0
      %4424 = vmatmul.mubr.bf16.gmra.mxu0 %v4273
      %v4425 = vpop.f32.mrf.mxu0
      %v4426 = vadd.f32 0.0, %v4425
      %v4427 = vpop.f32.mrf.mxu0
      %v4428 = vpop.f32.mrf.mxu0
      %v4429 = vadd.f32 0.0, %v4428
      %v4430 = vpop.f32.mrf.mxu0
      %4431 = vmatprep.mubr.bf16.mxu0 0
      %4432 = vmatmul.mubr.bf16.gmra.mxu0 %v4276
      %v4433 = vpop.f32.mrf.mxu0
      %v4434 = vadd.f32 0.0, %v4433
      %v4435 = vpop.f32.mrf.mxu0
      %v4436 = vpop.f32.mrf.mxu0
      %v4437 = vadd.f32 0.0, %v4436
      %v4438 = vpop.f32.mrf.mxu0
      %4439 = vmatprep.mubr.bf16.mxu0 0
      %4440 = vmatmul.mubr.bf16.gmra.mxu0 %v4279
      %v4441 = vpop.f32.mrf.mxu0
      %v4442 = vadd.f32 0.0, %v4441
      %v4443 = vpop.f32.mrf.mxu0
      %v4444 = vpop.f32.mrf.mxu0
      %v4445 = vadd.f32 0.0, %v4444
      %v4446 = vpop.f32.mrf.mxu0
      %4447 = vmatprep.mubr.bf16.mxu0 0
      %4448 = vmatmul.mubr.bf16.gmra.mxu0 %v4282
      %v4449 = vpop.f32.mrf.mxu0
      %v4450 = vadd.f32 0.0, %v4449
      %v4451 = vpop.f32.mrf.mxu0
      %v4452 = vpop.f32.mrf.mxu0
      %v4453 = vadd.f32 0.0, %v4452
      %v4454 = vpop.f32.mrf.mxu0
      %4455 = vmatprep.mubr.bf16.mxu0 0
      %4456 = vmatmul.mubr.bf16.gmra.mxu0 %v4285
      %v4457 = vpop.f32.mrf.mxu0
      %v4458 = vadd.f32 0.0, %v4457
      %v4459 = vpop.f32.mrf.mxu0
      %v4460 = vpop.f32.mrf.mxu0
      %v4461 = vadd.f32 0.0, %v4460
      %v4462 = vpop.f32.mrf.mxu0
      %4463 = vmatprep.mubr.bf16.mxu0 0
      %4464 = vmatmul.mubr.bf16.gmra.mxu0 %v4288
      %v4465 = vpop.f32.mrf.mxu0
      %v4466 = vadd.f32 0.0, %v4465
      %v4467 = vpop.f32.mrf.mxu0
      %v4468 = vpop.f32.mrf.mxu0
      %v4469 = vadd.f32 0.0, %v4468
      %v4470 = vpop.f32.mrf.mxu0
      %4471 = vmatprep.mubr.bf16.mxu0 0
      %4472 = vmatmul.mubr.bf16.gmra.mxu0 %v4291
      %v4473 = vpop.f32.mrf.mxu0
      %v4474 = vadd.f32 0.0, %v4473
      %v4475 = vpop.f32.mrf.mxu0
      %v4476 = vpop.f32.mrf.mxu0
      %v4477 = vadd.f32 0.0, %v4476
      %v4478 = vpop.f32.mrf.mxu0
      %4479 = vmatprep.mubr.bf16.mxu0 0
      %4480 = vmatmul.mubr.bf16.gmra.mxu0 %v4294
      %v4481 = vpop.f32.mrf.mxu0
      %v4482 = vadd.f32 0.0, %v4481
      %v4483 = vpop.f32.mrf.mxu0
      %v4484 = vpop.f32.mrf.mxu0
      %v4485 = vadd.f32 0.0, %v4484
      %v4486 = vpop.f32.mrf.mxu0
      %4487 = vmatprep.mubr.bf16.mxu0 0
      %4488 = vmatmul.mubr.bf16.gmra.mxu0 %v4297
      %v4489 = vpop.f32.mrf.mxu0
      %v4490 = vadd.f32 0.0, %v4489
      %v4491 = vpop.f32.mrf.mxu0
      %v4492 = vpop.f32.mrf.mxu0
      %v4493 = vadd.f32 0.0, %v4492
      %v4494 = vpop.f32.mrf.mxu0
      %4495 = vmatprep.mubr.bf16.mxu0 0
      %4496 = vmatmul.mubr.bf16.gmra.mxu0 %v4300
      %v4497 = vpop.f32.mrf.mxu0
      %v4498 = vadd.f32 0.0, %v4497
      %v4499 = vpop.f32.mrf.mxu0
      %v4500 = vpop.f32.mrf.mxu0
      %v4501 = vadd.f32 0.0, %v4500
      %v4502 = vpop.f32.mrf.mxu0
      %4503 = vmatprep.mubr.bf16.mxu0 0
      %4504 = vmatmul.mubr.bf16.gmra.mxu0 %v4303
      %v4505 = vpop.f32.mrf.mxu0
      %v4506 = vadd.f32 0.0, %v4505
      %v4507 = vpop.f32.mrf.mxu0
      %v4508 = vpop.f32.mrf.mxu0
      %v4509 = vadd.f32 0.0, %v4508
      %v4510 = vpop.f32.mrf.mxu0
      %4511 = vmatprep.mubr.bf16.mxu0 0
      %4512 = vmatmul.mubr.bf16.gmra.mxu0 %v4306
      %v4513 = vpop.f32.mrf.mxu0
      %v4514 = vadd.f32 0.0, %v4513
      %v4515 = vpop.f32.mrf.mxu0
      %v4516 = vpop.f32.mrf.mxu0
      %v4517 = vadd.f32 0.0, %v4516
      %v4518 = vpop.f32.mrf.mxu0
      %4519 = vmatprep.mubr.bf16.mxu0 0
      %4520 = vmatmul.mubr.bf16.gmra.mxu0 %v4309
      %v4521 = vpop.f32.mrf.mxu0
      %v4522 = vadd.f32 0.0, %v4521
      %v4523 = vpop.f32.mrf.mxu0
      %v4524 = vpop.f32.mrf.mxu0
      %v4525 = vadd.f32 0.0, %v4524
      %v4526 = vpop.f32.mrf.mxu0
      %4527 = vmatprep.mubr.bf16.mxu0 0
      %4528 = vmatmul.mubr.bf16.gmra.mxu0 %v4312
      %v4529 = vpop.f32.mrf.mxu0
      %v4530 = vadd.f32 0.0, %v4529
      %v4531 = vpop.f32.mrf.mxu0
      %v4532 = vpop.f32.mrf.mxu0
      %v4533 = vadd.f32 0.0, %v4532
      %v4534 = vpop.f32.mrf.mxu0
      %4535 = vmatprep.mubr.bf16.mxu0 0
      %4536 = vmatmul.mubr.bf16.gmra.mxu0 %v4315
      %v4537 = vpop.f32.mrf.mxu0
      %v4538 = vadd.f32 0.0, %v4537
      %v4539 = vpop.f32.mrf.mxu0
      %v4540 = vpop.f32.mrf.mxu0
      %v4541 = vadd.f32 0.0, %v4540
      %v4542 = vpop.f32.mrf.mxu0
      %4543 = vmatprep.mubr.bf16.mxu0 0
      %4544 = vmatmul.mubr.bf16.gmra.mxu0 %v4318
      %v4545 = vpop.f32.mrf.mxu0
      %v4546 = vadd.f32 0.0, %v4545
      %v4547 = vpop.f32.mrf.mxu0
      %v4548 = vpop.f32.mrf.mxu0
      %v4549 = vadd.f32 0.0, %v4548
      %v4550 = vpop.f32.mrf.mxu0
      %4551 = vmatprep.mubr.bf16.mxu0 0
      %4552 = vmatmul.mubr.bf16.gmra.mxu0 %v4321
      %v4553 = vpop.f32.mrf.mxu0
      %v4554 = vadd.f32 0.0, %v4553
      %v4555 = vpop.f32.mrf.mxu0
      %v4556 = vpop.f32.mrf.mxu0
      %v4557 = vadd.f32 0.0, %v4556
      %v4558 = vpop.f32.mrf.mxu0
      %4559 = vmatprep.mubr.bf16.mxu0 0
      %4560 = vmatmul.mubr.bf16.gmra.mxu0 %v4324
      %v4561 = vpop.f32.mrf.mxu0
      %v4562 = vadd.f32 0.0, %v4561
      %v4563 = vpop.f32.mrf.mxu0
      %v4564 = vpop.f32.mrf.mxu0
      %v4565 = vadd.f32 0.0, %v4564
      %v4566 = vpop.f32.mrf.mxu0
      %4567 = vmatprep.mubr.bf16.mxu0 0
      %4568 = vmatmul.mubr.bf16.gmra.mxu0 %v4327
      %v4569 = vpop.f32.mrf.mxu0
      %v4570 = vadd.f32 0.0, %v4569
      %v4571 = vpop.f32.mrf.mxu0
      %v4572 = vpop.f32.mrf.mxu0
      %v4573 = vadd.f32 0.0, %v4572
      %v4574 = vpop.f32.mrf.mxu0
      %4575 = vmatprep.mubr.bf16.mxu0 0
      %4576 = vmatmul.mubr.bf16.gmra.mxu0 %v4330
      %v4577 = vpop.f32.mrf.mxu0
      %v4578 = vadd.f32 0.0, %v4577
      %v4579 = vpop.f32.mrf.mxu0
      %v4580 = vpop.f32.mrf.mxu0
      %v4581 = vadd.f32 0.0, %v4580
      %v4582 = vpop.f32.mrf.mxu0
      %4583 = vmatprep.mubr.bf16.mxu0 0
      %4584 = vmatmul.mubr.bf16.gmra.mxu0 %v4333
      %v4585 = vpop.f32.mrf.mxu0
      %v4586 = vadd.f32 0.0, %v4585
      %v4587 = vpop.f32.mrf.mxu0
      %v4588 = vpop.f32.mrf.mxu0
      %v4589 = vadd.f32 0.0, %v4588
      %v4590 = vpop.f32.mrf.mxu0
      %4591 = vmatprep.mubr.bf16.mxu0 0
      %4592 = vmatmul.mubr.bf16.gmra.mxu0 %v4336
      %v4593 = vpop.f32.mrf.mxu0
      %v4594 = vadd.f32 0.0, %v4593
      %v4595 = vpop.f32.mrf.mxu0
      %v4596 = vpop.f32.mrf.mxu0
      %v4597 = vadd.f32 0.0, %v4596
      %v4598 = vpop.f32.mrf.mxu0
      %4599 = vmatprep.mubr.bf16.mxu0 0
      %4600 = vmatmul.mubr.bf16.gmra.mxu0 %v4339
      %v4601 = vpop.f32.mrf.mxu0
      %v4602 = vadd.f32 0.0, %v4601
      %v4603 = vpop.f32.mrf.mxu0
      %v4604 = vpop.f32.mrf.mxu0
      %v4605 = vadd.f32 0.0, %v4604
      %v4606 = vpop.f32.mrf.mxu0
      %4607 = vmatprep.mubr.bf16.mxu0 0
      %4608 = vmatmul.mubr.bf16.gmra.mxu0 %v4342
      %v4609 = vpop.f32.mrf.mxu0
      %v4610 = vadd.f32 0.0, %v4609
      %v4611 = vpop.f32.mrf.mxu0
      %v4612 = vpop.f32.mrf.mxu0
      %v4613 = vadd.f32 0.0, %v4612
      %v4614 = vpop.f32.mrf.mxu0
      %4615 = vmatprep.mubr.bf16.mxu0 0
      %4616 = vmatmul.mubr.bf16.gmra.mxu0 %v4345
      %v4617 = vpop.f32.mrf.mxu0
      %v4618 = vadd.f32 0.0, %v4617
      %v4619 = vpop.f32.mrf.mxu0
      %v4620 = vpop.f32.mrf.mxu0
      %v4621 = vadd.f32 0.0, %v4620
      %v4622 = vpop.f32.mrf.mxu0
      %4623 = vmatprep.mubr.bf16.mxu0 0
      %4624 = vmatmul.mubr.bf16.gmra.mxu0 %v4348
      %v4625 = vpop.f32.mrf.mxu0
      %v4626 = vadd.f32 0.0, %v4625
      %v4627 = vpop.f32.mrf.mxu0
      %v4628 = vpop.f32.mrf.mxu0
      %v4629 = vadd.f32 0.0, %v4628
      %v4630 = vpop.f32.mrf.mxu0
      %4631 = vmatprep.mubr.bf16.mxu0 0
      %4632 = vmatmul.mubr.bf16.gmra.mxu0 %v4351
      %v4633 = vpop.f32.mrf.mxu0
      %v4634 = vadd.f32 0.0, %v4633
      %v4635 = vpop.f32.mrf.mxu0
      %v4636 = vpop.f32.mrf.mxu0
      %v4637 = vadd.f32 0.0, %v4636
      %v4638 = vpop.f32.mrf.mxu0
      %4639 = vmatprep.mubr.bf16.mxu0 0
      %4640 = vmatmul.mubr.bf16.gmra.mxu0 %v4354
      %v4641 = vpop.f32.mrf.mxu0
      %v4642 = vadd.f32 0.0, %v4641
      %v4643 = vpop.f32.mrf.mxu0
      %v4644 = vpop.f32.mrf.mxu0
      %v4645 = vadd.f32 0.0, %v4644
      %v4646 = vpop.f32.mrf.mxu0
      %4647 = vdwg.mxu0
      %v4648 = vadd.f32 %v3426, %v4394
      %v4649 = vadd.f32 %v3427, %v4397
      %v4650 = vadd.f32 %v3428, %v4402
      %v4651 = vadd.f32 %v3429, %v4405
      %v4652 = vadd.f32 %v3430, %v4410
      %v4653 = vadd.f32 %v3431, %v4413
      %v4654 = vadd.f32 %v3432, %v4418
      %v4655 = vadd.f32 %v3433, %v4421
      %v4656 = vadd.f32 %v3434, %v4426
      %v4657 = vadd.f32 %v3435, %v4429
      %v4658 = vadd.f32 %v3436, %v4434
      %v4659 = vadd.f32 %v3437, %v4437
      %v4660 = vadd.f32 %v3438, %v4442
      %v4661 = vadd.f32 %v3439, %v4445
      %v4662 = vadd.f32 %v3440, %v4450
      %v4663 = vadd.f32 %v3441, %v4453
      %v4664 = vadd.f32 %v3442, %v4458
      %v4665 = vadd.f32 %v3443, %v4461
      %v4666 = vadd.f32 %v3444, %v4466
      %v4667 = vadd.f32 %v3445, %v4469
      %v4668 = vadd.f32 %v3446, %v4474
      %v4669 = vadd.f32 %v3447, %v4477
      %v4670 = vadd.f32 %v3448, %v4482
      %v4671 = vadd.f32 %v3449, %v4485
      %v4672 = vadd.f32 %v3450, %v4490
      %v4673 = vadd.f32 %v3451, %v4493
      %v4674 = vadd.f32 %v3452, %v4498
      %v4675 = vadd.f32 %v3453, %v4501
      %v4676 = vadd.f32 %v3454, %v4506
      %v4677 = vadd.f32 %v3455, %v4509
      %v4678 = vadd.f32 %v3456, %v4514
      %v4679 = vadd.f32 %v3457, %v4517
      %v4680 = vadd.f32 %v3458, %v4522
      %v4681 = vadd.f32 %v3459, %v4525
      %v4682 = vadd.f32 %v3460, %v4530
      %v4683 = vadd.f32 %v3461, %v4533
      %v4684 = vadd.f32 %v3462, %v4538
      %v4685 = vadd.f32 %v3463, %v4541
      %v4686 = vadd.f32 %v3464, %v4546
      %v4687 = vadd.f32 %v3465, %v4549
      %v4688 = vadd.f32 %v3466, %v4554
      %v4689 = vadd.f32 %v3467, %v4557
      %v4690 = vadd.f32 %v3468, %v4562
      %v4691 = vadd.f32 %v3469, %v4565
      %v4692 = vadd.f32 %v3470, %v4570
      %v4693 = vadd.f32 %v3471, %v4573
      %v4694 = vadd.f32 %v3472, %v4578
      %v4695 = vadd.f32 %v3473, %v4581
      %v4696 = vadd.f32 %v3474, %v4586
      %v4697 = vadd.f32 %v3475, %v4589
      %v4698 = vadd.f32 %v3476, %v4594
      %v4699 = vadd.f32 %v3477, %v4597
      %v4700 = vadd.f32 %v3478, %v4602
      %v4701 = vadd.f32 %v3479, %v4605
      %v4702 = vadd.f32 %v3480, %v4610
      %v4703 = vadd.f32 %v3481, %v4613
      %v4704 = vadd.f32 %v3482, %v4618
      %v4705 = vadd.f32 %v3483, %v4621
      %v4706 = vadd.f32 %v3484, %v4626
      %v4707 = vadd.f32 %v3485, %v4629
      %v4708 = vadd.f32 %v3486, %v4634
      %v4709 = vadd.f32 %v3487, %v4637
      %v4710 = vadd.f32 %v3488, %v4642
      %v4711 = vadd.f32 %v3489, %v4645
      %v4720 = vrot.slane %v2804, 5
      %v4721 = vrot.slane %v4720, 4
      %v4722 = vrot.slane %v2805, 5
      %v4723 = vsel %vm2049, %v4721, %v4722
      %v4724 = vrot.slane %v4722, 4
      %v4725 = vrot.slane %v2806, 5
      %v4726 = vsel %vm2049, %v4724, %v4725
      %v4727 = vrot.slane %v4725, 4
      %v4728 = vrot.slane %v2807, 5
      %v4729 = vsel %vm2049, %v4727, %v4728
      %v4730 = vrot.slane %v4728, 4
      %v4731 = vrot.slane %v2808, 5
      %v4732 = vsel %vm2049, %v4730, %v4731
      %v4733 = vrot.slane %v4731, 4
      %v4734 = vrot.slane %v2809, 5
      %v4735 = vsel %vm2049, %v4733, %v4734
      %v4736 = vrot.slane %v4734, 4
      %v4737 = vrot.slane %v2810, 5
      %v4738 = vsel %vm2049, %v4736, %v4737
      %v4739 = vrot.slane %v4737, 4
      %v4740 = vrot.slane %v2811, 5
      %v4741 = vsel %vm2049, %v4739, %v4740
      %v4742 = vrot.slane %v4740, 4
      %v4743 = vrot.slane %v2812, 5
      %v4744 = vsel %vm2049, %v4742, %v4743
      %v4745 = vrot.slane %v2813, 5
      %v4746 = vrot.slane %v4745, 4
      %v4747 = vrot.slane %v2814, 5
      %v4748 = vsel %vm2049, %v4746, %v4747
      %v4749 = vrot.slane %v4747, 4
      %v4750 = vrot.slane %v2815, 5
      %v4751 = vsel %vm2049, %v4749, %v4750
      %v4752 = vrot.slane %v4750, 4
      %v4753 = vrot.slane %v2816, 5
      %v4754 = vsel %vm2049, %v4752, %v4753
      %v4755 = vrot.slane %v4753, 4
      %v4756 = vrot.slane %v2817, 5
      %v4757 = vsel %vm2049, %v4755, %v4756
      %v4758 = vrot.slane %v4756, 4
      %v4759 = vrot.slane %v2818, 5
      %v4760 = vsel %vm2049, %v4758, %v4759
      %v4761 = vrot.slane %v4759, 4
      %v4762 = vrot.slane %v2819, 5
      %v4763 = vsel %vm2049, %v4761, %v4762
      %v4764 = vrot.slane %v4762, 4
      %v4765 = vrot.slane %v2820, 5
      %v4766 = vsel %vm2049, %v4764, %v4765
      %v4767 = vrot.slane %v4765, 4
      %v4768 = vrot.slane %v2821, 5
      %v4769 = vsel %vm2049, %v4767, %v4768
      %v4770 = vrot.slane %v2822, 5
      %v4771 = vrot.slane %v4770, 4
      %v4772 = vrot.slane %v2823, 5
      %v4773 = vsel %vm2049, %v4771, %v4772
      %v4774 = vrot.slane %v4772, 4
      %v4775 = vrot.slane %v2824, 5
      %v4776 = vsel %vm2049, %v4774, %v4775
      %v4777 = vrot.slane %v4775, 4
      %v4778 = vrot.slane %v2825, 5
      %v4779 = vsel %vm2049, %v4777, %v4778
      %v4780 = vrot.slane %v4778, 4
      %v4781 = vrot.slane %v2826, 5
      %v4782 = vsel %vm2049, %v4780, %v4781
      %v4783 = vrot.slane %v4781, 4
      %v4784 = vrot.slane %v2827, 5
      %v4785 = vsel %vm2049, %v4783, %v4784
      %v4786 = vrot.slane %v4784, 4
      %v4787 = vrot.slane %v2828, 5
      %v4788 = vsel %vm2049, %v4786, %v4787
      %v4789 = vrot.slane %v4787, 4
      %v4790 = vrot.slane %v2829, 5
      %v4791 = vsel %vm2049, %v4789, %v4790
      %v4792 = vrot.slane %v4790, 4
      %v4793 = vrot.slane %v2830, 5
      %v4794 = vsel %vm2049, %v4792, %v4793
      %v4795 = vrot.slane %v2831, 5
      %v4796 = vrot.slane %v4795, 4
      %v4797 = vrot.slane %v2832, 5
      %v4798 = vsel %vm2049, %v4796, %v4797
      %v4799 = vrot.slane %v4797, 4
      %v4800 = vrot.slane %v2833, 5
      %v4801 = vsel %vm2049, %v4799, %v4800
      %v4802 = vrot.slane %v4800, 4
      %v4803 = vrot.slane %v2834, 5
      %v4804 = vsel %vm2049, %v4802, %v4803
      %v4805 = vrot.slane %v4803, 4
      %v4806 = vrot.slane %v2835, 5
      %v4807 = vsel %vm2049, %v4805, %v4806
      %v4808 = vrot.slane %v4806, 4
      %v4809 = vrot.slane %v2836, 5
      %v4810 = vsel %vm2049, %v4808, %v4809
      %v4811 = vrot.slane %v4809, 4
      %v4812 = vrot.slane %v2837, 5
      %v4813 = vsel %vm2049, %v4811, %v4812
      %v4814 = vrot.slane %v4812, 4
      %v4815 = vrot.slane %v2838, 5
      %v4816 = vsel %vm2049, %v4814, %v4815
      %v4817 = vrot.slane %v4815, 4
      %v4818 = vrot.slane %v2839, 5
      %v4819 = vsel %vm2049, %v4817, %v4818
      %v4820 = vrot.slane %v2840, 5
      %v4821 = vrot.slane %v4820, 4
      %v4822 = vrot.slane %v2841, 5
      %v4823 = vsel %vm2049, %v4821, %v4822
      %v4824 = vrot.slane %v4822, 4
      %v4825 = vrot.slane %v2842, 5
      %v4826 = vsel %vm2049, %v4824, %v4825
      %v4827 = vrot.slane %v4825, 4
      %v4828 = vrot.slane %v2843, 5
      %v4829 = vsel %vm2049, %v4827, %v4828
      %v4830 = vrot.slane %v4828, 4
      %v4831 = vrot.slane %v2844, 5
      %v4832 = vsel %vm2049, %v4830, %v4831
      %v4833 = vrot.slane %v4831, 4
      %v4834 = vrot.slane %v2845, 5
      %v4835 = vsel %vm2049, %v4833, %v4834
      %v4836 = vrot.slane %v4834, 4
      %v4837 = vrot.slane %v2846, 5
      %v4838 = vsel %vm2049, %v4836, %v4837
      %v4839 = vrot.slane %v4837, 4
      %v4840 = vrot.slane %v2847, 5
      %v4841 = vsel %vm2049, %v4839, %v4840
      %v4842 = vrot.slane %v4840, 4
      %v4843 = vrot.slane %v2848, 5
      %v4844 = vsel %vm2049, %v4842, %v4843
      %v4845 = vrot.slane %v2849, 5
      %v4846 = vrot.slane %v4845, 4
      %v4847 = vrot.slane %v2850, 5
      %v4848 = vsel %vm2049, %v4846, %v4847
      %v4849 = vrot.slane %v4847, 4
      %v4850 = vrot.slane %v2851, 5
      %v4851 = vsel %vm2049, %v4849, %v4850
      %v4852 = vrot.slane %v4850, 4
      %v4853 = vrot.slane %v2852, 5
      %v4854 = vsel %vm2049, %v4852, %v4853
      %v4855 = vrot.slane %v4853, 4
      %v4856 = vrot.slane %v2853, 5
      %v4857 = vsel %vm2049, %v4855, %v4856
      %v4858 = vrot.slane %v4856, 4
      %v4859 = vrot.slane %v2854, 5
      %v4860 = vsel %vm2049, %v4858, %v4859
      %v4861 = vrot.slane %v4859, 4
      %v4862 = vrot.slane %v2855, 5
      %v4863 = vsel %vm2049, %v4861, %v4862
      %v4864 = vrot.slane %v4862, 4
      %v4865 = vrot.slane %v2856, 5
      %v4866 = vsel %vm2049, %v4864, %v4865
      %v4867 = vrot.slane %v4865, 4
      %v4868 = vrot.slane %v2857, 5
      %v4869 = vsel %vm2049, %v4867, %v4868
      %v4870 = vrot.slane %v2858, 5
      %v4871 = vrot.slane %v4870, 4
      %v4872 = vrot.slane %v2859, 5
      %v4873 = vsel %vm2049, %v4871, %v4872
      %v4874 = vrot.slane %v4872, 4
      %v4875 = vrot.slane %v2860, 5
      %v4876 = vsel %vm2049, %v4874, %v4875
      %v4877 = vrot.slane %v4875, 4
      %v4878 = vrot.slane %v2861, 5
      %v4879 = vsel %vm2049, %v4877, %v4878
      %v4880 = vrot.slane %v4878, 4
      %v4881 = vrot.slane %v2862, 5
      %v4882 = vsel %vm2049, %v4880, %v4881
      %v4883 = vrot.slane %v4881, 4
      %v4884 = vrot.slane %v2863, 5
      %v4885 = vsel %vm2049, %v4883, %v4884
      %v4886 = vrot.slane %v4884, 4
      %v4887 = vrot.slane %v2864, 5
      %v4888 = vsel %vm2049, %v4886, %v4887
      %v4889 = vrot.slane %v4887, 4
      %v4890 = vrot.slane %v2865, 5
      %v4891 = vsel %vm2049, %v4889, %v4890
      %v4892 = vrot.slane %v4890, 4
      %v4893 = vrot.slane %v2866, 5
      %v4894 = vsel %vm2049, %v4892, %v4893
      %v4895 = vrot.slane %v2867, 5
      %v4896 = vrot.slane %v4895, 4
      %v4897 = vrot.slane %v2868, 5
      %v4898 = vsel %vm2049, %v4896, %v4897
      %v4899 = vrot.slane %v4897, 4
      %v4900 = vrot.slane %v2869, 5
      %v4901 = vsel %vm2049, %v4899, %v4900
      %v4902 = vrot.slane %v4900, 4
      %v4903 = vrot.slane %v2870, 5
      %v4904 = vsel %vm2049, %v4902, %v4903
      %v4905 = vrot.slane %v4903, 4
      %v4906 = vrot.slane %v2871, 5
      %v4907 = vsel %vm2049, %v4905, %v4906
      %v4908 = vrot.slane %v4906, 4
      %v4909 = vrot.slane %v2872, 5
      %v4910 = vsel %vm2049, %v4908, %v4909
      %v4911 = vrot.slane %v4909, 4
      %v4912 = vrot.slane %v2873, 5
      %v4913 = vsel %vm2049, %v4911, %v4912
      %v4914 = vrot.slane %v4912, 4
      %v4915 = vrot.slane %v2874, 5
      %v4916 = vsel %vm2049, %v4914, %v4915
      %v4917 = vrot.slane %v4915, 4
      %v4918 = vrot.slane %v2875, 5
      %v4919 = vsel %vm2049, %v4917, %v4918
      %s4920 = scalar_lea.vmem %s1, 10
      %v4921 = vld [vmem:[%s4920] sm:$0x3]
      %v4922 = vunpack.c.l.b16 %v4723
      %v4923 = vunpack.c.l.b16 %v4726
      %v4924 = vunpack.c.l.b16 %v4729
      %v4925 = vunpack.c.l.b16 %v4732
      %v4926 = vunpack.c.l.b16 %v4735
      %v4927 = vunpack.c.l.b16 %v4738
      %v4928 = vunpack.c.l.b16 %v4741
      %v4929 = vunpack.c.l.b16 %v4744
      %v4930 = vunpack.c.l.b16 %v4748
      %v4931 = vunpack.c.l.b16 %v4751
      %v4932 = vunpack.c.l.b16 %v4754
      %v4933 = vunpack.c.l.b16 %v4757
      %v4934 = vunpack.c.l.b16 %v4760
      %v4935 = vunpack.c.l.b16 %v4763
      %v4936 = vunpack.c.l.b16 %v4766
      %v4937 = vunpack.c.l.b16 %v4769
      %v4938 = vunpack.c.l.b16 %v4773
      %v4939 = vunpack.c.l.b16 %v4776
      %v4940 = vunpack.c.l.b16 %v4779
      %v4941 = vunpack.c.l.b16 %v4782
      %v4942 = vunpack.c.l.b16 %v4785
      %v4943 = vunpack.c.l.b16 %v4788
      %v4944 = vunpack.c.l.b16 %v4791
      %v4945 = vunpack.c.l.b16 %v4794
      %v4946 = vunpack.c.l.b16 %v4798
      %v4947 = vunpack.c.l.b16 %v4801
      %v4948 = vunpack.c.l.b16 %v4804
      %v4949 = vunpack.c.l.b16 %v4807
      %v4950 = vunpack.c.l.b16 %v4810
      %v4951 = vunpack.c.l.b16 %v4813
      %v4952 = vunpack.c.l.b16 %v4816
      %v4953 = vunpack.c.l.b16 %v4819
      %v4954 = vunpack.c.l.b16 %v4823
      %v4955 = vunpack.c.l.b16 %v4826
      %v4956 = vunpack.c.l.b16 %v4829
      %v4957 = vunpack.c.l.b16 %v4832
      %v4958 = vunpack.c.l.b16 %v4835
      %v4959 = vunpack.c.l.b16 %v4838
      %v4960 = vunpack.c.l.b16 %v4841
      %v4961 = vunpack.c.l.b16 %v4844
      %v4962 = vunpack.c.l.b16 %v4848
      %v4963 = vunpack.c.l.b16 %v4851
      %v4964 = vunpack.c.l.b16 %v4854
      %v4965 = vunpack.c.l.b16 %v4857
      %v4966 = vunpack.c.l.b16 %v4860
      %v4967 = vunpack.c.l.b16 %v4863
      %v4968 = vunpack.c.l.b16 %v4866
      %v4969 = vunpack.c.l.b16 %v4869
      %v4970 = vunpack.c.l.b16 %v4873
      %v4971 = vunpack.c.l.b16 %v4876
      %v4972 = vunpack.c.l.b16 %v4879
      %v4973 = vunpack.c.l.b16 %v4882
      %v4974 = vunpack.c.l.b16 %v4885
      %v4975 = vunpack.c.l.b16 %v4888
      %v4976 = vunpack.c.l.b16 %v4891
      %v4977 = vunpack.c.l.b16 %v4894
      %v4978 = vunpack.c.l.b16 %v4898
      %v4979 = vunpack.c.l.b16 %v4901
      %v4980 = vunpack.c.l.b16 %v4904
      %v4981 = vunpack.c.l.b16 %v4907
      %v4982 = vunpack.c.l.b16 %v4910
      %v4983 = vunpack.c.l.b16 %v4913
      %v4984 = vunpack.c.l.b16 %v4916
      %v4985 = vunpack.c.l.b16 %v4919
      %v4986 = vpack.c.b16 %v4923, %v4922
      %v4987 = vpack.c.b16 %v4925, %v4924
      %v4988 = vpack.c.b16 %v4927, %v4926
      %v4989 = vpack.c.b16 %v4929, %v4928
      %v4990 = vpack.c.b16 %v4931, %v4930
      %v4991 = vpack.c.b16 %v4933, %v4932
      %v4992 = vpack.c.b16 %v4935, %v4934
      %v4993 = vpack.c.b16 %v4937, %v4936
      %v4994 = vpack.c.b16 %v4939, %v4938
      %v4995 = vpack.c.b16 %v4941, %v4940
      %v4996 = vpack.c.b16 %v4943, %v4942
      %v4997 = vpack.c.b16 %v4945, %v4944
      %v4998 = vpack.c.b16 %v4947, %v4946
      %v4999 = vpack.c.b16 %v4949, %v4948
      %v5000 = vpack.c.b16 %v4951, %v4950
      %v5001 = vpack.c.b16 %v4953, %v4952
      %v5002 = vpack.c.b16 %v4955, %v4954
      %v5003 = vpack.c.b16 %v4957, %v4956
      %v5004 = vpack.c.b16 %v4959, %v4958
      %v5005 = vpack.c.b16 %v4961, %v4960
      %v5006 = vpack.c.b16 %v4963, %v4962
      %v5007 = vpack.c.b16 %v4965, %v4964
      %v5008 = vpack.c.b16 %v4967, %v4966
      %v5009 = vpack.c.b16 %v4969, %v4968
      %v5010 = vpack.c.b16 %v4971, %v4970
      %v5011 = vpack.c.b16 %v4973, %v4972
      %v5012 = vpack.c.b16 %v4975, %v4974
      %v5013 = vpack.c.b16 %v4977, %v4976
      %v5014 = vpack.c.b16 %v4979, %v4978
      %v5015 = vpack.c.b16 %v4981, %v4980
      %v5016 = vpack.c.b16 %v4983, %v4982
      %v5017 = vpack.c.b16 %v4985, %v4984
      %v5019 = vsel %vm1101, %v4986, 0
      %v5022 = vsel %vm1101, %v4987, 0
      %v5025 = vsel %vm1101, %v4988, 0
      %v5028 = vsel %vm1101, %v4989, 0
      %v5031 = vsel %vm1101, %v4990, 0
      %v5034 = vsel %vm1101, %v4991, 0
      %v5037 = vsel %vm1101, %v4992, 0
      %v5040 = vsel %vm1101, %v4993, 0
      %v5043 = vsel %vm1101, %v4994, 0
      %v5046 = vsel %vm1101, %v4995, 0
      %v5049 = vsel %vm1101, %v4996, 0
      %v5052 = vsel %vm1101, %v4997, 0
      %v5055 = vsel %vm1101, %v4998, 0
      %v5058 = vsel %vm1101, %v4999, 0
      %v5061 = vsel %vm1101, %v5000, 0
      %v5064 = vsel %vm1101, %v5001, 0
      %v5067 = vsel %vm1101, %v5002, 0
      %v5070 = vsel %vm1101, %v5003, 0
      %v5073 = vsel %vm1101, %v5004, 0
      %v5076 = vsel %vm1101, %v5005, 0
      %v5079 = vsel %vm1101, %v5006, 0
      %v5082 = vsel %vm1101, %v5007, 0
      %v5085 = vsel %vm1101, %v5008, 0
      %v5088 = vsel %vm1101, %v5009, 0
      %v5091 = vsel %vm1101, %v5010, 0
      %v5094 = vsel %vm1101, %v5011, 0
      %v5097 = vsel %vm1101, %v5012, 0
      %v5100 = vsel %vm1101, %v5013, 0
      %v5103 = vsel %vm1101, %v5014, 0
      %v5106 = vsel %vm1101, %v5015, 0
      %v5109 = vsel %vm1101, %v5016, 0
      %v5112 = vsel %vm1101, %v5017, 0
      %v5115 = vsel %vm1198, %v4921, 0
      %5117 = vmatprep.subr.bf16.mxu0 0
      %5118 = vmatpush1.bf16.msra.mxu0 0
      %5119 = vmatprep.subr.bf16.mxu0 0
      %5120 = vmatpush1.bf16.msra.mxu0 0
      %5121 = vmatprep.subr.bf16.mxu0 0
      %5122 = vmatpush1.bf16.msra.mxu0 0
      %5123 = vmatprep.subr.bf16.mxu0 0
      %5124 = vmatpush1.bf16.msra.mxu0 0
      %5125 = vmatprep.subr.bf16.mxu0 0
      %5126 = vmatpush1.bf16.msra.mxu0 0
      %5127 = vmatprep.subr.bf16.mxu0 0
      %5128 = vmatpush1.bf16.msra.mxu0 0
      %5129 = vmatprep.subr.bf16.mxu0 0
      %5130 = vmatpush1.bf16.msra.mxu0 0
      %5131 = vmatprep.subr.bf16.mxu0 0
      %5132 = vmatpush1.bf16.msra.mxu0 %v5115
      %5133 = vmatprep.subr.bf16.mxu0 0
      %5134 = vmatpush2.bf16.msra.mxu0 0
      %5135 = vmatprep.subr.bf16.mxu0 0
      %5136 = vmatpush2.bf16.msra.mxu0 0
      %5137 = vmatprep.subr.bf16.mxu0 0
      %5138 = vmatpush2.bf16.msra.mxu0 0
      %5139 = vmatprep.subr.bf16.mxu0 0
      %5140 = vmatpush2.bf16.msra.mxu0 0
      %5141 = vmatprep.subr.bf16.mxu0 0
      %5142 = vmatpush2.bf16.msra.mxu0 0
      %5143 = vmatprep.subr.bf16.mxu0 0
      %5144 = vmatpush2.bf16.msra.mxu0 0
      %5145 = vmatprep.subr.bf16.mxu0 0
      %5146 = vmatpush2.bf16.msra.mxu0 0
      %5147 = vmatprep.subr.bf16.mxu0 0
      %5148 = vmatpush2.bf16.msra.mxu0 0
      %5149 = vmatprep.mubr.bf16.mxu0 0
      %5150 = vmatmul.mubr.bf16.gmra.mxu0 %v5019
      %v5151 = vpop.f32.mrf.mxu0
      %v5152 = vadd.f32 0.0, %v5151
      %v5153 = vpop.f32.mrf.mxu0
      %v5154 = vpop.f32.mrf.mxu0
      %v5155 = vadd.f32 0.0, %v5154
      %v5156 = vpop.f32.mrf.mxu0
      %5157 = vmatprep.mubr.bf16.mxu0 0
      %5158 = vmatmul.mubr.bf16.gmra.mxu0 %v5022
      %v5159 = vpop.f32.mrf.mxu0
      %v5160 = vadd.f32 0.0, %v5159
      %v5161 = vpop.f32.mrf.mxu0
      %v5162 = vpop.f32.mrf.mxu0
      %v5163 = vadd.f32 0.0, %v5162
      %v5164 = vpop.f32.mrf.mxu0
      %5165 = vmatprep.mubr.bf16.mxu0 0
      %5166 = vmatmul.mubr.bf16.gmra.mxu0 %v5025
      %v5167 = vpop.f32.mrf.mxu0
      %v5168 = vadd.f32 0.0, %v5167
      %v5169 = vpop.f32.mrf.mxu0
      %v5170 = vpop.f32.mrf.mxu0
      %v5171 = vadd.f32 0.0, %v5170
      %v5172 = vpop.f32.mrf.mxu0
      %5173 = vmatprep.mubr.bf16.mxu0 0
      %5174 = vmatmul.mubr.bf16.gmra.mxu0 %v5028
      %v5175 = vpop.f32.mrf.mxu0
      %v5176 = vadd.f32 0.0, %v5175
      %v5177 = vpop.f32.mrf.mxu0
      %v5178 = vpop.f32.mrf.mxu0
      %v5179 = vadd.f32 0.0, %v5178
      %v5180 = vpop.f32.mrf.mxu0
      %5181 = vmatprep.mubr.bf16.mxu0 0
      %5182 = vmatmul.mubr.bf16.gmra.mxu0 %v5031
      %v5183 = vpop.f32.mrf.mxu0
      %v5184 = vadd.f32 0.0, %v5183
      %v5185 = vpop.f32.mrf.mxu0
      %v5186 = vpop.f32.mrf.mxu0
      %v5187 = vadd.f32 0.0, %v5186
      %v5188 = vpop.f32.mrf.mxu0
      %5189 = vmatprep.mubr.bf16.mxu0 0
      %5190 = vmatmul.mubr.bf16.gmra.mxu0 %v5034
      %v5191 = vpop.f32.mrf.mxu0
      %v5192 = vadd.f32 0.0, %v5191
      %v5193 = vpop.f32.mrf.mxu0
      %v5194 = vpop.f32.mrf.mxu0
      %v5195 = vadd.f32 0.0, %v5194
      %v5196 = vpop.f32.mrf.mxu0
      %5197 = vmatprep.mubr.bf16.mxu0 0
      %5198 = vmatmul.mubr.bf16.gmra.mxu0 %v5037
      %v5199 = vpop.f32.mrf.mxu0
      %v5200 = vadd.f32 0.0, %v5199
      %v5201 = vpop.f32.mrf.mxu0
      %v5202 = vpop.f32.mrf.mxu0
      %v5203 = vadd.f32 0.0, %v5202
      %v5204 = vpop.f32.mrf.mxu0
      %5205 = vmatprep.mubr.bf16.mxu0 0
      %5206 = vmatmul.mubr.bf16.gmra.mxu0 %v5040
      %v5207 = vpop.f32.mrf.mxu0
      %v5208 = vadd.f32 0.0, %v5207
      %v5209 = vpop.f32.mrf.mxu0
      %v5210 = vpop.f32.mrf.mxu0
      %v5211 = vadd.f32 0.0, %v5210
      %v5212 = vpop.f32.mrf.mxu0
      %5213 = vmatprep.mubr.bf16.mxu0 0
      %5214 = vmatmul.mubr.bf16.gmra.mxu0 %v5043
      %v5215 = vpop.f32.mrf.mxu0
      %v5216 = vadd.f32 0.0, %v5215
      %v5217 = vpop.f32.mrf.mxu0
      %v5218 = vpop.f32.mrf.mxu0
      %v5219 = vadd.f32 0.0, %v5218
      %v5220 = vpop.f32.mrf.mxu0
      %5221 = vmatprep.mubr.bf16.mxu0 0
      %5222 = vmatmul.mubr.bf16.gmra.mxu0 %v5046
      %v5223 = vpop.f32.mrf.mxu0
      %v5224 = vadd.f32 0.0, %v5223
      %v5225 = vpop.f32.mrf.mxu0
      %v5226 = vpop.f32.mrf.mxu0
      %v5227 = vadd.f32 0.0, %v5226
      %v5228 = vpop.f32.mrf.mxu0
      %5229 = vmatprep.mubr.bf16.mxu0 0
      %5230 = vmatmul.mubr.bf16.gmra.mxu0 %v5049
      %v5231 = vpop.f32.mrf.mxu0
      %v5232 = vadd.f32 0.0, %v5231
      %v5233 = vpop.f32.mrf.mxu0
      %v5234 = vpop.f32.mrf.mxu0
      %v5235 = vadd.f32 0.0, %v5234
      %v5236 = vpop.f32.mrf.mxu0
      %5237 = vmatprep.mubr.bf16.mxu0 0
      %5238 = vmatmul.mubr.bf16.gmra.mxu0 %v5052
      %v5239 = vpop.f32.mrf.mxu0
      %v5240 = vadd.f32 0.0, %v5239
      %v5241 = vpop.f32.mrf.mxu0
      %v5242 = vpop.f32.mrf.mxu0
      %v5243 = vadd.f32 0.0, %v5242
      %v5244 = vpop.f32.mrf.mxu0
      %5245 = vmatprep.mubr.bf16.mxu0 0
      %5246 = vmatmul.mubr.bf16.gmra.mxu0 %v5055
      %v5247 = vpop.f32.mrf.mxu0
      %v5248 = vadd.f32 0.0, %v5247
      %v5249 = vpop.f32.mrf.mxu0
      %v5250 = vpop.f32.mrf.mxu0
      %v5251 = vadd.f32 0.0, %v5250
      %v5252 = vpop.f32.mrf.mxu0
      %5253 = vmatprep.mubr.bf16.mxu0 0
      %5254 = vmatmul.mubr.bf16.gmra.mxu0 %v5058
      %v5255 = vpop.f32.mrf.mxu0
      %v5256 = vadd.f32 0.0, %v5255
      %v5257 = vpop.f32.mrf.mxu0
      %v5258 = vpop.f32.mrf.mxu0
      %v5259 = vadd.f32 0.0, %v5258
      %v5260 = vpop.f32.mrf.mxu0
      %5261 = vmatprep.mubr.bf16.mxu0 0
      %5262 = vmatmul.mubr.bf16.gmra.mxu0 %v5061
      %v5263 = vpop.f32.mrf.mxu0
      %v5264 = vadd.f32 0.0, %v5263
      %v5265 = vpop.f32.mrf.mxu0
      %v5266 = vpop.f32.mrf.mxu0
      %v5267 = vadd.f32 0.0, %v5266
      %v5268 = vpop.f32.mrf.mxu0
      %5269 = vmatprep.mubr.bf16.mxu0 0
      %5270 = vmatmul.mubr.bf16.gmra.mxu0 %v5064
      %v5271 = vpop.f32.mrf.mxu0
      %v5272 = vadd.f32 0.0, %v5271
      %v5273 = vpop.f32.mrf.mxu0
      %v5274 = vpop.f32.mrf.mxu0
      %v5275 = vadd.f32 0.0, %v5274
      %v5276 = vpop.f32.mrf.mxu0
      %5277 = vmatprep.mubr.bf16.mxu0 0
      %5278 = vmatmul.mubr.bf16.gmra.mxu0 %v5067
      %v5279 = vpop.f32.mrf.mxu0
      %v5280 = vadd.f32 0.0, %v5279
      %v5281 = vpop.f32.mrf.mxu0
      %v5282 = vpop.f32.mrf.mxu0
      %v5283 = vadd.f32 0.0, %v5282
      %v5284 = vpop.f32.mrf.mxu0
      %5285 = vmatprep.mubr.bf16.mxu0 0
      %5286 = vmatmul.mubr.bf16.gmra.mxu0 %v5070
      %v5287 = vpop.f32.mrf.mxu0
      %v5288 = vadd.f32 0.0, %v5287
      %v5289 = vpop.f32.mrf.mxu0
      %v5290 = vpop.f32.mrf.mxu0
      %v5291 = vadd.f32 0.0, %v5290
      %v5292 = vpop.f32.mrf.mxu0
      %5293 = vmatprep.mubr.bf16.mxu0 0
      %5294 = vmatmul.mubr.bf16.gmra.mxu0 %v5073
      %v5295 = vpop.f32.mrf.mxu0
      %v5296 = vadd.f32 0.0, %v5295
      %v5297 = vpop.f32.mrf.mxu0
      %v5298 = vpop.f32.mrf.mxu0
      %v5299 = vadd.f32 0.0, %v5298
      %v5300 = vpop.f32.mrf.mxu0
      %5301 = vmatprep.mubr.bf16.mxu0 0
      %5302 = vmatmul.mubr.bf16.gmra.mxu0 %v5076
      %v5303 = vpop.f32.mrf.mxu0
      %v5304 = vadd.f32 0.0, %v5303
      %v5305 = vpop.f32.mrf.mxu0
      %v5306 = vpop.f32.mrf.mxu0
      %v5307 = vadd.f32 0.0, %v5306
      %v5308 = vpop.f32.mrf.mxu0
      %5309 = vmatprep.mubr.bf16.mxu0 0
      %5310 = vmatmul.mubr.bf16.gmra.mxu0 %v5079
      %v5311 = vpop.f32.mrf.mxu0
      %v5312 = vadd.f32 0.0, %v5311
      %v5313 = vpop.f32.mrf.mxu0
      %v5314 = vpop.f32.mrf.mxu0
      %v5315 = vadd.f32 0.0, %v5314
      %v5316 = vpop.f32.mrf.mxu0
      %5317 = vmatprep.mubr.bf16.mxu0 0
      %5318 = vmatmul.mubr.bf16.gmra.mxu0 %v5082
      %v5319 = vpop.f32.mrf.mxu0
      %v5320 = vadd.f32 0.0, %v5319
      %v5321 = vpop.f32.mrf.mxu0
      %v5322 = vpop.f32.mrf.mxu0
      %v5323 = vadd.f32 0.0, %v5322
      %v5324 = vpop.f32.mrf.mxu0
      %5325 = vmatprep.mubr.bf16.mxu0 0
      %5326 = vmatmul.mubr.bf16.gmra.mxu0 %v5085
      %v5327 = vpop.f32.mrf.mxu0
      %v5328 = vadd.f32 0.0, %v5327
      %v5329 = vpop.f32.mrf.mxu0
      %v5330 = vpop.f32.mrf.mxu0
      %v5331 = vadd.f32 0.0, %v5330
      %v5332 = vpop.f32.mrf.mxu0
      %5333 = vmatprep.mubr.bf16.mxu0 0
      %5334 = vmatmul.mubr.bf16.gmra.mxu0 %v5088
      %v5335 = vpop.f32.mrf.mxu0
      %v5336 = vadd.f32 0.0, %v5335
      %v5337 = vpop.f32.mrf.mxu0
      %v5338 = vpop.f32.mrf.mxu0
      %v5339 = vadd.f32 0.0, %v5338
      %v5340 = vpop.f32.mrf.mxu0
      %5341 = vmatprep.mubr.bf16.mxu0 0
      %5342 = vmatmul.mubr.bf16.gmra.mxu0 %v5091
      %v5343 = vpop.f32.mrf.mxu0
      %v5344 = vadd.f32 0.0, %v5343
      %v5345 = vpop.f32.mrf.mxu0
      %v5346 = vpop.f32.mrf.mxu0
      %v5347 = vadd.f32 0.0, %v5346
      %v5348 = vpop.f32.mrf.mxu0
      %5349 = vmatprep.mubr.bf16.mxu0 0
      %5350 = vmatmul.mubr.bf16.gmra.mxu0 %v5094
      %v5351 = vpop.f32.mrf.mxu0
      %v5352 = vadd.f32 0.0, %v5351
      %v5353 = vpop.f32.mrf.mxu0
      %v5354 = vpop.f32.mrf.mxu0
      %v5355 = vadd.f32 0.0, %v5354
      %v5356 = vpop.f32.mrf.mxu0
      %5357 = vmatprep.mubr.bf16.mxu0 0
      %5358 = vmatmul.mubr.bf16.gmra.mxu0 %v5097
      %v5359 = vpop.f32.mrf.mxu0
      %v5360 = vadd.f32 0.0, %v5359
      %v5361 = vpop.f32.mrf.mxu0
      %v5362 = vpop.f32.mrf.mxu0
      %v5363 = vadd.f32 0.0, %v5362
      %v5364 = vpop.f32.mrf.mxu0
      %5365 = vmatprep.mubr.bf16.mxu0 0
      %5366 = vmatmul.mubr.bf16.gmra.mxu0 %v5100
      %v5367 = vpop.f32.mrf.mxu0
      %v5368 = vadd.f32 0.0, %v5367
      %v5369 = vpop.f32.mrf.mxu0
      %v5370 = vpop.f32.mrf.mxu0
      %v5371 = vadd.f32 0.0, %v5370
      %v5372 = vpop.f32.mrf.mxu0
      %5373 = vmatprep.mubr.bf16.mxu0 0
      %5374 = vmatmul.mubr.bf16.gmra.mxu0 %v5103
      %v5375 = vpop.f32.mrf.mxu0
      %v5376 = vadd.f32 0.0, %v5375
      %v5377 = vpop.f32.mrf.mxu0
      %v5378 = vpop.f32.mrf.mxu0
      %v5379 = vadd.f32 0.0, %v5378
      %v5380 = vpop.f32.mrf.mxu0
      %5381 = vmatprep.mubr.bf16.mxu0 0
      %5382 = vmatmul.mubr.bf16.gmra.mxu0 %v5106
      %v5383 = vpop.f32.mrf.mxu0
      %v5384 = vadd.f32 0.0, %v5383
      %v5385 = vpop.f32.mrf.mxu0
      %v5386 = vpop.f32.mrf.mxu0
      %v5387 = vadd.f32 0.0, %v5386
      %v5388 = vpop.f32.mrf.mxu0
      %5389 = vmatprep.mubr.bf16.mxu0 0
      %5390 = vmatmul.mubr.bf16.gmra.mxu0 %v5109
      %v5391 = vpop.f32.mrf.mxu0
      %v5392 = vadd.f32 0.0, %v5391
      %v5393 = vpop.f32.mrf.mxu0
      %v5394 = vpop.f32.mrf.mxu0
      %v5395 = vadd.f32 0.0, %v5394
      %v5396 = vpop.f32.mrf.mxu0
      %5397 = vmatprep.mubr.bf16.mxu0 0
      %5398 = vmatmul.mubr.bf16.gmra.mxu0 %v5112
      %v5399 = vpop.f32.mrf.mxu0
      %v5400 = vadd.f32 0.0, %v5399
      %v5401 = vpop.f32.mrf.mxu0
      %v5402 = vpop.f32.mrf.mxu0
      %v5403 = vadd.f32 0.0, %v5402
      %v5404 = vpop.f32.mrf.mxu0
      %5405 = vdwg.mxu0
      %v5406 = vadd.f32 %v4648, %v5152
      %v5407 = vadd.f32 %v4649, %v5155
      %v5408 = vadd.f32 %v4650, %v5160
      %v5409 = vadd.f32 %v4651, %v5163
      %v5410 = vadd.f32 %v4652, %v5168
      %v5411 = vadd.f32 %v4653, %v5171
      %v5412 = vadd.f32 %v4654, %v5176
      %v5413 = vadd.f32 %v4655, %v5179
      %v5414 = vadd.f32 %v4656, %v5184
      %v5415 = vadd.f32 %v4657, %v5187
      %v5416 = vadd.f32 %v4658, %v5192
      %v5417 = vadd.f32 %v4659, %v5195
      %v5418 = vadd.f32 %v4660, %v5200
      %v5419 = vadd.f32 %v4661, %v5203
      %v5420 = vadd.f32 %v4662, %v5208
      %v5421 = vadd.f32 %v4663, %v5211
      %v5422 = vadd.f32 %v4664, %v5216
      %v5423 = vadd.f32 %v4665, %v5219
      %v5424 = vadd.f32 %v4666, %v5224
      %v5425 = vadd.f32 %v4667, %v5227
      %v5426 = vadd.f32 %v4668, %v5232
      %v5427 = vadd.f32 %v4669, %v5235
      %v5428 = vadd.f32 %v4670, %v5240
      %v5429 = vadd.f32 %v4671, %v5243
      %v5430 = vadd.f32 %v4672, %v5248
      %v5431 = vadd.f32 %v4673, %v5251
      %v5432 = vadd.f32 %v4674, %v5256
      %v5433 = vadd.f32 %v4675, %v5259
      %v5434 = vadd.f32 %v4676, %v5264
      %v5435 = vadd.f32 %v4677, %v5267
      %v5436 = vadd.f32 %v4678, %v5272
      %v5437 = vadd.f32 %v4679, %v5275
      %v5438 = vadd.f32 %v4680, %v5280
      %v5439 = vadd.f32 %v4681, %v5283
      %v5440 = vadd.f32 %v4682, %v5288
      %v5441 = vadd.f32 %v4683, %v5291
      %v5442 = vadd.f32 %v4684, %v5296
      %v5443 = vadd.f32 %v4685, %v5299
      %v5444 = vadd.f32 %v4686, %v5304
      %v5445 = vadd.f32 %v4687, %v5307
      %v5446 = vadd.f32 %v4688, %v5312
      %v5447 = vadd.f32 %v4689, %v5315
      %v5448 = vadd.f32 %v4690, %v5320
      %v5449 = vadd.f32 %v4691, %v5323
      %v5450 = vadd.f32 %v4692, %v5328
      %v5451 = vadd.f32 %v4693, %v5331
      %v5452 = vadd.f32 %v4694, %v5336
      %v5453 = vadd.f32 %v4695, %v5339
      %v5454 = vadd.f32 %v4696, %v5344
      %v5455 = vadd.f32 %v4697, %v5347
      %v5456 = vadd.f32 %v4698, %v5352
      %v5457 = vadd.f32 %v4699, %v5355
      %v5458 = vadd.f32 %v4700, %v5360
      %v5459 = vadd.f32 %v4701, %v5363
      %v5460 = vadd.f32 %v4702, %v5368
      %v5461 = vadd.f32 %v4703, %v5371
      %v5462 = vadd.f32 %v4704, %v5376
      %v5463 = vadd.f32 %v4705, %v5379
      %v5464 = vadd.f32 %v4706, %v5384
      %v5465 = vadd.f32 %v4707, %v5387
      %v5466 = vadd.f32 %v4708, %v5392
      %v5467 = vadd.f32 %v4709, %v5395
      %v5468 = vadd.f32 %v4710, %v5400
      %v5469 = vadd.f32 %v4711, %v5403
      %s5470 = sadd.s32 %s251, 2
      %s5471 = smul.u32 %s5470, 9
      %s5472 = smul.addr %s5471, 4
      %s5473 = scalar_lea.vmem %s239, %s5472
      %v5474 = vld [vmem:[%s5473] sm:$0xf]
      %v5475 = vld [vmem:[%s5473 + $0x4] sm:$0xf]
      %v5476 = vld [vmem:[%s5473 + $0x8] sm:$0xf]
      %v5477 = vld [vmem:[%s5473 + $0xc] sm:$0xf]
      %v5478 = vld [vmem:[%s5473 + $0x10] sm:$0xf]
      %v5479 = vld [vmem:[%s5473 + $0x14] sm:$0xf]
      %v5480 = vld [vmem:[%s5473 + $0x18] sm:$0xf]
      %v5481 = vld [vmem:[%s5473 + $0x1c] sm:$0xf]
      %v5482 = vld [vmem:[%s5473 + $0x20] sm:$0x1]
      %v5483 = vld [vmem:[%s5473 + $0x24] sm:$0xf]
      %v5484 = vld [vmem:[%s5473 + $0x28] sm:$0xf]
      %v5485 = vld [vmem:[%s5473 + $0x2c] sm:$0xf]
      %v5486 = vld [vmem:[%s5473 + $0x30] sm:$0xf]
      %v5487 = vld [vmem:[%s5473 + $0x34] sm:$0xf]
      %v5488 = vld [vmem:[%s5473 + $0x38] sm:$0xf]
      %v5489 = vld [vmem:[%s5473 + $0x3c] sm:$0xf]
      %v5490 = vld [vmem:[%s5473 + $0x40] sm:$0xf]
      %v5491 = vld [vmem:[%s5473 + $0x44] sm:$0x1]
      %v5492 = vld [vmem:[%s5473 + $0x48] sm:$0xf]
      %v5493 = vld [vmem:[%s5473 + $0x4c] sm:$0xf]
      %v5494 = vld [vmem:[%s5473 + $0x50] sm:$0xf]
      %v5495 = vld [vmem:[%s5473 + $0x54] sm:$0xf]
      %v5496 = vld [vmem:[%s5473 + $0x58] sm:$0xf]
      %v5497 = vld [vmem:[%s5473 + $0x5c] sm:$0xf]
      %v5498 = vld [vmem:[%s5473 + $0x60] sm:$0xf]
      %v5499 = vld [vmem:[%s5473 + $0x64] sm:$0xf]
      %v5500 = vld [vmem:[%s5473 + $0x68] sm:$0x1]
      %v5501 = vld [vmem:[%s5473 + $0x6c] sm:$0xf]
      %v5502 = vld [vmem:[%s5473 + $0x70] sm:$0xf]
      %v5503 = vld [vmem:[%s5473 + $0x74] sm:$0xf]
      %v5504 = vld [vmem:[%s5473 + $0x78] sm:$0xf]
      %v5505 = vld [vmem:[%s5473 + $0x7c] sm:$0xf]
      %v5506 = vld [vmem:[%s5473 + $0x80] sm:$0xf]
      %v5507 = vld [vmem:[%s5473 + $0x84] sm:$0xf]
      %v5508 = vld [vmem:[%s5473 + $0x88] sm:$0xf]
      %v5509 = vld [vmem:[%s5473 + $0x8c] sm:$0x1]
      %v5510 = vld [vmem:[%s5473 + $0x90] sm:$0xf]
      %v5511 = vld [vmem:[%s5473 + $0x94] sm:$0xf]
      %v5512 = vld [vmem:[%s5473 + $0x98] sm:$0xf]
      %v5513 = vld [vmem:[%s5473 + $0x9c] sm:$0xf]
      %v5514 = vld [vmem:[%s5473 + $0xa0] sm:$0xf]
      %v5515 = vld [vmem:[%s5473 + $0xa4] sm:$0xf]
      %v5516 = vld [vmem:[%s5473 + $0xa8] sm:$0xf]
      %v5517 = vld [vmem:[%s5473 + $0xac] sm:$0xf]
      %v5518 = vld [vmem:[%s5473 + $0xb0] sm:$0x1]
      %v5519 = vld [vmem:[%s5473 + $0xb4] sm:$0xf]
      %v5520 = vld [vmem:[%s5473 + $0xb8] sm:$0xf]
      %v5521 = vld [vmem:[%s5473 + $0xbc] sm:$0xf]
      %v5522 = vld [vmem:[%s5473 + $0xc0] sm:$0xf]
      %v5523 = vld [vmem:[%s5473 + $0xc4] sm:$0xf]
      %v5524 = vld [vmem:[%s5473 + $0xc8] sm:$0xf]
      %v5525 = vld [vmem:[%s5473 + $0xcc] sm:$0xf]
      %v5526 = vld [vmem:[%s5473 + $0xd0] sm:$0xf]
      %v5527 = vld [vmem:[%s5473 + $0xd4] sm:$0x1]
      %v5528 = vld [vmem:[%s5473 + $0xd8] sm:$0xf]
      %v5529 = vld [vmem:[%s5473 + $0xdc] sm:$0xf]
      %v5530 = vld [vmem:[%s5473 + $0xe0] sm:$0xf]
      %v5531 = vld [vmem:[%s5473 + $0xe4] sm:$0xf]
      %v5532 = vld [vmem:[%s5473 + $0xe8] sm:$0xf]
      %v5533 = vld [vmem:[%s5473 + $0xec] sm:$0xf]
      %v5534 = vld [vmem:[%s5473 + $0xf0] sm:$0xf]
      %v5535 = vld [vmem:[%s5473 + $0xf4] sm:$0xf]
      %v5536 = vld [vmem:[%s5473 + $0xf8] sm:$0x1]
      %v5537 = vld [vmem:[%s5473 + $0xfc] sm:$0xf]
      %v5538 = vld [vmem:[%s5473 + $0x100] sm:$0xf]
      %v5539 = vld [vmem:[%s5473 + $0x104] sm:$0xf]
      %v5540 = vld [vmem:[%s5473 + $0x108] sm:$0xf]
      %v5541 = vld [vmem:[%s5473 + $0x10c] sm:$0xf]
      %v5542 = vld [vmem:[%s5473 + $0x110] sm:$0xf]
      %v5543 = vld [vmem:[%s5473 + $0x114] sm:$0xf]
      %v5544 = vld [vmem:[%s5473 + $0x118] sm:$0xf]
      %v5545 = vld [vmem:[%s5473 + $0x11c] sm:$0x1]
      %s5546 = scalar_lea.vmem %s1, 12
      %v5547 = vld [vmem:[%s5546] sm:$0x3]
      %v5612 = vunpack.c.l.b16 %v5474
      %v5613 = vunpack.c.l.b16 %v5475
      %v5614 = vunpack.c.l.b16 %v5476
      %v5615 = vunpack.c.l.b16 %v5477
      %v5616 = vunpack.c.l.b16 %v5478
      %v5617 = vunpack.c.l.b16 %v5479
      %v5618 = vunpack.c.l.b16 %v5480
      %v5619 = vunpack.c.l.b16 %v5481
      %v5620 = vunpack.c.l.b16 %v5483
      %v5621 = vunpack.c.l.b16 %v5484
      %v5622 = vunpack.c.l.b16 %v5485
      %v5623 = vunpack.c.l.b16 %v5486
      %v5624 = vunpack.c.l.b16 %v5487
      %v5625 = vunpack.c.l.b16 %v5488
      %v5626 = vunpack.c.l.b16 %v5489
      %v5627 = vunpack.c.l.b16 %v5490
      %v5628 = vunpack.c.l.b16 %v5492
      %v5629 = vunpack.c.l.b16 %v5493
      %v5630 = vunpack.c.l.b16 %v5494
      %v5631 = vunpack.c.l.b16 %v5495
      %v5632 = vunpack.c.l.b16 %v5496
      %v5633 = vunpack.c.l.b16 %v5497
      %v5634 = vunpack.c.l.b16 %v5498
      %v5635 = vunpack.c.l.b16 %v5499
      %v5636 = vunpack.c.l.b16 %v5501
      %v5637 = vunpack.c.l.b16 %v5502
      %v5638 = vunpack.c.l.b16 %v5503
      %v5639 = vunpack.c.l.b16 %v5504
      %v5640 = vunpack.c.l.b16 %v5505
      %v5641 = vunpack.c.l.b16 %v5506
      %v5642 = vunpack.c.l.b16 %v5507
      %v5643 = vunpack.c.l.b16 %v5508
      %v5644 = vunpack.c.l.b16 %v5510
      %v5645 = vunpack.c.l.b16 %v5511
      %v5646 = vunpack.c.l.b16 %v5512
      %v5647 = vunpack.c.l.b16 %v5513
      %v5648 = vunpack.c.l.b16 %v5514
      %v5649 = vunpack.c.l.b16 %v5515
      %v5650 = vunpack.c.l.b16 %v5516
      %v5651 = vunpack.c.l.b16 %v5517
      %v5652 = vunpack.c.l.b16 %v5519
      %v5653 = vunpack.c.l.b16 %v5520
      %v5654 = vunpack.c.l.b16 %v5521
      %v5655 = vunpack.c.l.b16 %v5522
      %v5656 = vunpack.c.l.b16 %v5523
      %v5657 = vunpack.c.l.b16 %v5524
      %v5658 = vunpack.c.l.b16 %v5525
      %v5659 = vunpack.c.l.b16 %v5526
      %v5660 = vunpack.c.l.b16 %v5528
      %v5661 = vunpack.c.l.b16 %v5529
      %v5662 = vunpack.c.l.b16 %v5530
      %v5663 = vunpack.c.l.b16 %v5531
      %v5664 = vunpack.c.l.b16 %v5532
      %v5665 = vunpack.c.l.b16 %v5533
      %v5666 = vunpack.c.l.b16 %v5534
      %v5667 = vunpack.c.l.b16 %v5535
      %v5668 = vunpack.c.l.b16 %v5537
      %v5669 = vunpack.c.l.b16 %v5538
      %v5670 = vunpack.c.l.b16 %v5539
      %v5671 = vunpack.c.l.b16 %v5540
      %v5672 = vunpack.c.l.b16 %v5541
      %v5673 = vunpack.c.l.b16 %v5542
      %v5674 = vunpack.c.l.b16 %v5543
      %v5675 = vunpack.c.l.b16 %v5544
      %v5676 = vpack.c.b16 %v5613, %v5612
      %v5677 = vpack.c.b16 %v5615, %v5614
      %v5678 = vpack.c.b16 %v5617, %v5616
      %v5679 = vpack.c.b16 %v5619, %v5618
      %v5680 = vpack.c.b16 %v5621, %v5620
      %v5681 = vpack.c.b16 %v5623, %v5622
      %v5682 = vpack.c.b16 %v5625, %v5624
      %v5683 = vpack.c.b16 %v5627, %v5626
      %v5684 = vpack.c.b16 %v5629, %v5628
      %v5685 = vpack.c.b16 %v5631, %v5630
      %v5686 = vpack.c.b16 %v5633, %v5632
      %v5687 = vpack.c.b16 %v5635, %v5634
      %v5688 = vpack.c.b16 %v5637, %v5636
      %v5689 = vpack.c.b16 %v5639, %v5638
      %v5690 = vpack.c.b16 %v5641, %v5640
      %v5691 = vpack.c.b16 %v5643, %v5642
      %v5692 = vpack.c.b16 %v5645, %v5644
      %v5693 = vpack.c.b16 %v5647, %v5646
      %v5694 = vpack.c.b16 %v5649, %v5648
      %v5695 = vpack.c.b16 %v5651, %v5650
      %v5696 = vpack.c.b16 %v5653, %v5652
      %v5697 = vpack.c.b16 %v5655, %v5654
      %v5698 = vpack.c.b16 %v5657, %v5656
      %v5699 = vpack.c.b16 %v5659, %v5658
      %v5700 = vpack.c.b16 %v5661, %v5660
      %v5701 = vpack.c.b16 %v5663, %v5662
      %v5702 = vpack.c.b16 %v5665, %v5664
      %v5703 = vpack.c.b16 %v5667, %v5666
      %v5704 = vpack.c.b16 %v5669, %v5668
      %v5705 = vpack.c.b16 %v5671, %v5670
      %v5706 = vpack.c.b16 %v5673, %v5672
      %v5707 = vpack.c.b16 %v5675, %v5674
      %v5709 = vsel %vm1101, %v5676, 0
      %v5712 = vsel %vm1101, %v5677, 0
      %v5715 = vsel %vm1101, %v5678, 0
      %v5718 = vsel %vm1101, %v5679, 0
      %v5721 = vsel %vm1101, %v5680, 0
      %v5724 = vsel %vm1101, %v5681, 0
      %v5727 = vsel %vm1101, %v5682, 0
      %v5730 = vsel %vm1101, %v5683, 0
      %v5733 = vsel %vm1101, %v5684, 0
      %v5736 = vsel %vm1101, %v5685, 0
      %v5739 = vsel %vm1101, %v5686, 0
      %v5742 = vsel %vm1101, %v5687, 0
      %v5745 = vsel %vm1101, %v5688, 0
      %v5748 = vsel %vm1101, %v5689, 0
      %v5751 = vsel %vm1101, %v5690, 0
      %v5754 = vsel %vm1101, %v5691, 0
      %v5757 = vsel %vm1101, %v5692, 0
      %v5760 = vsel %vm1101, %v5693, 0
      %v5763 = vsel %vm1101, %v5694, 0
      %v5766 = vsel %vm1101, %v5695, 0
      %v5769 = vsel %vm1101, %v5696, 0
      %v5772 = vsel %vm1101, %v5697, 0
      %v5775 = vsel %vm1101, %v5698, 0
      %v5778 = vsel %vm1101, %v5699, 0
      %v5781 = vsel %vm1101, %v5700, 0
      %v5784 = vsel %vm1101, %v5701, 0
      %v5787 = vsel %vm1101, %v5702, 0
      %v5790 = vsel %vm1101, %v5703, 0
      %v5793 = vsel %vm1101, %v5704, 0
      %v5796 = vsel %vm1101, %v5705, 0
      %v5799 = vsel %vm1101, %v5706, 0
      %v5802 = vsel %vm1101, %v5707, 0
      %v5805 = vsel %vm1198, %v5547, 0
      %5807 = vmatprep.subr.bf16.mxu0 0
      %5808 = vmatpush1.bf16.msra.mxu0 0
      %5809 = vmatprep.subr.bf16.mxu0 0
      %5810 = vmatpush1.bf16.msra.mxu0 0
      %5811 = vmatprep.subr.bf16.mxu0 0
      %5812 = vmatpush1.bf16.msra.mxu0 0
      %5813 = vmatprep.subr.bf16.mxu0 0
      %5814 = vmatpush1.bf16.msra.mxu0 0
      %5815 = vmatprep.subr.bf16.mxu0 0
      %5816 = vmatpush1.bf16.msra.mxu0 0
      %5817 = vmatprep.subr.bf16.mxu0 0
      %5818 = vmatpush1.bf16.msra.mxu0 0
      %5819 = vmatprep.subr.bf16.mxu0 0
      %5820 = vmatpush1.bf16.msra.mxu0 0
      %5821 = vmatprep.subr.bf16.mxu0 0
      %5822 = vmatpush1.bf16.msra.mxu0 %v5805
      %5823 = vmatprep.subr.bf16.mxu0 0
      %5824 = vmatpush2.bf16.msra.mxu0 0
      %5825 = vmatprep.subr.bf16.mxu0 0
      %5826 = vmatpush2.bf16.msra.mxu0 0
      %5827 = vmatprep.subr.bf16.mxu0 0
      %5828 = vmatpush2.bf16.msra.mxu0 0
      %5829 = vmatprep.subr.bf16.mxu0 0
      %5830 = vmatpush2.bf16.msra.mxu0 0
      %5831 = vmatprep.subr.bf16.mxu0 0
      %5832 = vmatpush2.bf16.msra.mxu0 0
      %5833 = vmatprep.subr.bf16.mxu0 0
      %5834 = vmatpush2.bf16.msra.mxu0 0
      %5835 = vmatprep.subr.bf16.mxu0 0
      %5836 = vmatpush2.bf16.msra.mxu0 0
      %5837 = vmatprep.subr.bf16.mxu0 0
      %5838 = vmatpush2.bf16.msra.mxu0 0
      %5839 = vmatprep.mubr.bf16.mxu0 0
      %5840 = vmatmul.mubr.bf16.gmra.mxu0 %v5709
      %v5841 = vpop.f32.mrf.mxu0
      %v5842 = vadd.f32 0.0, %v5841
      %v5843 = vpop.f32.mrf.mxu0
      %v5844 = vpop.f32.mrf.mxu0
      %v5845 = vadd.f32 0.0, %v5844
      %v5846 = vpop.f32.mrf.mxu0
      %5847 = vmatprep.mubr.bf16.mxu0 0
      %5848 = vmatmul.mubr.bf16.gmra.mxu0 %v5712
      %v5849 = vpop.f32.mrf.mxu0
      %v5850 = vadd.f32 0.0, %v5849
      %v5851 = vpop.f32.mrf.mxu0
      %v5852 = vpop.f32.mrf.mxu0
      %v5853 = vadd.f32 0.0, %v5852
      %v5854 = vpop.f32.mrf.mxu0
      %5855 = vmatprep.mubr.bf16.mxu0 0
      %5856 = vmatmul.mubr.bf16.gmra.mxu0 %v5715
      %v5857 = vpop.f32.mrf.mxu0
      %v5858 = vadd.f32 0.0, %v5857
      %v5859 = vpop.f32.mrf.mxu0
      %v5860 = vpop.f32.mrf.mxu0
      %v5861 = vadd.f32 0.0, %v5860
      %v5862 = vpop.f32.mrf.mxu0
      %5863 = vmatprep.mubr.bf16.mxu0 0
      %5864 = vmatmul.mubr.bf16.gmra.mxu0 %v5718
      %v5865 = vpop.f32.mrf.mxu0
      %v5866 = vadd.f32 0.0, %v5865
      %v5867 = vpop.f32.mrf.mxu0
      %v5868 = vpop.f32.mrf.mxu0
      %v5869 = vadd.f32 0.0, %v5868
      %v5870 = vpop.f32.mrf.mxu0
      %5871 = vmatprep.mubr.bf16.mxu0 0
      %5872 = vmatmul.mubr.bf16.gmra.mxu0 %v5721
      %v5873 = vpop.f32.mrf.mxu0
      %v5874 = vadd.f32 0.0, %v5873
      %v5875 = vpop.f32.mrf.mxu0
      %v5876 = vpop.f32.mrf.mxu0
      %v5877 = vadd.f32 0.0, %v5876
      %v5878 = vpop.f32.mrf.mxu0
      %5879 = vmatprep.mubr.bf16.mxu0 0
      %5880 = vmatmul.mubr.bf16.gmra.mxu0 %v5724
      %v5881 = vpop.f32.mrf.mxu0
      %v5882 = vadd.f32 0.0, %v5881
      %v5883 = vpop.f32.mrf.mxu0
      %v5884 = vpop.f32.mrf.mxu0
      %v5885 = vadd.f32 0.0, %v5884
      %v5886 = vpop.f32.mrf.mxu0
      %5887 = vmatprep.mubr.bf16.mxu0 0
      %5888 = vmatmul.mubr.bf16.gmra.mxu0 %v5727
      %v5889 = vpop.f32.mrf.mxu0
      %v5890 = vadd.f32 0.0, %v5889
      %v5891 = vpop.f32.mrf.mxu0
      %v5892 = vpop.f32.mrf.mxu0
      %v5893 = vadd.f32 0.0, %v5892
      %v5894 = vpop.f32.mrf.mxu0
      %5895 = vmatprep.mubr.bf16.mxu0 0
      %5896 = vmatmul.mubr.bf16.gmra.mxu0 %v5730
      %v5897 = vpop.f32.mrf.mxu0
      %v5898 = vadd.f32 0.0, %v5897
      %v5899 = vpop.f32.mrf.mxu0
      %v5900 = vpop.f32.mrf.mxu0
      %v5901 = vadd.f32 0.0, %v5900
      %v5902 = vpop.f32.mrf.mxu0
      %5903 = vmatprep.mubr.bf16.mxu0 0
      %5904 = vmatmul.mubr.bf16.gmra.mxu0 %v5733
      %v5905 = vpop.f32.mrf.mxu0
      %v5906 = vadd.f32 0.0, %v5905
      %v5907 = vpop.f32.mrf.mxu0
      %v5908 = vpop.f32.mrf.mxu0
      %v5909 = vadd.f32 0.0, %v5908
      %v5910 = vpop.f32.mrf.mxu0
      %5911 = vmatprep.mubr.bf16.mxu0 0
      %5912 = vmatmul.mubr.bf16.gmra.mxu0 %v5736
      %v5913 = vpop.f32.mrf.mxu0
      %v5914 = vadd.f32 0.0, %v5913
      %v5915 = vpop.f32.mrf.mxu0
      %v5916 = vpop.f32.mrf.mxu0
      %v5917 = vadd.f32 0.0, %v5916
      %v5918 = vpop.f32.mrf.mxu0
      %5919 = vmatprep.mubr.bf16.mxu0 0
      %5920 = vmatmul.mubr.bf16.gmra.mxu0 %v5739
      %v5921 = vpop.f32.mrf.mxu0
      %v5922 = vadd.f32 0.0, %v5921
      %v5923 = vpop.f32.mrf.mxu0
      %v5924 = vpop.f32.mrf.mxu0
      %v5925 = vadd.f32 0.0, %v5924
      %v5926 = vpop.f32.mrf.mxu0
      %5927 = vmatprep.mubr.bf16.mxu0 0
      %5928 = vmatmul.mubr.bf16.gmra.mxu0 %v5742
      %v5929 = vpop.f32.mrf.mxu0
      %v5930 = vadd.f32 0.0, %v5929
      %v5931 = vpop.f32.mrf.mxu0
      %v5932 = vpop.f32.mrf.mxu0
      %v5933 = vadd.f32 0.0, %v5932
      %v5934 = vpop.f32.mrf.mxu0
      %5935 = vmatprep.mubr.bf16.mxu0 0
      %5936 = vmatmul.mubr.bf16.gmra.mxu0 %v5745
      %v5937 = vpop.f32.mrf.mxu0
      %v5938 = vadd.f32 0.0, %v5937
      %v5939 = vpop.f32.mrf.mxu0
      %v5940 = vpop.f32.mrf.mxu0
      %v5941 = vadd.f32 0.0, %v5940
      %v5942 = vpop.f32.mrf.mxu0
      %5943 = vmatprep.mubr.bf16.mxu0 0
      %5944 = vmatmul.mubr.bf16.gmra.mxu0 %v5748
      %v5945 = vpop.f32.mrf.mxu0
      %v5946 = vadd.f32 0.0, %v5945
      %v5947 = vpop.f32.mrf.mxu0
      %v5948 = vpop.f32.mrf.mxu0
      %v5949 = vadd.f32 0.0, %v5948
      %v5950 = vpop.f32.mrf.mxu0
      %5951 = vmatprep.mubr.bf16.mxu0 0
      %5952 = vmatmul.mubr.bf16.gmra.mxu0 %v5751
      %v5953 = vpop.f32.mrf.mxu0
      %v5954 = vadd.f32 0.0, %v5953
      %v5955 = vpop.f32.mrf.mxu0
      %v5956 = vpop.f32.mrf.mxu0
      %v5957 = vadd.f32 0.0, %v5956
      %v5958 = vpop.f32.mrf.mxu0
      %5959 = vmatprep.mubr.bf16.mxu0 0
      %5960 = vmatmul.mubr.bf16.gmra.mxu0 %v5754
      %v5961 = vpop.f32.mrf.mxu0
      %v5962 = vadd.f32 0.0, %v5961
      %v5963 = vpop.f32.mrf.mxu0
      %v5964 = vpop.f32.mrf.mxu0
      %v5965 = vadd.f32 0.0, %v5964
      %v5966 = vpop.f32.mrf.mxu0
      %5967 = vmatprep.mubr.bf16.mxu0 0
      %5968 = vmatmul.mubr.bf16.gmra.mxu0 %v5757
      %v5969 = vpop.f32.mrf.mxu0
      %v5970 = vadd.f32 0.0, %v5969
      %v5971 = vpop.f32.mrf.mxu0
      %v5972 = vpop.f32.mrf.mxu0
      %v5973 = vadd.f32 0.0, %v5972
      %v5974 = vpop.f32.mrf.mxu0
      %5975 = vmatprep.mubr.bf16.mxu0 0
      %5976 = vmatmul.mubr.bf16.gmra.mxu0 %v5760
      %v5977 = vpop.f32.mrf.mxu0
      %v5978 = vadd.f32 0.0, %v5977
      %v5979 = vpop.f32.mrf.mxu0
      %v5980 = vpop.f32.mrf.mxu0
      %v5981 = vadd.f32 0.0, %v5980
      %v5982 = vpop.f32.mrf.mxu0
      %5983 = vmatprep.mubr.bf16.mxu0 0
      %5984 = vmatmul.mubr.bf16.gmra.mxu0 %v5763
      %v5985 = vpop.f32.mrf.mxu0
      %v5986 = vadd.f32 0.0, %v5985
      %v5987 = vpop.f32.mrf.mxu0
      %v5988 = vpop.f32.mrf.mxu0
      %v5989 = vadd.f32 0.0, %v5988
      %v5990 = vpop.f32.mrf.mxu0
      %5991 = vmatprep.mubr.bf16.mxu0 0
      %5992 = vmatmul.mubr.bf16.gmra.mxu0 %v5766
      %v5993 = vpop.f32.mrf.mxu0
      %v5994 = vadd.f32 0.0, %v5993
      %v5995 = vpop.f32.mrf.mxu0
      %v5996 = vpop.f32.mrf.mxu0
      %v5997 = vadd.f32 0.0, %v5996
      %v5998 = vpop.f32.mrf.mxu0
      %5999 = vmatprep.mubr.bf16.mxu0 0
      %6000 = vmatmul.mubr.bf16.gmra.mxu0 %v5769
      %v6001 = vpop.f32.mrf.mxu0
      %v6002 = vadd.f32 0.0, %v6001
      %v6003 = vpop.f32.mrf.mxu0
      %v6004 = vpop.f32.mrf.mxu0
      %v6005 = vadd.f32 0.0, %v6004
      %v6006 = vpop.f32.mrf.mxu0
      %6007 = vmatprep.mubr.bf16.mxu0 0
      %6008 = vmatmul.mubr.bf16.gmra.mxu0 %v5772
      %v6009 = vpop.f32.mrf.mxu0
      %v6010 = vadd.f32 0.0, %v6009
      %v6011 = vpop.f32.mrf.mxu0
      %v6012 = vpop.f32.mrf.mxu0
      %v6013 = vadd.f32 0.0, %v6012
      %v6014 = vpop.f32.mrf.mxu0
      %6015 = vmatprep.mubr.bf16.mxu0 0
      %6016 = vmatmul.mubr.bf16.gmra.mxu0 %v5775
      %v6017 = vpop.f32.mrf.mxu0
      %v6018 = vadd.f32 0.0, %v6017
      %v6019 = vpop.f32.mrf.mxu0
      %v6020 = vpop.f32.mrf.mxu0
      %v6021 = vadd.f32 0.0, %v6020
      %v6022 = vpop.f32.mrf.mxu0
      %6023 = vmatprep.mubr.bf16.mxu0 0
      %6024 = vmatmul.mubr.bf16.gmra.mxu0 %v5778
      %v6025 = vpop.f32.mrf.mxu0
      %v6026 = vadd.f32 0.0, %v6025
      %v6027 = vpop.f32.mrf.mxu0
      %v6028 = vpop.f32.mrf.mxu0
      %v6029 = vadd.f32 0.0, %v6028
      %v6030 = vpop.f32.mrf.mxu0
      %6031 = vmatprep.mubr.bf16.mxu0 0
      %6032 = vmatmul.mubr.bf16.gmra.mxu0 %v5781
      %v6033 = vpop.f32.mrf.mxu0
      %v6034 = vadd.f32 0.0, %v6033
      %v6035 = vpop.f32.mrf.mxu0
      %v6036 = vpop.f32.mrf.mxu0
      %v6037 = vadd.f32 0.0, %v6036
      %v6038 = vpop.f32.mrf.mxu0
      %6039 = vmatprep.mubr.bf16.mxu0 0
      %6040 = vmatmul.mubr.bf16.gmra.mxu0 %v5784
      %v6041 = vpop.f32.mrf.mxu0
      %v6042 = vadd.f32 0.0, %v6041
      %v6043 = vpop.f32.mrf.mxu0
      %v6044 = vpop.f32.mrf.mxu0
      %v6045 = vadd.f32 0.0, %v6044
      %v6046 = vpop.f32.mrf.mxu0
      %6047 = vmatprep.mubr.bf16.mxu0 0
      %6048 = vmatmul.mubr.bf16.gmra.mxu0 %v5787
      %v6049 = vpop.f32.mrf.mxu0
      %v6050 = vadd.f32 0.0, %v6049
      %v6051 = vpop.f32.mrf.mxu0
      %v6052 = vpop.f32.mrf.mxu0
      %v6053 = vadd.f32 0.0, %v6052
      %v6054 = vpop.f32.mrf.mxu0
      %6055 = vmatprep.mubr.bf16.mxu0 0
      %6056 = vmatmul.mubr.bf16.gmra.mxu0 %v5790
      %v6057 = vpop.f32.mrf.mxu0
      %v6058 = vadd.f32 0.0, %v6057
      %v6059 = vpop.f32.mrf.mxu0
      %v6060 = vpop.f32.mrf.mxu0
      %v6061 = vadd.f32 0.0, %v6060
      %v6062 = vpop.f32.mrf.mxu0
      %6063 = vmatprep.mubr.bf16.mxu0 0
      %6064 = vmatmul.mubr.bf16.gmra.mxu0 %v5793
      %v6065 = vpop.f32.mrf.mxu0
      %v6066 = vadd.f32 0.0, %v6065
      %v6067 = vpop.f32.mrf.mxu0
      %v6068 = vpop.f32.mrf.mxu0
      %v6069 = vadd.f32 0.0, %v6068
      %v6070 = vpop.f32.mrf.mxu0
      %6071 = vmatprep.mubr.bf16.mxu0 0
      %6072 = vmatmul.mubr.bf16.gmra.mxu0 %v5796
      %v6073 = vpop.f32.mrf.mxu0
      %v6074 = vadd.f32 0.0, %v6073
      %v6075 = vpop.f32.mrf.mxu0
      %v6076 = vpop.f32.mrf.mxu0
      %v6077 = vadd.f32 0.0, %v6076
      %v6078 = vpop.f32.mrf.mxu0
      %6079 = vmatprep.mubr.bf16.mxu0 0
      %6080 = vmatmul.mubr.bf16.gmra.mxu0 %v5799
      %v6081 = vpop.f32.mrf.mxu0
      %v6082 = vadd.f32 0.0, %v6081
      %v6083 = vpop.f32.mrf.mxu0
      %v6084 = vpop.f32.mrf.mxu0
      %v6085 = vadd.f32 0.0, %v6084
      %v6086 = vpop.f32.mrf.mxu0
      %6087 = vmatprep.mubr.bf16.mxu0 0
      %6088 = vmatmul.mubr.bf16.gmra.mxu0 %v5802
      %v6089 = vpop.f32.mrf.mxu0
      %v6090 = vadd.f32 0.0, %v6089
      %v6091 = vpop.f32.mrf.mxu0
      %v6092 = vpop.f32.mrf.mxu0
      %v6093 = vadd.f32 0.0, %v6092
      %v6094 = vpop.f32.mrf.mxu0
      %6095 = vdwg.mxu0
      %v6096 = vadd.f32 %v5406, %v5842
      %v6097 = vadd.f32 %v5407, %v5845
      %v6098 = vadd.f32 %v5408, %v5850
      %v6099 = vadd.f32 %v5409, %v5853
      %v6100 = vadd.f32 %v5410, %v5858
      %v6101 = vadd.f32 %v5411, %v5861
      %v6102 = vadd.f32 %v5412, %v5866
      %v6103 = vadd.f32 %v5413, %v5869
      %v6104 = vadd.f32 %v5414, %v5874
      %v6105 = vadd.f32 %v5415, %v5877
      %v6106 = vadd.f32 %v5416, %v5882
      %v6107 = vadd.f32 %v5417, %v5885
      %v6108 = vadd.f32 %v5418, %v5890
      %v6109 = vadd.f32 %v5419, %v5893
      %v6110 = vadd.f32 %v5420, %v5898
      %v6111 = vadd.f32 %v5421, %v5901
      %v6112 = vadd.f32 %v5422, %v5906
      %v6113 = vadd.f32 %v5423, %v5909
      %v6114 = vadd.f32 %v5424, %v5914
      %v6115 = vadd.f32 %v5425, %v5917
      %v6116 = vadd.f32 %v5426, %v5922
      %v6117 = vadd.f32 %v5427, %v5925
      %v6118 = vadd.f32 %v5428, %v5930
      %v6119 = vadd.f32 %v5429, %v5933
      %v6120 = vadd.f32 %v5430, %v5938
      %v6121 = vadd.f32 %v5431, %v5941
      %v6122 = vadd.f32 %v5432, %v5946
      %v6123 = vadd.f32 %v5433, %v5949
      %v6124 = vadd.f32 %v5434, %v5954
      %v6125 = vadd.f32 %v5435, %v5957
      %v6126 = vadd.f32 %v5436, %v5962
      %v6127 = vadd.f32 %v5437, %v5965
      %v6128 = vadd.f32 %v5438, %v5970
      %v6129 = vadd.f32 %v5439, %v5973
      %v6130 = vadd.f32 %v5440, %v5978
      %v6131 = vadd.f32 %v5441, %v5981
      %v6132 = vadd.f32 %v5442, %v5986
      %v6133 = vadd.f32 %v5443, %v5989
      %v6134 = vadd.f32 %v5444, %v5994
      %v6135 = vadd.f32 %v5445, %v5997
      %v6136 = vadd.f32 %v5446, %v6002
      %v6137 = vadd.f32 %v5447, %v6005
      %v6138 = vadd.f32 %v5448, %v6010
      %v6139 = vadd.f32 %v5449, %v6013
      %v6140 = vadd.f32 %v5450, %v6018
      %v6141 = vadd.f32 %v5451, %v6021
      %v6142 = vadd.f32 %v5452, %v6026
      %v6143 = vadd.f32 %v5453, %v6029
      %v6144 = vadd.f32 %v5454, %v6034
      %v6145 = vadd.f32 %v5455, %v6037
      %v6146 = vadd.f32 %v5456, %v6042
      %v6147 = vadd.f32 %v5457, %v6045
      %v6148 = vadd.f32 %v5458, %v6050
      %v6149 = vadd.f32 %v5459, %v6053
      %v6150 = vadd.f32 %v5460, %v6058
      %v6151 = vadd.f32 %v5461, %v6061
      %v6152 = vadd.f32 %v5462, %v6066
      %v6153 = vadd.f32 %v5463, %v6069
      %v6154 = vadd.f32 %v5464, %v6074
      %v6155 = vadd.f32 %v5465, %v6077
      %v6156 = vadd.f32 %v5466, %v6082
      %v6157 = vadd.f32 %v5467, %v6085
      %v6158 = vadd.f32 %v5468, %v6090
      %v6159 = vadd.f32 %v5469, %v6093
      %v6161 = vshrl.u32 %v5474, 16
      %v6163 = vrot.slane %v6161, 4
      %v6164 = vshll.u32 %v5474, 16
      %v6166 = vrot.slane %v6164, 5
      %v6167 = vor.u32 %v6163, %v6166
      %v6168 = vrot.slane %v6167, 4
      %v6170 = vshll.u32 %v5475, 16
      %v6172 = vrot.slane %v6170, 5
      %v6173 = vsel %vm330, %v6168, %v6172
      %v6174 = vshrl.u32 %v5475, 16
      %v6176 = vrot.slane %v6174, 4
      %v6177 = vor.u32 %v6176, %v6172
      %v6178 = vrot.slane %v6177, 4
      %v6180 = vshll.u32 %v5476, 16
      %v6182 = vrot.slane %v6180, 5
      %v6183 = vsel %vm330, %v6178, %v6182
      %v6184 = vshrl.u32 %v5476, 16
      %v6186 = vrot.slane %v6184, 4
      %v6187 = vor.u32 %v6186, %v6182
      %v6188 = vrot.slane %v6187, 4
      %v6190 = vshll.u32 %v5477, 16
      %v6192 = vrot.slane %v6190, 5
      %v6193 = vsel %vm330, %v6188, %v6192
      %v6194 = vshrl.u32 %v5477, 16
      %v6196 = vrot.slane %v6194, 4
      %v6197 = vor.u32 %v6196, %v6192
      %v6198 = vrot.slane %v6197, 4
      %v6200 = vshll.u32 %v5478, 16
      %v6202 = vrot.slane %v6200, 5
      %v6203 = vsel %vm330, %v6198, %v6202
      %v6204 = vshrl.u32 %v5478, 16
      %v6206 = vrot.slane %v6204, 4
      %v6207 = vor.u32 %v6206, %v6202
      %v6208 = vrot.slane %v6207, 4
      %v6210 = vshll.u32 %v5479, 16
      %v6212 = vrot.slane %v6210, 5
      %v6213 = vsel %vm330, %v6208, %v6212
      %v6214 = vshrl.u32 %v5479, 16
      %v6216 = vrot.slane %v6214, 4
      %v6217 = vor.u32 %v6216, %v6212
      %v6218 = vrot.slane %v6217, 4
      %v6220 = vshll.u32 %v5480, 16
      %v6222 = vrot.slane %v6220, 5
      %v6223 = vsel %vm330, %v6218, %v6222
      %v6224 = vshrl.u32 %v5480, 16
      %v6226 = vrot.slane %v6224, 4
      %v6227 = vor.u32 %v6226, %v6222
      %v6228 = vrot.slane %v6227, 4
      %v6230 = vshll.u32 %v5481, 16
      %v6232 = vrot.slane %v6230, 5
      %v6233 = vsel %vm330, %v6228, %v6232
      %v6234 = vshrl.u32 %v5481, 16
      %v6236 = vrot.slane %v6234, 4
      %v6237 = vor.u32 %v6236, %v6232
      %v6238 = vrot.slane %v6237, 4
      %v6240 = vshll.u32 %v5482, 16
      %v6242 = vrot.slane %v6240, 5
      %v6243 = vsel %vm330, %v6238, %v6242
      %v6245 = vshrl.u32 %v5483, 16
      %v6247 = vrot.slane %v6245, 4
      %v6248 = vshll.u32 %v5483, 16
      %v6250 = vrot.slane %v6248, 5
      %v6251 = vor.u32 %v6247, %v6250
      %v6252 = vrot.slane %v6251, 4
      %v6254 = vshll.u32 %v5484, 16
      %v6256 = vrot.slane %v6254, 5
      %v6257 = vsel %vm330, %v6252, %v6256
      %v6258 = vshrl.u32 %v5484, 16
      %v6260 = vrot.slane %v6258, 4
      %v6261 = vor.u32 %v6260, %v6256
      %v6262 = vrot.slane %v6261, 4
      %v6264 = vshll.u32 %v5485, 16
      %v6266 = vrot.slane %v6264, 5
      %v6267 = vsel %vm330, %v6262, %v6266
      %v6268 = vshrl.u32 %v5485, 16
      %v6270 = vrot.slane %v6268, 4
      %v6271 = vor.u32 %v6270, %v6266
      %v6272 = vrot.slane %v6271, 4
      %v6274 = vshll.u32 %v5486, 16
      %v6276 = vrot.slane %v6274, 5
      %v6277 = vsel %vm330, %v6272, %v6276
      %v6278 = vshrl.u32 %v5486, 16
      %v6280 = vrot.slane %v6278, 4
      %v6281 = vor.u32 %v6280, %v6276
      %v6282 = vrot.slane %v6281, 4
      %v6284 = vshll.u32 %v5487, 16
      %v6286 = vrot.slane %v6284, 5
      %v6287 = vsel %vm330, %v6282, %v6286
      %v6288 = vshrl.u32 %v5487, 16
      %v6290 = vrot.slane %v6288, 4
      %v6291 = vor.u32 %v6290, %v6286
      %v6292 = vrot.slane %v6291, 4
      %v6294 = vshll.u32 %v5488, 16
      %v6296 = vrot.slane %v6294, 5
      %v6297 = vsel %vm330, %v6292, %v6296
      %v6298 = vshrl.u32 %v5488, 16
      %v6300 = vrot.slane %v6298, 4
      %v6301 = vor.u32 %v6300, %v6296
      %v6302 = vrot.slane %v6301, 4
      %v6304 = vshll.u32 %v5489, 16
      %v6306 = vrot.slane %v6304, 5
      %v6307 = vsel %vm330, %v6302, %v6306
      %v6308 = vshrl.u32 %v5489, 16
      %v6310 = vrot.slane %v6308, 4
      %v6311 = vor.u32 %v6310, %v6306
      %v6312 = vrot.slane %v6311, 4
      %v6314 = vshll.u32 %v5490, 16
      %v6316 = vrot.slane %v6314, 5
      %v6317 = vsel %vm330, %v6312, %v6316
      %v6318 = vshrl.u32 %v5490, 16
      %v6320 = vrot.slane %v6318, 4
      %v6321 = vor.u32 %v6320, %v6316
      %v6322 = vrot.slane %v6321, 4
      %v6324 = vshll.u32 %v5491, 16
      %v6326 = vrot.slane %v6324, 5
      %v6327 = vsel %vm330, %v6322, %v6326
      %v6329 = vshrl.u32 %v5492, 16
      %v6331 = vrot.slane %v6329, 4
      %v6332 = vshll.u32 %v5492, 16
      %v6334 = vrot.slane %v6332, 5
      %v6335 = vor.u32 %v6331, %v6334
      %v6336 = vrot.slane %v6335, 4
      %v6338 = vshll.u32 %v5493, 16
      %v6340 = vrot.slane %v6338, 5
      %v6341 = vsel %vm330, %v6336, %v6340
      %v6342 = vshrl.u32 %v5493, 16
      %v6344 = vrot.slane %v6342, 4
      %v6345 = vor.u32 %v6344, %v6340
      %v6346 = vrot.slane %v6345, 4
      %v6348 = vshll.u32 %v5494, 16
      %v6350 = vrot.slane %v6348, 5
      %v6351 = vsel %vm330, %v6346, %v6350
      %v6352 = vshrl.u32 %v5494, 16
      %v6354 = vrot.slane %v6352, 4
      %v6355 = vor.u32 %v6354, %v6350
      %v6356 = vrot.slane %v6355, 4
      %v6358 = vshll.u32 %v5495, 16
      %v6360 = vrot.slane %v6358, 5
      %v6361 = vsel %vm330, %v6356, %v6360
      %v6362 = vshrl.u32 %v5495, 16
      %v6364 = vrot.slane %v6362, 4
      %v6365 = vor.u32 %v6364, %v6360
      %v6366 = vrot.slane %v6365, 4
      %v6368 = vshll.u32 %v5496, 16
      %v6370 = vrot.slane %v6368, 5
      %v6371 = vsel %vm330, %v6366, %v6370
      %v6372 = vshrl.u32 %v5496, 16
      %v6374 = vrot.slane %v6372, 4
      %v6375 = vor.u32 %v6374, %v6370
      %v6376 = vrot.slane %v6375, 4
      %v6378 = vshll.u32 %v5497, 16
      %v6380 = vrot.slane %v6378, 5
      %v6381 = vsel %vm330, %v6376, %v6380
      %v6382 = vshrl.u32 %v5497, 16
      %v6384 = vrot.slane %v6382, 4
      %v6385 = vor.u32 %v6384, %v6380
      %v6386 = vrot.slane %v6385, 4
      %v6388 = vshll.u32 %v5498, 16
      %v6390 = vrot.slane %v6388, 5
      %v6391 = vsel %vm330, %v6386, %v6390
      %v6392 = vshrl.u32 %v5498, 16
      %v6394 = vrot.slane %v6392, 4
      %v6395 = vor.u32 %v6394, %v6390
      %v6396 = vrot.slane %v6395, 4
      %v6398 = vshll.u32 %v5499, 16
      %v6400 = vrot.slane %v6398, 5
      %v6401 = vsel %vm330, %v6396, %v6400
      %v6402 = vshrl.u32 %v5499, 16
      %v6404 = vrot.slane %v6402, 4
      %v6405 = vor.u32 %v6404, %v6400
      %v6406 = vrot.slane %v6405, 4
      %v6408 = vshll.u32 %v5500, 16
      %v6410 = vrot.slane %v6408, 5
      %v6411 = vsel %vm330, %v6406, %v6410
      %v6413 = vshrl.u32 %v5501, 16
      %v6415 = vrot.slane %v6413, 4
      %v6416 = vshll.u32 %v5501, 16
      %v6418 = vrot.slane %v6416, 5
      %v6419 = vor.u32 %v6415, %v6418
      %v6420 = vrot.slane %v6419, 4
      %v6422 = vshll.u32 %v5502, 16
      %v6424 = vrot.slane %v6422, 5
      %v6425 = vsel %vm330, %v6420, %v6424
      %v6426 = vshrl.u32 %v5502, 16
      %v6428 = vrot.slane %v6426, 4
      %v6429 = vor.u32 %v6428, %v6424
      %v6430 = vrot.slane %v6429, 4
      %v6432 = vshll.u32 %v5503, 16
      %v6434 = vrot.slane %v6432, 5
      %v6435 = vsel %vm330, %v6430, %v6434
      %v6436 = vshrl.u32 %v5503, 16
      %v6438 = vrot.slane %v6436, 4
      %v6439 = vor.u32 %v6438, %v6434
      %v6440 = vrot.slane %v6439, 4
      %v6442 = vshll.u32 %v5504, 16
      %v6444 = vrot.slane %v6442, 5
      %v6445 = vsel %vm330, %v6440, %v6444
      %v6446 = vshrl.u32 %v5504, 16
      %v6448 = vrot.slane %v6446, 4
      %v6449 = vor.u32 %v6448, %v6444
      %v6450 = vrot.slane %v6449, 4
      %v6452 = vshll.u32 %v5505, 16
      %v6454 = vrot.slane %v6452, 5
      %v6455 = vsel %vm330, %v6450, %v6454
      %v6456 = vshrl.u32 %v5505, 16
      %v6458 = vrot.slane %v6456, 4
      %v6459 = vor.u32 %v6458, %v6454
      %v6460 = vrot.slane %v6459, 4
      %v6462 = vshll.u32 %v5506, 16
      %v6464 = vrot.slane %v6462, 5
      %v6465 = vsel %vm330, %v6460, %v6464
      %v6466 = vshrl.u32 %v5506, 16
      %v6468 = vrot.slane %v6466, 4
      %v6469 = vor.u32 %v6468, %v6464
      %v6470 = vrot.slane %v6469, 4
      %v6472 = vshll.u32 %v5507, 16
      %v6474 = vrot.slane %v6472, 5
      %v6475 = vsel %vm330, %v6470, %v6474
      %v6476 = vshrl.u32 %v5507, 16
      %v6478 = vrot.slane %v6476, 4
      %v6479 = vor.u32 %v6478, %v6474
      %v6480 = vrot.slane %v6479, 4
      %v6482 = vshll.u32 %v5508, 16
      %v6484 = vrot.slane %v6482, 5
      %v6485 = vsel %vm330, %v6480, %v6484
      %v6486 = vshrl.u32 %v5508, 16
      %v6488 = vrot.slane %v6486, 4
      %v6489 = vor.u32 %v6488, %v6484
      %v6490 = vrot.slane %v6489, 4
      %v6492 = vshll.u32 %v5509, 16
      %v6494 = vrot.slane %v6492, 5
      %v6495 = vsel %vm330, %v6490, %v6494
      %v6497 = vshrl.u32 %v5510, 16
      %v6499 = vrot.slane %v6497, 4
      %v6500 = vshll.u32 %v5510, 16
      %v6502 = vrot.slane %v6500, 5
      %v6503 = vor.u32 %v6499, %v6502
      %v6504 = vrot.slane %v6503, 4
      %v6506 = vshll.u32 %v5511, 16
      %v6508 = vrot.slane %v6506, 5
      %v6509 = vsel %vm330, %v6504, %v6508
      %v6510 = vshrl.u32 %v5511, 16
      %v6512 = vrot.slane %v6510, 4
      %v6513 = vor.u32 %v6512, %v6508
      %v6514 = vrot.slane %v6513, 4
      %v6516 = vshll.u32 %v5512, 16
      %v6518 = vrot.slane %v6516, 5
      %v6519 = vsel %vm330, %v6514, %v6518
      %v6520 = vshrl.u32 %v5512, 16
      %v6522 = vrot.slane %v6520, 4
      %v6523 = vor.u32 %v6522, %v6518
      %v6524 = vrot.slane %v6523, 4
      %v6526 = vshll.u32 %v5513, 16
      %v6528 = vrot.slane %v6526, 5
      %v6529 = vsel %vm330, %v6524, %v6528
      %v6530 = vshrl.u32 %v5513, 16
      %v6532 = vrot.slane %v6530, 4
      %v6533 = vor.u32 %v6532, %v6528
      %v6534 = vrot.slane %v6533, 4
      %v6536 = vshll.u32 %v5514, 16
      %v6538 = vrot.slane %v6536, 5
      %v6539 = vsel %vm330, %v6534, %v6538
      %v6540 = vshrl.u32 %v5514, 16
      %v6542 = vrot.slane %v6540, 4
      %v6543 = vor.u32 %v6542, %v6538
      %v6544 = vrot.slane %v6543, 4
      %v6546 = vshll.u32 %v5515, 16
      %v6548 = vrot.slane %v6546, 5
      %v6549 = vsel %vm330, %v6544, %v6548
      %v6550 = vshrl.u32 %v5515, 16
      %v6552 = vrot.slane %v6550, 4
      %v6553 = vor.u32 %v6552, %v6548
      %v6554 = vrot.slane %v6553, 4
      %v6556 = vshll.u32 %v5516, 16
      %v6558 = vrot.slane %v6556, 5
      %v6559 = vsel %vm330, %v6554, %v6558
      %v6560 = vshrl.u32 %v5516, 16
      %v6562 = vrot.slane %v6560, 4
      %v6563 = vor.u32 %v6562, %v6558
      %v6564 = vrot.slane %v6563, 4
      %v6566 = vshll.u32 %v5517, 16
      %v6568 = vrot.slane %v6566, 5
      %v6569 = vsel %vm330, %v6564, %v6568
      %v6570 = vshrl.u32 %v5517, 16
      %v6572 = vrot.slane %v6570, 4
      %v6573 = vor.u32 %v6572, %v6568
      %v6574 = vrot.slane %v6573, 4
      %v6576 = vshll.u32 %v5518, 16
      %v6578 = vrot.slane %v6576, 5
      %v6579 = vsel %vm330, %v6574, %v6578
      %v6581 = vshrl.u32 %v5519, 16
      %v6583 = vrot.slane %v6581, 4
      %v6584 = vshll.u32 %v5519, 16
      %v6586 = vrot.slane %v6584, 5
      %v6587 = vor.u32 %v6583, %v6586
      %v6588 = vrot.slane %v6587, 4
      %v6590 = vshll.u32 %v5520, 16
      %v6592 = vrot.slane %v6590, 5
      %v6593 = vsel %vm330, %v6588, %v6592
      %v6594 = vshrl.u32 %v5520, 16
      %v6596 = vrot.slane %v6594, 4
      %v6597 = vor.u32 %v6596, %v6592
      %v6598 = vrot.slane %v6597, 4
      %v6600 = vshll.u32 %v5521, 16
      %v6602 = vrot.slane %v6600, 5
      %v6603 = vsel %vm330, %v6598, %v6602
      %v6604 = vshrl.u32 %v5521, 16
      %v6606 = vrot.slane %v6604, 4
      %v6607 = vor.u32 %v6606, %v6602
      %v6608 = vrot.slane %v6607, 4
      %v6610 = vshll.u32 %v5522, 16
      %v6612 = vrot.slane %v6610, 5
      %v6613 = vsel %vm330, %v6608, %v6612
      %v6614 = vshrl.u32 %v5522, 16
      %v6616 = vrot.slane %v6614, 4
      %v6617 = vor.u32 %v6616, %v6612
      %v6618 = vrot.slane %v6617, 4
      %v6620 = vshll.u32 %v5523, 16
      %v6622 = vrot.slane %v6620, 5
      %v6623 = vsel %vm330, %v6618, %v6622
      %v6624 = vshrl.u32 %v5523, 16
      %v6626 = vrot.slane %v6624, 4
      %v6627 = vor.u32 %v6626, %v6622
      %v6628 = vrot.slane %v6627, 4
      %v6630 = vshll.u32 %v5524, 16
      %v6632 = vrot.slane %v6630, 5
      %v6633 = vsel %vm330, %v6628, %v6632
      %v6634 = vshrl.u32 %v5524, 16
      %v6636 = vrot.slane %v6634, 4
      %v6637 = vor.u32 %v6636, %v6632
      %v6638 = vrot.slane %v6637, 4
      %v6640 = vshll.u32 %v5525, 16
      %v6642 = vrot.slane %v6640, 5
      %v6643 = vsel %vm330, %v6638, %v6642
      %v6644 = vshrl.u32 %v5525, 16
      %v6646 = vrot.slane %v6644, 4
      %v6647 = vor.u32 %v6646, %v6642
      %v6648 = vrot.slane %v6647, 4
      %v6650 = vshll.u32 %v5526, 16
      %v6652 = vrot.slane %v6650, 5
      %v6653 = vsel %vm330, %v6648, %v6652
      %v6654 = vshrl.u32 %v5526, 16
      %v6656 = vrot.slane %v6654, 4
      %v6657 = vor.u32 %v6656, %v6652
      %v6658 = vrot.slane %v6657, 4
      %v6660 = vshll.u32 %v5527, 16
      %v6662 = vrot.slane %v6660, 5
      %v6663 = vsel %vm330, %v6658, %v6662
      %v6665 = vshrl.u32 %v5528, 16
      %v6667 = vrot.slane %v6665, 4
      %v6668 = vshll.u32 %v5528, 16
      %v6670 = vrot.slane %v6668, 5
      %v6671 = vor.u32 %v6667, %v6670
      %v6672 = vrot.slane %v6671, 4
      %v6674 = vshll.u32 %v5529, 16
      %v6676 = vrot.slane %v6674, 5
      %v6677 = vsel %vm330, %v6672, %v6676
      %v6678 = vshrl.u32 %v5529, 16
      %v6680 = vrot.slane %v6678, 4
      %v6681 = vor.u32 %v6680, %v6676
      %v6682 = vrot.slane %v6681, 4
      %v6684 = vshll.u32 %v5530, 16
      %v6686 = vrot.slane %v6684, 5
      %v6687 = vsel %vm330, %v6682, %v6686
      %v6688 = vshrl.u32 %v5530, 16
      %v6690 = vrot.slane %v6688, 4
      %v6691 = vor.u32 %v6690, %v6686
      %v6692 = vrot.slane %v6691, 4
      %v6694 = vshll.u32 %v5531, 16
      %v6696 = vrot.slane %v6694, 5
      %v6697 = vsel %vm330, %v6692, %v6696
      %v6698 = vshrl.u32 %v5531, 16
      %v6700 = vrot.slane %v6698, 4
      %v6701 = vor.u32 %v6700, %v6696
      %v6702 = vrot.slane %v6701, 4
      %v6704 = vshll.u32 %v5532, 16
      %v6706 = vrot.slane %v6704, 5
      %v6707 = vsel %vm330, %v6702, %v6706
      %v6708 = vshrl.u32 %v5532, 16
      %v6710 = vrot.slane %v6708, 4
      %v6711 = vor.u32 %v6710, %v6706
      %v6712 = vrot.slane %v6711, 4
      %v6714 = vshll.u32 %v5533, 16
      %v6716 = vrot.slane %v6714, 5
      %v6717 = vsel %vm330, %v6712, %v6716
      %v6718 = vshrl.u32 %v5533, 16
      %v6720 = vrot.slane %v6718, 4
      %v6721 = vor.u32 %v6720, %v6716
      %v6722 = vrot.slane %v6721, 4
      %v6724 = vshll.u32 %v5534, 16
      %v6726 = vrot.slane %v6724, 5
      %v6727 = vsel %vm330, %v6722, %v6726
      %v6728 = vshrl.u32 %v5534, 16
      %v6730 = vrot.slane %v6728, 4
      %v6731 = vor.u32 %v6730, %v6726
      %v6732 = vrot.slane %v6731, 4
      %v6734 = vshll.u32 %v5535, 16
      %v6736 = vrot.slane %v6734, 5
      %v6737 = vsel %vm330, %v6732, %v6736
      %v6738 = vshrl.u32 %v5535, 16
      %v6740 = vrot.slane %v6738, 4
      %v6741 = vor.u32 %v6740, %v6736
      %v6742 = vrot.slane %v6741, 4
      %v6744 = vshll.u32 %v5536, 16
      %v6746 = vrot.slane %v6744, 5
      %v6747 = vsel %vm330, %v6742, %v6746
      %v6749 = vshrl.u32 %v5537, 16
      %v6751 = vrot.slane %v6749, 4
      %v6752 = vshll.u32 %v5537, 16
      %v6754 = vrot.slane %v6752, 5
      %v6755 = vor.u32 %v6751, %v6754
      %v6756 = vrot.slane %v6755, 4
      %v6758 = vshll.u32 %v5538, 16
      %v6760 = vrot.slane %v6758, 5
      %v6761 = vsel %vm330, %v6756, %v6760
      %v6762 = vshrl.u32 %v5538, 16
      %v6764 = vrot.slane %v6762, 4
      %v6765 = vor.u32 %v6764, %v6760
      %v6766 = vrot.slane %v6765, 4
      %v6768 = vshll.u32 %v5539, 16
      %v6770 = vrot.slane %v6768, 5
      %v6771 = vsel %vm330, %v6766, %v6770
      %v6772 = vshrl.u32 %v5539, 16
      %v6774 = vrot.slane %v6772, 4
      %v6775 = vor.u32 %v6774, %v6770
      %v6776 = vrot.slane %v6775, 4
      %v6778 = vshll.u32 %v5540, 16
      %v6780 = vrot.slane %v6778, 5
      %v6781 = vsel %vm330, %v6776, %v6780
      %v6782 = vshrl.u32 %v5540, 16
      %v6784 = vrot.slane %v6782, 4
      %v6785 = vor.u32 %v6784, %v6780
      %v6786 = vrot.slane %v6785, 4
      %v6788 = vshll.u32 %v5541, 16
      %v6790 = vrot.slane %v6788, 5
      %v6791 = vsel %vm330, %v6786, %v6790
      %v6792 = vshrl.u32 %v5541, 16
      %v6794 = vrot.slane %v6792, 4
      %v6795 = vor.u32 %v6794, %v6790
      %v6796 = vrot.slane %v6795, 4
      %v6798 = vshll.u32 %v5542, 16
      %v6800 = vrot.slane %v6798, 5
      %v6801 = vsel %vm330, %v6796, %v6800
      %v6802 = vshrl.u32 %v5542, 16
      %v6804 = vrot.slane %v6802, 4
      %v6805 = vor.u32 %v6804, %v6800
      %v6806 = vrot.slane %v6805, 4
      %v6808 = vshll.u32 %v5543, 16
      %v6810 = vrot.slane %v6808, 5
      %v6811 = vsel %vm330, %v6806, %v6810
      %v6812 = vshrl.u32 %v5543, 16
      %v6814 = vrot.slane %v6812, 4
      %v6815 = vor.u32 %v6814, %v6810
      %v6816 = vrot.slane %v6815, 4
      %v6818 = vshll.u32 %v5544, 16
      %v6820 = vrot.slane %v6818, 5
      %v6821 = vsel %vm330, %v6816, %v6820
      %v6822 = vshrl.u32 %v5544, 16
      %v6824 = vrot.slane %v6822, 4
      %v6825 = vor.u32 %v6824, %v6820
      %v6826 = vrot.slane %v6825, 4
      %v6828 = vshll.u32 %v5545, 16
      %v6830 = vrot.slane %v6828, 5
      %v6831 = vsel %vm330, %v6826, %v6830
      %s6832 = scalar_lea.vmem %s1, 14
      %v6833 = vld [vmem:[%s6832] sm:$0x3]
      %v6834 = vunpack.c.l.b16 %v6173
      %v6835 = vunpack.c.l.b16 %v6183
      %v6836 = vunpack.c.l.b16 %v6193
      %v6837 = vunpack.c.l.b16 %v6203
      %v6838 = vunpack.c.l.b16 %v6213
      %v6839 = vunpack.c.l.b16 %v6223
      %v6840 = vunpack.c.l.b16 %v6233
      %v6841 = vunpack.c.l.b16 %v6243
      %v6842 = vunpack.c.l.b16 %v6257
      %v6843 = vunpack.c.l.b16 %v6267
      %v6844 = vunpack.c.l.b16 %v6277
      %v6845 = vunpack.c.l.b16 %v6287
      %v6846 = vunpack.c.l.b16 %v6297
      %v6847 = vunpack.c.l.b16 %v6307
      %v6848 = vunpack.c.l.b16 %v6317
      %v6849 = vunpack.c.l.b16 %v6327
      %v6850 = vunpack.c.l.b16 %v6341
      %v6851 = vunpack.c.l.b16 %v6351
      %v6852 = vunpack.c.l.b16 %v6361
      %v6853 = vunpack.c.l.b16 %v6371
      %v6854 = vunpack.c.l.b16 %v6381
      %v6855 = vunpack.c.l.b16 %v6391
      %v6856 = vunpack.c.l.b16 %v6401
      %v6857 = vunpack.c.l.b16 %v6411
      %v6858 = vunpack.c.l.b16 %v6425
      %v6859 = vunpack.c.l.b16 %v6435
      %v6860 = vunpack.c.l.b16 %v6445
      %v6861 = vunpack.c.l.b16 %v6455
      %v6862 = vunpack.c.l.b16 %v6465
      %v6863 = vunpack.c.l.b16 %v6475
      %v6864 = vunpack.c.l.b16 %v6485
      %v6865 = vunpack.c.l.b16 %v6495
      %v6866 = vunpack.c.l.b16 %v6509
      %v6867 = vunpack.c.l.b16 %v6519
      %v6868 = vunpack.c.l.b16 %v6529
      %v6869 = vunpack.c.l.b16 %v6539
      %v6870 = vunpack.c.l.b16 %v6549
      %v6871 = vunpack.c.l.b16 %v6559
      %v6872 = vunpack.c.l.b16 %v6569
      %v6873 = vunpack.c.l.b16 %v6579
      %v6874 = vunpack.c.l.b16 %v6593
      %v6875 = vunpack.c.l.b16 %v6603
      %v6876 = vunpack.c.l.b16 %v6613
      %v6877 = vunpack.c.l.b16 %v6623
      %v6878 = vunpack.c.l.b16 %v6633
      %v6879 = vunpack.c.l.b16 %v6643
      %v6880 = vunpack.c.l.b16 %v6653
      %v6881 = vunpack.c.l.b16 %v6663
      %v6882 = vunpack.c.l.b16 %v6677
      %v6883 = vunpack.c.l.b16 %v6687
      %v6884 = vunpack.c.l.b16 %v6697
      %v6885 = vunpack.c.l.b16 %v6707
      %v6886 = vunpack.c.l.b16 %v6717
      %v6887 = vunpack.c.l.b16 %v6727
      %v6888 = vunpack.c.l.b16 %v6737
      %v6889 = vunpack.c.l.b16 %v6747
      %v6890 = vunpack.c.l.b16 %v6761
      %v6891 = vunpack.c.l.b16 %v6771
      %v6892 = vunpack.c.l.b16 %v6781
      %v6893 = vunpack.c.l.b16 %v6791
      %v6894 = vunpack.c.l.b16 %v6801
      %v6895 = vunpack.c.l.b16 %v6811
      %v6896 = vunpack.c.l.b16 %v6821
      %v6897 = vunpack.c.l.b16 %v6831
      %v6898 = vpack.c.b16 %v6835, %v6834
      %v6899 = vpack.c.b16 %v6837, %v6836
      %v6900 = vpack.c.b16 %v6839, %v6838
      %v6901 = vpack.c.b16 %v6841, %v6840
      %v6902 = vpack.c.b16 %v6843, %v6842
      %v6903 = vpack.c.b16 %v6845, %v6844
      %v6904 = vpack.c.b16 %v6847, %v6846
      %v6905 = vpack.c.b16 %v6849, %v6848
      %v6906 = vpack.c.b16 %v6851, %v6850
      %v6907 = vpack.c.b16 %v6853, %v6852
      %v6908 = vpack.c.b16 %v6855, %v6854
      %v6909 = vpack.c.b16 %v6857, %v6856
      %v6910 = vpack.c.b16 %v6859, %v6858
      %v6911 = vpack.c.b16 %v6861, %v6860
      %v6912 = vpack.c.b16 %v6863, %v6862
      %v6913 = vpack.c.b16 %v6865, %v6864
      %v6914 = vpack.c.b16 %v6867, %v6866
      %v6915 = vpack.c.b16 %v6869, %v6868
      %v6916 = vpack.c.b16 %v6871, %v6870
      %v6917 = vpack.c.b16 %v6873, %v6872
      %v6918 = vpack.c.b16 %v6875, %v6874
      %v6919 = vpack.c.b16 %v6877, %v6876
      %v6920 = vpack.c.b16 %v6879, %v6878
      %v6921 = vpack.c.b16 %v6881, %v6880
      %v6922 = vpack.c.b16 %v6883, %v6882
      %v6923 = vpack.c.b16 %v6885, %v6884
      %v6924 = vpack.c.b16 %v6887, %v6886
      %v6925 = vpack.c.b16 %v6889, %v6888
      %v6926 = vpack.c.b16 %v6891, %v6890
      %v6927 = vpack.c.b16 %v6893, %v6892
      %v6928 = vpack.c.b16 %v6895, %v6894
      %v6929 = vpack.c.b16 %v6897, %v6896
      %v6931 = vsel %vm1101, %v6898, 0
      %v6934 = vsel %vm1101, %v6899, 0
      %v6937 = vsel %vm1101, %v6900, 0
      %v6940 = vsel %vm1101, %v6901, 0
      %v6943 = vsel %vm1101, %v6902, 0
      %v6946 = vsel %vm1101, %v6903, 0
      %v6949 = vsel %vm1101, %v6904, 0
      %v6952 = vsel %vm1101, %v6905, 0
      %v6955 = vsel %vm1101, %v6906, 0
      %v6958 = vsel %vm1101, %v6907, 0
      %v6961 = vsel %vm1101, %v6908, 0
      %v6964 = vsel %vm1101, %v6909, 0
      %v6967 = vsel %vm1101, %v6910, 0
      %v6970 = vsel %vm1101, %v6911, 0
      %v6973 = vsel %vm1101, %v6912, 0
      %v6976 = vsel %vm1101, %v6913, 0
      %v6979 = vsel %vm1101, %v6914, 0
      %v6982 = vsel %vm1101, %v6915, 0
      %v6985 = vsel %vm1101, %v6916, 0
      %v6988 = vsel %vm1101, %v6917, 0
      %v6991 = vsel %vm1101, %v6918, 0
      %v6994 = vsel %vm1101, %v6919, 0
      %v6997 = vsel %vm1101, %v6920, 0
      %v7000 = vsel %vm1101, %v6921, 0
      %v7003 = vsel %vm1101, %v6922, 0
      %v7006 = vsel %vm1101, %v6923, 0
      %v7009 = vsel %vm1101, %v6924, 0
      %v7012 = vsel %vm1101, %v6925, 0
      %v7015 = vsel %vm1101, %v6926, 0
      %v7018 = vsel %vm1101, %v6927, 0
      %v7021 = vsel %vm1101, %v6928, 0
      %v7024 = vsel %vm1101, %v6929, 0
      %v7027 = vsel %vm1198, %v6833, 0
      %7029 = vmatprep.subr.bf16.mxu0 0
      %7030 = vmatpush1.bf16.msra.mxu0 0
      %7031 = vmatprep.subr.bf16.mxu0 0
      %7032 = vmatpush1.bf16.msra.mxu0 0
      %7033 = vmatprep.subr.bf16.mxu0 0
      %7034 = vmatpush1.bf16.msra.mxu0 0
      %7035 = vmatprep.subr.bf16.mxu0 0
      %7036 = vmatpush1.bf16.msra.mxu0 0
      %7037 = vmatprep.subr.bf16.mxu0 0
      %7038 = vmatpush1.bf16.msra.mxu0 0
      %7039 = vmatprep.subr.bf16.mxu0 0
      %7040 = vmatpush1.bf16.msra.mxu0 0
      %7041 = vmatprep.subr.bf16.mxu0 0
      %7042 = vmatpush1.bf16.msra.mxu0 0
      %7043 = vmatprep.subr.bf16.mxu0 0
      %7044 = vmatpush1.bf16.msra.mxu0 %v7027
      %7045 = vmatprep.subr.bf16.mxu0 0
      %7046 = vmatpush2.bf16.msra.mxu0 0
      %7047 = vmatprep.subr.bf16.mxu0 0
      %7048 = vmatpush2.bf16.msra.mxu0 0
      %7049 = vmatprep.subr.bf16.mxu0 0
      %7050 = vmatpush2.bf16.msra.mxu0 0
      %7051 = vmatprep.subr.bf16.mxu0 0
      %7052 = vmatpush2.bf16.msra.mxu0 0
      %7053 = vmatprep.subr.bf16.mxu0 0
      %7054 = vmatpush2.bf16.msra.mxu0 0
      %7055 = vmatprep.subr.bf16.mxu0 0
      %7056 = vmatpush2.bf16.msra.mxu0 0
      %7057 = vmatprep.subr.bf16.mxu0 0
      %7058 = vmatpush2.bf16.msra.mxu0 0
      %7059 = vmatprep.subr.bf16.mxu0 0
      %7060 = vmatpush2.bf16.msra.mxu0 0
      %7061 = vmatprep.mubr.bf16.mxu0 0
      %7062 = vmatmul.mubr.bf16.gmra.mxu0 %v6931
      %v7063 = vpop.f32.mrf.mxu0
      %v7064 = vadd.f32 0.0, %v7063
      %v7065 = vpop.f32.mrf.mxu0
      %v7066 = vpop.f32.mrf.mxu0
      %v7067 = vadd.f32 0.0, %v7066
      %v7068 = vpop.f32.mrf.mxu0
      %7069 = vmatprep.mubr.bf16.mxu0 0
      %7070 = vmatmul.mubr.bf16.gmra.mxu0 %v6934
      %v7071 = vpop.f32.mrf.mxu0
      %v7072 = vadd.f32 0.0, %v7071
      %v7073 = vpop.f32.mrf.mxu0
      %v7074 = vpop.f32.mrf.mxu0
      %v7075 = vadd.f32 0.0, %v7074
      %v7076 = vpop.f32.mrf.mxu0
      %7077 = vmatprep.mubr.bf16.mxu0 0
      %7078 = vmatmul.mubr.bf16.gmra.mxu0 %v6937
      %v7079 = vpop.f32.mrf.mxu0
      %v7080 = vadd.f32 0.0, %v7079
      %v7081 = vpop.f32.mrf.mxu0
      %v7082 = vpop.f32.mrf.mxu0
      %v7083 = vadd.f32 0.0, %v7082
      %v7084 = vpop.f32.mrf.mxu0
      %7085 = vmatprep.mubr.bf16.mxu0 0
      %7086 = vmatmul.mubr.bf16.gmra.mxu0 %v6940
      %v7087 = vpop.f32.mrf.mxu0
      %v7088 = vadd.f32 0.0, %v7087
      %v7089 = vpop.f32.mrf.mxu0
      %v7090 = vpop.f32.mrf.mxu0
      %v7091 = vadd.f32 0.0, %v7090
      %v7092 = vpop.f32.mrf.mxu0
      %7093 = vmatprep.mubr.bf16.mxu0 0
      %7094 = vmatmul.mubr.bf16.gmra.mxu0 %v6943
      %v7095 = vpop.f32.mrf.mxu0
      %v7096 = vadd.f32 0.0, %v7095
      %v7097 = vpop.f32.mrf.mxu0
      %v7098 = vpop.f32.mrf.mxu0
      %v7099 = vadd.f32 0.0, %v7098
      %v7100 = vpop.f32.mrf.mxu0
      %7101 = vmatprep.mubr.bf16.mxu0 0
      %7102 = vmatmul.mubr.bf16.gmra.mxu0 %v6946
      %v7103 = vpop.f32.mrf.mxu0
      %v7104 = vadd.f32 0.0, %v7103
      %v7105 = vpop.f32.mrf.mxu0
      %v7106 = vpop.f32.mrf.mxu0
      %v7107 = vadd.f32 0.0, %v7106
      %v7108 = vpop.f32.mrf.mxu0
      %7109 = vmatprep.mubr.bf16.mxu0 0
      %7110 = vmatmul.mubr.bf16.gmra.mxu0 %v6949
      %v7111 = vpop.f32.mrf.mxu0
      %v7112 = vadd.f32 0.0, %v7111
      %v7113 = vpop.f32.mrf.mxu0
      %v7114 = vpop.f32.mrf.mxu0
      %v7115 = vadd.f32 0.0, %v7114
      %v7116 = vpop.f32.mrf.mxu0
      %7117 = vmatprep.mubr.bf16.mxu0 0
      %7118 = vmatmul.mubr.bf16.gmra.mxu0 %v6952
      %v7119 = vpop.f32.mrf.mxu0
      %v7120 = vadd.f32 0.0, %v7119
      %v7121 = vpop.f32.mrf.mxu0
      %v7122 = vpop.f32.mrf.mxu0
      %v7123 = vadd.f32 0.0, %v7122
      %v7124 = vpop.f32.mrf.mxu0
      %7125 = vmatprep.mubr.bf16.mxu0 0
      %7126 = vmatmul.mubr.bf16.gmra.mxu0 %v6955
      %v7127 = vpop.f32.mrf.mxu0
      %v7128 = vadd.f32 0.0, %v7127
      %v7129 = vpop.f32.mrf.mxu0
      %v7130 = vpop.f32.mrf.mxu0
      %v7131 = vadd.f32 0.0, %v7130
      %v7132 = vpop.f32.mrf.mxu0
      %7133 = vmatprep.mubr.bf16.mxu0 0
      %7134 = vmatmul.mubr.bf16.gmra.mxu0 %v6958
      %v7135 = vpop.f32.mrf.mxu0
      %v7136 = vadd.f32 0.0, %v7135
      %v7137 = vpop.f32.mrf.mxu0
      %v7138 = vpop.f32.mrf.mxu0
      %v7139 = vadd.f32 0.0, %v7138
      %v7140 = vpop.f32.mrf.mxu0
      %7141 = vmatprep.mubr.bf16.mxu0 0
      %7142 = vmatmul.mubr.bf16.gmra.mxu0 %v6961
      %v7143 = vpop.f32.mrf.mxu0
      %v7144 = vadd.f32 0.0, %v7143
      %v7145 = vpop.f32.mrf.mxu0
      %v7146 = vpop.f32.mrf.mxu0
      %v7147 = vadd.f32 0.0, %v7146
      %v7148 = vpop.f32.mrf.mxu0
      %7149 = vmatprep.mubr.bf16.mxu0 0
      %7150 = vmatmul.mubr.bf16.gmra.mxu0 %v6964
      %v7151 = vpop.f32.mrf.mxu0
      %v7152 = vadd.f32 0.0, %v7151
      %v7153 = vpop.f32.mrf.mxu0
      %v7154 = vpop.f32.mrf.mxu0
      %v7155 = vadd.f32 0.0, %v7154
      %v7156 = vpop.f32.mrf.mxu0
      %7157 = vmatprep.mubr.bf16.mxu0 0
      %7158 = vmatmul.mubr.bf16.gmra.mxu0 %v6967
      %v7159 = vpop.f32.mrf.mxu0
      %v7160 = vadd.f32 0.0, %v7159
      %v7161 = vpop.f32.mrf.mxu0
      %v7162 = vpop.f32.mrf.mxu0
      %v7163 = vadd.f32 0.0, %v7162
      %v7164 = vpop.f32.mrf.mxu0
      %7165 = vmatprep.mubr.bf16.mxu0 0
      %7166 = vmatmul.mubr.bf16.gmra.mxu0 %v6970
      %v7167 = vpop.f32.mrf.mxu0
      %v7168 = vadd.f32 0.0, %v7167
      %v7169 = vpop.f32.mrf.mxu0
      %v7170 = vpop.f32.mrf.mxu0
      %v7171 = vadd.f32 0.0, %v7170
      %v7172 = vpop.f32.mrf.mxu0
      %7173 = vmatprep.mubr.bf16.mxu0 0
      %7174 = vmatmul.mubr.bf16.gmra.mxu0 %v6973
      %v7175 = vpop.f32.mrf.mxu0
      %v7176 = vadd.f32 0.0, %v7175
      %v7177 = vpop.f32.mrf.mxu0
      %v7178 = vpop.f32.mrf.mxu0
      %v7179 = vadd.f32 0.0, %v7178
      %v7180 = vpop.f32.mrf.mxu0
      %7181 = vmatprep.mubr.bf16.mxu0 0
      %7182 = vmatmul.mubr.bf16.gmra.mxu0 %v6976
      %v7183 = vpop.f32.mrf.mxu0
      %v7184 = vadd.f32 0.0, %v7183
      %v7185 = vpop.f32.mrf.mxu0
      %v7186 = vpop.f32.mrf.mxu0
      %v7187 = vadd.f32 0.0, %v7186
      %v7188 = vpop.f32.mrf.mxu0
      %7189 = vmatprep.mubr.bf16.mxu0 0
      %7190 = vmatmul.mubr.bf16.gmra.mxu0 %v6979
      %v7191 = vpop.f32.mrf.mxu0
      %v7192 = vadd.f32 0.0, %v7191
      %v7193 = vpop.f32.mrf.mxu0
      %v7194 = vpop.f32.mrf.mxu0
      %v7195 = vadd.f32 0.0, %v7194
      %v7196 = vpop.f32.mrf.mxu0
      %7197 = vmatprep.mubr.bf16.mxu0 0
      %7198 = vmatmul.mubr.bf16.gmra.mxu0 %v6982
      %v7199 = vpop.f32.mrf.mxu0
      %v7200 = vadd.f32 0.0, %v7199
      %v7201 = vpop.f32.mrf.mxu0
      %v7202 = vpop.f32.mrf.mxu0
      %v7203 = vadd.f32 0.0, %v7202
      %v7204 = vpop.f32.mrf.mxu0
      %7205 = vmatprep.mubr.bf16.mxu0 0
      %7206 = vmatmul.mubr.bf16.gmra.mxu0 %v6985
      %v7207 = vpop.f32.mrf.mxu0
      %v7208 = vadd.f32 0.0, %v7207
      %v7209 = vpop.f32.mrf.mxu0
      %v7210 = vpop.f32.mrf.mxu0
      %v7211 = vadd.f32 0.0, %v7210
      %v7212 = vpop.f32.mrf.mxu0
      %7213 = vmatprep.mubr.bf16.mxu0 0
      %7214 = vmatmul.mubr.bf16.gmra.mxu0 %v6988
      %v7215 = vpop.f32.mrf.mxu0
      %v7216 = vadd.f32 0.0, %v7215
      %v7217 = vpop.f32.mrf.mxu0
      %v7218 = vpop.f32.mrf.mxu0
      %v7219 = vadd.f32 0.0, %v7218
      %v7220 = vpop.f32.mrf.mxu0
      %7221 = vmatprep.mubr.bf16.mxu0 0
      %7222 = vmatmul.mubr.bf16.gmra.mxu0 %v6991
      %v7223 = vpop.f32.mrf.mxu0
      %v7224 = vadd.f32 0.0, %v7223
      %v7225 = vpop.f32.mrf.mxu0
      %v7226 = vpop.f32.mrf.mxu0
      %v7227 = vadd.f32 0.0, %v7226
      %v7228 = vpop.f32.mrf.mxu0
      %7229 = vmatprep.mubr.bf16.mxu0 0
      %7230 = vmatmul.mubr.bf16.gmra.mxu0 %v6994
      %v7231 = vpop.f32.mrf.mxu0
      %v7232 = vadd.f32 0.0, %v7231
      %v7233 = vpop.f32.mrf.mxu0
      %v7234 = vpop.f32.mrf.mxu0
      %v7235 = vadd.f32 0.0, %v7234
      %v7236 = vpop.f32.mrf.mxu0
      %7237 = vmatprep.mubr.bf16.mxu0 0
      %7238 = vmatmul.mubr.bf16.gmra.mxu0 %v6997
      %v7239 = vpop.f32.mrf.mxu0
      %v7240 = vadd.f32 0.0, %v7239
      %v7241 = vpop.f32.mrf.mxu0
      %v7242 = vpop.f32.mrf.mxu0
      %v7243 = vadd.f32 0.0, %v7242
      %v7244 = vpop.f32.mrf.mxu0
      %7245 = vmatprep.mubr.bf16.mxu0 0
      %7246 = vmatmul.mubr.bf16.gmra.mxu0 %v7000
      %v7247 = vpop.f32.mrf.mxu0
      %v7248 = vadd.f32 0.0, %v7247
      %v7249 = vpop.f32.mrf.mxu0
      %v7250 = vpop.f32.mrf.mxu0
      %v7251 = vadd.f32 0.0, %v7250
      %v7252 = vpop.f32.mrf.mxu0
      %7253 = vmatprep.mubr.bf16.mxu0 0
      %7254 = vmatmul.mubr.bf16.gmra.mxu0 %v7003
      %v7255 = vpop.f32.mrf.mxu0
      %v7256 = vadd.f32 0.0, %v7255
      %v7257 = vpop.f32.mrf.mxu0
      %v7258 = vpop.f32.mrf.mxu0
      %v7259 = vadd.f32 0.0, %v7258
      %v7260 = vpop.f32.mrf.mxu0
      %7261 = vmatprep.mubr.bf16.mxu0 0
      %7262 = vmatmul.mubr.bf16.gmra.mxu0 %v7006
      %v7263 = vpop.f32.mrf.mxu0
      %v7264 = vadd.f32 0.0, %v7263
      %v7265 = vpop.f32.mrf.mxu0
      %v7266 = vpop.f32.mrf.mxu0
      %v7267 = vadd.f32 0.0, %v7266
      %v7268 = vpop.f32.mrf.mxu0
      %7269 = vmatprep.mubr.bf16.mxu0 0
      %7270 = vmatmul.mubr.bf16.gmra.mxu0 %v7009
      %v7271 = vpop.f32.mrf.mxu0
      %v7272 = vadd.f32 0.0, %v7271
      %v7273 = vpop.f32.mrf.mxu0
      %v7274 = vpop.f32.mrf.mxu0
      %v7275 = vadd.f32 0.0, %v7274
      %v7276 = vpop.f32.mrf.mxu0
      %7277 = vmatprep.mubr.bf16.mxu0 0
      %7278 = vmatmul.mubr.bf16.gmra.mxu0 %v7012
      %v7279 = vpop.f32.mrf.mxu0
      %v7280 = vadd.f32 0.0, %v7279
      %v7281 = vpop.f32.mrf.mxu0
      %v7282 = vpop.f32.mrf.mxu0
      %v7283 = vadd.f32 0.0, %v7282
      %v7284 = vpop.f32.mrf.mxu0
      %7285 = vmatprep.mubr.bf16.mxu0 0
      %7286 = vmatmul.mubr.bf16.gmra.mxu0 %v7015
      %v7287 = vpop.f32.mrf.mxu0
      %v7288 = vadd.f32 0.0, %v7287
      %v7289 = vpop.f32.mrf.mxu0
      %v7290 = vpop.f32.mrf.mxu0
      %v7291 = vadd.f32 0.0, %v7290
      %v7292 = vpop.f32.mrf.mxu0
      %7293 = vmatprep.mubr.bf16.mxu0 0
      %7294 = vmatmul.mubr.bf16.gmra.mxu0 %v7018
      %v7295 = vpop.f32.mrf.mxu0
      %v7296 = vadd.f32 0.0, %v7295
      %v7297 = vpop.f32.mrf.mxu0
      %v7298 = vpop.f32.mrf.mxu0
      %v7299 = vadd.f32 0.0, %v7298
      %v7300 = vpop.f32.mrf.mxu0
      %7301 = vmatprep.mubr.bf16.mxu0 0
      %7302 = vmatmul.mubr.bf16.gmra.mxu0 %v7021
      %v7303 = vpop.f32.mrf.mxu0
      %v7304 = vadd.f32 0.0, %v7303
      %v7305 = vpop.f32.mrf.mxu0
      %v7306 = vpop.f32.mrf.mxu0
      %v7307 = vadd.f32 0.0, %v7306
      %v7308 = vpop.f32.mrf.mxu0
      %7309 = vmatprep.mubr.bf16.mxu0 0
      %7310 = vmatmul.mubr.bf16.gmra.mxu0 %v7024
      %v7311 = vpop.f32.mrf.mxu0
      %v7312 = vadd.f32 0.0, %v7311
      %v7313 = vpop.f32.mrf.mxu0
      %v7314 = vpop.f32.mrf.mxu0
      %v7315 = vadd.f32 0.0, %v7314
      %v7316 = vpop.f32.mrf.mxu0
      %7317 = vdwg.mxu0
      %v7318 = vadd.f32 %v6096, %v7064
      %v7319 = vadd.f32 %v6097, %v7067
      %v7320 = vadd.f32 %v6098, %v7072
      %v7321 = vadd.f32 %v6099, %v7075
      %v7322 = vadd.f32 %v6100, %v7080
      %v7323 = vadd.f32 %v6101, %v7083
      %v7324 = vadd.f32 %v6102, %v7088
      %v7325 = vadd.f32 %v6103, %v7091
      %v7326 = vadd.f32 %v6104, %v7096
      %v7327 = vadd.f32 %v6105, %v7099
      %v7328 = vadd.f32 %v6106, %v7104
      %v7329 = vadd.f32 %v6107, %v7107
      %v7330 = vadd.f32 %v6108, %v7112
      %v7331 = vadd.f32 %v6109, %v7115
      %v7332 = vadd.f32 %v6110, %v7120
      %v7333 = vadd.f32 %v6111, %v7123
      %v7334 = vadd.f32 %v6112, %v7128
      %v7335 = vadd.f32 %v6113, %v7131
      %v7336 = vadd.f32 %v6114, %v7136
      %v7337 = vadd.f32 %v6115, %v7139
      %v7338 = vadd.f32 %v6116, %v7144
      %v7339 = vadd.f32 %v6117, %v7147
      %v7340 = vadd.f32 %v6118, %v7152
      %v7341 = vadd.f32 %v6119, %v7155
      %v7342 = vadd.f32 %v6120, %v7160
      %v7343 = vadd.f32 %v6121, %v7163
      %v7344 = vadd.f32 %v6122, %v7168
      %v7345 = vadd.f32 %v6123, %v7171
      %v7346 = vadd.f32 %v6124, %v7176
      %v7347 = vadd.f32 %v6125, %v7179
      %v7348 = vadd.f32 %v6126, %v7184
      %v7349 = vadd.f32 %v6127, %v7187
      %v7350 = vadd.f32 %v6128, %v7192
      %v7351 = vadd.f32 %v6129, %v7195
      %v7352 = vadd.f32 %v6130, %v7200
      %v7353 = vadd.f32 %v6131, %v7203
      %v7354 = vadd.f32 %v6132, %v7208
      %v7355 = vadd.f32 %v6133, %v7211
      %v7356 = vadd.f32 %v6134, %v7216
      %v7357 = vadd.f32 %v6135, %v7219
      %v7358 = vadd.f32 %v6136, %v7224
      %v7359 = vadd.f32 %v6137, %v7227
      %v7360 = vadd.f32 %v6138, %v7232
      %v7361 = vadd.f32 %v6139, %v7235
      %v7362 = vadd.f32 %v6140, %v7240
      %v7363 = vadd.f32 %v6141, %v7243
      %v7364 = vadd.f32 %v6142, %v7248
      %v7365 = vadd.f32 %v6143, %v7251
      %v7366 = vadd.f32 %v6144, %v7256
      %v7367 = vadd.f32 %v6145, %v7259
      %v7368 = vadd.f32 %v6146, %v7264
      %v7369 = vadd.f32 %v6147, %v7267
      %v7370 = vadd.f32 %v6148, %v7272
      %v7371 = vadd.f32 %v6149, %v7275
      %v7372 = vadd.f32 %v6150, %v7280
      %v7373 = vadd.f32 %v6151, %v7283
      %v7374 = vadd.f32 %v6152, %v7288
      %v7375 = vadd.f32 %v6153, %v7291
      %v7376 = vadd.f32 %v6154, %v7296
      %v7377 = vadd.f32 %v6155, %v7299
      %v7378 = vadd.f32 %v6156, %v7304
      %v7379 = vadd.f32 %v6157, %v7307
      %v7380 = vadd.f32 %v6158, %v7312
      %v7381 = vadd.f32 %v6159, %v7315
      %v7390 = vrot.slane %v5474, 5
      %v7391 = vrot.slane %v7390, 4
      %v7392 = vrot.slane %v5475, 5
      %v7393 = vsel %vm2049, %v7391, %v7392
      %v7394 = vrot.slane %v7392, 4
      %v7395 = vrot.slane %v5476, 5
      %v7396 = vsel %vm2049, %v7394, %v7395
      %v7397 = vrot.slane %v7395, 4
      %v7398 = vrot.slane %v5477, 5
      %v7399 = vsel %vm2049, %v7397, %v7398
      %v7400 = vrot.slane %v7398, 4
      %v7401 = vrot.slane %v5478, 5
      %v7402 = vsel %vm2049, %v7400, %v7401
      %v7403 = vrot.slane %v7401, 4
      %v7404 = vrot.slane %v5479, 5
      %v7405 = vsel %vm2049, %v7403, %v7404
      %v7406 = vrot.slane %v7404, 4
      %v7407 = vrot.slane %v5480, 5
      %v7408 = vsel %vm2049, %v7406, %v7407
      %v7409 = vrot.slane %v7407, 4
      %v7410 = vrot.slane %v5481, 5
      %v7411 = vsel %vm2049, %v7409, %v7410
      %v7412 = vrot.slane %v7410, 4
      %v7413 = vrot.slane %v5482, 5
      %v7414 = vsel %vm2049, %v7412, %v7413
      %v7415 = vrot.slane %v5483, 5
      %v7416 = vrot.slane %v7415, 4
      %v7417 = vrot.slane %v5484, 5
      %v7418 = vsel %vm2049, %v7416, %v7417
      %v7419 = vrot.slane %v7417, 4
      %v7420 = vrot.slane %v5485, 5
      %v7421 = vsel %vm2049, %v7419, %v7420
      %v7422 = vrot.slane %v7420, 4
      %v7423 = vrot.slane %v5486, 5
      %v7424 = vsel %vm2049, %v7422, %v7423
      %v7425 = vrot.slane %v7423, 4
      %v7426 = vrot.slane %v5487, 5
      %v7427 = vsel %vm2049, %v7425, %v7426
      %v7428 = vrot.slane %v7426, 4
      %v7429 = vrot.slane %v5488, 5
      %v7430 = vsel %vm2049, %v7428, %v7429
      %v7431 = vrot.slane %v7429, 4
      %v7432 = vrot.slane %v5489, 5
      %v7433 = vsel %vm2049, %v7431, %v7432
      %v7434 = vrot.slane %v7432, 4
      %v7435 = vrot.slane %v5490, 5
      %v7436 = vsel %vm2049, %v7434, %v7435
      %v7437 = vrot.slane %v7435, 4
      %v7438 = vrot.slane %v5491, 5
      %v7439 = vsel %vm2049, %v7437, %v7438
      %v7440 = vrot.slane %v5492, 5
      %v7441 = vrot.slane %v7440, 4
      %v7442 = vrot.slane %v5493, 5
      %v7443 = vsel %vm2049, %v7441, %v7442
      %v7444 = vrot.slane %v7442, 4
      %v7445 = vrot.slane %v5494, 5
      %v7446 = vsel %vm2049, %v7444, %v7445
      %v7447 = vrot.slane %v7445, 4
      %v7448 = vrot.slane %v5495, 5
      %v7449 = vsel %vm2049, %v7447, %v7448
      %v7450 = vrot.slane %v7448, 4
      %v7451 = vrot.slane %v5496, 5
      %v7452 = vsel %vm2049, %v7450, %v7451
      %v7453 = vrot.slane %v7451, 4
      %v7454 = vrot.slane %v5497, 5
      %v7455 = vsel %vm2049, %v7453, %v7454
      %v7456 = vrot.slane %v7454, 4
      %v7457 = vrot.slane %v5498, 5
      %v7458 = vsel %vm2049, %v7456, %v7457
      %v7459 = vrot.slane %v7457, 4
      %v7460 = vrot.slane %v5499, 5
      %v7461 = vsel %vm2049, %v7459, %v7460
      %v7462 = vrot.slane %v7460, 4
      %v7463 = vrot.slane %v5500, 5
      %v7464 = vsel %vm2049, %v7462, %v7463
      %v7465 = vrot.slane %v5501, 5
      %v7466 = vrot.slane %v7465, 4
      %v7467 = vrot.slane %v5502, 5
      %v7468 = vsel %vm2049, %v7466, %v7467
      %v7469 = vrot.slane %v7467, 4
      %v7470 = vrot.slane %v5503, 5
      %v7471 = vsel %vm2049, %v7469, %v7470
      %v7472 = vrot.slane %v7470, 4
      %v7473 = vrot.slane %v5504, 5
      %v7474 = vsel %vm2049, %v7472, %v7473
      %v7475 = vrot.slane %v7473, 4
      %v7476 = vrot.slane %v5505, 5
      %v7477 = vsel %vm2049, %v7475, %v7476
      %v7478 = vrot.slane %v7476, 4
      %v7479 = vrot.slane %v5506, 5
      %v7480 = vsel %vm2049, %v7478, %v7479
      %v7481 = vrot.slane %v7479, 4
      %v7482 = vrot.slane %v5507, 5
      %v7483 = vsel %vm2049, %v7481, %v7482
      %v7484 = vrot.slane %v7482, 4
      %v7485 = vrot.slane %v5508, 5
      %v7486 = vsel %vm2049, %v7484, %v7485
      %v7487 = vrot.slane %v7485, 4
      %v7488 = vrot.slane %v5509, 5
      %v7489 = vsel %vm2049, %v7487, %v7488
      %v7490 = vrot.slane %v5510, 5
      %v7491 = vrot.slane %v7490, 4
      %v7492 = vrot.slane %v5511, 5
      %v7493 = vsel %vm2049, %v7491, %v7492
      %v7494 = vrot.slane %v7492, 4
      %v7495 = vrot.slane %v5512, 5
      %v7496 = vsel %vm2049, %v7494, %v7495
      %v7497 = vrot.slane %v7495, 4
      %v7498 = vrot.slane %v5513, 5
      %v7499 = vsel %vm2049, %v7497, %v7498
      %v7500 = vrot.slane %v7498, 4
      %v7501 = vrot.slane %v5514, 5
      %v7502 = vsel %vm2049, %v7500, %v7501
      %v7503 = vrot.slane %v7501, 4
      %v7504 = vrot.slane %v5515, 5
      %v7505 = vsel %vm2049, %v7503, %v7504
      %v7506 = vrot.slane %v7504, 4
      %v7507 = vrot.slane %v5516, 5
      %v7508 = vsel %vm2049, %v7506, %v7507
      %v7509 = vrot.slane %v7507, 4
      %v7510 = vrot.slane %v5517, 5
      %v7511 = vsel %vm2049, %v7509, %v7510
      %v7512 = vrot.slane %v7510, 4
      %v7513 = vrot.slane %v5518, 5
      %v7514 = vsel %vm2049, %v7512, %v7513
      %v7515 = vrot.slane %v5519, 5
      %v7516 = vrot.slane %v7515, 4
      %v7517 = vrot.slane %v5520, 5
      %v7518 = vsel %vm2049, %v7516, %v7517
      %v7519 = vrot.slane %v7517, 4
      %v7520 = vrot.slane %v5521, 5
      %v7521 = vsel %vm2049, %v7519, %v7520
      %v7522 = vrot.slane %v7520, 4
      %v7523 = vrot.slane %v5522, 5
      %v7524 = vsel %vm2049, %v7522, %v7523
      %v7525 = vrot.slane %v7523, 4
      %v7526 = vrot.slane %v5523, 5
      %v7527 = vsel %vm2049, %v7525, %v7526
      %v7528 = vrot.slane %v7526, 4
      %v7529 = vrot.slane %v5524, 5
      %v7530 = vsel %vm2049, %v7528, %v7529
      %v7531 = vrot.slane %v7529, 4
      %v7532 = vrot.slane %v5525, 5
      %v7533 = vsel %vm2049, %v7531, %v7532
      %v7534 = vrot.slane %v7532, 4
      %v7535 = vrot.slane %v5526, 5
      %v7536 = vsel %vm2049, %v7534, %v7535
      %v7537 = vrot.slane %v7535, 4
      %v7538 = vrot.slane %v5527, 5
      %v7539 = vsel %vm2049, %v7537, %v7538
      %v7540 = vrot.slane %v5528, 5
      %v7541 = vrot.slane %v7540, 4
      %v7542 = vrot.slane %v5529, 5
      %v7543 = vsel %vm2049, %v7541, %v7542
      %v7544 = vrot.slane %v7542, 4
      %v7545 = vrot.slane %v5530, 5
      %v7546 = vsel %vm2049, %v7544, %v7545
      %v7547 = vrot.slane %v7545, 4
      %v7548 = vrot.slane %v5531, 5
      %v7549 = vsel %vm2049, %v7547, %v7548
      %v7550 = vrot.slane %v7548, 4
      %v7551 = vrot.slane %v5532, 5
      %v7552 = vsel %vm2049, %v7550, %v7551
      %v7553 = vrot.slane %v7551, 4
      %v7554 = vrot.slane %v5533, 5
      %v7555 = vsel %vm2049, %v7553, %v7554
      %v7556 = vrot.slane %v7554, 4
      %v7557 = vrot.slane %v5534, 5
      %v7558 = vsel %vm2049, %v7556, %v7557
      %v7559 = vrot.slane %v7557, 4
      %v7560 = vrot.slane %v5535, 5
      %v7561 = vsel %vm2049, %v7559, %v7560
      %v7562 = vrot.slane %v7560, 4
      %v7563 = vrot.slane %v5536, 5
      %v7564 = vsel %vm2049, %v7562, %v7563
      %v7565 = vrot.slane %v5537, 5
      %v7566 = vrot.slane %v7565, 4
      %v7567 = vrot.slane %v5538, 5
      %v7568 = vsel %vm2049, %v7566, %v7567
      %v7569 = vrot.slane %v7567, 4
      %v7570 = vrot.slane %v5539, 5
      %v7571 = vsel %vm2049, %v7569, %v7570
      %v7572 = vrot.slane %v7570, 4
      %v7573 = vrot.slane %v5540, 5
      %v7574 = vsel %vm2049, %v7572, %v7573
      %v7575 = vrot.slane %v7573, 4
      %v7576 = vrot.slane %v5541, 5
      %v7577 = vsel %vm2049, %v7575, %v7576
      %v7578 = vrot.slane %v7576, 4
      %v7579 = vrot.slane %v5542, 5
      %v7580 = vsel %vm2049, %v7578, %v7579
      %v7581 = vrot.slane %v7579, 4
      %v7582 = vrot.slane %v5543, 5
      %v7583 = vsel %vm2049, %v7581, %v7582
      %v7584 = vrot.slane %v7582, 4
      %v7585 = vrot.slane %v5544, 5
      %v7586 = vsel %vm2049, %v7584, %v7585
      %v7587 = vrot.slane %v7585, 4
      %v7588 = vrot.slane %v5545, 5
      %v7589 = vsel %vm2049, %v7587, %v7588
      %s7590 = scalar_lea.vmem %s1, 16
      %v7591 = vld [vmem:[%s7590] sm:$0x3]
      %v7592 = vunpack.c.l.b16 %v7393
      %v7593 = vunpack.c.l.b16 %v7396
      %v7594 = vunpack.c.l.b16 %v7399
      %v7595 = vunpack.c.l.b16 %v7402
      %v7596 = vunpack.c.l.b16 %v7405
      %v7597 = vunpack.c.l.b16 %v7408
      %v7598 = vunpack.c.l.b16 %v7411
      %v7599 = vunpack.c.l.b16 %v7414
      %v7600 = vunpack.c.l.b16 %v7418
      %v7601 = vunpack.c.l.b16 %v7421
      %v7602 = vunpack.c.l.b16 %v7424
      %v7603 = vunpack.c.l.b16 %v7427
      %v7604 = vunpack.c.l.b16 %v7430
      %v7605 = vunpack.c.l.b16 %v7433
      %v7606 = vunpack.c.l.b16 %v7436
      %v7607 = vunpack.c.l.b16 %v7439
      %v7608 = vunpack.c.l.b16 %v7443
      %v7609 = vunpack.c.l.b16 %v7446
      %v7610 = vunpack.c.l.b16 %v7449
      %v7611 = vunpack.c.l.b16 %v7452
      %v7612 = vunpack.c.l.b16 %v7455
      %v7613 = vunpack.c.l.b16 %v7458
      %v7614 = vunpack.c.l.b16 %v7461
      %v7615 = vunpack.c.l.b16 %v7464
      %v7616 = vunpack.c.l.b16 %v7468
      %v7617 = vunpack.c.l.b16 %v7471
      %v7618 = vunpack.c.l.b16 %v7474
      %v7619 = vunpack.c.l.b16 %v7477
      %v7620 = vunpack.c.l.b16 %v7480
      %v7621 = vunpack.c.l.b16 %v7483
      %v7622 = vunpack.c.l.b16 %v7486
      %v7623 = vunpack.c.l.b16 %v7489
      %v7624 = vunpack.c.l.b16 %v7493
      %v7625 = vunpack.c.l.b16 %v7496
      %v7626 = vunpack.c.l.b16 %v7499
      %v7627 = vunpack.c.l.b16 %v7502
      %v7628 = vunpack.c.l.b16 %v7505
      %v7629 = vunpack.c.l.b16 %v7508
      %v7630 = vunpack.c.l.b16 %v7511
      %v7631 = vunpack.c.l.b16 %v7514
      %v7632 = vunpack.c.l.b16 %v7518
      %v7633 = vunpack.c.l.b16 %v7521
      %v7634 = vunpack.c.l.b16 %v7524
      %v7635 = vunpack.c.l.b16 %v7527
      %v7636 = vunpack.c.l.b16 %v7530
      %v7637 = vunpack.c.l.b16 %v7533
      %v7638 = vunpack.c.l.b16 %v7536
      %v7639 = vunpack.c.l.b16 %v7539
      %v7640 = vunpack.c.l.b16 %v7543
      %v7641 = vunpack.c.l.b16 %v7546
      %v7642 = vunpack.c.l.b16 %v7549
      %v7643 = vunpack.c.l.b16 %v7552
      %v7644 = vunpack.c.l.b16 %v7555
      %v7645 = vunpack.c.l.b16 %v7558
      %v7646 = vunpack.c.l.b16 %v7561
      %v7647 = vunpack.c.l.b16 %v7564
      %v7648 = vunpack.c.l.b16 %v7568
      %v7649 = vunpack.c.l.b16 %v7571
      %v7650 = vunpack.c.l.b16 %v7574
      %v7651 = vunpack.c.l.b16 %v7577
      %v7652 = vunpack.c.l.b16 %v7580
      %v7653 = vunpack.c.l.b16 %v7583
      %v7654 = vunpack.c.l.b16 %v7586
      %v7655 = vunpack.c.l.b16 %v7589
      %v7656 = vpack.c.b16 %v7593, %v7592
      %v7657 = vpack.c.b16 %v7595, %v7594
      %v7658 = vpack.c.b16 %v7597, %v7596
      %v7659 = vpack.c.b16 %v7599, %v7598
      %v7660 = vpack.c.b16 %v7601, %v7600
      %v7661 = vpack.c.b16 %v7603, %v7602
      %v7662 = vpack.c.b16 %v7605, %v7604
      %v7663 = vpack.c.b16 %v7607, %v7606
      %v7664 = vpack.c.b16 %v7609, %v7608
      %v7665 = vpack.c.b16 %v7611, %v7610
      %v7666 = vpack.c.b16 %v7613, %v7612
      %v7667 = vpack.c.b16 %v7615, %v7614
      %v7668 = vpack.c.b16 %v7617, %v7616
      %v7669 = vpack.c.b16 %v7619, %v7618
      %v7670 = vpack.c.b16 %v7621, %v7620
      %v7671 = vpack.c.b16 %v7623, %v7622
      %v7672 = vpack.c.b16 %v7625, %v7624
      %v7673 = vpack.c.b16 %v7627, %v7626
      %v7674 = vpack.c.b16 %v7629, %v7628
      %v7675 = vpack.c.b16 %v7631, %v7630
      %v7676 = vpack.c.b16 %v7633, %v7632
      %v7677 = vpack.c.b16 %v7635, %v7634
      %v7678 = vpack.c.b16 %v7637, %v7636
      %v7679 = vpack.c.b16 %v7639, %v7638
      %v7680 = vpack.c.b16 %v7641, %v7640
      %v7681 = vpack.c.b16 %v7643, %v7642
      %v7682 = vpack.c.b16 %v7645, %v7644
      %v7683 = vpack.c.b16 %v7647, %v7646
      %v7684 = vpack.c.b16 %v7649, %v7648
      %v7685 = vpack.c.b16 %v7651, %v7650
      %v7686 = vpack.c.b16 %v7653, %v7652
      %v7687 = vpack.c.b16 %v7655, %v7654
      %v7689 = vsel %vm1101, %v7656, 0
      %v7692 = vsel %vm1101, %v7657, 0
      %v7695 = vsel %vm1101, %v7658, 0
      %v7698 = vsel %vm1101, %v7659, 0
      %v7701 = vsel %vm1101, %v7660, 0
      %v7704 = vsel %vm1101, %v7661, 0
      %v7707 = vsel %vm1101, %v7662, 0
      %v7710 = vsel %vm1101, %v7663, 0
      %v7713 = vsel %vm1101, %v7664, 0
      %v7716 = vsel %vm1101, %v7665, 0
      %v7719 = vsel %vm1101, %v7666, 0
      %v7722 = vsel %vm1101, %v7667, 0
      %v7725 = vsel %vm1101, %v7668, 0
      %v7728 = vsel %vm1101, %v7669, 0
      %v7731 = vsel %vm1101, %v7670, 0
      %v7734 = vsel %vm1101, %v7671, 0
      %v7737 = vsel %vm1101, %v7672, 0
      %v7740 = vsel %vm1101, %v7673, 0
      %v7743 = vsel %vm1101, %v7674, 0
      %v7746 = vsel %vm1101, %v7675, 0
      %v7749 = vsel %vm1101, %v7676, 0
      %v7752 = vsel %vm1101, %v7677, 0
      %v7755 = vsel %vm1101, %v7678, 0
      %v7758 = vsel %vm1101, %v7679, 0
      %v7761 = vsel %vm1101, %v7680, 0
      %v7764 = vsel %vm1101, %v7681, 0
      %v7767 = vsel %vm1101, %v7682, 0
      %v7770 = vsel %vm1101, %v7683, 0
      %v7773 = vsel %vm1101, %v7684, 0
      %v7776 = vsel %vm1101, %v7685, 0
      %v7779 = vsel %vm1101, %v7686, 0
      %v7782 = vsel %vm1101, %v7687, 0
      %v7785 = vsel %vm1198, %v7591, 0
      %7787 = vmatprep.subr.bf16.mxu0 0
      %7788 = vmatpush1.bf16.msra.mxu0 0
      %7789 = vmatprep.subr.bf16.mxu0 0
      %7790 = vmatpush1.bf16.msra.mxu0 0
      %7791 = vmatprep.subr.bf16.mxu0 0
      %7792 = vmatpush1.bf16.msra.mxu0 0
      %7793 = vmatprep.subr.bf16.mxu0 0
      %7794 = vmatpush1.bf16.msra.mxu0 0
      %7795 = vmatprep.subr.bf16.mxu0 0
      %7796 = vmatpush1.bf16.msra.mxu0 0
      %7797 = vmatprep.subr.bf16.mxu0 0
      %7798 = vmatpush1.bf16.msra.mxu0 0
      %7799 = vmatprep.subr.bf16.mxu0 0
      %7800 = vmatpush1.bf16.msra.mxu0 0
      %7801 = vmatprep.subr.bf16.mxu0 0
      %7802 = vmatpush1.bf16.msra.mxu0 %v7785
      %7803 = vmatprep.subr.bf16.mxu0 0
      %7804 = vmatpush2.bf16.msra.mxu0 0
      %7805 = vmatprep.subr.bf16.mxu0 0
      %7806 = vmatpush2.bf16.msra.mxu0 0
      %7807 = vmatprep.subr.bf16.mxu0 0
      %7808 = vmatpush2.bf16.msra.mxu0 0
      %7809 = vmatprep.subr.bf16.mxu0 0
      %7810 = vmatpush2.bf16.msra.mxu0 0
      %7811 = vmatprep.subr.bf16.mxu0 0
      %7812 = vmatpush2.bf16.msra.mxu0 0
      %7813 = vmatprep.subr.bf16.mxu0 0
      %7814 = vmatpush2.bf16.msra.mxu0 0
      %7815 = vmatprep.subr.bf16.mxu0 0
      %7816 = vmatpush2.bf16.msra.mxu0 0
      %7817 = vmatprep.subr.bf16.mxu0 0
      %7818 = vmatpush2.bf16.msra.mxu0 0
      %7819 = vmatprep.mubr.bf16.mxu0 0
      %7820 = vmatmul.mubr.bf16.gmra.mxu0 %v7689
      %v7821 = vpop.f32.mrf.mxu0
      %v7822 = vadd.f32 0.0, %v7821
      %v7823 = vpop.f32.mrf.mxu0
      %v7824 = vpop.f32.mrf.mxu0
      %v7825 = vadd.f32 0.0, %v7824
      %v7826 = vpop.f32.mrf.mxu0
      %7827 = vmatprep.mubr.bf16.mxu0 0
      %7828 = vmatmul.mubr.bf16.gmra.mxu0 %v7692
      %v7829 = vpop.f32.mrf.mxu0
      %v7830 = vadd.f32 0.0, %v7829
      %v7831 = vpop.f32.mrf.mxu0
      %v7832 = vpop.f32.mrf.mxu0
      %v7833 = vadd.f32 0.0, %v7832
      %v7834 = vpop.f32.mrf.mxu0
      %7835 = vmatprep.mubr.bf16.mxu0 0
      %7836 = vmatmul.mubr.bf16.gmra.mxu0 %v7695
      %v7837 = vpop.f32.mrf.mxu0
      %v7838 = vadd.f32 0.0, %v7837
      %v7839 = vpop.f32.mrf.mxu0
      %v7840 = vpop.f32.mrf.mxu0
      %v7841 = vadd.f32 0.0, %v7840
      %v7842 = vpop.f32.mrf.mxu0
      %7843 = vmatprep.mubr.bf16.mxu0 0
      %7844 = vmatmul.mubr.bf16.gmra.mxu0 %v7698
      %v7845 = vpop.f32.mrf.mxu0
      %v7846 = vadd.f32 0.0, %v7845
      %v7847 = vpop.f32.mrf.mxu0
      %v7848 = vpop.f32.mrf.mxu0
      %v7849 = vadd.f32 0.0, %v7848
      %v7850 = vpop.f32.mrf.mxu0
      %7851 = vmatprep.mubr.bf16.mxu0 0
      %7852 = vmatmul.mubr.bf16.gmra.mxu0 %v7701
      %v7853 = vpop.f32.mrf.mxu0
      %v7854 = vadd.f32 0.0, %v7853
      %v7855 = vpop.f32.mrf.mxu0
      %v7856 = vpop.f32.mrf.mxu0
      %v7857 = vadd.f32 0.0, %v7856
      %v7858 = vpop.f32.mrf.mxu0
      %7859 = vmatprep.mubr.bf16.mxu0 0
      %7860 = vmatmul.mubr.bf16.gmra.mxu0 %v7704
      %v7861 = vpop.f32.mrf.mxu0
      %v7862 = vadd.f32 0.0, %v7861
      %v7863 = vpop.f32.mrf.mxu0
      %v7864 = vpop.f32.mrf.mxu0
      %v7865 = vadd.f32 0.0, %v7864
      %v7866 = vpop.f32.mrf.mxu0
      %7867 = vmatprep.mubr.bf16.mxu0 0
      %7868 = vmatmul.mubr.bf16.gmra.mxu0 %v7707
      %v7869 = vpop.f32.mrf.mxu0
      %v7870 = vadd.f32 0.0, %v7869
      %v7871 = vpop.f32.mrf.mxu0
      %v7872 = vpop.f32.mrf.mxu0
      %v7873 = vadd.f32 0.0, %v7872
      %v7874 = vpop.f32.mrf.mxu0
      %7875 = vmatprep.mubr.bf16.mxu0 0
      %7876 = vmatmul.mubr.bf16.gmra.mxu0 %v7710
      %v7877 = vpop.f32.mrf.mxu0
      %v7878 = vadd.f32 0.0, %v7877
      %v7879 = vpop.f32.mrf.mxu0
      %v7880 = vpop.f32.mrf.mxu0
      %v7881 = vadd.f32 0.0, %v7880
      %v7882 = vpop.f32.mrf.mxu0
      %7883 = vmatprep.mubr.bf16.mxu0 0
      %7884 = vmatmul.mubr.bf16.gmra.mxu0 %v7713
      %v7885 = vpop.f32.mrf.mxu0
      %v7886 = vadd.f32 0.0, %v7885
      %v7887 = vpop.f32.mrf.mxu0
      %v7888 = vpop.f32.mrf.mxu0
      %v7889 = vadd.f32 0.0, %v7888
      %v7890 = vpop.f32.mrf.mxu0
      %7891 = vmatprep.mubr.bf16.mxu0 0
      %7892 = vmatmul.mubr.bf16.gmra.mxu0 %v7716
      %v7893 = vpop.f32.mrf.mxu0
      %v7894 = vadd.f32 0.0, %v7893
      %v7895 = vpop.f32.mrf.mxu0
      %v7896 = vpop.f32.mrf.mxu0
      %v7897 = vadd.f32 0.0, %v7896
      %v7898 = vpop.f32.mrf.mxu0
      %7899 = vmatprep.mubr.bf16.mxu0 0
      %7900 = vmatmul.mubr.bf16.gmra.mxu0 %v7719
      %v7901 = vpop.f32.mrf.mxu0
      %v7902 = vadd.f32 0.0, %v7901
      %v7903 = vpop.f32.mrf.mxu0
      %v7904 = vpop.f32.mrf.mxu0
      %v7905 = vadd.f32 0.0, %v7904
      %v7906 = vpop.f32.mrf.mxu0
      %7907 = vmatprep.mubr.bf16.mxu0 0
      %7908 = vmatmul.mubr.bf16.gmra.mxu0 %v7722
      %v7909 = vpop.f32.mrf.mxu0
      %v7910 = vadd.f32 0.0, %v7909
      %v7911 = vpop.f32.mrf.mxu0
      %v7912 = vpop.f32.mrf.mxu0
      %v7913 = vadd.f32 0.0, %v7912
      %v7914 = vpop.f32.mrf.mxu0
      %7915 = vmatprep.mubr.bf16.mxu0 0
      %7916 = vmatmul.mubr.bf16.gmra.mxu0 %v7725
      %v7917 = vpop.f32.mrf.mxu0
      %v7918 = vadd.f32 0.0, %v7917
      %v7919 = vpop.f32.mrf.mxu0
      %v7920 = vpop.f32.mrf.mxu0
      %v7921 = vadd.f32 0.0, %v7920
      %v7922 = vpop.f32.mrf.mxu0
      %7923 = vmatprep.mubr.bf16.mxu0 0
      %7924 = vmatmul.mubr.bf16.gmra.mxu0 %v7728
      %v7925 = vpop.f32.mrf.mxu0
      %v7926 = vadd.f32 0.0, %v7925
      %v7927 = vpop.f32.mrf.mxu0
      %v7928 = vpop.f32.mrf.mxu0
      %v7929 = vadd.f32 0.0, %v7928
      %v7930 = vpop.f32.mrf.mxu0
      %7931 = vmatprep.mubr.bf16.mxu0 0
      %7932 = vmatmul.mubr.bf16.gmra.mxu0 %v7731
      %v7933 = vpop.f32.mrf.mxu0
      %v7934 = vadd.f32 0.0, %v7933
      %v7935 = vpop.f32.mrf.mxu0
      %v7936 = vpop.f32.mrf.mxu0
      %v7937 = vadd.f32 0.0, %v7936
      %v7938 = vpop.f32.mrf.mxu0
      %7939 = vmatprep.mubr.bf16.mxu0 0
      %7940 = vmatmul.mubr.bf16.gmra.mxu0 %v7734
      %v7941 = vpop.f32.mrf.mxu0
      %v7942 = vadd.f32 0.0, %v7941
      %v7943 = vpop.f32.mrf.mxu0
      %v7944 = vpop.f32.mrf.mxu0
      %v7945 = vadd.f32 0.0, %v7944
      %v7946 = vpop.f32.mrf.mxu0
      %7947 = vmatprep.mubr.bf16.mxu0 0
      %7948 = vmatmul.mubr.bf16.gmra.mxu0 %v7737
      %v7949 = vpop.f32.mrf.mxu0
      %v7950 = vadd.f32 0.0, %v7949
      %v7951 = vpop.f32.mrf.mxu0
      %v7952 = vpop.f32.mrf.mxu0
      %v7953 = vadd.f32 0.0, %v7952
      %v7954 = vpop.f32.mrf.mxu0
      %7955 = vmatprep.mubr.bf16.mxu0 0
      %7956 = vmatmul.mubr.bf16.gmra.mxu0 %v7740
      %v7957 = vpop.f32.mrf.mxu0
      %v7958 = vadd.f32 0.0, %v7957
      %v7959 = vpop.f32.mrf.mxu0
      %v7960 = vpop.f32.mrf.mxu0
      %v7961 = vadd.f32 0.0, %v7960
      %v7962 = vpop.f32.mrf.mxu0
      %7963 = vmatprep.mubr.bf16.mxu0 0
      %7964 = vmatmul.mubr.bf16.gmra.mxu0 %v7743
      %v7965 = vpop.f32.mrf.mxu0
      %v7966 = vadd.f32 0.0, %v7965
      %v7967 = vpop.f32.mrf.mxu0
      %v7968 = vpop.f32.mrf.mxu0
      %v7969 = vadd.f32 0.0, %v7968
      %v7970 = vpop.f32.mrf.mxu0
      %7971 = vmatprep.mubr.bf16.mxu0 0
      %7972 = vmatmul.mubr.bf16.gmra.mxu0 %v7746
      %v7973 = vpop.f32.mrf.mxu0
      %v7974 = vadd.f32 0.0, %v7973
      %v7975 = vpop.f32.mrf.mxu0
      %v7976 = vpop.f32.mrf.mxu0
      %v7977 = vadd.f32 0.0, %v7976
      %v7978 = vpop.f32.mrf.mxu0
      %7979 = vmatprep.mubr.bf16.mxu0 0
      %7980 = vmatmul.mubr.bf16.gmra.mxu0 %v7749
      %v7981 = vpop.f32.mrf.mxu0
      %v7982 = vadd.f32 0.0, %v7981
      %v7983 = vpop.f32.mrf.mxu0
      %v7984 = vpop.f32.mrf.mxu0
      %v7985 = vadd.f32 0.0, %v7984
      %v7986 = vpop.f32.mrf.mxu0
      %7987 = vmatprep.mubr.bf16.mxu0 0
      %7988 = vmatmul.mubr.bf16.gmra.mxu0 %v7752
      %v7989 = vpop.f32.mrf.mxu0
      %v7990 = vadd.f32 0.0, %v7989
      %v7991 = vpop.f32.mrf.mxu0
      %v7992 = vpop.f32.mrf.mxu0
      %v7993 = vadd.f32 0.0, %v7992
      %v7994 = vpop.f32.mrf.mxu0
      %7995 = vmatprep.mubr.bf16.mxu0 0
      %7996 = vmatmul.mubr.bf16.gmra.mxu0 %v7755
      %v7997 = vpop.f32.mrf.mxu0
      %v7998 = vadd.f32 0.0, %v7997
      %v7999 = vpop.f32.mrf.mxu0
      %v8000 = vpop.f32.mrf.mxu0
      %v8001 = vadd.f32 0.0, %v8000
      %v8002 = vpop.f32.mrf.mxu0
      %8003 = vmatprep.mubr.bf16.mxu0 0
      %8004 = vmatmul.mubr.bf16.gmra.mxu0 %v7758
      %v8005 = vpop.f32.mrf.mxu0
      %v8006 = vadd.f32 0.0, %v8005
      %v8007 = vpop.f32.mrf.mxu0
      %v8008 = vpop.f32.mrf.mxu0
      %v8009 = vadd.f32 0.0, %v8008
      %v8010 = vpop.f32.mrf.mxu0
      %8011 = vmatprep.mubr.bf16.mxu0 0
      %8012 = vmatmul.mubr.bf16.gmra.mxu0 %v7761
      %v8013 = vpop.f32.mrf.mxu0
      %v8014 = vadd.f32 0.0, %v8013
      %v8015 = vpop.f32.mrf.mxu0
      %v8016 = vpop.f32.mrf.mxu0
      %v8017 = vadd.f32 0.0, %v8016
      %v8018 = vpop.f32.mrf.mxu0
      %8019 = vmatprep.mubr.bf16.mxu0 0
      %8020 = vmatmul.mubr.bf16.gmra.mxu0 %v7764
      %v8021 = vpop.f32.mrf.mxu0
      %v8022 = vadd.f32 0.0, %v8021
      %v8023 = vpop.f32.mrf.mxu0
      %v8024 = vpop.f32.mrf.mxu0
      %v8025 = vadd.f32 0.0, %v8024
      %v8026 = vpop.f32.mrf.mxu0
      %8027 = vmatprep.mubr.bf16.mxu0 0
      %8028 = vmatmul.mubr.bf16.gmra.mxu0 %v7767
      %v8029 = vpop.f32.mrf.mxu0
      %v8030 = vadd.f32 0.0, %v8029
      %v8031 = vpop.f32.mrf.mxu0
      %v8032 = vpop.f32.mrf.mxu0
      %v8033 = vadd.f32 0.0, %v8032
      %v8034 = vpop.f32.mrf.mxu0
      %8035 = vmatprep.mubr.bf16.mxu0 0
      %8036 = vmatmul.mubr.bf16.gmra.mxu0 %v7770
      %v8037 = vpop.f32.mrf.mxu0
      %v8038 = vadd.f32 0.0, %v8037
      %v8039 = vpop.f32.mrf.mxu0
      %v8040 = vpop.f32.mrf.mxu0
      %v8041 = vadd.f32 0.0, %v8040
      %v8042 = vpop.f32.mrf.mxu0
      %8043 = vmatprep.mubr.bf16.mxu0 0
      %8044 = vmatmul.mubr.bf16.gmra.mxu0 %v7773
      %v8045 = vpop.f32.mrf.mxu0
      %v8046 = vadd.f32 0.0, %v8045
      %v8047 = vpop.f32.mrf.mxu0
      %v8048 = vpop.f32.mrf.mxu0
      %v8049 = vadd.f32 0.0, %v8048
      %v8050 = vpop.f32.mrf.mxu0
      %8051 = vmatprep.mubr.bf16.mxu0 0
      %8052 = vmatmul.mubr.bf16.gmra.mxu0 %v7776
      %v8053 = vpop.f32.mrf.mxu0
      %v8054 = vadd.f32 0.0, %v8053
      %v8055 = vpop.f32.mrf.mxu0
      %v8056 = vpop.f32.mrf.mxu0
      %v8057 = vadd.f32 0.0, %v8056
      %v8058 = vpop.f32.mrf.mxu0
      %8059 = vmatprep.mubr.bf16.mxu0 0
      %8060 = vmatmul.mubr.bf16.gmra.mxu0 %v7779
      %v8061 = vpop.f32.mrf.mxu0
      %v8062 = vadd.f32 0.0, %v8061
      %v8063 = vpop.f32.mrf.mxu0
      %v8064 = vpop.f32.mrf.mxu0
      %v8065 = vadd.f32 0.0, %v8064
      %v8066 = vpop.f32.mrf.mxu0
      %8067 = vmatprep.mubr.bf16.mxu0 0
      %8068 = vmatmul.mubr.bf16.gmra.mxu0 %v7782
      %v8069 = vpop.f32.mrf.mxu0
      %v8070 = vadd.f32 0.0, %v8069
      %v8071 = vpop.f32.mrf.mxu0
      %v8072 = vpop.f32.mrf.mxu0
      %v8073 = vadd.f32 0.0, %v8072
      %v8074 = vpop.f32.mrf.mxu0
      %8075 = vdwg.mxu0
      %v8076 = vadd.f32 %v7318, %v7822
      %v8077 = vadd.f32 %v7319, %v7825
      %v8078 = vadd.f32 %v7320, %v7830
      %v8079 = vadd.f32 %v7321, %v7833
      %v8080 = vadd.f32 %v7322, %v7838
      %v8081 = vadd.f32 %v7323, %v7841
      %v8082 = vadd.f32 %v7324, %v7846
      %v8083 = vadd.f32 %v7325, %v7849
      %v8084 = vadd.f32 %v7326, %v7854
      %v8085 = vadd.f32 %v7327, %v7857
      %v8086 = vadd.f32 %v7328, %v7862
      %v8087 = vadd.f32 %v7329, %v7865
      %v8088 = vadd.f32 %v7330, %v7870
      %v8089 = vadd.f32 %v7331, %v7873
      %v8090 = vadd.f32 %v7332, %v7878
      %v8091 = vadd.f32 %v7333, %v7881
      %v8092 = vadd.f32 %v7334, %v7886
      %v8093 = vadd.f32 %v7335, %v7889
      %v8094 = vadd.f32 %v7336, %v7894
      %v8095 = vadd.f32 %v7337, %v7897
      %v8096 = vadd.f32 %v7338, %v7902
      %v8097 = vadd.f32 %v7339, %v7905
      %v8098 = vadd.f32 %v7340, %v7910
      %v8099 = vadd.f32 %v7341, %v7913
      %v8100 = vadd.f32 %v7342, %v7918
      %v8101 = vadd.f32 %v7343, %v7921
      %v8102 = vadd.f32 %v7344, %v7926
      %v8103 = vadd.f32 %v7345, %v7929
      %v8104 = vadd.f32 %v7346, %v7934
      %v8105 = vadd.f32 %v7347, %v7937
      %v8106 = vadd.f32 %v7348, %v7942
      %v8107 = vadd.f32 %v7349, %v7945
      %v8108 = vadd.f32 %v7350, %v7950
      %v8109 = vadd.f32 %v7351, %v7953
      %v8110 = vadd.f32 %v7352, %v7958
      %v8111 = vadd.f32 %v7353, %v7961
      %v8112 = vadd.f32 %v7354, %v7966
      %v8113 = vadd.f32 %v7355, %v7969
      %v8114 = vadd.f32 %v7356, %v7974
      %v8115 = vadd.f32 %v7357, %v7977
      %v8116 = vadd.f32 %v7358, %v7982
      %v8117 = vadd.f32 %v7359, %v7985
      %v8118 = vadd.f32 %v7360, %v7990
      %v8119 = vadd.f32 %v7361, %v7993
      %v8120 = vadd.f32 %v7362, %v7998
      %v8121 = vadd.f32 %v7363, %v8001
      %v8122 = vadd.f32 %v7364, %v8006
      %v8123 = vadd.f32 %v7365, %v8009
      %v8124 = vadd.f32 %v7366, %v8014
      %v8125 = vadd.f32 %v7367, %v8017
      %v8126 = vadd.f32 %v7368, %v8022
      %v8127 = vadd.f32 %v7369, %v8025
      %v8128 = vadd.f32 %v7370, %v8030
      %v8129 = vadd.f32 %v7371, %v8033
      %v8130 = vadd.f32 %v7372, %v8038
      %v8131 = vadd.f32 %v7373, %v8041
      %v8132 = vadd.f32 %v7374, %v8046
      %v8133 = vadd.f32 %v7375, %v8049
      %v8134 = vadd.f32 %v7376, %v8054
      %v8135 = vadd.f32 %v7377, %v8057
      %v8136 = vadd.f32 %v7378, %v8062
      %v8137 = vadd.f32 %v7379, %v8065
      %v8138 = vadd.f32 %v7380, %v8070
      %v8139 = vadd.f32 %v7381, %v8073
      %v8140 = vld [vmem:[%s2] sm:$0x1]
      %v8142 = vlaneseq
      %v8143 = vshrl.u32 %v8142, 7
      %v8144 = vsub.s32 0, %v8143
      %v8145 = vrot.slane %v8140, %v8144
      %v8147 = vadd.f32 %v8076, %v8145
      %v8148 = vadd.f32 %v8077, %v8145
      %v8149 = vadd.f32 %v8078, %v8145
      %v8150 = vadd.f32 %v8079, %v8145
      %v8151 = vadd.f32 %v8080, %v8145
      %v8152 = vadd.f32 %v8081, %v8145
      %v8153 = vadd.f32 %v8082, %v8145
      %v8154 = vadd.f32 %v8083, %v8145
      %v8155 = vadd.f32 %v8084, %v8145
      %v8156 = vadd.f32 %v8085, %v8145
      %v8157 = vadd.f32 %v8086, %v8145
      %v8158 = vadd.f32 %v8087, %v8145
      %v8159 = vadd.f32 %v8088, %v8145
      %v8160 = vadd.f32 %v8089, %v8145
      %v8161 = vadd.f32 %v8090, %v8145
      %v8162 = vadd.f32 %v8091, %v8145
      %v8163 = vadd.f32 %v8092, %v8145
      %v8164 = vadd.f32 %v8093, %v8145
      %v8165 = vadd.f32 %v8094, %v8145
      %v8166 = vadd.f32 %v8095, %v8145
      %v8167 = vadd.f32 %v8096, %v8145
      %v8168 = vadd.f32 %v8097, %v8145
      %v8169 = vadd.f32 %v8098, %v8145
      %v8170 = vadd.f32 %v8099, %v8145
      %v8171 = vadd.f32 %v8100, %v8145
      %v8172 = vadd.f32 %v8101, %v8145
      %v8173 = vadd.f32 %v8102, %v8145
      %v8174 = vadd.f32 %v8103, %v8145
      %v8175 = vadd.f32 %v8104, %v8145
      %v8176 = vadd.f32 %v8105, %v8145
      %v8177 = vadd.f32 %v8106, %v8145
      %v8178 = vadd.f32 %v8107, %v8145
      %v8179 = vadd.f32 %v8108, %v8145
      %v8180 = vadd.f32 %v8109, %v8145
      %v8181 = vadd.f32 %v8110, %v8145
      %v8182 = vadd.f32 %v8111, %v8145
      %v8183 = vadd.f32 %v8112, %v8145
      %v8184 = vadd.f32 %v8113, %v8145
      %v8185 = vadd.f32 %v8114, %v8145
      %v8186 = vadd.f32 %v8115, %v8145
      %v8187 = vadd.f32 %v8116, %v8145
      %v8188 = vadd.f32 %v8117, %v8145
      %v8189 = vadd.f32 %v8118, %v8145
      %v8190 = vadd.f32 %v8119, %v8145
      %v8191 = vadd.f32 %v8120, %v8145
      %v8192 = vadd.f32 %v8121, %v8145
      %v8193 = vadd.f32 %v8122, %v8145
      %v8194 = vadd.f32 %v8123, %v8145
      %v8195 = vadd.f32 %v8124, %v8145
      %v8196 = vadd.f32 %v8125, %v8145
      %v8197 = vadd.f32 %v8126, %v8145
      %v8198 = vadd.f32 %v8127, %v8145
      %v8199 = vadd.f32 %v8128, %v8145
      %v8200 = vadd.f32 %v8129, %v8145
      %v8201 = vadd.f32 %v8130, %v8145
      %v8202 = vadd.f32 %v8131, %v8145
      %v8203 = vadd.f32 %v8132, %v8145
      %v8204 = vadd.f32 %v8133, %v8145
      %v8205 = vadd.f32 %v8134, %v8145
      %v8206 = vadd.f32 %v8135, %v8145
      %v8207 = vadd.f32 %v8136, %v8145
      %v8208 = vadd.f32 %v8137, %v8145
      %v8209 = vadd.f32 %v8138, %v8145
      %v8210 = vadd.f32 %v8139, %v8145
      %v8211 = vmax.f32 %v8147, 0.0
      %v8212 = vmax.f32 %v8148, 0.0
      %v8213 = vmax.f32 %v8149, 0.0
      %v8214 = vmax.f32 %v8150, 0.0
      %v8215 = vmax.f32 %v8151, 0.0
      %v8216 = vmax.f32 %v8152, 0.0
      %v8217 = vmax.f32 %v8153, 0.0
      %v8218 = vmax.f32 %v8154, 0.0
      %v8219 = vmax.f32 %v8155, 0.0
      %v8220 = vmax.f32 %v8156, 0.0
      %v8221 = vmax.f32 %v8157, 0.0
      %v8222 = vmax.f32 %v8158, 0.0
      %v8223 = vmax.f32 %v8159, 0.0
      %v8224 = vmax.f32 %v8160, 0.0
      %v8225 = vmax.f32 %v8161, 0.0
      %v8226 = vmax.f32 %v8162, 0.0
      %v8227 = vmax.f32 %v8163, 0.0
      %v8228 = vmax.f32 %v8164, 0.0
      %v8229 = vmax.f32 %v8165, 0.0
      %v8230 = vmax.f32 %v8166, 0.0
      %v8231 = vmax.f32 %v8167, 0.0
      %v8232 = vmax.f32 %v8168, 0.0
      %v8233 = vmax.f32 %v8169, 0.0
      %v8234 = vmax.f32 %v8170, 0.0
      %v8235 = vmax.f32 %v8171, 0.0
      %v8236 = vmax.f32 %v8172, 0.0
      %v8237 = vmax.f32 %v8173, 0.0
      %v8238 = vmax.f32 %v8174, 0.0
      %v8239 = vmax.f32 %v8175, 0.0
      %v8240 = vmax.f32 %v8176, 0.0
      %v8241 = vmax.f32 %v8177, 0.0
      %v8242 = vmax.f32 %v8178, 0.0
      %v8243 = vmax.f32 %v8179, 0.0
      %v8244 = vmax.f32 %v8180, 0.0
      %v8245 = vmax.f32 %v8181, 0.0
      %v8246 = vmax.f32 %v8182, 0.0
      %v8247 = vmax.f32 %v8183, 0.0
      %v8248 = vmax.f32 %v8184, 0.0
      %v8249 = vmax.f32 %v8185, 0.0
      %v8250 = vmax.f32 %v8186, 0.0
      %v8251 = vmax.f32 %v8187, 0.0
      %v8252 = vmax.f32 %v8188, 0.0
      %v8253 = vmax.f32 %v8189, 0.0
      %v8254 = vmax.f32 %v8190, 0.0
      %v8255 = vmax.f32 %v8191, 0.0
      %v8256 = vmax.f32 %v8192, 0.0
      %v8257 = vmax.f32 %v8193, 0.0
      %v8258 = vmax.f32 %v8194, 0.0
      %v8259 = vmax.f32 %v8195, 0.0
      %v8260 = vmax.f32 %v8196, 0.0
      %v8261 = vmax.f32 %v8197, 0.0
      %v8262 = vmax.f32 %v8198, 0.0
      %v8263 = vmax.f32 %v8199, 0.0
      %v8264 = vmax.f32 %v8200, 0.0
      %v8265 = vmax.f32 %v8201, 0.0
      %v8266 = vmax.f32 %v8202, 0.0
      %v8267 = vmax.f32 %v8203, 0.0
      %v8268 = vmax.f32 %v8204, 0.0
      %v8269 = vmax.f32 %v8205, 0.0
      %v8270 = vmax.f32 %v8206, 0.0
      %v8271 = vmax.f32 %v8207, 0.0
      %v8272 = vmax.f32 %v8208, 0.0
      %v8273 = vmax.f32 %v8209, 0.0
      %v8274 = vmax.f32 %v8210, 0.0
      %v8275 = vld [vmem:[%s3] sm:$0x1]
      %v8277 = vlaneseq
      %v8278 = vshrl.u32 %v8277, 7
      %v8279 = vsub.s32 0, %v8278
      %v8280 = vrot.slane %v8275, %v8279
      %v8282 = vmul.f32 %v8211, %v8280
      %v8283 = vmul.f32 %v8212, %v8280
      %v8284 = vmul.f32 %v8213, %v8280
      %v8285 = vmul.f32 %v8214, %v8280
      %v8286 = vmul.f32 %v8215, %v8280
      %v8287 = vmul.f32 %v8216, %v8280
      %v8288 = vmul.f32 %v8217, %v8280
      %v8289 = vmul.f32 %v8218, %v8280
      %v8290 = vmul.f32 %v8219, %v8280
      %v8291 = vmul.f32 %v8220, %v8280
      %v8292 = vmul.f32 %v8221, %v8280
      %v8293 = vmul.f32 %v8222, %v8280
      %v8294 = vmul.f32 %v8223, %v8280
      %v8295 = vmul.f32 %v8224, %v8280
      %v8296 = vmul.f32 %v8225, %v8280
      %v8297 = vmul.f32 %v8226, %v8280
      %v8298 = vmul.f32 %v8227, %v8280
      %v8299 = vmul.f32 %v8228, %v8280
      %v8300 = vmul.f32 %v8229, %v8280
      %v8301 = vmul.f32 %v8230, %v8280
      %v8302 = vmul.f32 %v8231, %v8280
      %v8303 = vmul.f32 %v8232, %v8280
      %v8304 = vmul.f32 %v8233, %v8280
      %v8305 = vmul.f32 %v8234, %v8280
      %v8306 = vmul.f32 %v8235, %v8280
      %v8307 = vmul.f32 %v8236, %v8280
      %v8308 = vmul.f32 %v8237, %v8280
      %v8309 = vmul.f32 %v8238, %v8280
      %v8310 = vmul.f32 %v8239, %v8280
      %v8311 = vmul.f32 %v8240, %v8280
      %v8312 = vmul.f32 %v8241, %v8280
      %v8313 = vmul.f32 %v8242, %v8280
      %v8314 = vmul.f32 %v8243, %v8280
      %v8315 = vmul.f32 %v8244, %v8280
      %v8316 = vmul.f32 %v8245, %v8280
      %v8317 = vmul.f32 %v8246, %v8280
      %v8318 = vmul.f32 %v8247, %v8280
      %v8319 = vmul.f32 %v8248, %v8280
      %v8320 = vmul.f32 %v8249, %v8280
      %v8321 = vmul.f32 %v8250, %v8280
      %v8322 = vmul.f32 %v8251, %v8280
      %v8323 = vmul.f32 %v8252, %v8280
      %v8324 = vmul.f32 %v8253, %v8280
      %v8325 = vmul.f32 %v8254, %v8280
      %v8326 = vmul.f32 %v8255, %v8280
      %v8327 = vmul.f32 %v8256, %v8280
      %v8328 = vmul.f32 %v8257, %v8280
      %v8329 = vmul.f32 %v8258, %v8280
      %v8330 = vmul.f32 %v8259, %v8280
      %v8331 = vmul.f32 %v8260, %v8280
      %v8332 = vmul.f32 %v8261, %v8280
      %v8333 = vmul.f32 %v8262, %v8280
      %v8334 = vmul.f32 %v8263, %v8280
      %v8335 = vmul.f32 %v8264, %v8280
      %v8336 = vmul.f32 %v8265, %v8280
      %v8337 = vmul.f32 %v8266, %v8280
      %v8338 = vmul.f32 %v8267, %v8280
      %v8339 = vmul.f32 %v8268, %v8280
      %v8340 = vmul.f32 %v8269, %v8280
      %v8341 = vmul.f32 %v8270, %v8280
      %v8342 = vmul.f32 %v8271, %v8280
      %v8343 = vmul.f32 %v8272, %v8280
      %v8344 = vmul.f32 %v8273, %v8280
      %v8345 = vmul.f32 %v8274, %v8280
      %vm8346 = vcmask 130048
      %v8347 = vsel %vm8346, %v8282, 0.0
      %8348 = vadd.xlane.f32.xlu0 %v8347
      %v8349 = vpop.xlane.xlu0 %8348
      %v8350 = vsel %vm8346, %v8283, 0.0
      %8351 = vadd.xlane.f32.xlu0 %v8350
      %v8352 = vpop.xlane.xlu0 %8351
      %v8353 = vsel %vm8346, %v8284, 0.0
      %8354 = vadd.xlane.f32.xlu0 %v8353
      %v8355 = vpop.xlane.xlu0 %8354
      %v8356 = vsel %vm8346, %v8285, 0.0
      %8357 = vadd.xlane.f32.xlu0 %v8356
      %v8358 = vpop.xlane.xlu0 %8357
      %v8359 = vsel %vm8346, %v8286, 0.0
      %8360 = vadd.xlane.f32.xlu0 %v8359
      %v8361 = vpop.xlane.xlu0 %8360
      %v8362 = vsel %vm8346, %v8287, 0.0
      %8363 = vadd.xlane.f32.xlu0 %v8362
      %v8364 = vpop.xlane.xlu0 %8363
      %v8365 = vsel %vm8346, %v8288, 0.0
      %8366 = vadd.xlane.f32.xlu0 %v8365
      %v8367 = vpop.xlane.xlu0 %8366
      %v8368 = vsel %vm8346, %v8289, 0.0
      %8369 = vadd.xlane.f32.xlu0 %v8368
      %v8370 = vpop.xlane.xlu0 %8369
      %v8371 = vsel %vm8346, %v8290, 0.0
      %8372 = vadd.xlane.f32.xlu0 %v8371
      %v8373 = vpop.xlane.xlu0 %8372
      %v8374 = vsel %vm8346, %v8291, 0.0
      %8375 = vadd.xlane.f32.xlu0 %v8374
      %v8376 = vpop.xlane.xlu0 %8375
      %v8377 = vsel %vm8346, %v8292, 0.0
      %8378 = vadd.xlane.f32.xlu0 %v8377
      %v8379 = vpop.xlane.xlu0 %8378
      %v8380 = vsel %vm8346, %v8293, 0.0
      %8381 = vadd.xlane.f32.xlu0 %v8380
      %v8382 = vpop.xlane.xlu0 %8381
      %v8383 = vsel %vm8346, %v8294, 0.0
      %8384 = vadd.xlane.f32.xlu0 %v8383
      %v8385 = vpop.xlane.xlu0 %8384
      %v8386 = vsel %vm8346, %v8295, 0.0
      %8387 = vadd.xlane.f32.xlu0 %v8386
      %v8388 = vpop.xlane.xlu0 %8387
      %v8389 = vsel %vm8346, %v8296, 0.0
      %8390 = vadd.xlane.f32.xlu0 %v8389
      %v8391 = vpop.xlane.xlu0 %8390
      %v8392 = vsel %vm8346, %v8297, 0.0
      %8393 = vadd.xlane.f32.xlu0 %v8392
      %v8394 = vpop.xlane.xlu0 %8393
      %v8395 = vsel %vm8346, %v8298, 0.0
      %8396 = vadd.xlane.f32.xlu0 %v8395
      %v8397 = vpop.xlane.xlu0 %8396
      %v8398 = vsel %vm8346, %v8299, 0.0
      %8399 = vadd.xlane.f32.xlu0 %v8398
      %v8400 = vpop.xlane.xlu0 %8399
      %v8401 = vsel %vm8346, %v8300, 0.0
      %8402 = vadd.xlane.f32.xlu0 %v8401
      %v8403 = vpop.xlane.xlu0 %8402
      %v8404 = vsel %vm8346, %v8301, 0.0
      %8405 = vadd.xlane.f32.xlu0 %v8404
      %v8406 = vpop.xlane.xlu0 %8405
      %v8407 = vsel %vm8346, %v8302, 0.0
      %8408 = vadd.xlane.f32.xlu0 %v8407
      %v8409 = vpop.xlane.xlu0 %8408
      %v8410 = vsel %vm8346, %v8303, 0.0
      %8411 = vadd.xlane.f32.xlu0 %v8410
      %v8412 = vpop.xlane.xlu0 %8411
      %v8413 = vsel %vm8346, %v8304, 0.0
      %8414 = vadd.xlane.f32.xlu0 %v8413
      %v8415 = vpop.xlane.xlu0 %8414
      %v8416 = vsel %vm8346, %v8305, 0.0
      %8417 = vadd.xlane.f32.xlu0 %v8416
      %v8418 = vpop.xlane.xlu0 %8417
      %v8419 = vsel %vm8346, %v8306, 0.0
      %8420 = vadd.xlane.f32.xlu0 %v8419
      %v8421 = vpop.xlane.xlu0 %8420
      %v8422 = vsel %vm8346, %v8307, 0.0
      %8423 = vadd.xlane.f32.xlu0 %v8422
      %v8424 = vpop.xlane.xlu0 %8423
      %v8425 = vsel %vm8346, %v8308, 0.0
      %8426 = vadd.xlane.f32.xlu0 %v8425
      %v8427 = vpop.xlane.xlu0 %8426
      %v8428 = vsel %vm8346, %v8309, 0.0
      %8429 = vadd.xlane.f32.xlu0 %v8428
      %v8430 = vpop.xlane.xlu0 %8429
      %v8431 = vsel %vm8346, %v8310, 0.0
      %8432 = vadd.xlane.f32.xlu0 %v8431
      %v8433 = vpop.xlane.xlu0 %8432
      %v8434 = vsel %vm8346, %v8311, 0.0
      %8435 = vadd.xlane.f32.xlu0 %v8434
      %v8436 = vpop.xlane.xlu0 %8435
      %v8437 = vsel %vm8346, %v8312, 0.0
      %8438 = vadd.xlane.f32.xlu0 %v8437
      %v8439 = vpop.xlane.xlu0 %8438
      %v8440 = vsel %vm8346, %v8313, 0.0
      %8441 = vadd.xlane.f32.xlu0 %v8440
      %v8442 = vpop.xlane.xlu0 %8441
      %v8443 = vsel %vm8346, %v8314, 0.0
      %8444 = vadd.xlane.f32.xlu0 %v8443
      %v8445 = vpop.xlane.xlu0 %8444
      %v8446 = vsel %vm8346, %v8315, 0.0
      %8447 = vadd.xlane.f32.xlu0 %v8446
      %v8448 = vpop.xlane.xlu0 %8447
      %v8449 = vsel %vm8346, %v8316, 0.0
      %8450 = vadd.xlane.f32.xlu0 %v8449
      %v8451 = vpop.xlane.xlu0 %8450
      %v8452 = vsel %vm8346, %v8317, 0.0
      %8453 = vadd.xlane.f32.xlu0 %v8452
      %v8454 = vpop.xlane.xlu0 %8453
      %v8455 = vsel %vm8346, %v8318, 0.0
      %8456 = vadd.xlane.f32.xlu0 %v8455
      %v8457 = vpop.xlane.xlu0 %8456
      %v8458 = vsel %vm8346, %v8319, 0.0
      %8459 = vadd.xlane.f32.xlu0 %v8458
      %v8460 = vpop.xlane.xlu0 %8459
      %v8461 = vsel %vm8346, %v8320, 0.0
      %8462 = vadd.xlane.f32.xlu0 %v8461
      %v8463 = vpop.xlane.xlu0 %8462
      %v8464 = vsel %vm8346, %v8321, 0.0
      %8465 = vadd.xlane.f32.xlu0 %v8464
      %v8466 = vpop.xlane.xlu0 %8465
      %v8467 = vsel %vm8346, %v8322, 0.0
      %8468 = vadd.xlane.f32.xlu0 %v8467
      %v8469 = vpop.xlane.xlu0 %8468
      %v8470 = vsel %vm8346, %v8323, 0.0
      %8471 = vadd.xlane.f32.xlu0 %v8470
      %v8472 = vpop.xlane.xlu0 %8471
      %v8473 = vsel %vm8346, %v8324, 0.0
      %8474 = vadd.xlane.f32.xlu0 %v8473
      %v8475 = vpop.xlane.xlu0 %8474
      %v8476 = vsel %vm8346, %v8325, 0.0
      %8477 = vadd.xlane.f32.xlu0 %v8476
      %v8478 = vpop.xlane.xlu0 %8477
      %v8479 = vsel %vm8346, %v8326, 0.0
      %8480 = vadd.xlane.f32.xlu0 %v8479
      %v8481 = vpop.xlane.xlu0 %8480
      %v8482 = vsel %vm8346, %v8327, 0.0
      %8483 = vadd.xlane.f32.xlu0 %v8482
      %v8484 = vpop.xlane.xlu0 %8483
      %v8485 = vsel %vm8346, %v8328, 0.0
      %8486 = vadd.xlane.f32.xlu0 %v8485
      %v8487 = vpop.xlane.xlu0 %8486
      %v8488 = vsel %vm8346, %v8329, 0.0
      %8489 = vadd.xlane.f32.xlu0 %v8488
      %v8490 = vpop.xlane.xlu0 %8489
      %v8491 = vsel %vm8346, %v8330, 0.0
      %8492 = vadd.xlane.f32.xlu0 %v8491
      %v8493 = vpop.xlane.xlu0 %8492
      %v8494 = vsel %vm8346, %v8331, 0.0
      %8495 = vadd.xlane.f32.xlu0 %v8494
      %v8496 = vpop.xlane.xlu0 %8495
      %v8497 = vsel %vm8346, %v8332, 0.0
      %8498 = vadd.xlane.f32.xlu0 %v8497
      %v8499 = vpop.xlane.xlu0 %8498
      %v8500 = vsel %vm8346, %v8333, 0.0
      %8501 = vadd.xlane.f32.xlu0 %v8500
      %v8502 = vpop.xlane.xlu0 %8501
      %v8503 = vsel %vm8346, %v8334, 0.0
      %8504 = vadd.xlane.f32.xlu0 %v8503
      %v8505 = vpop.xlane.xlu0 %8504
      %v8506 = vsel %vm8346, %v8335, 0.0
      %8507 = vadd.xlane.f32.xlu0 %v8506
      %v8508 = vpop.xlane.xlu0 %8507
      %v8509 = vsel %vm8346, %v8336, 0.0
      %8510 = vadd.xlane.f32.xlu0 %v8509
      %v8511 = vpop.xlane.xlu0 %8510
      %v8512 = vsel %vm8346, %v8337, 0.0
      %8513 = vadd.xlane.f32.xlu0 %v8512
      %v8514 = vpop.xlane.xlu0 %8513
      %v8515 = vsel %vm8346, %v8338, 0.0
      %8516 = vadd.xlane.f32.xlu0 %v8515
      %v8517 = vpop.xlane.xlu0 %8516
      %v8518 = vsel %vm8346, %v8339, 0.0
      %8519 = vadd.xlane.f32.xlu0 %v8518
      %v8520 = vpop.xlane.xlu0 %8519
      %v8521 = vsel %vm8346, %v8340, 0.0
      %8522 = vadd.xlane.f32.xlu0 %v8521
      %v8523 = vpop.xlane.xlu0 %8522
      %v8524 = vsel %vm8346, %v8341, 0.0
      %8525 = vadd.xlane.f32.xlu0 %v8524
      %v8526 = vpop.xlane.xlu0 %8525
      %v8527 = vsel %vm8346, %v8342, 0.0
      %8528 = vadd.xlane.f32.xlu0 %v8527
      %v8529 = vpop.xlane.xlu0 %8528
      %v8530 = vsel %vm8346, %v8343, 0.0
      %8531 = vadd.xlane.f32.xlu0 %v8530
      %v8532 = vpop.xlane.xlu0 %8531
      %v8533 = vsel %vm8346, %v8344, 0.0
      %8534 = vadd.xlane.f32.xlu0 %v8533
      %v8535 = vpop.xlane.xlu0 %8534
      %v8536 = vsel %vm8346, %v8345, 0.0
      %8537 = vadd.xlane.f32.xlu0 %v8536
      %v8538 = vpop.xlane.xlu0 %8537
      %v8539 = vld [vmem:[#allocation2] sm:$0x1]
      %v8541 = vlaneseq
      %v8542 = vshrl.u32 %v8541, 7
      %v8543 = vsub.s32 0, %v8542
      %v8544 = vrot.slane %v8539, %v8543
      %v8546 = vadd.f32 %v8349, %v8544
      %v8547 = vadd.f32 %v8352, %v8544
      %v8548 = vadd.f32 %v8355, %v8544
      %v8549 = vadd.f32 %v8358, %v8544
      %v8550 = vadd.f32 %v8361, %v8544
      %v8551 = vadd.f32 %v8364, %v8544
      %v8552 = vadd.f32 %v8367, %v8544
      %v8553 = vadd.f32 %v8370, %v8544
      %v8554 = vadd.f32 %v8373, %v8544
      %v8555 = vadd.f32 %v8376, %v8544
      %v8556 = vadd.f32 %v8379, %v8544
      %v8557 = vadd.f32 %v8382, %v8544
      %v8558 = vadd.f32 %v8385, %v8544
      %v8559 = vadd.f32 %v8388, %v8544
      %v8560 = vadd.f32 %v8391, %v8544
      %v8561 = vadd.f32 %v8394, %v8544
      %v8562 = vadd.f32 %v8397, %v8544
      %v8563 = vadd.f32 %v8400, %v8544
      %v8564 = vadd.f32 %v8403, %v8544
      %v8565 = vadd.f32 %v8406, %v8544
      %v8566 = vadd.f32 %v8409, %v8544
      %v8567 = vadd.f32 %v8412, %v8544
      %v8568 = vadd.f32 %v8415, %v8544
      %v8569 = vadd.f32 %v8418, %v8544
      %v8570 = vadd.f32 %v8421, %v8544
      %v8571 = vadd.f32 %v8424, %v8544
      %v8572 = vadd.f32 %v8427, %v8544
      %v8573 = vadd.f32 %v8430, %v8544
      %v8574 = vadd.f32 %v8433, %v8544
      %v8575 = vadd.f32 %v8436, %v8544
      %v8576 = vadd.f32 %v8439, %v8544
      %v8577 = vadd.f32 %v8442, %v8544
      %v8578 = vadd.f32 %v8445, %v8544
      %v8579 = vadd.f32 %v8448, %v8544
      %v8580 = vadd.f32 %v8451, %v8544
      %v8581 = vadd.f32 %v8454, %v8544
      %v8582 = vadd.f32 %v8457, %v8544
      %v8583 = vadd.f32 %v8460, %v8544
      %v8584 = vadd.f32 %v8463, %v8544
      %v8585 = vadd.f32 %v8466, %v8544
      %v8586 = vadd.f32 %v8469, %v8544
      %v8587 = vadd.f32 %v8472, %v8544
      %v8588 = vadd.f32 %v8475, %v8544
      %v8589 = vadd.f32 %v8478, %v8544
      %v8590 = vadd.f32 %v8481, %v8544
      %v8591 = vadd.f32 %v8484, %v8544
      %v8592 = vadd.f32 %v8487, %v8544
      %v8593 = vadd.f32 %v8490, %v8544
      %v8594 = vadd.f32 %v8493, %v8544
      %v8595 = vadd.f32 %v8496, %v8544
      %v8596 = vadd.f32 %v8499, %v8544
      %v8597 = vadd.f32 %v8502, %v8544
      %v8598 = vadd.f32 %v8505, %v8544
      %v8599 = vadd.f32 %v8508, %v8544
      %v8600 = vadd.f32 %v8511, %v8544
      %v8601 = vadd.f32 %v8514, %v8544
      %v8602 = vadd.f32 %v8517, %v8544
      %v8603 = vadd.f32 %v8520, %v8544
      %v8604 = vadd.f32 %v8523, %v8544
      %v8605 = vadd.f32 %v8526, %v8544
      %v8606 = vadd.f32 %v8529, %v8544
      %v8607 = vadd.f32 %v8532, %v8544
      %v8608 = vadd.f32 %v8535, %v8544
      %v8609 = vadd.f32 %v8538, %v8544
      %v8610 = vsub.f32 0.0, %v8546
      %v8611 = vsub.f32 0.0, %v8547
      %v8612 = vsub.f32 0.0, %v8548
      %v8613 = vsub.f32 0.0, %v8549
      %v8614 = vsub.f32 0.0, %v8550
      %v8615 = vsub.f32 0.0, %v8551
      %v8616 = vsub.f32 0.0, %v8552
      %v8617 = vsub.f32 0.0, %v8553
      %v8618 = vsub.f32 0.0, %v8554
      %v8619 = vsub.f32 0.0, %v8555
      %v8620 = vsub.f32 0.0, %v8556
      %v8621 = vsub.f32 0.0, %v8557
      %v8622 = vsub.f32 0.0, %v8558
      %v8623 = vsub.f32 0.0, %v8559
      %v8624 = vsub.f32 0.0, %v8560
      %v8625 = vsub.f32 0.0, %v8561
      %v8626 = vsub.f32 0.0, %v8562
      %v8627 = vsub.f32 0.0, %v8563
      %v8628 = vsub.f32 0.0, %v8564
      %v8629 = vsub.f32 0.0, %v8565
      %v8630 = vsub.f32 0.0, %v8566
      %v8631 = vsub.f32 0.0, %v8567
      %v8632 = vsub.f32 0.0, %v8568
      %v8633 = vsub.f32 0.0, %v8569
      %v8634 = vsub.f32 0.0, %v8570
      %v8635 = vsub.f32 0.0, %v8571
      %v8636 = vsub.f32 0.0, %v8572
      %v8637 = vsub.f32 0.0, %v8573
      %v8638 = vsub.f32 0.0, %v8574
      %v8639 = vsub.f32 0.0, %v8575
      %v8640 = vsub.f32 0.0, %v8576
      %v8641 = vsub.f32 0.0, %v8577
      %v8642 = vsub.f32 0.0, %v8578
      %v8643 = vsub.f32 0.0, %v8579
      %v8644 = vsub.f32 0.0, %v8580
      %v8645 = vsub.f32 0.0, %v8581
      %v8646 = vsub.f32 0.0, %v8582
      %v8647 = vsub.f32 0.0, %v8583
      %v8648 = vsub.f32 0.0, %v8584
      %v8649 = vsub.f32 0.0, %v8585
      %v8650 = vsub.f32 0.0, %v8586
      %v8651 = vsub.f32 0.0, %v8587
      %v8652 = vsub.f32 0.0, %v8588
      %v8653 = vsub.f32 0.0, %v8589
      %v8654 = vsub.f32 0.0, %v8590
      %v8655 = vsub.f32 0.0, %v8591
      %v8656 = vsub.f32 0.0, %v8592
      %v8657 = vsub.f32 0.0, %v8593
      %v8658 = vsub.f32 0.0, %v8594
      %v8659 = vsub.f32 0.0, %v8595
      %v8660 = vsub.f32 0.0, %v8596
      %v8661 = vsub.f32 0.0, %v8597
      %v8662 = vsub.f32 0.0, %v8598
      %v8663 = vsub.f32 0.0, %v8599
      %v8664 = vsub.f32 0.0, %v8600
      %v8665 = vsub.f32 0.0, %v8601
      %v8666 = vsub.f32 0.0, %v8602
      %v8667 = vsub.f32 0.0, %v8603
      %v8668 = vsub.f32 0.0, %v8604
      %v8669 = vsub.f32 0.0, %v8605
      %v8670 = vsub.f32 0.0, %v8606
      %v8671 = vsub.f32 0.0, %v8607
      %v8672 = vsub.f32 0.0, %v8608
      %v8673 = vsub.f32 0.0, %v8609
      %v8674 = vmul.f32 %v8610, 1.442695
      %v8675 = vpow.pop %v8674
      %v8676 = vmul.f32 %v8611, 1.442695
      %v8677 = vpow.pop %v8676
      %v8678 = vmul.f32 %v8612, 1.442695
      %v8679 = vpow.pop %v8678
      %v8680 = vmul.f32 %v8613, 1.442695
      %v8681 = vpow.pop %v8680
      %v8682 = vmul.f32 %v8614, 1.442695
      %v8683 = vpow.pop %v8682
      %v8684 = vmul.f32 %v8615, 1.442695
      %v8685 = vpow.pop %v8684
      %v8686 = vmul.f32 %v8616, 1.442695
      %v8687 = vpow.pop %v8686
      %v8688 = vmul.f32 %v8617, 1.442695
      %v8689 = vpow.pop %v8688
      %v8690 = vmul.f32 %v8618, 1.442695
      %v8691 = vpow.pop %v8690
      %v8692 = vmul.f32 %v8619, 1.442695
      %v8693 = vpow.pop %v8692
      %v8694 = vmul.f32 %v8620, 1.442695
      %v8695 = vpow.pop %v8694
      %v8696 = vmul.f32 %v8621, 1.442695
      %v8697 = vpow.pop %v8696
      %v8698 = vmul.f32 %v8622, 1.442695
      %v8699 = vpow.pop %v8698
      %v8700 = vmul.f32 %v8623, 1.442695
      %v8701 = vpow.pop %v8700
      %v8702 = vmul.f32 %v8624, 1.442695
      %v8703 = vpow.pop %v8702
      %v8704 = vmul.f32 %v8625, 1.442695
      %v8705 = vpow.pop %v8704
      %v8706 = vmul.f32 %v8626, 1.442695
      %v8707 = vpow.pop %v8706
      %v8708 = vmul.f32 %v8627, 1.442695
      %v8709 = vpow.pop %v8708
      %v8710 = vmul.f32 %v8628, 1.442695
      %v8711 = vpow.pop %v8710
      %v8712 = vmul.f32 %v8629, 1.442695
      %v8713 = vpow.pop %v8712
      %v8714 = vmul.f32 %v8630, 1.442695
      %v8715 = vpow.pop %v8714
      %v8716 = vmul.f32 %v8631, 1.442695
      %v8717 = vpow.pop %v8716
      %v8718 = vmul.f32 %v8632, 1.442695
      %v8719 = vpow.pop %v8718
      %v8720 = vmul.f32 %v8633, 1.442695
      %v8721 = vpow.pop %v8720
      %v8722 = vmul.f32 %v8634, 1.442695
      %v8723 = vpow.pop %v8722
      %v8724 = vmul.f32 %v8635, 1.442695
      %v8725 = vpow.pop %v8724
      %v8726 = vmul.f32 %v8636, 1.442695
      %v8727 = vpow.pop %v8726
      %v8728 = vmul.f32 %v8637, 1.442695
      %v8729 = vpow.pop %v8728
      %v8730 = vmul.f32 %v8638, 1.442695
      %v8731 = vpow.pop %v8730
      %v8732 = vmul.f32 %v8639, 1.442695
      %v8733 = vpow.pop %v8732
      %v8734 = vmul.f32 %v8640, 1.442695
      %v8735 = vpow.pop %v8734
      %v8736 = vmul.f32 %v8641, 1.442695
      %v8737 = vpow.pop %v8736
      %v8738 = vmul.f32 %v8642, 1.442695
      %v8739 = vpow.pop %v8738
      %v8740 = vmul.f32 %v8643, 1.442695
      %v8741 = vpow.pop %v8740
      %v8742 = vmul.f32 %v8644, 1.442695
      %v8743 = vpow.pop %v8742
      %v8744 = vmul.f32 %v8645, 1.442695
      %v8745 = vpow.pop %v8744
      %v8746 = vmul.f32 %v8646, 1.442695
      %v8747 = vpow.pop %v8746
      %v8748 = vmul.f32 %v8647, 1.442695
      %v8749 = vpow.pop %v8748
      %v8750 = vmul.f32 %v8648, 1.442695
      %v8751 = vpow.pop %v8750
      %v8752 = vmul.f32 %v8649, 1.442695
      %v8753 = vpow.pop %v8752
      %v8754 = vmul.f32 %v8650, 1.442695
      %v8755 = vpow.pop %v8754
      %v8756 = vmul.f32 %v8651, 1.442695
      %v8757 = vpow.pop %v8756
      %v8758 = vmul.f32 %v8652, 1.442695
      %v8759 = vpow.pop %v8758
      %v8760 = vmul.f32 %v8653, 1.442695
      %v8761 = vpow.pop %v8760
      %v8762 = vmul.f32 %v8654, 1.442695
      %v8763 = vpow.pop %v8762
      %v8764 = vmul.f32 %v8655, 1.442695
      %v8765 = vpow.pop %v8764
      %v8766 = vmul.f32 %v8656, 1.442695
      %v8767 = vpow.pop %v8766
      %v8768 = vmul.f32 %v8657, 1.442695
      %v8769 = vpow.pop %v8768
      %v8770 = vmul.f32 %v8658, 1.442695
      %v8771 = vpow.pop %v8770
      %v8772 = vmul.f32 %v8659, 1.442695
      %v8773 = vpow.pop %v8772
      %v8774 = vmul.f32 %v8660, 1.442695
      %v8775 = vpow.pop %v8774
      %v8776 = vmul.f32 %v8661, 1.442695
      %v8777 = vpow.pop %v8776
      %v8778 = vmul.f32 %v8662, 1.442695
      %v8779 = vpow.pop %v8778
      %v8780 = vmul.f32 %v8663, 1.442695
      %v8781 = vpow.pop %v8780
      %v8782 = vmul.f32 %v8664, 1.442695
      %v8783 = vpow.pop %v8782
      %v8784 = vmul.f32 %v8665, 1.442695
      %v8785 = vpow.pop %v8784
      %v8786 = vmul.f32 %v8666, 1.442695
      %v8787 = vpow.pop %v8786
      %v8788 = vmul.f32 %v8667, 1.442695
      %v8789 = vpow.pop %v8788
      %v8790 = vmul.f32 %v8668, 1.442695
      %v8791 = vpow.pop %v8790
      %v8792 = vmul.f32 %v8669, 1.442695
      %v8793 = vpow.pop %v8792
      %v8794 = vmul.f32 %v8670, 1.442695
      %v8795 = vpow.pop %v8794
      %v8796 = vmul.f32 %v8671, 1.442695
      %v8797 = vpow.pop %v8796
      %v8798 = vmul.f32 %v8672, 1.442695
      %v8799 = vpow.pop %v8798
      %v8800 = vmul.f32 %v8673, 1.442695
      %v8801 = vpow.pop %v8800
      %v8802 = vadd.f32 %v8675, 1.0
      %v8803 = vadd.f32 %v8677, 1.0
      %v8804 = vadd.f32 %v8679, 1.0
      %v8805 = vadd.f32 %v8681, 1.0
      %v8806 = vadd.f32 %v8683, 1.0
      %v8807 = vadd.f32 %v8685, 1.0
      %v8808 = vadd.f32 %v8687, 1.0
      %v8809 = vadd.f32 %v8689, 1.0
      %v8810 = vadd.f32 %v8691, 1.0
      %v8811 = vadd.f32 %v8693, 1.0
      %v8812 = vadd.f32 %v8695, 1.0
      %v8813 = vadd.f32 %v8697, 1.0
      %v8814 = vadd.f32 %v8699, 1.0
      %v8815 = vadd.f32 %v8701, 1.0
      %v8816 = vadd.f32 %v8703, 1.0
      %v8817 = vadd.f32 %v8705, 1.0
      %v8818 = vadd.f32 %v8707, 1.0
      %v8819 = vadd.f32 %v8709, 1.0
      %v8820 = vadd.f32 %v8711, 1.0
      %v8821 = vadd.f32 %v8713, 1.0
      %v8822 = vadd.f32 %v8715, 1.0
      %v8823 = vadd.f32 %v8717, 1.0
      %v8824 = vadd.f32 %v8719, 1.0
      %v8825 = vadd.f32 %v8721, 1.0
      %v8826 = vadd.f32 %v8723, 1.0
      %v8827 = vadd.f32 %v8725, 1.0
      %v8828 = vadd.f32 %v8727, 1.0
      %v8829 = vadd.f32 %v8729, 1.0
      %v8830 = vadd.f32 %v8731, 1.0
      %v8831 = vadd.f32 %v8733, 1.0
      %v8832 = vadd.f32 %v8735, 1.0
      %v8833 = vadd.f32 %v8737, 1.0
      %v8834 = vadd.f32 %v8739, 1.0
      %v8835 = vadd.f32 %v8741, 1.0
      %v8836 = vadd.f32 %v8743, 1.0
      %v8837 = vadd.f32 %v8745, 1.0
      %v8838 = vadd.f32 %v8747, 1.0
      %v8839 = vadd.f32 %v8749, 1.0
      %v8840 = vadd.f32 %v8751, 1.0
      %v8841 = vadd.f32 %v8753, 1.0
      %v8842 = vadd.f32 %v8755, 1.0
      %v8843 = vadd.f32 %v8757, 1.0
      %v8844 = vadd.f32 %v8759, 1.0
      %v8845 = vadd.f32 %v8761, 1.0
      %v8846 = vadd.f32 %v8763, 1.0
      %v8847 = vadd.f32 %v8765, 1.0
      %v8848 = vadd.f32 %v8767, 1.0
      %v8849 = vadd.f32 %v8769, 1.0
      %v8850 = vadd.f32 %v8771, 1.0
      %v8851 = vadd.f32 %v8773, 1.0
      %v8852 = vadd.f32 %v8775, 1.0
      %v8853 = vadd.f32 %v8777, 1.0
      %v8854 = vadd.f32 %v8779, 1.0
      %v8855 = vadd.f32 %v8781, 1.0
      %v8856 = vadd.f32 %v8783, 1.0
      %v8857 = vadd.f32 %v8785, 1.0
      %v8858 = vadd.f32 %v8787, 1.0
      %v8859 = vadd.f32 %v8789, 1.0
      %v8860 = vadd.f32 %v8791, 1.0
      %v8861 = vadd.f32 %v8793, 1.0
      %v8862 = vadd.f32 %v8795, 1.0
      %v8863 = vadd.f32 %v8797, 1.0
      %v8864 = vadd.f32 %v8799, 1.0
      %v8865 = vadd.f32 %v8801, 1.0
      %v8866 = vrcp.pop %v8802
      %v8867 = vmul.f32 1.0, %v8866
      %v8868 = vrcp.pop %v8803
      %v8869 = vmul.f32 1.0, %v8868
      %v8870 = vrcp.pop %v8804
      %v8871 = vmul.f32 1.0, %v8870
      %v8872 = vrcp.pop %v8805
      %v8873 = vmul.f32 1.0, %v8872
      %v8874 = vrcp.pop %v8806
      %v8875 = vmul.f32 1.0, %v8874
      %v8876 = vrcp.pop %v8807
      %v8877 = vmul.f32 1.0, %v8876
      %v8878 = vrcp.pop %v8808
      %v8879 = vmul.f32 1.0, %v8878
      %v8880 = vrcp.pop %v8809
      %v8881 = vmul.f32 1.0, %v8880
      %v8882 = vrcp.pop %v8810
      %v8883 = vmul.f32 1.0, %v8882
      %v8884 = vrcp.pop %v8811
      %v8885 = vmul.f32 1.0, %v8884
      %v8886 = vrcp.pop %v8812
      %v8887 = vmul.f32 1.0, %v8886
      %v8888 = vrcp.pop %v8813
      %v8889 = vmul.f32 1.0, %v8888
      %v8890 = vrcp.pop %v8814
      %v8891 = vmul.f32 1.0, %v8890
      %v8892 = vrcp.pop %v8815
      %v8893 = vmul.f32 1.0, %v8892
      %v8894 = vrcp.pop %v8816
      %v8895 = vmul.f32 1.0, %v8894
      %v8896 = vrcp.pop %v8817
      %v8897 = vmul.f32 1.0, %v8896
      %v8898 = vrcp.pop %v8818
      %v8899 = vmul.f32 1.0, %v8898
      %v8900 = vrcp.pop %v8819
      %v8901 = vmul.f32 1.0, %v8900
      %v8902 = vrcp.pop %v8820
      %v8903 = vmul.f32 1.0, %v8902
      %v8904 = vrcp.pop %v8821
      %v8905 = vmul.f32 1.0, %v8904
      %v8906 = vrcp.pop %v8822
      %v8907 = vmul.f32 1.0, %v8906
      %v8908 = vrcp.pop %v8823
      %v8909 = vmul.f32 1.0, %v8908
      %v8910 = vrcp.pop %v8824
      %v8911 = vmul.f32 1.0, %v8910
      %v8912 = vrcp.pop %v8825
      %v8913 = vmul.f32 1.0, %v8912
      %v8914 = vrcp.pop %v8826
      %v8915 = vmul.f32 1.0, %v8914
      %v8916 = vrcp.pop %v8827
      %v8917 = vmul.f32 1.0, %v8916
      %v8918 = vrcp.pop %v8828
      %v8919 = vmul.f32 1.0, %v8918
      %v8920 = vrcp.pop %v8829
      %v8921 = vmul.f32 1.0, %v8920
      %v8922 = vrcp.pop %v8830
      %v8923 = vmul.f32 1.0, %v8922
      %v8924 = vrcp.pop %v8831
      %v8925 = vmul.f32 1.0, %v8924
      %v8926 = vrcp.pop %v8832
      %v8927 = vmul.f32 1.0, %v8926
      %v8928 = vrcp.pop %v8833
      %v8929 = vmul.f32 1.0, %v8928
      %v8930 = vrcp.pop %v8834
      %v8931 = vmul.f32 1.0, %v8930
      %v8932 = vrcp.pop %v8835
      %v8933 = vmul.f32 1.0, %v8932
      %v8934 = vrcp.pop %v8836
      %v8935 = vmul.f32 1.0, %v8934
      %v8936 = vrcp.pop %v8837
      %v8937 = vmul.f32 1.0, %v8936
      %v8938 = vrcp.pop %v8838
      %v8939 = vmul.f32 1.0, %v8938
      %v8940 = vrcp.pop %v8839
      %v8941 = vmul.f32 1.0, %v8940
      %v8942 = vrcp.pop %v8840
      %v8943 = vmul.f32 1.0, %v8942
      %v8944 = vrcp.pop %v8841
      %v8945 = vmul.f32 1.0, %v8944
      %v8946 = vrcp.pop %v8842
      %v8947 = vmul.f32 1.0, %v8946
      %v8948 = vrcp.pop %v8843
      %v8949 = vmul.f32 1.0, %v8948
      %v8950 = vrcp.pop %v8844
      %v8951 = vmul.f32 1.0, %v8950
      %v8952 = vrcp.pop %v8845
      %v8953 = vmul.f32 1.0, %v8952
      %v8954 = vrcp.pop %v8846
      %v8955 = vmul.f32 1.0, %v8954
      %v8956 = vrcp.pop %v8847
      %v8957 = vmul.f32 1.0, %v8956
      %v8958 = vrcp.pop %v8848
      %v8959 = vmul.f32 1.0, %v8958
      %v8960 = vrcp.pop %v8849
      %v8961 = vmul.f32 1.0, %v8960
      %v8962 = vrcp.pop %v8850
      %v8963 = vmul.f32 1.0, %v8962
      %v8964 = vrcp.pop %v8851
      %v8965 = vmul.f32 1.0, %v8964
      %v8966 = vrcp.pop %v8852
      %v8967 = vmul.f32 1.0, %v8966
      %v8968 = vrcp.pop %v8853
      %v8969 = vmul.f32 1.0, %v8968
      %v8970 = vrcp.pop %v8854
      %v8971 = vmul.f32 1.0, %v8970
      %v8972 = vrcp.pop %v8855
      %v8973 = vmul.f32 1.0, %v8972
      %v8974 = vrcp.pop %v8856
      %v8975 = vmul.f32 1.0, %v8974
      %v8976 = vrcp.pop %v8857
      %v8977 = vmul.f32 1.0, %v8976
      %v8978 = vrcp.pop %v8858
      %v8979 = vmul.f32 1.0, %v8978
      %v8980 = vrcp.pop %v8859
      %v8981 = vmul.f32 1.0, %v8980
      %v8982 = vrcp.pop %v8860
      %v8983 = vmul.f32 1.0, %v8982
      %v8984 = vrcp.pop %v8861
      %v8985 = vmul.f32 1.0, %v8984
      %v8986 = vrcp.pop %v8862
      %v8987 = vmul.f32 1.0, %v8986
      %v8988 = vrcp.pop %v8863
      %v8989 = vmul.f32 1.0, %v8988
      %v8990 = vrcp.pop %v8864
      %v8991 = vmul.f32 1.0, %v8990
      %v8992 = vrcp.pop %v8865
      %v8993 = vmul.f32 1.0, %v8992
      %vm8994 = vcmask 7168
      %8995 = vst.msk [vmem:[%s248] sm:$0xff] %vm8994, %v8867
      %8996 = vst.msk [vmem:[%s248 + $0x8] sm:$0xff] %vm8994, %v8869
      %8997 = vst.msk [vmem:[%s248 + $0x10] sm:$0xff] %vm8994, %v8871
      %8998 = vst.msk [vmem:[%s248 + $0x18] sm:$0xff] %vm8994, %v8873
      %8999 = vst.msk [vmem:[%s248 + $0x20] sm:$0xff] %vm8994, %v8875
      %9000 = vst.msk [vmem:[%s248 + $0x28] sm:$0xff] %vm8994, %v8877
      %9001 = vst.msk [vmem:[%s248 + $0x30] sm:$0xff] %vm8994, %v8879
      %9002 = vst.msk [vmem:[%s248 + $0x38] sm:$0xff] %vm8994, %v8881
      %9003 = vst.msk [vmem:[%s248 + $0x40] sm:$0xff] %vm8994, %v8883
      %9004 = vst.msk [vmem:[%s248 + $0x48] sm:$0xff] %vm8994, %v8885
      %9005 = vst.msk [vmem:[%s248 + $0x50] sm:$0xff] %vm8994, %v8887
      %9006 = vst.msk [vmem:[%s248 + $0x58] sm:$0xff] %vm8994, %v8889
      %9007 = vst.msk [vmem:[%s248 + $0x60] sm:$0xff] %vm8994, %v8891
      %9008 = vst.msk [vmem:[%s248 + $0x68] sm:$0xff] %vm8994, %v8893
      %9009 = vst.msk [vmem:[%s248 + $0x70] sm:$0xff] %vm8994, %v8895
      %9010 = vst.msk [vmem:[%s248 + $0x78] sm:$0xff] %vm8994, %v8897
      %9011 = vst.msk [vmem:[%s248 + $0x80] sm:$0xff] %vm8994, %v8899
      %9012 = vst.msk [vmem:[%s248 + $0x88] sm:$0xff] %vm8994, %v8901
      %9013 = vst.msk [vmem:[%s248 + $0x90] sm:$0xff] %vm8994, %v8903
      %9014 = vst.msk [vmem:[%s248 + $0x98] sm:$0xff] %vm8994, %v8905
      %9015 = vst.msk [vmem:[%s248 + $0xa0] sm:$0xff] %vm8994, %v8907
      %9016 = vst.msk [vmem:[%s248 + $0xa8] sm:$0xff] %vm8994, %v8909
      %9017 = vst.msk [vmem:[%s248 + $0xb0] sm:$0xff] %vm8994, %v8911
      %9018 = vst.msk [vmem:[%s248 + $0xb8] sm:$0xff] %vm8994, %v8913
      %9019 = vst.msk [vmem:[%s248 + $0xc0] sm:$0xff] %vm8994, %v8915
      %9020 = vst.msk [vmem:[%s248 + $0xc8] sm:$0xff] %vm8994, %v8917
      %9021 = vst.msk [vmem:[%s248 + $0xd0] sm:$0xff] %vm8994, %v8919
      %9022 = vst.msk [vmem:[%s248 + $0xd8] sm:$0xff] %vm8994, %v8921
      %9023 = vst.msk [vmem:[%s248 + $0xe0] sm:$0xff] %vm8994, %v8923
      %9024 = vst.msk [vmem:[%s248 + $0xe8] sm:$0xff] %vm8994, %v8925
      %9025 = vst.msk [vmem:[%s248 + $0xf0] sm:$0xff] %vm8994, %v8927
      %9026 = vst.msk [vmem:[%s248 + $0xf8] sm:$0xff] %vm8994, %v8929
      %9027 = vst.msk [vmem:[%s248 + $0x100] sm:$0xff] %vm8994, %v8931
      %9028 = vst.msk [vmem:[%s248 + $0x108] sm:$0xff] %vm8994, %v8933
      %9029 = vst.msk [vmem:[%s248 + $0x110] sm:$0xff] %vm8994, %v8935
      %9030 = vst.msk [vmem:[%s248 + $0x118] sm:$0xff] %vm8994, %v8937
      %9031 = vst.msk [vmem:[%s248 + $0x120] sm:$0xff] %vm8994, %v8939
      %9032 = vst.msk [vmem:[%s248 + $0x128] sm:$0xff] %vm8994, %v8941
      %9033 = vst.msk [vmem:[%s248 + $0x130] sm:$0xff] %vm8994, %v8943
      %9034 = vst.msk [vmem:[%s248 + $0x138] sm:$0xff] %vm8994, %v8945
      %9035 = vst.msk [vmem:[%s248 + $0x140] sm:$0xff] %vm8994, %v8947
      %9036 = vst.msk [vmem:[%s248 + $0x148] sm:$0xff] %vm8994, %v8949
      %9037 = vst.msk [vmem:[%s248 + $0x150] sm:$0xff] %vm8994, %v8951
      %9038 = vst.msk [vmem:[%s248 + $0x158] sm:$0xff] %vm8994, %v8953
      %9039 = vst.msk [vmem:[%s248 + $0x160] sm:$0xff] %vm8994, %v8955
      %9040 = vst.msk [vmem:[%s248 + $0x168] sm:$0xff] %vm8994, %v8957
      %9041 = vst.msk [vmem:[%s248 + $0x170] sm:$0xff] %vm8994, %v8959
      %9042 = vst.msk [vmem:[%s248 + $0x178] sm:$0xff] %vm8994, %v8961
      %9043 = vst.msk [vmem:[%s248 + $0x180] sm:$0xff] %vm8994, %v8963
      %9044 = vst.msk [vmem:[%s248 + $0x188] sm:$0xff] %vm8994, %v8965
      %9045 = vst.msk [vmem:[%s248 + $0x190] sm:$0xff] %vm8994, %v8967
      %9046 = vst.msk [vmem:[%s248 + $0x198] sm:$0xff] %vm8994, %v8969
      %9047 = vst.msk [vmem:[%s248 + $0x1a0] sm:$0xff] %vm8994, %v8971
      %9048 = vst.msk [vmem:[%s248 + $0x1a8] sm:$0xff] %vm8994, %v8973
      %9049 = vst.msk [vmem:[%s248 + $0x1b0] sm:$0xff] %vm8994, %v8975
      %9050 = vst.msk [vmem:[%s248 + $0x1b8] sm:$0xff] %vm8994, %v8977
      %9051 = vst.msk [vmem:[%s248 + $0x1c0] sm:$0xff] %vm8994, %v8979
      %9052 = vst.msk [vmem:[%s248 + $0x1c8] sm:$0xff] %vm8994, %v8981
      %9053 = vst.msk [vmem:[%s248 + $0x1d0] sm:$0xff] %vm8994, %v8983
      %9054 = vst.msk [vmem:[%s248 + $0x1d8] sm:$0xff] %vm8994, %v8985
      %9055 = vst.msk [vmem:[%s248 + $0x1e0] sm:$0xff] %vm8994, %v8987
      %9056 = vst.msk [vmem:[%s248 + $0x1e8] sm:$0xff] %vm8994, %v8989
      %9057 = vst.msk [vmem:[%s248 + $0x1f0] sm:$0xff] %vm8994, %v8991
      %9058 = vst.msk [vmem:[%s248 + $0x1f8] sm:$0xff] %vm8994, %v8993
      %s9059 = smul.u32 64, %s23
      %p9060 = scmp.lt.s32.totalorder %s22, 1
      %s9061 = scalar_select %p9060, %s22, 1
      %p9062 = scmp.lt.s32.totalorder %s9059, 511
      %s9063 = scalar_select %p9062, %s9059, 511
      %s9064 = smul.addr %s9061, 512
      %s9065 = sadd.s32 %s9063, %s9064
      %s9066 = smul.addr %s9065, 8
      %s9067 = scalar_lea.vmem %s5, %s9066
      // Predicated region
      $region41: #{mask_decoder_forward.6} parent=39 // pred_check
        %p9068 = pneg %p160
      $region42: #{mask_decoder_forward.6} parent=39 // pred_check_branch
        %9070 = sbr.rel (%p9068) target = $region44
      $region43: #{mask_decoder_forward.6} parent=39 // pred_region
        %s9071 = smul.u32 64, %s23
      $region44: #{mask_decoder_forward.6} parent=39 // pred_fallthru
        _
    $region40: #{mask_decoder_forward.6} parent=5 // pred_fallthru
      _
    %p9072 = scmp.le.s32.totalorder 2, %s13
    // Predicated region
    $region45: #{mask_decoder_forward.6} parent=5 // pred_check
      %p9073 = pneg %p9072
    $region46: #{mask_decoder_forward.6} parent=5 // pred_check_branch
      %9075 = sbr.rel (%p9073) target = $region48
    $region47: #{mask_decoder_forward.6} parent=5 // pred_region
      %s9076 = ssub.s32 %s13, 2
      // Predicated region
      $region49: #{mask_decoder_forward.6} parent=47 // pred_check
        %p9077 = pneg %p166
      $region50: #{mask_decoder_forward.6} parent=47 // pred_check_branch
        %9079 = sbr.rel (%p9077) target = $region52
      $region51: #{mask_decoder_forward.6} parent=47 // pred_region
        %s9080 = smul.u32 64, %s25
        %p9081 = scmp.lt.s32.totalorder %s24, 1
        %s9082 = scalar_select %p9081, %s24, 1
        %p9083 = scmp.lt.s32.totalorder %s9080, 511
        %s9084 = scalar_select %p9083, %s9080, 511
        %s9085 = smul.addr %s9082, 512
        %s9086 = sadd.s32 %s9084, %s9085
        %s9087 = smul.addr %s9086, 8
        %s9088 = scalar_lea.vmem %s5, %s9087
      $region52: #{mask_decoder_forward.6} parent=47 // pred_fallthru
        _
    $region48: #{mask_decoder_forward.6} parent=5 // pred_fallthru
      _
  $region6: #{mask_decoder_forward.6} parent=0 // loop_footer
    %s17 = sadd.s32 1, %s13
  $region7: #{mask_decoder_forward.6} parent=0 // loop_footer_branch
    %12 = sbr.rel target = $region3
  $region8: #{mask_decoder_forward.6} parent=0 // loop_exit
    _

</llo_original>
